<compile_context>
chip_gen: v6e
topology: v6e:2x2x1
jax: 0.10.0
libtpu: 0.0.40
codegen_flags: <defaults>
</compile_context>

<pallas_src>
import functools

import jax
import jax.numpy as jnp
import numpy as np
from jax import lax
from jax.experimental import pallas as pl
from jax.experimental.pallas import tpu as pltpu


# ----------------------------- kernel helpers ---------------------------------


def _rmsnorm(v, w, eps):
    # v: (rows, D) f32, w: (1, D) f32 -> f32
    ms = jnp.mean(v * v, axis=-1, keepdims=True)
    return v * lax.rsqrt(ms + eps) * w


def _rope(y, cos_rows, sin_rows, d_k):
    # rotate-half RoPE on one head: y (rows, d_k) f32, tables (rows, d_k) f32.
    # sign is folded into sin_rows, so this is just mul/add + one XLU lane roll.
    return y * cos_rows + pltpu.roll(y, d_k // 2, axis=1) * sin_rows


# ----------------------------- Pallas kernel ----------------------------------


def transformer_block_kernel(
    x_ref, ln1_ref, ln2_ref,
    wq_ref, wk_ref, wv_ref, wo_ref,
    w1_ref, w2_ref, w3_ref,
    cos_ref, sin_ref,
    o_ref,
    k_scr, v_scr,
    *, num_heads: int, d_k: int, tq: int, eps: float,
):
    qi = pl.program_id(1)
    q_start = pl.multiple_of(qi * tq, tq)

    ln1 = ln1_ref[...]                  # (1, D) f32
    ln2 = ln2_ref[...]
    scale = jnp.float32(1.0 / np.sqrt(d_k))
    cos_t = cos_ref[...]                # (tq, d_k) rows [q_start, q_start+tq)
    sin_t = sin_ref[...]

    # ---- projections for this tile's rows (Q, plus the NEW K/V rows) ----
    xq = x_ref[0]                                               # (tq, D) f32
    h = _rmsnorm(xq, ln1, eps).astype(jnp.bfloat16)
    q2 = jnp.dot(h, wq_ref[...], preferred_element_type=jnp.float32)
    k2 = jnp.dot(h, wk_ref[...], preferred_element_type=jnp.float32)
    v2 = jnp.dot(h, wv_ref[...], preferred_element_type=jnp.float32)

    q_heads = []
    for hd in range(num_heads):
        lo = hd * d_k
        qh = _rope(q2[:, lo:lo + d_k], cos_t, sin_t, d_k) * scale
        q_heads.append(qh.astype(jnp.bfloat16))
        kh = _rope(k2[:, lo:lo + d_k], cos_t, sin_t, d_k)
        # incremental K/V: append this tile's rows (causality: later tiles only
        # ever read rows <= their own q range, so stale rows are never touched).
        k_scr[hd, pl.ds(q_start, tq), :] = kh.astype(jnp.bfloat16)
        v_scr[hd, pl.ds(q_start, tq), :] = v2[:, lo:lo + d_k].astype(jnp.bfloat16)
    q_all = jnp.stack(q_heads, axis=0)                          # (H, tq, d_k) bf16 value

    # ---- flash-style online softmax over KV tiles 0..qi ----
    def kv_step(k_start, carry, mask):
        m, l, acc = carry
        kb = k_scr[:, pl.ds(k_start, tq), :]                    # (H, tq, d_k) bf16
        vb = v_scr[:, pl.ds(k_start, tq), :]
        s = jnp.einsum("hqd,hkd->hqk", q_all, kb,
                       preferred_element_type=jnp.float32)      # (H, tq, tq) f32
        if mask is not None:
            s = jnp.where(mask, s, jnp.float32(-1e9))
        m_new = jnp.maximum(m, jnp.max(s, axis=-1, keepdims=True))
        alpha = jnp.exp(m - m_new)
        p = jnp.exp(s - m_new)
        l_new = alpha * l + jnp.sum(p, axis=-1, keepdims=True)
        acc_new = alpha * acc + jnp.einsum(
            "hqk,hkd->hqd", p.astype(jnp.bfloat16), vb,
            preferred_element_type=jnp.float32)
        return m_new, l_new, acc_new

    init = (
        jnp.full((num_heads, tq, 1), -1e30, jnp.float32),       # running max
        jnp.zeros((num_heads, tq, 1), jnp.float32),             # running sum
        jnp.zeros((num_heads, tq, d_k), jnp.float32),           # running PV
    )

    def body(kt, carry):                                        # fully-unmasked tiles
        return kv_step(pl.multiple_of(kt * tq, tq), carry, None)

    carry = lax.fori_loop(0, qi, body, init)

    # diagonal tile: the only place the causal mask is applied
    rows = lax.broadcasted_iota(jnp.int32, (tq, tq), 0)
    cols = lax.broadcasted_iota(jnp.int32, (tq, tq), 1)
    diag_mask = (cols <= rows)[None]                            # (1, tq, tq)
    m, l, acc = kv_step(q_start, carry, diag_mask)

    attn = acc / l                                              # exact softmax norm

    # ---- output projection: per-head contraction straight into the residual ----
    x1 = xq                                                     # f32 (tq, D)
    for hd in range(num_heads):
        x1 = x1 + jnp.dot(attn[hd].astype(jnp.bfloat16), wo_ref[hd],
                          preferred_element_type=jnp.float32)

    # ---- SwiGLU FFN ----
    # TODO(synk): for very large d_ff, stream the Dff axis of W1/W3 (N) and W2 (K)
    # in >=256-wide chunks instead of holding the full (D, Dff) blocks resident.
    h2 = _rmsnorm(x1, ln2, eps).astype(jnp.bfloat16)
    a = jnp.dot(h2, w1_ref[...], preferred_element_type=jnp.float32)
    g = jnp.dot(h2, w3_ref[...], preferred_element_type=jnp.float32)
    silu = a * pl.reciprocal(1.0 + jnp.exp(-a), approx=True)
    f = jnp.dot((silu * g).astype(jnp.bfloat16), w2_ref[...],
                preferred_element_type=jnp.float32)

    o_ref[0] = (x1 + f).astype(o_ref.dtype)


# ----------------------------- wrapper -----------------------------------------


def transformer_block(x, params, *, num_heads: int, tq: int = 128, eps: float = 1e-5):
    B, S, D = x.shape
    assert D % num_heads == 0
    d_k = D // num_heads
    assert d_k % 2 == 0
    tq = min(tq, S)
    assert S % tq == 0 and tq % 8 == 0
    Dff = params["w1"].shape[1]

    bf16 = jnp.bfloat16
    kern = functools.partial(
        transformer_block_kernel, num_heads=num_heads, d_k=d_k, tq=tq, eps=eps)

    # constant-index blocks: single-buffer them (their block index never changes,
    # double-buffering would only double resident VMEM).
    def const(shape):
        nd = len(shape)
        return pl.BlockSpec(shape, lambda b, qi, _n=nd: (0,) * _n,
                            pipeline_mode=pl.Buffered(1))

    # explicit VMEM budget: weights (1x) + f32 x/out tiles (2x) + rope tiles (2x)
    # + bf16 KV scratch, doubled for intermediates/spills, + compiler headroom.
    w_bytes = (4 * D * D + 3 * D * Dff) * 2
    io_bytes = 2 * (2 * tq * D * 4)
    rope_bytes = 2 * (2 * tq * d_k * 4)
    kv_bytes = 2 * num_heads * S * d_k * 2
    vmem_limit = min(2 * (w_bytes + io_bytes + rope_bytes + kv_bytes) + (16 << 20),
                     96 << 20)

    # NOTE: the qi axis MUST stay "arbitrary" (sequential per batch element on one
    # core): K/V rows are accumulated incrementally in VMEM scratch across q tiles.
    # TODO(synk): for v7x dual-core with small B, split KV production into its own
    # pallas_call so the qi axis can be marked "parallel".
    return pl.pallas_call(
        kern,
        out_shape=jax.ShapeDtypeStruct((B, S, D), x.dtype),
        grid=(B, S // tq),
        in_specs=[
            pl.BlockSpec((1, tq, D), lambda b, qi: (b, qi, 0)),   # x (this q tile only)
            const((1, D)),                                        # ln1
            const((1, D)),                                        # ln2
            const((D, D)), const((D, D)), const((D, D)),          # Wq Wk Wv
            const((num_heads, d_k, D)),                           # Wo (per-head split)
            const((D, Dff)), const((Dff, D)), const((D, Dff)),    # W1 W2 W3
            pl.BlockSpec((tq, d_k), lambda b, qi: (qi, 0)),        # RoPE cos rows
            pl.BlockSpec((tq, d_k), lambda b, qi: (qi, 0)),        # RoPE signed sin rows
        ],
        out_specs=pl.BlockSpec((1, tq, D), lambda b, qi: (b, qi, 0)),
        scratch_shapes=[
            pltpu.VMEM((num_heads, S, d_k), bf16),                 # K heads (RoPE'd)
            pltpu.VMEM((num_heads, S, d_k), bf16),                 # V heads
        ],
        compiler_params=pltpu.CompilerParams(
            dimension_semantics=("parallel", "arbitrary"),
            vmem_limit_bytes=int(vmem_limit),
        ),
    )(
        x,
        params["ln1"], params["ln2"],
        params["wq"].astype(bf16), params["wk"].astype(bf16), params["wv"].astype(bf16),
        params["wo"].astype(bf16).reshape(num_heads, d_k, D),
        params["w1"].astype(bf16), params["w2"].astype(bf16), params["w3"].astype(bf16),
        params["rope_cos"], params["rope_sin_signed"],
    )


# ----------------------------- parameter setup ---------------------------------


def make_params(key, d_model, num_heads, d_ff, seq_len, theta):
    d_k = d_model // num_heads
    ks = jax.random.split(key, 7)
    scale = 0.02

    def w(k, shape):                      # (in, out) = transposed PyTorch layout
        return (scale * jax.random.normal(k, shape)).astype(jnp.float32)

    params = {
        "wq": w(ks[0], (d_model, d_model)),
        "wk": w(ks[1], (d_model, d_model)),
        "wv": w(ks[2], (d_model, d_model)),
        "wo": w(ks[3], (d_model, d_model)),
        "w1": w(ks[4], (d_model, d_ff)),
        "w2": w(ks[5], (d_ff, d_model)),
        "w3": w(ks[6], (d_model, d_ff)),
        "ln1": jnp.ones((1, d_model), jnp.float32),
        "ln2": jnp.ones((1, d_model), jnp.float32),
    }

    # RoPE tables (rotate-half convention), per-head: (S, d_k/2) half tables for the
    # reference and packed (S, d_k) cos / signed-sin tables for the kernel.
    pos = np.arange(seq_len, dtype=np.float32)
    inv_freq = theta ** (-np.arange(0, d_k, 2, dtype=np.float32) / d_k)  # (d_k/2,)
    ang = pos[:, None] * inv_freq[None, :]                               # (S, d_k/2)
    cos_h, sin_h = np.cos(ang), np.sin(ang)
    params["cos_half"] = jnp.asarray(cos_h, jnp.float32)
    params["sin_half"] = jnp.asarray(sin_h, jnp.float32)
    params["rope_cos"] = jnp.asarray(np.concatenate([cos_h, cos_h], -1), jnp.float32)
    params["rope_sin_signed"] = jnp.asarray(
        np.concatenate([-sin_h, sin_h], -1), jnp.float32)
    return params


# ----------------------------- pure-JAX reference -------------------------------


def reference_block(x, params, *, num_heads):
    B, S, D = x.shape
    d_k = D // num_heads
    eps = 1e-5

    def rms(v, w):
        return v * lax.rsqrt(jnp.mean(v * v, -1, keepdims=True) + eps) * w

    h = rms(x, params["ln1"])
    q = h @ params["wq"]
    k = h @ params["wk"]
    v = h @ params["wv"]

    def split(t):
        return t.reshape(B, S, num_heads, d_k).transpose(0, 2, 1, 3)

    qh, kh, vh = split(q), split(k), split(v)

    def rope(t):                                 # rotate-half, independent formulation
        d2 = d_k // 2
        t1, t2 = t[..., :d2], t[..., d2:]
        c, s = params["cos_half"], params["sin_half"]
        return jnp.concatenate([t1 * c - t2 * s, t2 * c + t1 * s], axis=-1)

    qh, kh = rope(qh), rope(kh)
    scores = jnp.einsum("bhqd,bhkd->bhqk", qh, kh) / np.sqrt(d_k)
    mask = np.tril(np.ones((S, S), bool))
    scores = jnp.where(mask[None, None], scores, -1e9)
    w_ = jax.nn.softmax(scores, axis=-1)
    o = jnp.einsum("bhqk,bhkd->bhqd", w_, vh).transpose(0, 2, 1, 3).reshape(B, S, D)
    x1 = x + o @ params["wo"]

    h2 = rms(x1, params["ln2"])
    a = h2 @ params["w1"]
    f = ((a * jax.nn.sigmoid(a)) * (h2 @ params["w3"])) @ params["w2"]
    return x1 + f


# ----------------------------- main ---------------------------------------------


if __name__ == "__main__":
    B, S, D, H, DFF = 2, 256, 256, 2, 512        # d_k = 128 (lane-aligned), 2 q-tiles
    THETA = 10000.0

    key = jax.random.PRNGKey(0)
    kx, kp = jax.random.split(key)
    x = jax.random.normal(kx, (B, S, D), dtype=jnp.float32)
    params = make_params(kp, D, H, DFF, S, THETA)

    out = transformer_block(x, params, num_heads=H, tq=128)
    out = jax.block_until_ready(out)

    ref = reference_block(x, params, num_heads=H)
    np.testing.assert_allclose(np.asarray(out), np.asarray(ref), atol=2e-2, rtol=2e-2)

    print("KERNEL_OK")
</pallas_src>

<mosaic_0001>
module attributes {stable_mosaic.version = 11 : i64} {
  func.func @transformer_block_kernel(%arg0: i32, %arg1: i32, %arg2: memref<1x128x256xf32, #tpu.memory_space<vmem>>, %arg3: memref<1x256xf32, #tpu.memory_space<vmem>>, %arg4: memref<1x256xf32, #tpu.memory_space<vmem>>, %arg5: memref<256x256xbf16, #tpu.memory_space<vmem>>, %arg6: memref<256x256xbf16, #tpu.memory_space<vmem>>, %arg7: memref<256x256xbf16, #tpu.memory_space<vmem>>, %arg8: memref<2x128x256xbf16, #tpu.memory_space<vmem>>, %arg9: memref<256x512xbf16, #tpu.memory_space<vmem>>, %arg10: memref<512x256xbf16, #tpu.memory_space<vmem>>, %arg11: memref<256x512xbf16, #tpu.memory_space<vmem>>, %arg12: memref<128x128xf32, #tpu.memory_space<vmem>>, %arg13: memref<128x128xf32, #tpu.memory_space<vmem>>, %arg14: memref<1x128x256xf32, #tpu.memory_space<vmem>>, %arg15: memref<2x256x128xbf16, #tpu.memory_space<vmem>>, %arg16: memref<2x256x128xbf16, #tpu.memory_space<vmem>>) attributes {dimension_semantics = [#tpu.dimension_semantics<parallel>, #tpu.dimension_semantics<arbitrary>], iteration_bounds = array<i64: 2, 2>, scalar_prefetch = 0 : i64, scratch_operands = 2 : i64, tpu.core_type = #tpu.core_type<tc>, window_params = [{transform_indices = @transform_0, window_bounds = array<i64: 1, 128, 256>}, {pipeline_mode = #tpu.pipeline_mode<synchronous>, transform_indices = @transform_1, window_bounds = array<i64: 1, 256>}, {pipeline_mode = #tpu.pipeline_mode<synchronous>, transform_indices = @transform_2, window_bounds = array<i64: 1, 256>}, {pipeline_mode = #tpu.pipeline_mode<synchronous>, transform_indices = @transform_3, window_bounds = array<i64: 256, 256>}, {pipeline_mode = #tpu.pipeline_mode<synchronous>, transform_indices = @transform_4, window_bounds = array<i64: 256, 256>}, {pipeline_mode = #tpu.pipeline_mode<synchronous>, transform_indices = @transform_5, window_bounds = array<i64: 256, 256>}, {pipeline_mode = #tpu.pipeline_mode<synchronous>, transform_indices = @transform_6, window_bounds = array<i64: 2, 128, 256>}, {pipeline_mode = #tpu.pipeline_mode<synchronous>, transform_indices = @transform_7, window_bounds = array<i64: 256, 512>}, {pipeline_mode = #tpu.pipeline_mode<synchronous>, transform_indices = @transform_8, window_bounds = array<i64: 512, 256>}, {pipeline_mode = #tpu.pipeline_mode<synchronous>, transform_indices = @transform_9, window_bounds = array<i64: 256, 512>}, {transform_indices = @transform_10, window_bounds = array<i64: 128, 128>}, {transform_indices = @transform_11, window_bounds = array<i64: 128, 128>}, {transform_indices = @transform_12, window_bounds = array<i64: 1, 128, 256>}]} {
    %c128_i32 = arith.constant 128 : i32
    %0 = arith.muli %arg1, %c128_i32 : i32
    %1 = tpu.assume_multiple %0, 128 : i32
    %c0 = arith.constant 0 : index
    %c0_0 = arith.constant 0 : index
    %2 = vector.load %arg3[%c0, %c0_0] : memref<1x256xf32, #tpu.memory_space<vmem>>, vector<1x256xf32>
    %c0_1 = arith.constant 0 : index
    %c0_2 = arith.constant 0 : index
    %3 = vector.load %arg4[%c0_1, %c0_2] : memref<1x256xf32, #tpu.memory_space<vmem>>, vector<1x256xf32>
    %c0_3 = arith.constant 0 : index
    %c0_4 = arith.constant 0 : index
    %4 = vector.load %arg12[%c0_3, %c0_4] : memref<128x128xf32, #tpu.memory_space<vmem>>, vector<128x128xf32>
    %c0_5 = arith.constant 0 : index
    %c0_6 = arith.constant 0 : index
    %5 = vector.load %arg13[%c0_5, %c0_6] : memref<128x128xf32, #tpu.memory_space<vmem>>, vector<128x128xf32>
    %c0_7 = arith.constant 0 : index
    %c0_8 = arith.constant 0 : index
    %c0_9 = arith.constant 0 : index
    %6 = vector.load %arg2[%c0_7, %c0_8, %c0_9] : memref<1x128x256xf32, #tpu.memory_space<vmem>>, vector<1x128x256xf32>
    %7 = vector.shape_cast %6 : vector<1x128x256xf32> to vector<128x256xf32>
    %8 = arith.mulf %7, %7 : vector<128x256xf32>
    %cst = arith.constant dense<0.000000e+00> : vector<128xf32>
    %9 = vector.multi_reduction <add>, %8, %cst [1] : vector<128x256xf32> to vector<128xf32>
    %10 = vector.shape_cast %9 : vector<128xf32> to vector<128x1xf32>
    %cst_10 = arith.constant 2.560000e+02 : f32
    %11 = vector.broadcast %cst_10 : f32 to vector<128x1xf32>
    %12 = arith.divf %10, %11 : vector<128x1xf32>
    %cst_11 = arith.constant 9.99999974E-6 : f32
    %13 = vector.broadcast %cst_11 : f32 to vector<128x1xf32>
    %14 = arith.addf %12, %13 : vector<128x1xf32>
    %15 = math.rsqrt %14 : vector<128x1xf32>
    %16 = vector.broadcast %15 : vector<128x1xf32> to vector<128x256xf32>
    %17 = arith.mulf %7, %16 : vector<128x256xf32>
    %18 = vector.broadcast %2 : vector<1x256xf32> to vector<128x256xf32>
    %19 = arith.mulf %17, %18 : vector<128x256xf32>
    %20 = arith.truncf %19 : vector<128x256xf32> to vector<128x256xbf16>
    %c0_12 = arith.constant 0 : index
    %c0_13 = arith.constant 0 : index
    %21 = vector.load %arg5[%c0_12, %c0_13] : memref<256x256xbf16, #tpu.memory_space<vmem>>, vector<256x256xbf16>
    %cst_14 = arith.constant dense<0.000000e+00> : vector<128x256xf32>
    %22 = tpu.matmul %20, %21, %cst_14 {dimension_numbers = #tpu.dot_dimension_numbers<[1], [0], [0], [1], [0, 0, 1, 1], [], []>} : vector<128x256xbf16>, vector<256x256xbf16>, vector<128x256xf32> -> vector<128x256xf32>
    %c0_15 = arith.constant 0 : index
    %c0_16 = arith.constant 0 : index
    %23 = vector.load %arg6[%c0_15, %c0_16] : memref<256x256xbf16, #tpu.memory_space<vmem>>, vector<256x256xbf16>
    %cst_17 = arith.constant dense<0.000000e+00> : vector<128x256xf32>
    %24 = tpu.matmul %20, %23, %cst_17 {dimension_numbers = #tpu.dot_dimension_numbers<[1], [0], [0], [1], [0, 0, 1, 1], [], []>} : vector<128x256xbf16>, vector<256x256xbf16>, vector<128x256xf32> -> vector<128x256xf32>
    %c0_18 = arith.constant 0 : index
    %c0_19 = arith.constant 0 : index
    %25 = vector.load %arg7[%c0_18, %c0_19] : memref<256x256xbf16, #tpu.memory_space<vmem>>, vector<256x256xbf16>
    %cst_20 = arith.constant dense<0.000000e+00> : vector<128x256xf32>
    %26 = tpu.matmul %20, %25, %cst_20 {dimension_numbers = #tpu.dot_dimension_numbers<[1], [0], [0], [1], [0, 0, 1, 1], [], []>} : vector<128x256xbf16>, vector<256x256xbf16>, vector<128x256xf32> -> vector<128x256xf32>
    %27 = vector.extract_strided_slice %22 {offsets = [0, 0], sizes = [128, 128], strides = [1, 1]} : vector<128x256xf32> to vector<128x128xf32>
    %28 = arith.mulf %27, %4 : vector<128x128xf32>
    %c64_i32 = arith.constant 64 : i32
    %29 = tpu.dynamic_rotate %27 by %c64_i32 dim 1 : vector<128x128xf32>, i32 -> vector<128x128xf32>
    %30 = arith.mulf %29, %5 : vector<128x128xf32>
    %31 = arith.addf %28, %30 : vector<128x128xf32>
    %cst_21 = arith.constant 0.0883883461 : f32
    %32 = vector.broadcast %cst_21 : f32 to vector<128x128xf32>
    %33 = arith.mulf %31, %32 : vector<128x128xf32>
    %34 = arith.truncf %33 : vector<128x128xf32> to vector<128x128xbf16>
    %35 = vector.extract_strided_slice %24 {offsets = [0, 0], sizes = [128, 128], strides = [1, 1]} : vector<128x256xf32> to vector<128x128xf32>
    %36 = arith.mulf %35, %4 : vector<128x128xf32>
    %c64_i32_22 = arith.constant 64 : i32
    %37 = tpu.dynamic_rotate %35 by %c64_i32_22 dim 1 : vector<128x128xf32>, i32 -> vector<128x128xf32>
    %38 = arith.mulf %37, %5 : vector<128x128xf32>
    %39 = arith.addf %36, %38 : vector<128x128xf32>
    %40 = arith.truncf %39 : vector<128x128xf32> to vector<128x128xbf16>
    %c0_23 = arith.constant 0 : index
    %41 = arith.index_cast %1 : i32 to index
    %c0_24 = arith.constant 0 : index
    %42 = vector.load %arg15[%c0_23, %41, %c0_24] : memref<2x256x128xbf16, #tpu.memory_space<vmem>>, vector<1x128x128xbf16>
    %43 = vector.shape_cast %42 : vector<1x128x128xbf16> to vector<128x128xbf16>
    %44 = vector.shape_cast %40 : vector<128x128xbf16> to vector<1x128x128xbf16>
    tpu.vector_store %arg15[%c0_23, %41, %c0_24], %44 {strides = array<i32>} : memref<2x256x128xbf16, #tpu.memory_space<vmem>>, vector<1x128x128xbf16>,
    %45 = vector.extract_strided_slice %26 {offsets = [0, 0], sizes = [128, 128], strides = [1, 1]} : vector<128x256xf32> to vector<128x128xf32>
    %46 = arith.truncf %45 : vector<128x128xf32> to vector<128x128xbf16>
    %c0_25 = arith.constant 0 : index
    %47 = arith.index_cast %1 : i32 to index
    %c0_26 = arith.constant 0 : index
    %48 = vector.load %arg16[%c0_25, %47, %c0_26] : memref<2x256x128xbf16, #tpu.memory_space<vmem>>, vector<1x128x128xbf16>
    %49 = vector.shape_cast %48 : vector<1x128x128xbf16> to vector<128x128xbf16>
    %50 = vector.shape_cast %46 : vector<128x128xbf16> to vector<1x128x128xbf16>
    tpu.vector_store %arg16[%c0_25, %47, %c0_26], %50 {strides = array<i32>} : memref<2x256x128xbf16, #tpu.memory_space<vmem>>, vector<1x128x128xbf16>,
    %51 = vector.extract_strided_slice %22 {offsets = [0, 128], sizes = [128, 128], strides = [1, 1]} : vector<128x256xf32> to vector<128x128xf32>
    %52 = arith.mulf %51, %4 : vector<128x128xf32>
    %c64_i32_27 = arith.constant 64 : i32
    %53 = tpu.dynamic_rotate %51 by %c64_i32_27 dim 1 : vector<128x128xf32>, i32 -> vector<128x128xf32>
    %54 = arith.mulf %53, %5 : vector<128x128xf32>
    %55 = arith.addf %52, %54 : vector<128x128xf32>
    %cst_28 = arith.constant 0.0883883461 : f32
    %56 = vector.broadcast %cst_28 : f32 to vector<128x128xf32>
    %57 = arith.mulf %55, %56 : vector<128x128xf32>
    %58 = arith.truncf %57 : vector<128x128xf32> to vector<128x128xbf16>
    %59 = vector.extract_strided_slice %24 {offsets = [0, 128], sizes = [128, 128], strides = [1, 1]} : vector<128x256xf32> to vector<128x128xf32>
    %60 = arith.mulf %59, %4 : vector<128x128xf32>
    %c64_i32_29 = arith.constant 64 : i32
    %61 = tpu.dynamic_rotate %59 by %c64_i32_29 dim 1 : vector<128x128xf32>, i32 -> vector<128x128xf32>
    %62 = arith.mulf %61, %5 : vector<128x128xf32>
    %63 = arith.addf %60, %62 : vector<128x128xf32>
    %64 = arith.truncf %63 : vector<128x128xf32> to vector<128x128xbf16>
    %c1 = arith.constant 1 : index
    %65 = arith.index_cast %1 : i32 to index
    %c0_30 = arith.constant 0 : index
    %66 = vector.load %arg15[%c1, %65, %c0_30] : memref<2x256x128xbf16, #tpu.memory_space<vmem>>, vector<1x128x128xbf16>
    %67 = vector.shape_cast %66 : vector<1x128x128xbf16> to vector<128x128xbf16>
    %68 = vector.shape_cast %64 : vector<128x128xbf16> to vector<1x128x128xbf16>
    tpu.vector_store %arg15[%c1, %65, %c0_30], %68 {strides = array<i32>} : memref<2x256x128xbf16, #tpu.memory_space<vmem>>, vector<1x128x128xbf16>,
    %69 = vector.extract_strided_slice %26 {offsets = [0, 128], sizes = [128, 128], strides = [1, 1]} : vector<128x256xf32> to vector<128x128xf32>
    %70 = arith.truncf %69 : vector<128x128xf32> to vector<128x128xbf16>
    %c1_31 = arith.constant 1 : index
    %71 = arith.index_cast %1 : i32 to index
    %c0_32 = arith.constant 0 : index
    %72 = vector.load %arg16[%c1_31, %71, %c0_32] : memref<2x256x128xbf16, #tpu.memory_space<vmem>>, vector<1x128x128xbf16>
    %73 = vector.shape_cast %72 : vector<1x128x128xbf16> to vector<128x128xbf16>
    %74 = vector.shape_cast %70 : vector<128x128xbf16> to vector<1x128x128xbf16>
    tpu.vector_store %arg16[%c1_31, %71, %c0_32], %74 {strides = array<i32>} : memref<2x256x128xbf16, #tpu.memory_space<vmem>>, vector<1x128x128xbf16>,
    %75 = vector.shape_cast %34 : vector<128x128xbf16> to vector<1x128x128xbf16>
    %76 = vector.shape_cast %58 : vector<128x128xbf16> to vector<1x128x128xbf16>
    %77 = tpu.concatenate %75, %76 in 0 : vector<1x128x128xbf16>, vector<1x128x128xbf16> -> vector<2x128x128xbf16>
    %cst_33 = arith.constant -1.000000e+30 : f32
    %78 = vector.broadcast %cst_33 : f32 to vector<2x128x1xf32>
    %cst_34 = arith.constant 0.000000e+00 : f32
    %79 = vector.broadcast %cst_34 : f32 to vector<2x128x1xf32>
    %cst_35 = arith.constant 0.000000e+00 : f32
    %80 = vector.broadcast %cst_35 : f32 to vector<2x128x128xf32>
    %c0_i32 = arith.constant 0 : i32
    %81 = arith.subi %arg1, %c0_i32 : i32
    %82 = arith.addi %c0_i32, %81 : i32
    %c1_i32 = arith.constant 1 : i32
    %83:3 = scf.for %arg17 = %c0_i32 to %82 step %c1_i32 iter_args(%arg18 = %78, %arg19 = %79, %arg20 = %80) -> (vector<2x128x1xf32>, vector<2x128x1xf32>, vector<2x128x128xf32>)  : i32 {
      %c128_i32_70 = arith.constant 128 : i32
      %162 = arith.muli %arg17, %c128_i32_70 : i32
      %163 = tpu.assume_multiple %162, 128 : i32
      %c0_71 = arith.constant 0 : index
      %164 = arith.index_cast %163 : i32 to index
      %c0_72 = arith.constant 0 : index
      %165 = vector.load %arg15[%c0_71, %164, %c0_72] : memref<2x256x128xbf16, #tpu.memory_space<vmem>>, vector<2x128x128xbf16>
      %c0_73 = arith.constant 0 : index
      %166 = arith.index_cast %163 : i32 to index
      %c0_74 = arith.constant 0 : index
      %167 = vector.load %arg16[%c0_73, %166, %c0_74] : memref<2x256x128xbf16, #tpu.memory_space<vmem>>, vector<2x128x128xbf16>
      "tpu.trace_start"() <{level = 10 : i32, message = "hqd,hkd->hqk"}> : () -> ()
      %cst_75 = arith.constant dense<0.000000e+00> : vector<2x128x128xf32>
      %168 = tpu.matmul %77, %165, %cst_75 {dimension_numbers = #tpu.dot_dimension_numbers<[2], [2], [1], [1], [0, 0, 0, 1, 1, 1], [0], [0]>} : vector<2x128x128xbf16>, vector<2x128x128xbf16>, vector<2x128x128xf32> -> vector<2x128x128xf32>
      "tpu.trace_stop"() : () -> ()
      %cst_76 = arith.constant dense<0xFF800000> : vector<2x128xf32>
      %169 = vector.multi_reduction <maximumf>, %168, %cst_76 [2] : vector<2x128x128xf32> to vector<2x128xf32>
      %170 = vector.shape_cast %169 : vector<2x128xf32> to vector<2x128x1xf32>
      %171 = arith.maximumf %arg18, %170 : vector<2x128x1xf32>
      %172 = arith.subf %arg18, %171 : vector<2x128x1xf32>
      %173 = math.exp %172 : vector<2x128x1xf32>
      %174 = vector.broadcast %171 : vector<2x128x1xf32> to vector<2x128x128xf32>
      %175 = arith.subf %168, %174 : vector<2x128x128xf32>
      %176 = math.exp %175 : vector<2x128x128xf32>
      %177 = arith.mulf %173, %arg19 : vector<2x128x1xf32>
      %cst_77 = arith.constant dense<0.000000e+00> : vector<2x128xf32>
      %178 = vector.multi_reduction <add>, %176, %cst_77 [2] : vector<2x128x128xf32> to vector<2x128xf32>
      %179 = vector.shape_cast %178 : vector<2x128xf32> to vector<2x128x1xf32>
      %180 = arith.addf %177, %179 : vector<2x128x1xf32>
      %181 = vector.broadcast %173 : vector<2x128x1xf32> to vector<2x128x128xf32>
      %182 = arith.mulf %181, %arg20 : vector<2x128x128xf32>
      %183 = arith.truncf %176 : vector<2x128x128xf32> to vector<2x128x128xbf16>
      "tpu.trace_start"() <{level = 10 : i32, message = "hqk,hkd->hqd"}> : () -> ()
      %cst_78 = arith.constant dense<0.000000e+00> : vector<2x128x128xf32>
      %184 = tpu.matmul %183, %167, %cst_78 {dimension_numbers = #tpu.dot_dimension_numbers<[2], [1], [1], [2], [0, 0, 0, 1, 1, 2], [0], [0]>} : vector<2x128x128xbf16>, vector<2x128x128xbf16>, vector<2x128x128xf32> -> vector<2x128x128xf32>
      "tpu.trace_stop"() : () -> ()
      %185 = arith.addf %182, %184 : vector<2x128x128xf32>
      scf.yield %171, %180, %185 : vector<2x128x1xf32>, vector<2x128x1xf32>, vector<2x128x128xf32>
    }
    %84 = tpu.iota {dimensions = array<i32: 0>} : vector<128x128xi32>
    %85 = tpu.iota {dimensions = array<i32: 1>} : vector<128x128xi32>
    %86 = arith.cmpi sle, %85, %84 : vector<128x128xi32>
    %87 = vector.shape_cast %86 : vector<128x128xi1> to vector<1x128x128xi1>
    %c0_36 = arith.constant 0 : index
    %88 = arith.index_cast %1 : i32 to index
    %c0_37 = arith.constant 0 : index
    %89 = vector.load %arg15[%c0_36, %88, %c0_37] : memref<2x256x128xbf16, #tpu.memory_space<vmem>>, vector<2x128x128xbf16>
    %c0_38 = arith.constant 0 : index
    %90 = arith.index_cast %1 : i32 to index
    %c0_39 = arith.constant 0 : index
    %91 = vector.load %arg16[%c0_38, %90, %c0_39] : memref<2x256x128xbf16, #tpu.memory_space<vmem>>, vector<2x128x128xbf16>
    "tpu.trace_start"() <{level = 10 : i32, message = "hqd,hkd->hqk"}> : () -> ()
    %cst_40 = arith.constant dense<0.000000e+00> : vector<2x128x128xf32>
    %92 = tpu.matmul %77, %89, %cst_40 {dimension_numbers = #tpu.dot_dimension_numbers<[2], [2], [1], [1], [0, 0, 0, 1, 1, 1], [0], [0]>} : vector<2x128x128xbf16>, vector<2x128x128xbf16>, vector<2x128x128xf32> -> vector<2x128x128xf32>
    %cst_41 = arith.constant -1.000000e+09 : f32
    "tpu.trace_stop"() : () -> ()
    %93 = vector.shape_cast %87 : vector<1x128x128xi1> to vector<1x128x128xi1>
    %94 = vector.broadcast %93 : vector<1x128x128xi1> to vector<2x128x128xi1>
    %95 = vector.broadcast %cst_41 : f32 to vector<2x128x128xf32>
    %96 = arith.select %94, %92, %95 : vector<2x128x128xi1>, vector<2x128x128xf32>
    %cst_42 = arith.constant dense<0xFF800000> : vector<2x128xf32>
    %97 = vector.multi_reduction <maximumf>, %96, %cst_42 [2] : vector<2x128x128xf32> to vector<2x128xf32>
    %98 = vector.shape_cast %97 : vector<2x128xf32> to vector<2x128x1xf32>
    %99 = arith.maximumf %83#0, %98 : vector<2x128x1xf32>
    %100 = arith.subf %83#0, %99 : vector<2x128x1xf32>
    %101 = math.exp %100 : vector<2x128x1xf32>
    %102 = vector.broadcast %99 : vector<2x128x1xf32> to vector<2x128x128xf32>
    %103 = arith.subf %96, %102 : vector<2x128x128xf32>
    %104 = math.exp %103 : vector<2x128x128xf32>
    %105 = arith.mulf %101, %83#1 : vector<2x128x1xf32>
    %cst_43 = arith.constant dense<0.000000e+00> : vector<2x128xf32>
    %106 = vector.multi_reduction <add>, %104, %cst_43 [2] : vector<2x128x128xf32> to vector<2x128xf32>
    %107 = vector.shape_cast %106 : vector<2x128xf32> to vector<2x128x1xf32>
    %108 = arith.addf %105, %107 : vector<2x128x1xf32>
    %109 = vector.broadcast %101 : vector<2x128x1xf32> to vector<2x128x128xf32>
    %110 = arith.mulf %109, %83#2 : vector<2x128x128xf32>
    %111 = arith.truncf %104 : vector<2x128x128xf32> to vector<2x128x128xbf16>
    "tpu.trace_start"() <{level = 10 : i32, message = "hqk,hkd->hqd"}> : () -> ()
    %cst_44 = arith.constant dense<0.000000e+00> : vector<2x128x128xf32>
    %112 = tpu.matmul %111, %91, %cst_44 {dimension_numbers = #tpu.dot_dimension_numbers<[2], [1], [1], [2], [0, 0, 0, 1, 1, 2], [0], [0]>} : vector<2x128x128xbf16>, vector<2x128x128xbf16>, vector<2x128x128xf32> -> vector<2x128x128xf32>
    "tpu.trace_stop"() : () -> ()
    %113 = arith.addf %110, %112 : vector<2x128x128xf32>
    %114 = vector.broadcast %108 : vector<2x128x1xf32> to vector<2x128x128xf32>
    %115 = arith.divf %113, %114 : vector<2x128x128xf32>
    %116 = vector.extract_strided_slice %115 {offsets = [0, 0, 0], sizes = [1, 128, 128], strides = [1, 1, 1]} : vector<2x128x128xf32> to vector<1x128x128xf32>
    %117 = vector.shape_cast %116 : vector<1x128x128xf32> to vector<128x128xf32>
    %118 = arith.truncf %117 : vector<128x128xf32> to vector<128x128xbf16>
    %c0_45 = arith.constant 0 : index
    %c0_46 = arith.constant 0 : index
    %c0_47 = arith.constant 0 : index
    %119 = vector.load %arg8[%c0_45, %c0_46, %c0_47] : memref<2x128x256xbf16, #tpu.memory_space<vmem>>, vector<1x128x256xbf16>
    %120 = vector.shape_cast %119 : vector<1x128x256xbf16> to vector<128x256xbf16>
    %cst_48 = arith.constant dense<0.000000e+00> : vector<128x256xf32>
    %121 = tpu.matmul %118, %120, %cst_48 {dimension_numbers = #tpu.dot_dimension_numbers<[1], [0], [0], [1], [0, 0, 1, 1], [], []>} : vector<128x128xbf16>, vector<128x256xbf16>, vector<128x256xf32> -> vector<128x256xf32>
    %122 = arith.addf %7, %121 : vector<128x256xf32>
    %123 = vector.extract_strided_slice %115 {offsets = [1, 0, 0], sizes = [1, 128, 128], strides = [1, 1, 1]} : vector<2x128x128xf32> to vector<1x128x128xf32>
    %124 = vector.shape_cast %123 : vector<1x128x128xf32> to vector<128x128xf32>
    %125 = arith.truncf %124 : vector<128x128xf32> to vector<128x128xbf16>
    %c1_49 = arith.constant 1 : index
    %c0_50 = arith.constant 0 : index
    %c0_51 = arith.constant 0 : index
    %126 = vector.load %arg8[%c1_49, %c0_50, %c0_51] : memref<2x128x256xbf16, #tpu.memory_space<vmem>>, vector<1x128x256xbf16>
    %127 = vector.shape_cast %126 : vector<1x128x256xbf16> to vector<128x256xbf16>
    %cst_52 = arith.constant dense<0.000000e+00> : vector<128x256xf32>
    %128 = tpu.matmul %125, %127, %cst_52 {dimension_numbers = #tpu.dot_dimension_numbers<[1], [0], [0], [1], [0, 0, 1, 1], [], []>} : vector<128x128xbf16>, vector<128x256xbf16>, vector<128x256xf32> -> vector<128x256xf32>
    %129 = arith.addf %122, %128 : vector<128x256xf32>
    %130 = arith.mulf %129, %129 : vector<128x256xf32>
    %cst_53 = arith.constant dense<0.000000e+00> : vector<128xf32>
    %131 = vector.multi_reduction <add>, %130, %cst_53 [1] : vector<128x256xf32> to vector<128xf32>
    %132 = vector.shape_cast %131 : vector<128xf32> to vector<128x1xf32>
    %cst_54 = arith.constant 2.560000e+02 : f32
    %133 = vector.broadcast %cst_54 : f32 to vector<128x1xf32>
    %134 = arith.divf %132, %133 : vector<128x1xf32>
    %cst_55 = arith.constant 9.99999974E-6 : f32
    %135 = vector.broadcast %cst_55 : f32 to vector<128x1xf32>
    %136 = arith.addf %134, %135 : vector<128x1xf32>
    %137 = math.rsqrt %136 : vector<128x1xf32>
    %138 = vector.broadcast %137 : vector<128x1xf32> to vector<128x256xf32>
    %139 = arith.mulf %129, %138 : vector<128x256xf32>
    %140 = vector.broadcast %3 : vector<1x256xf32> to vector<128x256xf32>
    %141 = arith.mulf %139, %140 : vector<128x256xf32>
    %142 = arith.truncf %141 : vector<128x256xf32> to vector<128x256xbf16>
    %c0_56 = arith.constant 0 : index
    %c0_57 = arith.constant 0 : index
    %143 = vector.load %arg9[%c0_56, %c0_57] : memref<256x512xbf16, #tpu.memory_space<vmem>>, vector<256x512xbf16>
    %cst_58 = arith.constant dense<0.000000e+00> : vector<128x512xf32>
    %144 = tpu.matmul %142, %143, %cst_58 {dimension_numbers = #tpu.dot_dimension_numbers<[1], [0], [0], [1], [0, 0, 1, 1], [], []>} : vector<128x256xbf16>, vector<256x512xbf16>, vector<128x512xf32> -> vector<128x512xf32>
    %c0_59 = arith.constant 0 : index
    %c0_60 = arith.constant 0 : index
    %145 = vector.load %arg11[%c0_59, %c0_60] : memref<256x512xbf16, #tpu.memory_space<vmem>>, vector<256x512xbf16>
    %cst_61 = arith.constant dense<0.000000e+00> : vector<128x512xf32>
    %146 = tpu.matmul %142, %145, %cst_61 {dimension_numbers = #tpu.dot_dimension_numbers<[1], [0], [0], [1], [0, 0, 1, 1], [], []>} : vector<128x256xbf16>, vector<256x512xbf16>, vector<128x512xf32> -> vector<128x512xf32>
    %cst_62 = arith.constant 0.000000e+00 : f32
    %147 = vector.broadcast %cst_62 : f32 to vector<128x512xf32>
    %148 = arith.subf %147, %144 : vector<128x512xf32>
    %149 = math.exp %148 : vector<128x512xf32>
    %cst_63 = arith.constant 1.000000e+00 : f32
    %150 = vector.broadcast %cst_63 : f32 to vector<128x512xf32>
    %151 = arith.addf %150, %149 : vector<128x512xf32>
    %152 = tpu.reciprocal %151 {approx = true} : vector<128x512xf32> -> vector<128x512xf32>
    %153 = arith.mulf %144, %152 : vector<128x512xf32>
    %154 = arith.mulf %153, %146 : vector<128x512xf32>
    %155 = arith.truncf %154 : vector<128x512xf32> to vector<128x512xbf16>
    %c0_64 = arith.constant 0 : index
    %c0_65 = arith.constant 0 : index
    %156 = vector.load %arg10[%c0_64, %c0_65] : memref<512x256xbf16, #tpu.memory_space<vmem>>, vector<512x256xbf16>
    %cst_66 = arith.constant dense<0.000000e+00> : vector<128x256xf32>
    %157 = tpu.matmul %155, %156, %cst_66 {dimension_numbers = #tpu.dot_dimension_numbers<[1], [0], [0], [1], [0, 0, 1, 1], [], []>} : vector<128x512xbf16>, vector<512x256xbf16>, vector<128x256xf32> -> vector<128x256xf32>
    %158 = arith.addf %129, %157 : vector<128x256xf32>
    %c0_67 = arith.constant 0 : index
    %c0_68 = arith.constant 0 : index
    %c0_69 = arith.constant 0 : index
    %159 = vector.load %arg14[%c0_67, %c0_68, %c0_69] : memref<1x128x256xf32, #tpu.memory_space<vmem>>, vector<1x128x256xf32>
    %160 = vector.shape_cast %159 : vector<1x128x256xf32> to vector<128x256xf32>
    %161 = vector.shape_cast %158 : vector<128x256xf32> to vector<1x128x256xf32>
    tpu.vector_store %arg14[%c0_67, %c0_68, %c0_69], %161 {strides = array<i32>} : memref<1x128x256xf32, #tpu.memory_space<vmem>>, vector<1x128x256xf32>,
    return
  }
  func.func @transform_0(%arg0: i32, %arg1: i32) -> (i32, i32, i32) {
    %c0_i32 = arith.constant 0 : i32
    %c0_i32_0 = arith.constant 0 : i32
    return %arg0, %arg1, %c0_i32 : i32, i32, i32
  }
  func.func @transform_1(%arg0: i32, %arg1: i32) -> (i32, i32) {
    %c0_i32 = arith.constant 0 : i32
    %c0_i32_0 = arith.constant 0 : i32
    %c0_i32_1 = arith.constant 0 : i32
    return %c0_i32, %c0_i32_0 : i32, i32
  }
  func.func @transform_2(%arg0: i32, %arg1: i32) -> (i32, i32) {
    %c0_i32 = arith.constant 0 : i32
    %c0_i32_0 = arith.constant 0 : i32
    %c0_i32_1 = arith.constant 0 : i32
    return %c0_i32, %c0_i32_0 : i32, i32
  }
  func.func @transform_3(%arg0: i32, %arg1: i32) -> (i32, i32) {
    %c0_i32 = arith.constant 0 : i32
    %c0_i32_0 = arith.constant 0 : i32
    %c0_i32_1 = arith.constant 0 : i32
    return %c0_i32, %c0_i32_0 : i32, i32
  }
  func.func @transform_4(%arg0: i32, %arg1: i32) -> (i32, i32) {
    %c0_i32 = arith.constant 0 : i32
    %c0_i32_0 = arith.constant 0 : i32
    %c0_i32_1 = arith.constant 0 : i32
    return %c0_i32, %c0_i32_0 : i32, i32
  }
  func.func @transform_5(%arg0: i32, %arg1: i32) -> (i32, i32) {
    %c0_i32 = arith.constant 0 : i32
    %c0_i32_0 = arith.constant 0 : i32
    %c0_i32_1 = arith.constant 0 : i32
    return %c0_i32, %c0_i32_0 : i32, i32
  }
  func.func @transform_6(%arg0: i32, %arg1: i32) -> (i32, i32, i32) {
    %c0_i32 = arith.constant 0 : i32
    %c0_i32_0 = arith.constant 0 : i32
    %c0_i32_1 = arith.constant 0 : i32
    %c0_i32_2 = arith.constant 0 : i32
    return %c0_i32, %c0_i32_0, %c0_i32_1 : i32, i32, i32
  }
  func.func @transform_7(%arg0: i32, %arg1: i32) -> (i32, i32) {
    %c0_i32 = arith.constant 0 : i32
    %c0_i32_0 = arith.constant 0 : i32
    %c0_i32_1 = arith.constant 0 : i32
    return %c0_i32, %c0_i32_0 : i32, i32
  }
  func.func @transform_8(%arg0: i32, %arg1: i32) -> (i32, i32) {
    %c0_i32 = arith.constant 0 : i32
    %c0_i32_0 = arith.constant 0 : i32
    %c0_i32_1 = arith.constant 0 : i32
    return %c0_i32, %c0_i32_0 : i32, i32
  }
  func.func @transform_9(%arg0: i32, %arg1: i32) -> (i32, i32) {
    %c0_i32 = arith.constant 0 : i32
    %c0_i32_0 = arith.constant 0 : i32
    %c0_i32_1 = arith.constant 0 : i32
    return %c0_i32, %c0_i32_0 : i32, i32
  }
  func.func @transform_10(%arg0: i32, %arg1: i32) -> (i32, i32) {
    %c0_i32 = arith.constant 0 : i32
    %c0_i32_0 = arith.constant 0 : i32
    return %arg1, %c0_i32 : i32, i32
  }
  func.func @transform_11(%arg0: i32, %arg1: i32) -> (i32, i32) {
    %c0_i32 = arith.constant 0 : i32
    %c0_i32_0 = arith.constant 0 : i32
    return %arg1, %c0_i32 : i32, i32
  }
  func.func @transform_12(%arg0: i32, %arg1: i32) -> (i32, i32, i32) {
    %c0_i32 = arith.constant 0 : i32
    %c0_i32_0 = arith.constant 0 : i32
    return %arg0, %arg1, %c0_i32 : i32, i32, i32
  }
}

</mosaic_0001>

<llo_original>
// kernel: tpu_custom_call.1
$region0: #{tpu_custom_call.1}
  #allocation0 [shape = 'u32[]', space=smem, size = 0x4, offset = 0x4, fixed_abs, tag = 'smem constant byte address 0x4 - core index']
  #allocation1 [shape = 'u32[144,128]{1,0:T(1,128)}', space=vmem, size = 0x12000, scoped, tag = 'internal scratch']
  #allocation2 [shape = 'bf16[2,256,128]{2,1,0:T(8,128)(2,1)}', space=vmem, size = 0x20000, scoped, tag = 'scratch operand']
  #allocation3 [shape = 'bf16[2,256,128]{2,1,0:T(8,128)(2,1)}', space=vmem, size = 0x20000, scoped, tag = 'scratch operand']
  %s0 = inlined_call_operand.hbm [shape: f32[2,256,256], index: 0, kind: input, shape index: {}]
  %s1 = inlined_call_operand.hbm [shape: f32[1,256], index: 1, kind: input, shape index: {}]
  %s2 = inlined_call_operand.vmem [shape: f32[1,256], index: 2, kind: input, shape index: {}]
  %s3 = inlined_call_operand.hbm [shape: bf16[256,256], index: 3, kind: input, shape index: {}]
  %s4 = inlined_call_operand.hbm [shape: bf16[256,256], index: 4, kind: input, shape index: {}]
  %s5 = inlined_call_operand.hbm [shape: bf16[256,256], index: 5, kind: input, shape index: {}]
  %s6 = inlined_call_operand.hbm [shape: bf16[2,128,256], index: 6, kind: input, shape index: {}]
  %s7 = inlined_call_operand.hbm [shape: bf16[256,512], index: 7, kind: input, shape index: {}]
  %s8 = inlined_call_operand.hbm [shape: bf16[512,256], index: 8, kind: input, shape index: {}]
  %s9 = inlined_call_operand.hbm [shape: bf16[256,512], index: 9, kind: input, shape index: {}]
  %s10 = inlined_call_operand.hbm [shape: f32[256,128], index: 10, kind: input, shape index: {}]
  %s11 = inlined_call_operand.hbm [shape: f32[256,128], index: 11, kind: input, shape index: {}]
  %s12 = inlined_call_operand.hbm [shape: f32[2,256,256], index: 12, kind: output, shape index: {}]
  %s13 = sld [smem:[#allocation0]]
  $region132: #{tpu_custom_call.1} parent=0
    _
  %s15 = ssub.s32 1, %s13
  %s16 = scalar_select 0, %s15, %s13
  $region1: #{tpu_custom_call.1} parent=0
    #allocation4 [shape = 'u8[262144]{0}', space=vmem, size = 0x40000, scoped, tag = 'input window, operand 0']
    #allocation5 [shape = 's32[2]{0}', space=sflag, size = 0x8, scoped, tag = 'scoped memory for tpu_custom_call.1']
    #allocation6 [shape = 's32[2]{0}', space=sflag, size = 0x8, scoped, tag = 'scoped memory for tpu_custom_call.1']
    #allocation7 [shape = 'u8[1024]{0}', space=vmem, size = 0x400, scoped, tag = 'input window, operand 1, single buffered']
    #allocation8 [shape = 's32[1]{0}', space=sflag, size = 0x4, scoped, tag = 'scoped memory for tpu_custom_call.1']
    #allocation9 [shape = 'u8[131072]{0}', space=vmem, size = 0x20000, scoped, tag = 'input window, operand 3, single buffered']
    #allocation10 [shape = 'u8[131072]{0}', space=vmem, size = 0x20000, scoped, tag = 'input window, operand 4, single buffered']
    #allocation11 [shape = 's32[1]{0}', space=sflag, size = 0x4, scoped, tag = 'scoped memory for tpu_custom_call.1']
    #allocation12 [shape = 'u8[131072]{0}', space=vmem, size = 0x20000, scoped, tag = 'input window, operand 5, single buffered']
    #allocation13 [shape = 'u8[131072]{0}', space=vmem, size = 0x20000, scoped, tag = 'input window, operand 6, single buffered']
    #allocation14 [shape = 's32[1]{0}', space=sflag, size = 0x4, scoped, tag = 'scoped memory for tpu_custom_call.1']
    #allocation15 [shape = 'u8[262144]{0}', space=vmem, size = 0x40000, scoped, tag = 'input window, operand 7, single buffered']
    #allocation16 [shape = 'u8[262144]{0}', space=vmem, size = 0x40000, scoped, tag = 'input window, operand 8, single buffered']
    #allocation17 [shape = 's32[1]{0}', space=sflag, size = 0x4, scoped, tag = 'scoped memory for tpu_custom_call.1']
    #allocation18 [shape = 'u8[262144]{0}', space=vmem, size = 0x40000, scoped, tag = 'input window, operand 9, single buffered']
    #allocation19 [shape = 'u8[131072]{0}', space=vmem, size = 0x20000, scoped, tag = 'input window, operand 10']
    #allocation20 [shape = 's32[2]{0}', space=sflag, size = 0x8, scoped, tag = 'scoped memory for tpu_custom_call.1']
    #allocation21 [shape = 'u8[131072]{0}', space=vmem, size = 0x20000, scoped, tag = 'input window, operand 11']
    #allocation22 [shape = 'u8[262144]{0}', space=vmem, size = 0x40000, scoped, tag = 'output window, operand 0']
    %17 = vsyncpa [#allocation5], 0
    %s18 = scalar_lea.sflag [#allocation5], 1
    %19 = vsyncpa %s18, 0
    %20 = vsyncpa [#allocation8], 0
    %21 = vsyncpa [#allocation11], 0
    %22 = vsyncpa [#allocation14], 0
    %23 = vsyncpa [#allocation17], 0
    %24 = vsyncpa [#allocation20], 0
    %s25 = scalar_lea.sflag [#allocation20], 1
    %26 = vsyncpa %s25, 0
    %27 = vsyncpa [#allocation6], 0
    %s28 = scalar_lea.sflag [#allocation6], 1
    %29 = vsyncpa %s28, 0
    loop: start=0, step=1, limit=6
    $region2: #{tpu_custom_call.1} parent=1 // loop_pre_header
      _
    $region3: #{tpu_custom_call.1} parent=1 // loop_header
      %s31 = sphi 0, %s35
      %p32 = scmp.ge.s32.totalorder %s31, 6
      %s38 = sphi 0, %s50
      %s39 = sphi 0, %s46
      %s40 = sphi 0, %s38
      %s41 = sphi 0, %s39
      %s42 = sphi 0, %s40
      %s43 = sphi 0, %s41
      %s55 = sphi 0, %s57
      %s58 = sphi 0, %s55
      %s59 = sphi 0, %s58
      %s75 = sphi 0, %s59
      %s79 = sphi 0, %s79
      %s81 = sphi 0, %s79
      %s82 = sphi 0, %s81
      %s96 = sphi 0, %s82
      %s100 = sphi 0, %s100
      %s102 = sphi 0, %s100
      %s103 = sphi 0, %s102
      %s117 = sphi 0, %s103
      %s121 = sphi 0, %s121
      %s123 = sphi 0, %s121
      %s124 = sphi 0, %s123
      %s138 = sphi 0, %s124
      %s142 = sphi 0, %s142
      %s144 = sphi 0, %s142
      %s145 = sphi 0, %s144
      %s159 = sphi 0, %s145
      %s163 = sphi 0, %s163
      %s165 = sphi 0, %s163
      %s166 = sphi 0, %s165
      %s180 = sphi 0, %s166
      %s184 = sphi 0, %s184
      %s186 = sphi 0, %s184
      %s187 = sphi 0, %s186
      %s201 = sphi 0, %s187
      %s205 = sphi 0, %s205
      %s207 = sphi 0, %s205
      %s208 = sphi 0, %s207
      %s222 = sphi 0, %s208
      %s226 = sphi 0, %s226
      %s228 = sphi 0, %s226
      %s229 = sphi 0, %s228
      %s243 = sphi 0, %s229
      %s247 = sphi 0, %s247
      %s249 = sphi 0, %s247
      %s250 = sphi 0, %s249
      %s264 = sphi 0, %s250
      %s270 = sphi 0, %s272
      %s273 = sphi 0, %s270
      %s274 = sphi 0, %s273
      %s290 = sphi 0, %s274
      %s296 = sphi 0, %s298
      %s299 = sphi 0, %s296
      %s300 = sphi 0, %s299
      %s316 = sphi 0, %s300
      %s324 = sphi 0, %s326
      %s327 = sphi 0, %s324
      %s328 = sphi 0, %s327
      %s344 = sphi 0, %s328
    $region4: #{tpu_custom_call.1} parent=1 // loop_header_branch
      %34 = sbr.rel (%p32) target = $region8
    $region5: #{tpu_custom_call.1} parent=1 // loop_body
      %s36 = ssub.s32 %s31, 1
      %s37 = ssub.s32 %s31, 2
      %s44 = sadd.s32 1, %s39
      %p45 = scmp.ge.s32.totalorder %s44, 2
      %s46 = scalar_select %p45, 0, %s44
      %s47 = sadd.s32 1, %s38
      %s48 = scalar_select %p45, %s47, %s38
      %p49 = scmp.ge.s32.totalorder %s48, 2
      %s50 = scalar_select %p49, 0, %s48
      %s51 = ssub.s32 %s38, %s50
      %s52 = ssub.s32 %s39, %s46
      %s53 = sor.u32 %s51, %s52
      %p54 = scmp.eq.s32.totalorder %s53, 0
      %s56 = sadd.s32 %s55, 1
      %s57 = scalar_select %p54, %s55, %s56
      %p60 = pneg %p54
      %p61 = scmp.eq.s32.totalorder %s31, 3
      %p62 = por %p60, %p61
      %p63 = scmp.ne.s32.totalorder %s55, %s58
      %p64 = scmp.eq.s32.totalorder %s31, 0
      %p65 = por %p63, %p64
      %p66 = scmp.ne.s32.totalorder %s55, %s58
      %p67 = scmp.eq.s32.totalorder %s36, 3
      %p68 = por %p66, %p67
      %p69 = scmp.ne.s32.totalorder %s58, %s59
      %p70 = scmp.eq.s32.totalorder %s36, 0
      %p71 = por %p69, %p70
      %p72 = scmp.ne.s32.totalorder %s58, %s59
      %p73 = scmp.eq.s32.totalorder %s37, 3
      %p74 = por %p72, %p73
      %p76 = scmp.ne.s32.totalorder %s59, %s75
      %p77 = scmp.eq.s32.totalorder %s37, 0
      %p78 = por %p76, %p77
      %s80 = sadd.s32 %s79, 1
      %p83 = scmp.eq.s32.totalorder %s31, 3
      %p84 = scmp.ne.s32.totalorder %s79, %s81
      %p85 = scmp.eq.s32.totalorder %s31, 0
      %p86 = por %p84, %p85
      %p87 = scmp.ne.s32.totalorder %s79, %s81
      %p88 = scmp.eq.s32.totalorder %s36, 3
      %p89 = por %p87, %p88
      %p90 = scmp.ne.s32.totalorder %s81, %s82
      %p91 = scmp.eq.s32.totalorder %s36, 0
      %p92 = por %p90, %p91
      %p93 = scmp.ne.s32.totalorder %s81, %s82
      %p94 = scmp.eq.s32.totalorder %s37, 3
      %p95 = por %p93, %p94
      %p97 = scmp.ne.s32.totalorder %s82, %s96
      %p98 = scmp.eq.s32.totalorder %s37, 0
      %p99 = por %p97, %p98
      %s101 = sadd.s32 %s100, 1
      %p104 = scmp.eq.s32.totalorder %s31, 3
      %p105 = scmp.ne.s32.totalorder %s100, %s102
      %p106 = scmp.eq.s32.totalorder %s31, 0
      %p107 = por %p105, %p106
      %p108 = scmp.ne.s32.totalorder %s100, %s102
      %p109 = scmp.eq.s32.totalorder %s36, 3
      %p110 = por %p108, %p109
      %p111 = scmp.ne.s32.totalorder %s102, %s103
      %p112 = scmp.eq.s32.totalorder %s36, 0
      %p113 = por %p111, %p112
      %p114 = scmp.ne.s32.totalorder %s102, %s103
      %p115 = scmp.eq.s32.totalorder %s37, 3
      %p116 = por %p114, %p115
      %p118 = scmp.ne.s32.totalorder %s103, %s117
      %p119 = scmp.eq.s32.totalorder %s37, 0
      %p120 = por %p118, %p119
      %s122 = sadd.s32 %s121, 1
      %p125 = scmp.eq.s32.totalorder %s31, 3
      %p126 = scmp.ne.s32.totalorder %s121, %s123
      %p127 = scmp.eq.s32.totalorder %s31, 0
      %p128 = por %p126, %p127
      %p129 = scmp.ne.s32.totalorder %s121, %s123
      %p130 = scmp.eq.s32.totalorder %s36, 3
      %p131 = por %p129, %p130
      %p132 = scmp.ne.s32.totalorder %s123, %s124
      %p133 = scmp.eq.s32.totalorder %s36, 0
      %p134 = por %p132, %p133
      %p135 = scmp.ne.s32.totalorder %s123, %s124
      %p136 = scmp.eq.s32.totalorder %s37, 3
      %p137 = por %p135, %p136
      %p139 = scmp.ne.s32.totalorder %s124, %s138
      %p140 = scmp.eq.s32.totalorder %s37, 0
      %p141 = por %p139, %p140
      %s143 = sadd.s32 %s142, 1
      %p146 = scmp.eq.s32.totalorder %s31, 3
      %p147 = scmp.ne.s32.totalorder %s142, %s144
      %p148 = scmp.eq.s32.totalorder %s31, 0
      %p149 = por %p147, %p148
      %p150 = scmp.ne.s32.totalorder %s142, %s144
      %p151 = scmp.eq.s32.totalorder %s36, 3
      %p152 = por %p150, %p151
      %p153 = scmp.ne.s32.totalorder %s144, %s145
      %p154 = scmp.eq.s32.totalorder %s36, 0
      %p155 = por %p153, %p154
      %p156 = scmp.ne.s32.totalorder %s144, %s145
      %p157 = scmp.eq.s32.totalorder %s37, 3
      %p158 = por %p156, %p157
      %p160 = scmp.ne.s32.totalorder %s145, %s159
      %p161 = scmp.eq.s32.totalorder %s37, 0
      %p162 = por %p160, %p161
      %s164 = sadd.s32 %s163, 1
      %p167 = scmp.eq.s32.totalorder %s31, 3
      %p168 = scmp.ne.s32.totalorder %s163, %s165
      %p169 = scmp.eq.s32.totalorder %s31, 0
      %p170 = por %p168, %p169
      %p171 = scmp.ne.s32.totalorder %s163, %s165
      %p172 = scmp.eq.s32.totalorder %s36, 3
      %p173 = por %p171, %p172
      %p174 = scmp.ne.s32.totalorder %s165, %s166
      %p175 = scmp.eq.s32.totalorder %s36, 0
      %p176 = por %p174, %p175
      %p177 = scmp.ne.s32.totalorder %s165, %s166
      %p178 = scmp.eq.s32.totalorder %s37, 3
      %p179 = por %p177, %p178
      %p181 = scmp.ne.s32.totalorder %s166, %s180
      %p182 = scmp.eq.s32.totalorder %s37, 0
      %p183 = por %p181, %p182
      %s185 = sadd.s32 %s184, 1
      %p188 = scmp.eq.s32.totalorder %s31, 3
      %p189 = scmp.ne.s32.totalorder %s184, %s186
      %p190 = scmp.eq.s32.totalorder %s31, 0
      %p191 = por %p189, %p190
      %p192 = scmp.ne.s32.totalorder %s184, %s186
      %p193 = scmp.eq.s32.totalorder %s36, 3
      %p194 = por %p192, %p193
      %p195 = scmp.ne.s32.totalorder %s186, %s187
      %p196 = scmp.eq.s32.totalorder %s36, 0
      %p197 = por %p195, %p196
      %p198 = scmp.ne.s32.totalorder %s186, %s187
      %p199 = scmp.eq.s32.totalorder %s37, 3
      %p200 = por %p198, %p199
      %p202 = scmp.ne.s32.totalorder %s187, %s201
      %p203 = scmp.eq.s32.totalorder %s37, 0
      %p204 = por %p202, %p203
      %s206 = sadd.s32 %s205, 1
      %p209 = scmp.eq.s32.totalorder %s31, 3
      %p210 = scmp.ne.s32.totalorder %s205, %s207
      %p211 = scmp.eq.s32.totalorder %s31, 0
      %p212 = por %p210, %p211
      %p213 = scmp.ne.s32.totalorder %s205, %s207
      %p214 = scmp.eq.s32.totalorder %s36, 3
      %p215 = por %p213, %p214
      %p216 = scmp.ne.s32.totalorder %s207, %s208
      %p217 = scmp.eq.s32.totalorder %s36, 0
      %p218 = por %p216, %p217
      %p219 = scmp.ne.s32.totalorder %s207, %s208
      %p220 = scmp.eq.s32.totalorder %s37, 3
      %p221 = por %p219, %p220
      %p223 = scmp.ne.s32.totalorder %s208, %s222
      %p224 = scmp.eq.s32.totalorder %s37, 0
      %p225 = por %p223, %p224
      %s227 = sadd.s32 %s226, 1
      %p230 = scmp.eq.s32.totalorder %s31, 3
      %p231 = scmp.ne.s32.totalorder %s226, %s228
      %p232 = scmp.eq.s32.totalorder %s31, 0
      %p233 = por %p231, %p232
      %p234 = scmp.ne.s32.totalorder %s226, %s228
      %p235 = scmp.eq.s32.totalorder %s36, 3
      %p236 = por %p234, %p235
      %p237 = scmp.ne.s32.totalorder %s228, %s229
      %p238 = scmp.eq.s32.totalorder %s36, 0
      %p239 = por %p237, %p238
      %p240 = scmp.ne.s32.totalorder %s228, %s229
      %p241 = scmp.eq.s32.totalorder %s37, 3
      %p242 = por %p240, %p241
      %p244 = scmp.ne.s32.totalorder %s229, %s243
      %p245 = scmp.eq.s32.totalorder %s37, 0
      %p246 = por %p244, %p245
      %s248 = sadd.s32 %s247, 1
      %p251 = scmp.eq.s32.totalorder %s31, 3
      %p252 = scmp.ne.s32.totalorder %s247, %s249
      %p253 = scmp.eq.s32.totalorder %s31, 0
      %p254 = por %p252, %p253
      %p255 = scmp.ne.s32.totalorder %s247, %s249
      %p256 = scmp.eq.s32.totalorder %s36, 3
      %p257 = por %p255, %p256
      %p258 = scmp.ne.s32.totalorder %s249, %s250
      %p259 = scmp.eq.s32.totalorder %s36, 0
      %p260 = por %p258, %p259
      %p261 = scmp.ne.s32.totalorder %s249, %s250
      %p262 = scmp.eq.s32.totalorder %s37, 3
      %p263 = por %p261, %p262
      %p265 = scmp.ne.s32.totalorder %s250, %s264
      %p266 = scmp.eq.s32.totalorder %s37, 0
      %p267 = por %p265, %p266
      %s268 = ssub.s32 %s39, %s46
      %p269 = scmp.eq.s32.totalorder %s268, 0
      %s271 = sadd.s32 %s270, 1
      %s272 = scalar_select %p269, %s270, %s271
      %p275 = pneg %p269
      %p276 = scmp.eq.s32.totalorder %s31, 3
      %p277 = por %p275, %p276
      %p278 = scmp.ne.s32.totalorder %s270, %s273
      %p279 = scmp.eq.s32.totalorder %s31, 0
      %p280 = por %p278, %p279
      %p281 = scmp.ne.s32.totalorder %s270, %s273
      %p282 = scmp.eq.s32.totalorder %s36, 3
      %p283 = por %p281, %p282
      %p284 = scmp.ne.s32.totalorder %s273, %s274
      %p285 = scmp.eq.s32.totalorder %s36, 0
      %p286 = por %p284, %p285
      %p287 = scmp.ne.s32.totalorder %s273, %s274
      %p288 = scmp.eq.s32.totalorder %s37, 3
      %p289 = por %p287, %p288
      %p291 = scmp.ne.s32.totalorder %s274, %s290
      %p292 = scmp.eq.s32.totalorder %s37, 0
      %p293 = por %p291, %p292
      %s294 = ssub.s32 %s39, %s46
      %p295 = scmp.eq.s32.totalorder %s294, 0
      %s297 = sadd.s32 %s296, 1
      %s298 = scalar_select %p295, %s296, %s297
      %p301 = pneg %p295
      %p302 = scmp.eq.s32.totalorder %s31, 3
      %p303 = por %p301, %p302
      %p304 = scmp.ne.s32.totalorder %s296, %s299
      %p305 = scmp.eq.s32.totalorder %s31, 0
      %p306 = por %p304, %p305
      %p307 = scmp.ne.s32.totalorder %s296, %s299
      %p308 = scmp.eq.s32.totalorder %s36, 3
      %p309 = por %p307, %p308
      %p310 = scmp.ne.s32.totalorder %s299, %s300
      %p311 = scmp.eq.s32.totalorder %s36, 0
      %p312 = por %p310, %p311
      %p313 = scmp.ne.s32.totalorder %s299, %s300
      %p314 = scmp.eq.s32.totalorder %s37, 3
      %p315 = por %p313, %p314
      %p317 = scmp.ne.s32.totalorder %s300, %s316
      %p318 = scmp.eq.s32.totalorder %s37, 0
      %p319 = por %p317, %p318
      %s320 = ssub.s32 %s38, %s50
      %s321 = ssub.s32 %s39, %s46
      %s322 = sor.u32 %s320, %s321
      %p323 = scmp.eq.s32.totalorder %s322, 0
      %s325 = sadd.s32 %s324, 1
      %s326 = scalar_select %p323, %s324, %s325
      %p329 = pneg %p323
      %p330 = scmp.eq.s32.totalorder %s31, 3
      %p331 = por %p329, %p330
      %p332 = scmp.ne.s32.totalorder %s324, %s327
      %p333 = scmp.eq.s32.totalorder %s31, 0
      %p334 = por %p332, %p333
      %p335 = scmp.ne.s32.totalorder %s324, %s327
      %p336 = scmp.eq.s32.totalorder %s36, 3
      %p337 = por %p335, %p336
      %p338 = scmp.ne.s32.totalorder %s327, %s328
      %p339 = scmp.eq.s32.totalorder %s36, 0
      %p340 = por %p338, %p339
      %p341 = scmp.ne.s32.totalorder %s327, %s328
      %p342 = scmp.eq.s32.totalorder %s37, 3
      %p343 = por %p341, %p342
      %p345 = scmp.ne.s32.totalorder %s328, %s344
      %p346 = scmp.eq.s32.totalorder %s37, 0
      %p347 = por %p345, %p346
      %p348 = scmp.le.s32.totalorder 1, %s31
      %p349 = scmp.lt.s32.totalorder %s31, 5
      %p350 = pnand %p348, %p349
      %p351 = pneg %p350
      // Predicated region
      $region9: #{tpu_custom_call.1} parent=5 // pred_check
        _
      $region10: #{tpu_custom_call.1} parent=5 // pred_check_branch
        %353 = sbr.rel (%p350) target = $region12
      $region11: #{tpu_custom_call.1} parent=5 // pred_region
        %s354 = ssub.s32 %s31, 1
        // Predicated region
        $region13: #{tpu_custom_call.1} parent=11 // pred_check
          %p355 = pneg %p92
        $region14: #{tpu_custom_call.1} parent=11 // pred_check_branch
          %357 = sbr.rel (%p355) target = $region16
        $region15: #{tpu_custom_call.1} parent=11 // pred_region
          %s359 = ssub.s32 32, 32
          %360 = vsyncadd [#allocation8], %s359
          %s362 = sshll.u32 [#allocation7], 4
          %s363 = int_to_ptr.vmem [resolvable:$true] %s362
          %365 = dma.hbm_to_vmem [thread:$0]  %s1, 32, %s363, [#allocation8]
        $region16: #{tpu_custom_call.1} parent=11 // pred_fallthru
          _
        // Predicated region
        $region17: #{tpu_custom_call.1} parent=11 // pred_check
          %p366 = pneg %p113
        $region18: #{tpu_custom_call.1} parent=11 // pred_check_branch
          %368 = sbr.rel (%p366) target = $region20
        $region19: #{tpu_custom_call.1} parent=11 // pred_region
          _
        $region20: #{tpu_custom_call.1} parent=11 // pred_fallthru
          _
        // Predicated region
        $region21: #{tpu_custom_call.1} parent=11 // pred_check
          %p369 = pneg %p134
        $region22: #{tpu_custom_call.1} parent=11 // pred_check_branch
          %371 = sbr.rel (%p369) target = $region24
        $region23: #{tpu_custom_call.1} parent=11 // pred_region
          %s373 = ssub.s32 4096, 4096
          %374 = vsyncadd [#allocation8], %s373
          %s375 = sshll.u32 [#allocation9], 4
          %s376 = int_to_ptr.vmem [resolvable:$true] %s375
          %381 = dma.hbm_to_vmem [thread:$0]  %s3, 4096, %s376, [#allocation8], 128, 128, 8
        $region24: #{tpu_custom_call.1} parent=11 // pred_fallthru
          _
        // Predicated region
        $region25: #{tpu_custom_call.1} parent=11 // pred_check
          %p382 = pneg %p155
        $region26: #{tpu_custom_call.1} parent=11 // pred_check_branch
          %384 = sbr.rel (%p382) target = $region28
        $region27: #{tpu_custom_call.1} parent=11 // pred_region
          %s386 = ssub.s32 4096, 4096
          %387 = vsyncadd [#allocation11], %s386
          %s388 = sshll.u32 [#allocation10], 4
          %s389 = int_to_ptr.vmem [resolvable:$true] %s388
          %394 = dma.hbm_to_vmem [thread:$0]  %s4, 4096, %s389, [#allocation11], 128, 128, 8
        $region28: #{tpu_custom_call.1} parent=11 // pred_fallthru
          _
        // Predicated region
        $region29: #{tpu_custom_call.1} parent=11 // pred_check
          %p395 = pneg %p176
        $region30: #{tpu_custom_call.1} parent=11 // pred_check_branch
          %397 = sbr.rel (%p395) target = $region32
        $region31: #{tpu_custom_call.1} parent=11 // pred_region
          %s399 = ssub.s32 4096, 4096
          %400 = vsyncadd [#allocation11], %s399
          %s401 = sshll.u32 [#allocation12], 4
          %s402 = int_to_ptr.vmem [resolvable:$true] %s401
          %407 = dma.hbm_to_vmem [thread:$0]  %s5, 4096, %s402, [#allocation11], 128, 128, 8
        $region32: #{tpu_custom_call.1} parent=11 // pred_fallthru
          _
        // Predicated region
        $region33: #{tpu_custom_call.1} parent=11 // pred_check
          %p408 = pneg %p197
        $region34: #{tpu_custom_call.1} parent=11 // pred_check_branch
          %410 = sbr.rel (%p408) target = $region36
        $region35: #{tpu_custom_call.1} parent=11 // pred_region
          %s412 = ssub.s32 4096, 4096
          %413 = vsyncadd [#allocation14], %s412
          %s414 = sshll.u32 [#allocation13], 4
          %s415 = int_to_ptr.vmem [resolvable:$true] %s414
          %420 = dma.hbm_to_vmem [thread:$0]  %s6, 4096, %s415, [#allocation14], 128, 128, 8
        $region36: #{tpu_custom_call.1} parent=11 // pred_fallthru
          _
        // Predicated region
        $region37: #{tpu_custom_call.1} parent=11 // pred_check
          %p421 = pneg %p218
        $region38: #{tpu_custom_call.1} parent=11 // pred_check_branch
          %423 = sbr.rel (%p421) target = $region40
        $region39: #{tpu_custom_call.1} parent=11 // pred_region
          %s425 = ssub.s32 8192, 8192
          %426 = vsyncadd [#allocation14], %s425
          %s427 = sshll.u32 [#allocation15], 4
          %s428 = int_to_ptr.vmem [resolvable:$true] %s427
          %433 = dma.hbm_to_vmem [thread:$0]  %s7, 8192, %s428, [#allocation14], 256, 256, 16
        $region40: #{tpu_custom_call.1} parent=11 // pred_fallthru
          _
        // Predicated region
        $region41: #{tpu_custom_call.1} parent=11 // pred_check
          %p434 = pneg %p239
        $region42: #{tpu_custom_call.1} parent=11 // pred_check_branch
          %436 = sbr.rel (%p434) target = $region44
        $region43: #{tpu_custom_call.1} parent=11 // pred_region
          %s438 = ssub.s32 8192, 8192
          %439 = vsyncadd [#allocation17], %s438
          %s440 = sshll.u32 [#allocation16], 4
          %s441 = int_to_ptr.vmem [resolvable:$true] %s440
          %446 = dma.hbm_to_vmem [thread:$0]  %s8, 8192, %s441, [#allocation17], 128, 128, 8
        $region44: #{tpu_custom_call.1} parent=11 // pred_fallthru
          _
        // Predicated region
        $region45: #{tpu_custom_call.1} parent=11 // pred_check
          %p447 = pneg %p260
        $region46: #{tpu_custom_call.1} parent=11 // pred_check_branch
          %449 = sbr.rel (%p447) target = $region48
        $region47: #{tpu_custom_call.1} parent=11 // pred_region
          %s451 = ssub.s32 8192, 8192
          %452 = vsyncadd [#allocation17], %s451
          %s453 = sshll.u32 [#allocation18], 4
          %s454 = int_to_ptr.vmem [resolvable:$true] %s453
          %459 = dma.hbm_to_vmem [thread:$0]  %s9, 8192, %s454, [#allocation17], 256, 256, 16
        $region48: #{tpu_custom_call.1} parent=11 // pred_fallthru
          _
      $region12: #{tpu_custom_call.1} parent=5 // pred_fallthru
        _
      %p460 = scmp.lt.s32.totalorder %s31, 4
      // Predicated region
      $region49: #{tpu_custom_call.1} parent=5 // pred_check
        %p461 = pneg %p460
      $region50: #{tpu_custom_call.1} parent=5 // pred_check_branch
        %463 = sbr.rel (%p461) target = $region52
      $region51: #{tpu_custom_call.1} parent=5 // pred_region
        // Predicated region
        $region53: #{tpu_custom_call.1} parent=51 // pred_check
          %p464 = pneg %p65
        $region54: #{tpu_custom_call.1} parent=51 // pred_check_branch
          %466 = sbr.rel (%p464) target = $region56
        $region55: #{tpu_custom_call.1} parent=51 // pred_region
          %s467 = sand.u32 %s55, 1
          %s468 = scalar_lea.sflag [#allocation5], %s467
          %s469 = sand.u32 %s55, 1
          %s470 = smul.addr %s469, 256
          %s471 = scalar_lea.vmem [#allocation4], %s470
          %s472 = smul.u32 16, %s39
          %s474 = ssub.s32 4096, 4096
          %475 = vsyncadd %s468, %s474
          %s476 = smul.addr %s472, 2
          %s477 = smul.addr %s38, 64
          %s478 = sadd.s32 %s476, %s477
          %s479 = smul.addr %s478, 128
          %s480 = scalar_lea.hbm %s0, %s479
          %s481 = sshll.u32 %s471, 4
          %s482 = int_to_ptr.vmem [resolvable:$true] %s481
          %487 = dma.hbm_to_vmem [thread:$0]  %s480, 4096, %s482, %s468, 256, 256, 16
        $region56: #{tpu_custom_call.1} parent=51 // pred_fallthru
          _
        // Predicated region
        $region57: #{tpu_custom_call.1} parent=51 // pred_check
          %p488 = pneg %p280
        $region58: #{tpu_custom_call.1} parent=51 // pred_check_branch
          %490 = sbr.rel (%p488) target = $region60
        $region59: #{tpu_custom_call.1} parent=51 // pred_region
          %s491 = sand.u32 %s31, 1
          %s492 = scalar_lea.sflag [#allocation20], %s491
          %s493 = sand.u32 %s270, 1
          %s494 = smul.addr %s493, 128
          %s495 = scalar_lea.vmem [#allocation19], %s494
          %s496 = smul.u32 16, %s39
          %s498 = ssub.s32 2048, 2048
          %499 = vsyncadd %s492, %s498
          %s500 = smul.addr %s496, 128
          %s501 = scalar_lea.hbm %s10, %s500
          %s502 = sshll.u32 %s495, 4
          %s503 = int_to_ptr.vmem [resolvable:$true] %s502
          %508 = dma.hbm_to_vmem [thread:$0]  %s501, 2048, %s503, %s492, 128, 128, 8
        $region60: #{tpu_custom_call.1} parent=51 // pred_fallthru
          _
        // Predicated region
        $region61: #{tpu_custom_call.1} parent=51 // pred_check
          %p509 = pneg %p306
        $region62: #{tpu_custom_call.1} parent=51 // pred_check_branch
          %511 = sbr.rel (%p509) target = $region64
        $region63: #{tpu_custom_call.1} parent=51 // pred_region
          %s512 = sand.u32 %s31, 1
          %s513 = scalar_lea.sflag [#allocation20], %s512
          %s514 = sand.u32 %s296, 1
          %s515 = smul.addr %s514, 128
          %s516 = scalar_lea.vmem [#allocation21], %s515
          %s517 = smul.u32 16, %s39
          %s519 = ssub.s32 2048, 2048
          %520 = vsyncadd %s513, %s519
          %s521 = smul.addr %s517, 128
          %s522 = scalar_lea.hbm %s11, %s521
          %s523 = sshll.u32 %s516, 4
          %s524 = int_to_ptr.vmem [resolvable:$true] %s523
          %529 = dma.hbm_to_vmem [thread:$0]  %s522, 2048, %s524, %s513, 128, 128, 8
        $region64: #{tpu_custom_call.1} parent=51 // pred_fallthru
          _
      $region52: #{tpu_custom_call.1} parent=5 // pred_fallthru
        _
      %p530 = scmp.le.s32.totalorder 1, %s31
      %p531 = scmp.lt.s32.totalorder %s31, 5
      %p532 = pnand %p530, %p531
      %p533 = pneg %p532
      // Predicated region
      $region65: #{tpu_custom_call.1} parent=5 // pred_check
        _
      $region66: #{tpu_custom_call.1} parent=5 // pred_check_branch
        %535 = sbr.rel (%p532) target = $region68
      $region67: #{tpu_custom_call.1} parent=5 // pred_region
        %s536 = ssub.s32 %s31, 1
        %s537 = sand.u32 %s58, 1
        %s538 = scalar_lea.sflag [#allocation5], %s537
        %s539 = sand.u32 %s58, 1
        %s540 = smul.addr %s539, 256
        %s541 = scalar_lea.vmem [#allocation4], %s540
        // Predicated region
        $region69: #{tpu_custom_call.1} parent=67 // pred_check
          %p542 = pneg %p71
        $region70: #{tpu_custom_call.1} parent=67 // pred_check_branch
          %544 = sbr.rel (%p542) target = $region72
        $region71: #{tpu_custom_call.1} parent=67 // pred_region
          %545 = dma.done %s538, 4096
        $region72: #{tpu_custom_call.1} parent=67 // pred_fallthru
          _
        // Predicated region
        $region73: #{tpu_custom_call.1} parent=67 // pred_check
          %p546 = pneg %p92
        $region74: #{tpu_custom_call.1} parent=67 // pred_check_branch
          %548 = sbr.rel (%p546) target = $region76
        $region75: #{tpu_custom_call.1} parent=67 // pred_region
          %549 = dma.done [#allocation8], 32
        $region76: #{tpu_custom_call.1} parent=67 // pred_fallthru
          _
        // Predicated region
        $region77: #{tpu_custom_call.1} parent=67 // pred_check
          %p550 = pneg %p134
        $region78: #{tpu_custom_call.1} parent=67 // pred_check_branch
          %552 = sbr.rel (%p550) target = $region80
        $region79: #{tpu_custom_call.1} parent=67 // pred_region
          %553 = dma.done [#allocation8], 4096
        $region80: #{tpu_custom_call.1} parent=67 // pred_fallthru
          _
        // Predicated region
        $region81: #{tpu_custom_call.1} parent=67 // pred_check
          %p554 = pneg %p155
        $region82: #{tpu_custom_call.1} parent=67 // pred_check_branch
          %556 = sbr.rel (%p554) target = $region84
        $region83: #{tpu_custom_call.1} parent=67 // pred_region
          %557 = dma.done [#allocation11], 4096
        $region84: #{tpu_custom_call.1} parent=67 // pred_fallthru
          _
        // Predicated region
        $region85: #{tpu_custom_call.1} parent=67 // pred_check
          %p558 = pneg %p176
        $region86: #{tpu_custom_call.1} parent=67 // pred_check_branch
          %560 = sbr.rel (%p558) target = $region88
        $region87: #{tpu_custom_call.1} parent=67 // pred_region
          %561 = dma.done [#allocation11], 4096
        $region88: #{tpu_custom_call.1} parent=67 // pred_fallthru
          _
        // Predicated region
        $region89: #{tpu_custom_call.1} parent=67 // pred_check
          %p562 = pneg %p197
        $region90: #{tpu_custom_call.1} parent=67 // pred_check_branch
          %564 = sbr.rel (%p562) target = $region92
        $region91: #{tpu_custom_call.1} parent=67 // pred_region
          %565 = dma.done [#allocation14], 4096
        $region92: #{tpu_custom_call.1} parent=67 // pred_fallthru
          _
        // Predicated region
        $region93: #{tpu_custom_call.1} parent=67 // pred_check
          %p566 = pneg %p218
        $region94: #{tpu_custom_call.1} parent=67 // pred_check_branch
          %568 = sbr.rel (%p566) target = $region96
        $region95: #{tpu_custom_call.1} parent=67 // pred_region
          %569 = dma.done [#allocation14], 8192
        $region96: #{tpu_custom_call.1} parent=67 // pred_fallthru
          _
        // Predicated region
        $region97: #{tpu_custom_call.1} parent=67 // pred_check
          %p570 = pneg %p239
        $region98: #{tpu_custom_call.1} parent=67 // pred_check_branch
          %572 = sbr.rel (%p570) target = $region100
        $region99: #{tpu_custom_call.1} parent=67 // pred_region
          %573 = dma.done [#allocation17], 8192
        $region100: #{tpu_custom_call.1} parent=67 // pred_fallthru
          _
        // Predicated region
        $region101: #{tpu_custom_call.1} parent=67 // pred_check
          %p574 = pneg %p260
        $region102: #{tpu_custom_call.1} parent=67 // pred_check_branch
          %576 = sbr.rel (%p574) target = $region104
        $region103: #{tpu_custom_call.1} parent=67 // pred_region
          %577 = dma.done [#allocation17], 8192
        $region104: #{tpu_custom_call.1} parent=67 // pred_fallthru
          _
        %s578 = sand.u32 %s36, 1
        %s579 = scalar_lea.sflag [#allocation20], %s578
        %s580 = sand.u32 %s273, 1
        %s581 = smul.addr %s580, 128
        %s582 = scalar_lea.vmem [#allocation19], %s581
        // Predicated region
        $region105: #{tpu_custom_call.1} parent=67 // pred_check
          %p583 = pneg %p286
        $region106: #{tpu_custom_call.1} parent=67 // pred_check_branch
          %585 = sbr.rel (%p583) target = $region108
        $region107: #{tpu_custom_call.1} parent=67 // pred_region
          %586 = dma.done %s579, 2048
        $region108: #{tpu_custom_call.1} parent=67 // pred_fallthru
          _
        %s587 = sand.u32 %s36, 1
        %s588 = scalar_lea.sflag [#allocation20], %s587
        %s589 = sand.u32 %s299, 1
        %s590 = smul.addr %s589, 128
        %s591 = scalar_lea.vmem [#allocation21], %s590
        // Predicated region
        $region109: #{tpu_custom_call.1} parent=67 // pred_check
          %p592 = pneg %p312
        $region110: #{tpu_custom_call.1} parent=67 // pred_check_branch
          %594 = sbr.rel (%p592) target = $region112
        $region111: #{tpu_custom_call.1} parent=67 // pred_region
          %595 = dma.done %s588, 2048
        $region112: #{tpu_custom_call.1} parent=67 // pred_fallthru
          _
        %s596 = sand.u32 %s58, 1
        %s597 = scalar_lea.sflag [#allocation5], %s596
        %s598 = sand.u32 %s58, 1
        %s599 = smul.addr %s598, 256
        %s600 = scalar_lea.vmem [#allocation4], %s599
        %p601 = pneg %p71
        %p602 = pneg %p68
        %p603 = pneg %p92
        %p604 = pneg %p89
        %p605 = pneg %p113
        %p606 = pneg %p110
        %p607 = pneg %p134
        %p608 = pneg %p131
        %p609 = pneg %p155
        %p610 = pneg %p152
        %p611 = pneg %p176
        %p612 = pneg %p173
        %p613 = pneg %p197
        %p614 = pneg %p194
        %p615 = pneg %p218
        %p616 = pneg %p215
        %p617 = pneg %p239
        %p618 = pneg %p236
        %p619 = pneg %p260
        %p620 = pneg %p257
        %s621 = sand.u32 %s36, 1
        %s622 = scalar_lea.sflag [#allocation20], %s621
        %s623 = sand.u32 %s273, 1
        %s624 = smul.addr %s623, 128
        %s625 = scalar_lea.vmem [#allocation19], %s624
        %p626 = pneg %p286
        %p627 = pneg %p283
        %s628 = sand.u32 %s36, 1
        %s629 = scalar_lea.sflag [#allocation20], %s628
        %s630 = sand.u32 %s299, 1
        %s631 = smul.addr %s630, 128
        %s632 = scalar_lea.vmem [#allocation21], %s631
        %p633 = pneg %p312
        %p634 = pneg %p309
        %p635 = pneg %p340
        %p636 = pneg %p337
        %s637 = sand.u32 %s327, 1
        %s638 = scalar_lea.sflag [#allocation6], %s637
        %s639 = sand.u32 %s327, 1
        %s640 = smul.addr %s639, 256
        %s641 = scalar_lea.vmem [#allocation22], %s640
        %s642 = smul.u32 16, %s41
        %s643 = smul.u32 16, %s41
        %s644 = smul.u32 16, %s41
        %s645 = smul.u32 16, %s41
        %s647 = smul.u32 %s41, 128
        %v648 = vld [vmem:[#allocation7] sm:$0x3]
        %v649 = vld [vmem:[%s2] sm:$0x3]
        %v650 = vld [vmem:[%s582] sm:$0xff]
        %v651 = vld [vmem:[%s582 + $0x8] sm:$0xff]
        %v652 = vld [vmem:[%s582 + $0x10] sm:$0xff]
        %v653 = vld [vmem:[%s582 + $0x18] sm:$0xff]
        %v654 = vld [vmem:[%s582 + $0x20] sm:$0xff]
        %v655 = vld [vmem:[%s582 + $0x28] sm:$0xff]
        %v656 = vld [vmem:[%s582 + $0x30] sm:$0xff]
        %v657 = vld [vmem:[%s582 + $0x38] sm:$0xff]
        %v658 = vld [vmem:[%s582 + $0x40] sm:$0xff]
        %v659 = vld [vmem:[%s582 + $0x48] sm:$0xff]
        %v660 = vld [vmem:[%s582 + $0x50] sm:$0xff]
        %v661 = vld [vmem:[%s582 + $0x58] sm:$0xff]
        %v662 = vld [vmem:[%s582 + $0x60] sm:$0xff]
        %v663 = vld [vmem:[%s582 + $0x68] sm:$0xff]
        %v664 = vld [vmem:[%s582 + $0x70] sm:$0xff]
        %v665 = vld [vmem:[%s582 + $0x78] sm:$0xff]
        %v666 = vld [vmem:[%s591] sm:$0xff]
        %v667 = vld [vmem:[%s591 + $0x8] sm:$0xff]
        %v668 = vld [vmem:[%s591 + $0x10] sm:$0xff]
        %v669 = vld [vmem:[%s591 + $0x18] sm:$0xff]
        %v670 = vld [vmem:[%s591 + $0x20] sm:$0xff]
        %v671 = vld [vmem:[%s591 + $0x28] sm:$0xff]
        %v672 = vld [vmem:[%s591 + $0x30] sm:$0xff]
        %v673 = vld [vmem:[%s591 + $0x38] sm:$0xff]
        %v674 = vld [vmem:[%s591 + $0x40] sm:$0xff]
        %v675 = vld [vmem:[%s591 + $0x48] sm:$0xff]
        %v676 = vld [vmem:[%s591 + $0x50] sm:$0xff]
        %v677 = vld [vmem:[%s591 + $0x58] sm:$0xff]
        %v678 = vld [vmem:[%s591 + $0x60] sm:$0xff]
        %v679 = vld [vmem:[%s591 + $0x68] sm:$0xff]
        %v680 = vld [vmem:[%s591 + $0x70] sm:$0xff]
        %v681 = vld [vmem:[%s591 + $0x78] sm:$0xff]
        %v682 = vld [vmem:[%s541] sm:$0xff]
        %v683 = vld [vmem:[%s541 + $0x8] sm:$0xff]
        %v684 = vld [vmem:[%s541 + $0x10] sm:$0xff]
        %v685 = vld [vmem:[%s541 + $0x18] sm:$0xff]
        %v686 = vld [vmem:[%s541 + $0x20] sm:$0xff]
        %v687 = vld [vmem:[%s541 + $0x28] sm:$0xff]
        %v688 = vld [vmem:[%s541 + $0x30] sm:$0xff]
        %v689 = vld [vmem:[%s541 + $0x38] sm:$0xff]
        %v690 = vld [vmem:[%s541 + $0x40] sm:$0xff]
        %v691 = vld [vmem:[%s541 + $0x48] sm:$0xff]
        %v692 = vld [vmem:[%s541 + $0x50] sm:$0xff]
        %v693 = vld [vmem:[%s541 + $0x58] sm:$0xff]
        %v694 = vld [vmem:[%s541 + $0x60] sm:$0xff]
        %v695 = vld [vmem:[%s541 + $0x68] sm:$0xff]
        %v696 = vld [vmem:[%s541 + $0x70] sm:$0xff]
        %v697 = vld [vmem:[%s541 + $0x78] sm:$0xff]
        %v698 = vld [vmem:[%s541 + $0x80] sm:$0xff]
        %v699 = vld [vmem:[%s541 + $0x88] sm:$0xff]
        %v700 = vld [vmem:[%s541 + $0x90] sm:$0xff]
        %v701 = vld [vmem:[%s541 + $0x98] sm:$0xff]
        %v702 = vld [vmem:[%s541 + $0xa0] sm:$0xff]
        %v703 = vld [vmem:[%s541 + $0xa8] sm:$0xff]
        %v704 = vld [vmem:[%s541 + $0xb0] sm:$0xff]
        %v705 = vld [vmem:[%s541 + $0xb8] sm:$0xff]
        %v706 = vld [vmem:[%s541 + $0xc0] sm:$0xff]
        %v707 = vld [vmem:[%s541 + $0xc8] sm:$0xff]
        %v708 = vld [vmem:[%s541 + $0xd0] sm:$0xff]
        %v709 = vld [vmem:[%s541 + $0xd8] sm:$0xff]
        %v710 = vld [vmem:[%s541 + $0xe0] sm:$0xff]
        %v711 = vld [vmem:[%s541 + $0xe8] sm:$0xff]
        %v712 = vld [vmem:[%s541 + $0xf0] sm:$0xff]
        %v713 = vld [vmem:[%s541 + $0xf8] sm:$0xff]
        %v714 = vmul.f32 %v682, %v682
        %v715 = vmul.f32 %v683, %v683
        %v716 = vmul.f32 %v684, %v684
        %v717 = vmul.f32 %v685, %v685
        %v718 = vmul.f32 %v686, %v686
        %v719 = vmul.f32 %v687, %v687
        %v720 = vmul.f32 %v688, %v688
        %v721 = vmul.f32 %v689, %v689
        %v722 = vmul.f32 %v690, %v690
        %v723 = vmul.f32 %v691, %v691
        %v724 = vmul.f32 %v692, %v692
        %v725 = vmul.f32 %v693, %v693
        %v726 = vmul.f32 %v694, %v694
        %v727 = vmul.f32 %v695, %v695
        %v728 = vmul.f32 %v696, %v696
        %v729 = vmul.f32 %v697, %v697
        %v730 = vmul.f32 %v698, %v698
        %v731 = vmul.f32 %v699, %v699
        %v732 = vmul.f32 %v700, %v700
        %v733 = vmul.f32 %v701, %v701
        %v734 = vmul.f32 %v702, %v702
        %v735 = vmul.f32 %v703, %v703
        %v736 = vmul.f32 %v704, %v704
        %v737 = vmul.f32 %v705, %v705
        %v738 = vmul.f32 %v706, %v706
        %v739 = vmul.f32 %v707, %v707
        %v740 = vmul.f32 %v708, %v708
        %v741 = vmul.f32 %v709, %v709
        %v742 = vmul.f32 %v710, %v710
        %v743 = vmul.f32 %v711, %v711
        %v744 = vmul.f32 %v712, %v712
        %v745 = vmul.f32 %v713, %v713
        %v746 = vadd.f32 %v714, %v715
        %747 = vadd.xlane.f32.xlu0 %v746
        %v748 = vpop.xlane.xlu0 %747
        %v749 = vadd.f32 %v716, %v717
        %750 = vadd.xlane.f32.xlu0 %v749
        %v751 = vpop.xlane.xlu0 %750
        %v752 = vadd.f32 %v718, %v719
        %753 = vadd.xlane.f32.xlu0 %v752
        %v754 = vpop.xlane.xlu0 %753
        %v755 = vadd.f32 %v720, %v721
        %756 = vadd.xlane.f32.xlu0 %v755
        %v757 = vpop.xlane.xlu0 %756
        %v758 = vadd.f32 %v722, %v723
        %759 = vadd.xlane.f32.xlu0 %v758
        %v760 = vpop.xlane.xlu0 %759
        %v761 = vadd.f32 %v724, %v725
        %762 = vadd.xlane.f32.xlu0 %v761
        %v763 = vpop.xlane.xlu0 %762
        %v764 = vadd.f32 %v726, %v727
        %765 = vadd.xlane.f32.xlu0 %v764
        %v766 = vpop.xlane.xlu0 %765
        %v767 = vadd.f32 %v728, %v729
        %768 = vadd.xlane.f32.xlu0 %v767
        %v769 = vpop.xlane.xlu0 %768
        %v770 = vadd.f32 %v730, %v731
        %771 = vadd.xlane.f32.xlu0 %v770
        %v772 = vpop.xlane.xlu0 %771
        %v773 = vadd.f32 %v732, %v733
        %774 = vadd.xlane.f32.xlu0 %v773
        %v775 = vpop.xlane.xlu0 %774
        %v776 = vadd.f32 %v734, %v735
        %777 = vadd.xlane.f32.xlu0 %v776
        %v778 = vpop.xlane.xlu0 %777
        %v779 = vadd.f32 %v736, %v737
        %780 = vadd.xlane.f32.xlu0 %v779
        %v781 = vpop.xlane.xlu0 %780
        %v782 = vadd.f32 %v738, %v739
        %783 = vadd.xlane.f32.xlu0 %v782
        %v784 = vpop.xlane.xlu0 %783
        %v785 = vadd.f32 %v740, %v741
        %786 = vadd.xlane.f32.xlu0 %v785
        %v787 = vpop.xlane.xlu0 %786
        %v788 = vadd.f32 %v742, %v743
        %789 = vadd.xlane.f32.xlu0 %v788
        %v790 = vpop.xlane.xlu0 %789
        %v791 = vadd.f32 %v744, %v745
        %792 = vadd.xlane.f32.xlu0 %v791
        %v793 = vpop.xlane.xlu0 %792
        %v794 = vrcp.pop 256.0
        %v795 = vmul.f32 %v748, %v794
        %v796 = vmul.f32 %v751, %v794
        %v797 = vmul.f32 %v754, %v794
        %v798 = vmul.f32 %v757, %v794
        %v799 = vmul.f32 %v760, %v794
        %v800 = vmul.f32 %v763, %v794
        %v801 = vmul.f32 %v766, %v794
        %v802 = vmul.f32 %v769, %v794
        %v803 = vmul.f32 %v772, %v794
        %v804 = vmul.f32 %v775, %v794
        %v805 = vmul.f32 %v778, %v794
        %v806 = vmul.f32 %v781, %v794
        %v807 = vmul.f32 %v784, %v794
        %v808 = vmul.f32 %v787, %v794
        %v809 = vmul.f32 %v790, %v794
        %v810 = vmul.f32 %v793, %v794
        %v811 = vadd.f32 %v795, 1e-05
        %v812 = vadd.f32 %v796, 1e-05
        %v813 = vadd.f32 %v797, 1e-05
        %v814 = vadd.f32 %v798, 1e-05
        %v815 = vadd.f32 %v799, 1e-05
        %v816 = vadd.f32 %v800, 1e-05
        %v817 = vadd.f32 %v801, 1e-05
        %v818 = vadd.f32 %v802, 1e-05
        %v819 = vadd.f32 %v803, 1e-05
        %v820 = vadd.f32 %v804, 1e-05
        %v821 = vadd.f32 %v805, 1e-05
        %v822 = vadd.f32 %v806, 1e-05
        %v823 = vadd.f32 %v807, 1e-05
        %v824 = vadd.f32 %v808, 1e-05
        %v825 = vadd.f32 %v809, 1e-05
        %v826 = vadd.f32 %v810, 1e-05
        %v827 = vrsqrt.pop %v811
        %v828 = vrsqrt.pop %v812
        %v829 = vrsqrt.pop %v813
        %v830 = vrsqrt.pop %v814
        %v831 = vrsqrt.pop %v815
        %v832 = vrsqrt.pop %v816
        %v833 = vrsqrt.pop %v817
        %v834 = vrsqrt.pop %v818
        %v835 = vrsqrt.pop %v819
        %v836 = vrsqrt.pop %v820
        %v837 = vrsqrt.pop %v821
        %v838 = vrsqrt.pop %v822
        %v839 = vrsqrt.pop %v823
        %v840 = vrsqrt.pop %v824
        %v841 = vrsqrt.pop %v825
        %v842 = vrsqrt.pop %v826
        %v843 = vmul.f32 %v682, %v827
        %v844 = vmul.f32 %v683, %v827
        %v845 = vmul.f32 %v684, %v828
        %v846 = vmul.f32 %v685, %v828
        %v847 = vmul.f32 %v686, %v829
        %v848 = vmul.f32 %v687, %v829
        %v849 = vmul.f32 %v688, %v830
        %v850 = vmul.f32 %v689, %v830
        %v851 = vmul.f32 %v690, %v831
        %v852 = vmul.f32 %v691, %v831
        %v853 = vmul.f32 %v692, %v832
        %v854 = vmul.f32 %v693, %v832
        %v855 = vmul.f32 %v694, %v833
        %v856 = vmul.f32 %v695, %v833
        %v857 = vmul.f32 %v696, %v834
        %v858 = vmul.f32 %v697, %v834
        %v859 = vmul.f32 %v698, %v835
        %v860 = vmul.f32 %v699, %v835
        %v861 = vmul.f32 %v700, %v836
        %v862 = vmul.f32 %v701, %v836
        %v863 = vmul.f32 %v702, %v837
        %v864 = vmul.f32 %v703, %v837
        %v865 = vmul.f32 %v704, %v838
        %v866 = vmul.f32 %v705, %v838
        %v867 = vmul.f32 %v706, %v839
        %v868 = vmul.f32 %v707, %v839
        %v869 = vmul.f32 %v708, %v840
        %v870 = vmul.f32 %v709, %v840
        %v871 = vmul.f32 %v710, %v841
        %v872 = vmul.f32 %v711, %v841
        %v873 = vmul.f32 %v712, %v842
        %v874 = vmul.f32 %v713, %v842
        %v876 = vlaneseq
        %v877 = vshrl.u32 %v876, 7
        %v878 = vsub.s32 0, %v877
        %v879 = vrot.slane %v648, %v878
        %v880 = vlaneseq
        %v881 = vshrl.u32 %v880, 7
        %v882 = vsub.s32 1, %v881
        %v883 = vrot.slane %v648, %v882
        %v886 = vmul.f32 %v843, %v879
        %v887 = vmul.f32 %v844, %v883
        %v888 = vmul.f32 %v845, %v879
        %v889 = vmul.f32 %v846, %v883
        %v890 = vmul.f32 %v847, %v879
        %v891 = vmul.f32 %v848, %v883
        %v892 = vmul.f32 %v849, %v879
        %v893 = vmul.f32 %v850, %v883
        %v894 = vmul.f32 %v851, %v879
        %v895 = vmul.f32 %v852, %v883
        %v896 = vmul.f32 %v853, %v879
        %v897 = vmul.f32 %v854, %v883
        %v898 = vmul.f32 %v855, %v879
        %v899 = vmul.f32 %v856, %v883
        %v900 = vmul.f32 %v857, %v879
        %v901 = vmul.f32 %v858, %v883
        %v902 = vmul.f32 %v859, %v879
        %v903 = vmul.f32 %v860, %v883
        %v904 = vmul.f32 %v861, %v879
        %v905 = vmul.f32 %v862, %v883
        %v906 = vmul.f32 %v863, %v879
        %v907 = vmul.f32 %v864, %v883
        %v908 = vmul.f32 %v865, %v879
        %v909 = vmul.f32 %v866, %v883
        %v910 = vmul.f32 %v867, %v879
        %v911 = vmul.f32 %v868, %v883
        %v912 = vmul.f32 %v869, %v879
        %v913 = vmul.f32 %v870, %v883
        %v914 = vmul.f32 %v871, %v879
        %v915 = vmul.f32 %v872, %v883
        %v916 = vmul.f32 %v873, %v879
        %v917 = vmul.f32 %v874, %v883
        %v918 = vpack.c.bf16 %v888, %v886
        %v919 = vpack.c.bf16 %v889, %v887
        %v920 = vpack.c.bf16 %v892, %v890
        %v921 = vpack.c.bf16 %v893, %v891
        %v922 = vpack.c.bf16 %v896, %v894
        %v923 = vpack.c.bf16 %v897, %v895
        %v924 = vpack.c.bf16 %v900, %v898
        %v925 = vpack.c.bf16 %v901, %v899
        %v926 = vpack.c.bf16 %v904, %v902
        %v927 = vpack.c.bf16 %v905, %v903
        %v928 = vpack.c.bf16 %v908, %v906
        %v929 = vpack.c.bf16 %v909, %v907
        %v930 = vpack.c.bf16 %v912, %v910
        %v931 = vpack.c.bf16 %v913, %v911
        %v932 = vpack.c.bf16 %v916, %v914
        %v933 = vpack.c.bf16 %v917, %v915
        %v934 = vld [vmem:[#allocation9] sm:$0xff]
        %v935 = vld [vmem:[#allocation9 + $0x8] sm:$0xff]
        %v936 = vld [vmem:[#allocation9 + $0x10] sm:$0xff]
        %v937 = vld [vmem:[#allocation9 + $0x18] sm:$0xff]
        %v938 = vld [vmem:[#allocation9 + $0x20] sm:$0xff]
        %v939 = vld [vmem:[#allocation9 + $0x28] sm:$0xff]
        %v940 = vld [vmem:[#allocation9 + $0x30] sm:$0xff]
        %v941 = vld [vmem:[#allocation9 + $0x38] sm:$0xff]
        %v942 = vld [vmem:[#allocation9 + $0x40] sm:$0xff]
        %v943 = vld [vmem:[#allocation9 + $0x48] sm:$0xff]
        %v944 = vld [vmem:[#allocation9 + $0x50] sm:$0xff]
        %v945 = vld [vmem:[#allocation9 + $0x58] sm:$0xff]
        %v946 = vld [vmem:[#allocation9 + $0x60] sm:$0xff]
        %v947 = vld [vmem:[#allocation9 + $0x68] sm:$0xff]
        %v948 = vld [vmem:[#allocation9 + $0x70] sm:$0xff]
        %v949 = vld [vmem:[#allocation9 + $0x78] sm:$0xff]
        %v950 = vld [vmem:[#allocation9 + $0x80] sm:$0xff]
        %v951 = vld [vmem:[#allocation9 + $0x88] sm:$0xff]
        %v952 = vld [vmem:[#allocation9 + $0x90] sm:$0xff]
        %v953 = vld [vmem:[#allocation9 + $0x98] sm:$0xff]
        %v954 = vld [vmem:[#allocation9 + $0xa0] sm:$0xff]
        %v955 = vld [vmem:[#allocation9 + $0xa8] sm:$0xff]
        %v956 = vld [vmem:[#allocation9 + $0xb0] sm:$0xff]
        %v957 = vld [vmem:[#allocation9 + $0xb8] sm:$0xff]
        %v958 = vld [vmem:[#allocation9 + $0xc0] sm:$0xff]
        %v959 = vld [vmem:[#allocation9 + $0xc8] sm:$0xff]
        %v960 = vld [vmem:[#allocation9 + $0xd0] sm:$0xff]
        %v961 = vld [vmem:[#allocation9 + $0xd8] sm:$0xff]
        %v962 = vld [vmem:[#allocation9 + $0xe0] sm:$0xff]
        %v963 = vld [vmem:[#allocation9 + $0xe8] sm:$0xff]
        %v964 = vld [vmem:[#allocation9 + $0xf0] sm:$0xff]
        %v965 = vld [vmem:[#allocation9 + $0xf8] sm:$0xff]
        %v998 = vunpack.c.l.b16 %v934
        %v999 = vunpack.c.h.b16 %v934
        %v1000 = vunpack.c.l.b16 %v935
        %v1001 = vunpack.c.h.b16 %v935
        %v1002 = vunpack.c.l.b16 %v936
        %v1003 = vunpack.c.h.b16 %v936
        %v1004 = vunpack.c.l.b16 %v937
        %v1005 = vunpack.c.h.b16 %v937
        %v1006 = vunpack.c.l.b16 %v938
        %v1007 = vunpack.c.h.b16 %v938
        %v1008 = vunpack.c.l.b16 %v939
        %v1009 = vunpack.c.h.b16 %v939
        %v1010 = vunpack.c.l.b16 %v940
        %v1011 = vunpack.c.h.b16 %v940
        %v1012 = vunpack.c.l.b16 %v941
        %v1013 = vunpack.c.h.b16 %v941
        %v1014 = vunpack.c.l.b16 %v942
        %v1015 = vunpack.c.h.b16 %v942
        %v1016 = vunpack.c.l.b16 %v943
        %v1017 = vunpack.c.h.b16 %v943
        %v1018 = vunpack.c.l.b16 %v944
        %v1019 = vunpack.c.h.b16 %v944
        %v1020 = vunpack.c.l.b16 %v945
        %v1021 = vunpack.c.h.b16 %v945
        %v1022 = vunpack.c.l.b16 %v946
        %v1023 = vunpack.c.h.b16 %v946
        %v1024 = vunpack.c.l.b16 %v947
        %v1025 = vunpack.c.h.b16 %v947
        %v1026 = vunpack.c.l.b16 %v948
        %v1027 = vunpack.c.h.b16 %v948
        %v1028 = vunpack.c.l.b16 %v949
        %v1029 = vunpack.c.h.b16 %v949
        %v1030 = vunpack.c.l.b16 %v950
        %v1031 = vunpack.c.h.b16 %v950
        %v1032 = vunpack.c.l.b16 %v951
        %v1033 = vunpack.c.h.b16 %v951
        %v1034 = vunpack.c.l.b16 %v952
        %v1035 = vunpack.c.h.b16 %v952
        %v1036 = vunpack.c.l.b16 %v953
        %v1037 = vunpack.c.h.b16 %v953
        %v1038 = vunpack.c.l.b16 %v954
        %v1039 = vunpack.c.h.b16 %v954
        %v1040 = vunpack.c.l.b16 %v955
        %v1041 = vunpack.c.h.b16 %v955
        %v1042 = vunpack.c.l.b16 %v956
        %v1043 = vunpack.c.h.b16 %v956
        %v1044 = vunpack.c.l.b16 %v957
        %v1045 = vunpack.c.h.b16 %v957
        %v1046 = vunpack.c.l.b16 %v958
        %v1047 = vunpack.c.h.b16 %v958
        %v1048 = vunpack.c.l.b16 %v959
        %v1049 = vunpack.c.h.b16 %v959
        %v1050 = vunpack.c.l.b16 %v960
        %v1051 = vunpack.c.h.b16 %v960
        %v1052 = vunpack.c.l.b16 %v961
        %v1053 = vunpack.c.h.b16 %v961
        %v1054 = vunpack.c.l.b16 %v962
        %v1055 = vunpack.c.h.b16 %v962
        %v1056 = vunpack.c.l.b16 %v963
        %v1057 = vunpack.c.h.b16 %v963
        %v1058 = vunpack.c.l.b16 %v964
        %v1059 = vunpack.c.h.b16 %v964
        %v1060 = vunpack.c.l.b16 %v965
        %v1061 = vunpack.c.h.b16 %v965
        %v1062 = vpack.c.b16 %v1000, %v998
        %v1063 = vpack.c.b16 %v1001, %v999
        %v1064 = vpack.c.b16 %v1004, %v1002
        %v1065 = vpack.c.b16 %v1005, %v1003
        %v1066 = vpack.c.b16 %v1008, %v1006
        %v1067 = vpack.c.b16 %v1009, %v1007
        %v1068 = vpack.c.b16 %v1012, %v1010
        %v1069 = vpack.c.b16 %v1013, %v1011
        %v1070 = vpack.c.b16 %v1016, %v1014
        %v1071 = vpack.c.b16 %v1017, %v1015
        %v1072 = vpack.c.b16 %v1020, %v1018
        %v1073 = vpack.c.b16 %v1021, %v1019
        %v1074 = vpack.c.b16 %v1024, %v1022
        %v1075 = vpack.c.b16 %v1025, %v1023
        %v1076 = vpack.c.b16 %v1028, %v1026
        %v1077 = vpack.c.b16 %v1029, %v1027
        %v1078 = vpack.c.b16 %v1032, %v1030
        %v1079 = vpack.c.b16 %v1033, %v1031
        %v1080 = vpack.c.b16 %v1036, %v1034
        %v1081 = vpack.c.b16 %v1037, %v1035
        %v1082 = vpack.c.b16 %v1040, %v1038
        %v1083 = vpack.c.b16 %v1041, %v1039
        %v1084 = vpack.c.b16 %v1044, %v1042
        %v1085 = vpack.c.b16 %v1045, %v1043
        %v1086 = vpack.c.b16 %v1048, %v1046
        %v1087 = vpack.c.b16 %v1049, %v1047
        %v1088 = vpack.c.b16 %v1052, %v1050
        %v1089 = vpack.c.b16 %v1053, %v1051
        %v1090 = vpack.c.b16 %v1056, %v1054
        %v1091 = vpack.c.b16 %v1057, %v1055
        %v1092 = vpack.c.b16 %v1060, %v1058
        %v1093 = vpack.c.b16 %v1061, %v1059
        %1126 = vmatprep.subr.bf16.mxu0 %v1077
        %1127 = vmatpush1.bf16.msra.mxu0 %v1076
        %1128 = vmatprep.subr.bf16.mxu0 %v1075
        %1129 = vmatpush1.bf16.msra.mxu0 %v1074
        %1130 = vmatprep.subr.bf16.mxu0 %v1073
        %1131 = vmatpush1.bf16.msra.mxu0 %v1072
        %1132 = vmatprep.subr.bf16.mxu0 %v1071
        %1133 = vmatpush1.bf16.msra.mxu0 %v1070
        %1134 = vmatprep.subr.bf16.mxu0 %v1069
        %1135 = vmatpush1.bf16.msra.mxu0 %v1068
        %1136 = vmatprep.subr.bf16.mxu0 %v1067
        %1137 = vmatpush1.bf16.msra.mxu0 %v1066
        %1138 = vmatprep.subr.bf16.mxu0 %v1065
        %1139 = vmatpush1.bf16.msra.mxu0 %v1064
        %1140 = vmatprep.subr.bf16.mxu0 %v1063
        %1141 = vmatpush1.bf16.msra.mxu0 %v1062
        %1142 = vmatprep.subr.bf16.mxu0 %v1093
        %1143 = vmatpush2.bf16.msra.mxu0 %v1092
        %1144 = vmatprep.subr.bf16.mxu0 %v1091
        %1145 = vmatpush2.bf16.msra.mxu0 %v1090
        %1146 = vmatprep.subr.bf16.mxu0 %v1089
        %1147 = vmatpush2.bf16.msra.mxu0 %v1088
        %1148 = vmatprep.subr.bf16.mxu0 %v1087
        %1149 = vmatpush2.bf16.msra.mxu0 %v1086
        %1150 = vmatprep.subr.bf16.mxu0 %v1085
        %1151 = vmatpush2.bf16.msra.mxu0 %v1084
        %1152 = vmatprep.subr.bf16.mxu0 %v1083
        %1153 = vmatpush2.bf16.msra.mxu0 %v1082
        %1154 = vmatprep.subr.bf16.mxu0 %v1081
        %1155 = vmatpush2.bf16.msra.mxu0 %v1080
        %1156 = vmatprep.subr.bf16.mxu0 %v1079
        %1157 = vmatpush2.bf16.msra.mxu0 %v1078
        %1158 = vmatprep.mubr.bf16.mxu0 %v919
        %1159 = vmatmul.mubr.bf16.gmra.mxu0 %v918
        %v1160 = vpop.f32.mrf.mxu0
        %v1161 = vadd.f32 0.0, %v1160
        %v1162 = vpop.f32.mrf.mxu0
        %v1163 = vadd.f32 0.0, %v1162
        %v1164 = vpop.f32.mrf.mxu0
        %v1165 = vadd.f32 0.0, %v1164
        %v1166 = vpop.f32.mrf.mxu0
        %v1167 = vadd.f32 0.0, %v1166
        %1168 = vmatprep.mubr.bf16.mxu0 %v921
        %1169 = vmatmul.mubr.bf16.gmra.mxu0 %v920
        %v1170 = vpop.f32.mrf.mxu0
        %v1171 = vadd.f32 0.0, %v1170
        %v1172 = vpop.f32.mrf.mxu0
        %v1173 = vadd.f32 0.0, %v1172
        %v1174 = vpop.f32.mrf.mxu0
        %v1175 = vadd.f32 0.0, %v1174
        %v1176 = vpop.f32.mrf.mxu0
        %v1177 = vadd.f32 0.0, %v1176
        %1178 = vmatprep.mubr.bf16.mxu0 %v923
        %1179 = vmatmul.mubr.bf16.gmra.mxu0 %v922
        %v1180 = vpop.f32.mrf.mxu0
        %v1181 = vadd.f32 0.0, %v1180
        %v1182 = vpop.f32.mrf.mxu0
        %v1183 = vadd.f32 0.0, %v1182
        %v1184 = vpop.f32.mrf.mxu0
        %v1185 = vadd.f32 0.0, %v1184
        %v1186 = vpop.f32.mrf.mxu0
        %v1187 = vadd.f32 0.0, %v1186
        %1188 = vmatprep.mubr.bf16.mxu0 %v925
        %1189 = vmatmul.mubr.bf16.gmra.mxu0 %v924
        %v1190 = vpop.f32.mrf.mxu0
        %v1191 = vadd.f32 0.0, %v1190
        %v1192 = vpop.f32.mrf.mxu0
        %v1193 = vadd.f32 0.0, %v1192
        %v1194 = vpop.f32.mrf.mxu0
        %v1195 = vadd.f32 0.0, %v1194
        %v1196 = vpop.f32.mrf.mxu0
        %v1197 = vadd.f32 0.0, %v1196
        %1198 = vmatprep.mubr.bf16.mxu0 %v927
        %1199 = vmatmul.mubr.bf16.gmra.mxu0 %v926
        %v1200 = vpop.f32.mrf.mxu0
        %v1201 = vadd.f32 0.0, %v1200
        %v1202 = vpop.f32.mrf.mxu0
        %v1203 = vadd.f32 0.0, %v1202
        %v1204 = vpop.f32.mrf.mxu0
        %v1205 = vadd.f32 0.0, %v1204
        %v1206 = vpop.f32.mrf.mxu0
        %v1207 = vadd.f32 0.0, %v1206
        %1208 = vmatprep.mubr.bf16.mxu0 %v929
        %1209 = vmatmul.mubr.bf16.gmra.mxu0 %v928
        %v1210 = vpop.f32.mrf.mxu0
        %v1211 = vadd.f32 0.0, %v1210
        %v1212 = vpop.f32.mrf.mxu0
        %v1213 = vadd.f32 0.0, %v1212
        %v1214 = vpop.f32.mrf.mxu0
        %v1215 = vadd.f32 0.0, %v1214
        %v1216 = vpop.f32.mrf.mxu0
        %v1217 = vadd.f32 0.0, %v1216
        %1218 = vmatprep.mubr.bf16.mxu0 %v931
        %1219 = vmatmul.mubr.bf16.gmra.mxu0 %v930
        %v1220 = vpop.f32.mrf.mxu0
        %v1221 = vadd.f32 0.0, %v1220
        %v1222 = vpop.f32.mrf.mxu0
        %v1223 = vadd.f32 0.0, %v1222
        %v1224 = vpop.f32.mrf.mxu0
        %v1225 = vadd.f32 0.0, %v1224
        %v1226 = vpop.f32.mrf.mxu0
        %v1227 = vadd.f32 0.0, %v1226
        %1228 = vmatprep.mubr.bf16.mxu0 %v933
        %1229 = vmatmul.mubr.bf16.gmra.mxu0 %v932
        %v1230 = vpop.f32.mrf.mxu0
        %v1231 = vadd.f32 0.0, %v1230
        %v1232 = vpop.f32.mrf.mxu0
        %v1233 = vadd.f32 0.0, %v1232
        %v1234 = vpop.f32.mrf.mxu0
        %v1235 = vadd.f32 0.0, %v1234
        %v1236 = vpop.f32.mrf.mxu0
        %v1237 = vadd.f32 0.0, %v1236
        %1238 = vdwg.mxu0
        %v1239 = vld [vmem:[#allocation10] sm:$0xff]
        %v1240 = vld [vmem:[#allocation10 + $0x8] sm:$0xff]
        %v1241 = vld [vmem:[#allocation10 + $0x10] sm:$0xff]
        %v1242 = vld [vmem:[#allocation10 + $0x18] sm:$0xff]
        %v1243 = vld [vmem:[#allocation10 + $0x20] sm:$0xff]
        %v1244 = vld [vmem:[#allocation10 + $0x28] sm:$0xff]
        %v1245 = vld [vmem:[#allocation10 + $0x30] sm:$0xff]
        %v1246 = vld [vmem:[#allocation10 + $0x38] sm:$0xff]
        %v1247 = vld [vmem:[#allocation10 + $0x40] sm:$0xff]
        %v1248 = vld [vmem:[#allocation10 + $0x48] sm:$0xff]
        %v1249 = vld [vmem:[#allocation10 + $0x50] sm:$0xff]
        %v1250 = vld [vmem:[#allocation10 + $0x58] sm:$0xff]
        %v1251 = vld [vmem:[#allocation10 + $0x60] sm:$0xff]
        %v1252 = vld [vmem:[#allocation10 + $0x68] sm:$0xff]
        %v1253 = vld [vmem:[#allocation10 + $0x70] sm:$0xff]
        %v1254 = vld [vmem:[#allocation10 + $0x78] sm:$0xff]
        %v1255 = vld [vmem:[#allocation10 + $0x80] sm:$0xff]
        %v1256 = vld [vmem:[#allocation10 + $0x88] sm:$0xff]
        %v1257 = vld [vmem:[#allocation10 + $0x90] sm:$0xff]
        %v1258 = vld [vmem:[#allocation10 + $0x98] sm:$0xff]
        %v1259 = vld [vmem:[#allocation10 + $0xa0] sm:$0xff]
        %v1260 = vld [vmem:[#allocation10 + $0xa8] sm:$0xff]
        %v1261 = vld [vmem:[#allocation10 + $0xb0] sm:$0xff]
        %v1262 = vld [vmem:[#allocation10 + $0xb8] sm:$0xff]
        %v1263 = vld [vmem:[#allocation10 + $0xc0] sm:$0xff]
        %v1264 = vld [vmem:[#allocation10 + $0xc8] sm:$0xff]
        %v1265 = vld [vmem:[#allocation10 + $0xd0] sm:$0xff]
        %v1266 = vld [vmem:[#allocation10 + $0xd8] sm:$0xff]
        %v1267 = vld [vmem:[#allocation10 + $0xe0] sm:$0xff]
        %v1268 = vld [vmem:[#allocation10 + $0xe8] sm:$0xff]
        %v1269 = vld [vmem:[#allocation10 + $0xf0] sm:$0xff]
        %v1270 = vld [vmem:[#allocation10 + $0xf8] sm:$0xff]
        %v1303 = vunpack.c.l.b16 %v1239
        %v1304 = vunpack.c.h.b16 %v1239
        %v1305 = vunpack.c.l.b16 %v1240
        %v1306 = vunpack.c.h.b16 %v1240
        %v1307 = vunpack.c.l.b16 %v1241
        %v1308 = vunpack.c.h.b16 %v1241
        %v1309 = vunpack.c.l.b16 %v1242
        %v1310 = vunpack.c.h.b16 %v1242
        %v1311 = vunpack.c.l.b16 %v1243
        %v1312 = vunpack.c.h.b16 %v1243
        %v1313 = vunpack.c.l.b16 %v1244
        %v1314 = vunpack.c.h.b16 %v1244
        %v1315 = vunpack.c.l.b16 %v1245
        %v1316 = vunpack.c.h.b16 %v1245
        %v1317 = vunpack.c.l.b16 %v1246
        %v1318 = vunpack.c.h.b16 %v1246
        %v1319 = vunpack.c.l.b16 %v1247
        %v1320 = vunpack.c.h.b16 %v1247
        %v1321 = vunpack.c.l.b16 %v1248
        %v1322 = vunpack.c.h.b16 %v1248
        %v1323 = vunpack.c.l.b16 %v1249
        %v1324 = vunpack.c.h.b16 %v1249
        %v1325 = vunpack.c.l.b16 %v1250
        %v1326 = vunpack.c.h.b16 %v1250
        %v1327 = vunpack.c.l.b16 %v1251
        %v1328 = vunpack.c.h.b16 %v1251
        %v1329 = vunpack.c.l.b16 %v1252
        %v1330 = vunpack.c.h.b16 %v1252
        %v1331 = vunpack.c.l.b16 %v1253
        %v1332 = vunpack.c.h.b16 %v1253
        %v1333 = vunpack.c.l.b16 %v1254
        %v1334 = vunpack.c.h.b16 %v1254
        %v1335 = vunpack.c.l.b16 %v1255
        %v1336 = vunpack.c.h.b16 %v1255
        %v1337 = vunpack.c.l.b16 %v1256
        %v1338 = vunpack.c.h.b16 %v1256
        %v1339 = vunpack.c.l.b16 %v1257
        %v1340 = vunpack.c.h.b16 %v1257
        %v1341 = vunpack.c.l.b16 %v1258
        %v1342 = vunpack.c.h.b16 %v1258
        %v1343 = vunpack.c.l.b16 %v1259
        %v1344 = vunpack.c.h.b16 %v1259
        %v1345 = vunpack.c.l.b16 %v1260
        %v1346 = vunpack.c.h.b16 %v1260
        %v1347 = vunpack.c.l.b16 %v1261
        %v1348 = vunpack.c.h.b16 %v1261
        %v1349 = vunpack.c.l.b16 %v1262
        %v1350 = vunpack.c.h.b16 %v1262
        %v1351 = vunpack.c.l.b16 %v1263
        %v1352 = vunpack.c.h.b16 %v1263
        %v1353 = vunpack.c.l.b16 %v1264
        %v1354 = vunpack.c.h.b16 %v1264
        %v1355 = vunpack.c.l.b16 %v1265
        %v1356 = vunpack.c.h.b16 %v1265
        %v1357 = vunpack.c.l.b16 %v1266
        %v1358 = vunpack.c.h.b16 %v1266
        %v1359 = vunpack.c.l.b16 %v1267
        %v1360 = vunpack.c.h.b16 %v1267
        %v1361 = vunpack.c.l.b16 %v1268
        %v1362 = vunpack.c.h.b16 %v1268
        %v1363 = vunpack.c.l.b16 %v1269
        %v1364 = vunpack.c.h.b16 %v1269
        %v1365 = vunpack.c.l.b16 %v1270
        %v1366 = vunpack.c.h.b16 %v1270
        %v1367 = vpack.c.b16 %v1305, %v1303
        %v1368 = vpack.c.b16 %v1306, %v1304
        %v1369 = vpack.c.b16 %v1309, %v1307
        %v1370 = vpack.c.b16 %v1310, %v1308
        %v1371 = vpack.c.b16 %v1313, %v1311
        %v1372 = vpack.c.b16 %v1314, %v1312
        %v1373 = vpack.c.b16 %v1317, %v1315
        %v1374 = vpack.c.b16 %v1318, %v1316
        %v1375 = vpack.c.b16 %v1321, %v1319
        %v1376 = vpack.c.b16 %v1322, %v1320
        %v1377 = vpack.c.b16 %v1325, %v1323
        %v1378 = vpack.c.b16 %v1326, %v1324
        %v1379 = vpack.c.b16 %v1329, %v1327
        %v1380 = vpack.c.b16 %v1330, %v1328
        %v1381 = vpack.c.b16 %v1333, %v1331
        %v1382 = vpack.c.b16 %v1334, %v1332
        %v1383 = vpack.c.b16 %v1337, %v1335
        %v1384 = vpack.c.b16 %v1338, %v1336
        %v1385 = vpack.c.b16 %v1341, %v1339
        %v1386 = vpack.c.b16 %v1342, %v1340
        %v1387 = vpack.c.b16 %v1345, %v1343
        %v1388 = vpack.c.b16 %v1346, %v1344
        %v1389 = vpack.c.b16 %v1349, %v1347
        %v1390 = vpack.c.b16 %v1350, %v1348
        %v1391 = vpack.c.b16 %v1353, %v1351
        %v1392 = vpack.c.b16 %v1354, %v1352
        %v1393 = vpack.c.b16 %v1357, %v1355
        %v1394 = vpack.c.b16 %v1358, %v1356
        %v1395 = vpack.c.b16 %v1361, %v1359
        %v1396 = vpack.c.b16 %v1362, %v1360
        %v1397 = vpack.c.b16 %v1365, %v1363
        %v1398 = vpack.c.b16 %v1366, %v1364
        %1431 = vmatprep.subr.bf16.mxu0 %v1382
        %1432 = vmatpush1.bf16.msra.mxu0 %v1381
        %1433 = vmatprep.subr.bf16.mxu0 %v1380
        %1434 = vmatpush1.bf16.msra.mxu0 %v1379
        %1435 = vmatprep.subr.bf16.mxu0 %v1378
        %1436 = vmatpush1.bf16.msra.mxu0 %v1377
        %1437 = vmatprep.subr.bf16.mxu0 %v1376
        %1438 = vmatpush1.bf16.msra.mxu0 %v1375
        %1439 = vmatprep.subr.bf16.mxu0 %v1374
        %1440 = vmatpush1.bf16.msra.mxu0 %v1373
        %1441 = vmatprep.subr.bf16.mxu0 %v1372
        %1442 = vmatpush1.bf16.msra.mxu0 %v1371
        %1443 = vmatprep.subr.bf16.mxu0 %v1370
        %1444 = vmatpush1.bf16.msra.mxu0 %v1369
        %1445 = vmatprep.subr.bf16.mxu0 %v1368
        %1446 = vmatpush1.bf16.msra.mxu0 %v1367
        %1447 = vmatprep.subr.bf16.mxu0 %v1398
        %1448 = vmatpush2.bf16.msra.mxu0 %v1397
        %1449 = vmatprep.subr.bf16.mxu0 %v1396
        %1450 = vmatpush2.bf16.msra.mxu0 %v1395
        %1451 = vmatprep.subr.bf16.mxu0 %v1394
        %1452 = vmatpush2.bf16.msra.mxu0 %v1393
        %1453 = vmatprep.subr.bf16.mxu0 %v1392
        %1454 = vmatpush2.bf16.msra.mxu0 %v1391
        %1455 = vmatprep.subr.bf16.mxu0 %v1390
        %1456 = vmatpush2.bf16.msra.mxu0 %v1389
        %1457 = vmatprep.subr.bf16.mxu0 %v1388
        %1458 = vmatpush2.bf16.msra.mxu0 %v1387
        %1459 = vmatprep.subr.bf16.mxu0 %v1386
        %1460 = vmatpush2.bf16.msra.mxu0 %v1385
        %1461 = vmatprep.subr.bf16.mxu0 %v1384
        %1462 = vmatpush2.bf16.msra.mxu0 %v1383
        %1463 = vmatprep.mubr.bf16.mxu0 %v919
        %1464 = vmatmul.mubr.bf16.gmra.mxu0 %v918
        %v1465 = vpop.f32.mrf.mxu0
        %v1466 = vadd.f32 0.0, %v1465
        %v1467 = vpop.f32.mrf.mxu0
        %v1468 = vadd.f32 0.0, %v1467
        %v1469 = vpop.f32.mrf.mxu0
        %v1470 = vadd.f32 0.0, %v1469
        %v1471 = vpop.f32.mrf.mxu0
        %v1472 = vadd.f32 0.0, %v1471
        %1473 = vmatprep.mubr.bf16.mxu0 %v921
        %1474 = vmatmul.mubr.bf16.gmra.mxu0 %v920
        %v1475 = vpop.f32.mrf.mxu0
        %v1476 = vadd.f32 0.0, %v1475
        %v1477 = vpop.f32.mrf.mxu0
        %v1478 = vadd.f32 0.0, %v1477
        %v1479 = vpop.f32.mrf.mxu0
        %v1480 = vadd.f32 0.0, %v1479
        %v1481 = vpop.f32.mrf.mxu0
        %v1482 = vadd.f32 0.0, %v1481
        %1483 = vmatprep.mubr.bf16.mxu0 %v923
        %1484 = vmatmul.mubr.bf16.gmra.mxu0 %v922
        %v1485 = vpop.f32.mrf.mxu0
        %v1486 = vadd.f32 0.0, %v1485
        %v1487 = vpop.f32.mrf.mxu0
        %v1488 = vadd.f32 0.0, %v1487
        %v1489 = vpop.f32.mrf.mxu0
        %v1490 = vadd.f32 0.0, %v1489
        %v1491 = vpop.f32.mrf.mxu0
        %v1492 = vadd.f32 0.0, %v1491
        %1493 = vmatprep.mubr.bf16.mxu0 %v925
        %1494 = vmatmul.mubr.bf16.gmra.mxu0 %v924
        %v1495 = vpop.f32.mrf.mxu0
        %v1496 = vadd.f32 0.0, %v1495
        %v1497 = vpop.f32.mrf.mxu0
        %v1498 = vadd.f32 0.0, %v1497
        %v1499 = vpop.f32.mrf.mxu0
        %v1500 = vadd.f32 0.0, %v1499
        %v1501 = vpop.f32.mrf.mxu0
        %v1502 = vadd.f32 0.0, %v1501
        %1503 = vmatprep.mubr.bf16.mxu0 %v927
        %1504 = vmatmul.mubr.bf16.gmra.mxu0 %v926
        %v1505 = vpop.f32.mrf.mxu0
        %v1506 = vadd.f32 0.0, %v1505
        %v1507 = vpop.f32.mrf.mxu0
        %v1508 = vadd.f32 0.0, %v1507
        %v1509 = vpop.f32.mrf.mxu0
        %v1510 = vadd.f32 0.0, %v1509
        %v1511 = vpop.f32.mrf.mxu0
        %v1512 = vadd.f32 0.0, %v1511
        %1513 = vmatprep.mubr.bf16.mxu0 %v929
        %1514 = vmatmul.mubr.bf16.gmra.mxu0 %v928
        %v1515 = vpop.f32.mrf.mxu0
        %v1516 = vadd.f32 0.0, %v1515
        %v1517 = vpop.f32.mrf.mxu0
        %v1518 = vadd.f32 0.0, %v1517
        %v1519 = vpop.f32.mrf.mxu0
        %v1520 = vadd.f32 0.0, %v1519
        %v1521 = vpop.f32.mrf.mxu0
        %v1522 = vadd.f32 0.0, %v1521
        %1523 = vmatprep.mubr.bf16.mxu0 %v931
        %1524 = vmatmul.mubr.bf16.gmra.mxu0 %v930
        %v1525 = vpop.f32.mrf.mxu0
        %v1526 = vadd.f32 0.0, %v1525
        %v1527 = vpop.f32.mrf.mxu0
        %v1528 = vadd.f32 0.0, %v1527
        %v1529 = vpop.f32.mrf.mxu0
        %v1530 = vadd.f32 0.0, %v1529
        %v1531 = vpop.f32.mrf.mxu0
        %v1532 = vadd.f32 0.0, %v1531
        %1533 = vmatprep.mubr.bf16.mxu0 %v933
        %1534 = vmatmul.mubr.bf16.gmra.mxu0 %v932
        %v1535 = vpop.f32.mrf.mxu0
        %v1536 = vadd.f32 0.0, %v1535
        %v1537 = vpop.f32.mrf.mxu0
        %v1538 = vadd.f32 0.0, %v1537
        %v1539 = vpop.f32.mrf.mxu0
        %v1540 = vadd.f32 0.0, %v1539
        %v1541 = vpop.f32.mrf.mxu0
        %v1542 = vadd.f32 0.0, %v1541
        %1543 = vdwg.mxu0
        %v1544 = vld [vmem:[#allocation12] sm:$0xff]
        %v1545 = vld [vmem:[#allocation12 + $0x8] sm:$0xff]
        %v1546 = vld [vmem:[#allocation12 + $0x10] sm:$0xff]
        %v1547 = vld [vmem:[#allocation12 + $0x18] sm:$0xff]
        %v1548 = vld [vmem:[#allocation12 + $0x20] sm:$0xff]
        %v1549 = vld [vmem:[#allocation12 + $0x28] sm:$0xff]
        %v1550 = vld [vmem:[#allocation12 + $0x30] sm:$0xff]
        %v1551 = vld [vmem:[#allocation12 + $0x38] sm:$0xff]
        %v1552 = vld [vmem:[#allocation12 + $0x40] sm:$0xff]
        %v1553 = vld [vmem:[#allocation12 + $0x48] sm:$0xff]
        %v1554 = vld [vmem:[#allocation12 + $0x50] sm:$0xff]
        %v1555 = vld [vmem:[#allocation12 + $0x58] sm:$0xff]
        %v1556 = vld [vmem:[#allocation12 + $0x60] sm:$0xff]
        %v1557 = vld [vmem:[#allocation12 + $0x68] sm:$0xff]
        %v1558 = vld [vmem:[#allocation12 + $0x70] sm:$0xff]
        %v1559 = vld [vmem:[#allocation12 + $0x78] sm:$0xff]
        %v1560 = vld [vmem:[#allocation12 + $0x80] sm:$0xff]
        %v1561 = vld [vmem:[#allocation12 + $0x88] sm:$0xff]
        %v1562 = vld [vmem:[#allocation12 + $0x90] sm:$0xff]
        %v1563 = vld [vmem:[#allocation12 + $0x98] sm:$0xff]
        %v1564 = vld [vmem:[#allocation12 + $0xa0] sm:$0xff]
        %v1565 = vld [vmem:[#allocation12 + $0xa8] sm:$0xff]
        %v1566 = vld [vmem:[#allocation12 + $0xb0] sm:$0xff]
        %v1567 = vld [vmem:[#allocation12 + $0xb8] sm:$0xff]
        %v1568 = vld [vmem:[#allocation12 + $0xc0] sm:$0xff]
        %v1569 = vld [vmem:[#allocation12 + $0xc8] sm:$0xff]
        %v1570 = vld [vmem:[#allocation12 + $0xd0] sm:$0xff]
        %v1571 = vld [vmem:[#allocation12 + $0xd8] sm:$0xff]
        %v1572 = vld [vmem:[#allocation12 + $0xe0] sm:$0xff]
        %v1573 = vld [vmem:[#allocation12 + $0xe8] sm:$0xff]
        %v1574 = vld [vmem:[#allocation12 + $0xf0] sm:$0xff]
        %v1575 = vld [vmem:[#allocation12 + $0xf8] sm:$0xff]
        %v1608 = vunpack.c.l.b16 %v1544
        %v1609 = vunpack.c.h.b16 %v1544
        %v1610 = vunpack.c.l.b16 %v1545
        %v1611 = vunpack.c.h.b16 %v1545
        %v1612 = vunpack.c.l.b16 %v1546
        %v1613 = vunpack.c.h.b16 %v1546
        %v1614 = vunpack.c.l.b16 %v1547
        %v1615 = vunpack.c.h.b16 %v1547
        %v1616 = vunpack.c.l.b16 %v1548
        %v1617 = vunpack.c.h.b16 %v1548
        %v1618 = vunpack.c.l.b16 %v1549
        %v1619 = vunpack.c.h.b16 %v1549
        %v1620 = vunpack.c.l.b16 %v1550
        %v1621 = vunpack.c.h.b16 %v1550
        %v1622 = vunpack.c.l.b16 %v1551
        %v1623 = vunpack.c.h.b16 %v1551
        %v1624 = vunpack.c.l.b16 %v1552
        %v1625 = vunpack.c.h.b16 %v1552
        %v1626 = vunpack.c.l.b16 %v1553
        %v1627 = vunpack.c.h.b16 %v1553
        %v1628 = vunpack.c.l.b16 %v1554
        %v1629 = vunpack.c.h.b16 %v1554
        %v1630 = vunpack.c.l.b16 %v1555
        %v1631 = vunpack.c.h.b16 %v1555
        %v1632 = vunpack.c.l.b16 %v1556
        %v1633 = vunpack.c.h.b16 %v1556
        %v1634 = vunpack.c.l.b16 %v1557
        %v1635 = vunpack.c.h.b16 %v1557
        %v1636 = vunpack.c.l.b16 %v1558
        %v1637 = vunpack.c.h.b16 %v1558
        %v1638 = vunpack.c.l.b16 %v1559
        %v1639 = vunpack.c.h.b16 %v1559
        %v1640 = vunpack.c.l.b16 %v1560
        %v1641 = vunpack.c.h.b16 %v1560
        %v1642 = vunpack.c.l.b16 %v1561
        %v1643 = vunpack.c.h.b16 %v1561
        %v1644 = vunpack.c.l.b16 %v1562
        %v1645 = vunpack.c.h.b16 %v1562
        %v1646 = vunpack.c.l.b16 %v1563
        %v1647 = vunpack.c.h.b16 %v1563
        %v1648 = vunpack.c.l.b16 %v1564
        %v1649 = vunpack.c.h.b16 %v1564
        %v1650 = vunpack.c.l.b16 %v1565
        %v1651 = vunpack.c.h.b16 %v1565
        %v1652 = vunpack.c.l.b16 %v1566
        %v1653 = vunpack.c.h.b16 %v1566
        %v1654 = vunpack.c.l.b16 %v1567
        %v1655 = vunpack.c.h.b16 %v1567
        %v1656 = vunpack.c.l.b16 %v1568
        %v1657 = vunpack.c.h.b16 %v1568
        %v1658 = vunpack.c.l.b16 %v1569
        %v1659 = vunpack.c.h.b16 %v1569
        %v1660 = vunpack.c.l.b16 %v1570
        %v1661 = vunpack.c.h.b16 %v1570
        %v1662 = vunpack.c.l.b16 %v1571
        %v1663 = vunpack.c.h.b16 %v1571
        %v1664 = vunpack.c.l.b16 %v1572
        %v1665 = vunpack.c.h.b16 %v1572
        %v1666 = vunpack.c.l.b16 %v1573
        %v1667 = vunpack.c.h.b16 %v1573
        %v1668 = vunpack.c.l.b16 %v1574
        %v1669 = vunpack.c.h.b16 %v1574
        %v1670 = vunpack.c.l.b16 %v1575
        %v1671 = vunpack.c.h.b16 %v1575
        %v1672 = vpack.c.b16 %v1610, %v1608
        %v1673 = vpack.c.b16 %v1611, %v1609
        %v1674 = vpack.c.b16 %v1614, %v1612
        %v1675 = vpack.c.b16 %v1615, %v1613
        %v1676 = vpack.c.b16 %v1618, %v1616
        %v1677 = vpack.c.b16 %v1619, %v1617
        %v1678 = vpack.c.b16 %v1622, %v1620
        %v1679 = vpack.c.b16 %v1623, %v1621
        %v1680 = vpack.c.b16 %v1626, %v1624
        %v1681 = vpack.c.b16 %v1627, %v1625
        %v1682 = vpack.c.b16 %v1630, %v1628
        %v1683 = vpack.c.b16 %v1631, %v1629
        %v1684 = vpack.c.b16 %v1634, %v1632
        %v1685 = vpack.c.b16 %v1635, %v1633
        %v1686 = vpack.c.b16 %v1638, %v1636
        %v1687 = vpack.c.b16 %v1639, %v1637
        %v1688 = vpack.c.b16 %v1642, %v1640
        %v1689 = vpack.c.b16 %v1643, %v1641
        %v1690 = vpack.c.b16 %v1646, %v1644
        %v1691 = vpack.c.b16 %v1647, %v1645
        %v1692 = vpack.c.b16 %v1650, %v1648
        %v1693 = vpack.c.b16 %v1651, %v1649
        %v1694 = vpack.c.b16 %v1654, %v1652
        %v1695 = vpack.c.b16 %v1655, %v1653
        %v1696 = vpack.c.b16 %v1658, %v1656
        %v1697 = vpack.c.b16 %v1659, %v1657
        %v1698 = vpack.c.b16 %v1662, %v1660
        %v1699 = vpack.c.b16 %v1663, %v1661
        %v1700 = vpack.c.b16 %v1666, %v1664
        %v1701 = vpack.c.b16 %v1667, %v1665
        %v1702 = vpack.c.b16 %v1670, %v1668
        %v1703 = vpack.c.b16 %v1671, %v1669
        %1736 = vmatprep.subr.bf16.mxu0 %v1687
        %1737 = vmatpush1.bf16.msra.mxu0 %v1686
        %1738 = vmatprep.subr.bf16.mxu0 %v1685
        %1739 = vmatpush1.bf16.msra.mxu0 %v1684
        %1740 = vmatprep.subr.bf16.mxu0 %v1683
        %1741 = vmatpush1.bf16.msra.mxu0 %v1682
        %1742 = vmatprep.subr.bf16.mxu0 %v1681
        %1743 = vmatpush1.bf16.msra.mxu0 %v1680
        %1744 = vmatprep.subr.bf16.mxu0 %v1679
        %1745 = vmatpush1.bf16.msra.mxu0 %v1678
        %1746 = vmatprep.subr.bf16.mxu0 %v1677
        %1747 = vmatpush1.bf16.msra.mxu0 %v1676
        %1748 = vmatprep.subr.bf16.mxu0 %v1675
        %1749 = vmatpush1.bf16.msra.mxu0 %v1674
        %1750 = vmatprep.subr.bf16.mxu0 %v1673
        %1751 = vmatpush1.bf16.msra.mxu0 %v1672
        %1752 = vmatprep.subr.bf16.mxu0 %v1703
        %1753 = vmatpush2.bf16.msra.mxu0 %v1702
        %1754 = vmatprep.subr.bf16.mxu0 %v1701
        %1755 = vmatpush2.bf16.msra.mxu0 %v1700
        %1756 = vmatprep.subr.bf16.mxu0 %v1699
        %1757 = vmatpush2.bf16.msra.mxu0 %v1698
        %1758 = vmatprep.subr.bf16.mxu0 %v1697
        %1759 = vmatpush2.bf16.msra.mxu0 %v1696
        %1760 = vmatprep.subr.bf16.mxu0 %v1695
        %1761 = vmatpush2.bf16.msra.mxu0 %v1694
        %1762 = vmatprep.subr.bf16.mxu0 %v1693
        %1763 = vmatpush2.bf16.msra.mxu0 %v1692
        %1764 = vmatprep.subr.bf16.mxu0 %v1691
        %1765 = vmatpush2.bf16.msra.mxu0 %v1690
        %1766 = vmatprep.subr.bf16.mxu0 %v1689
        %1767 = vmatpush2.bf16.msra.mxu0 %v1688
        %1768 = vmatprep.mubr.bf16.mxu0 %v919
        %1769 = vmatmul.mubr.bf16.gmra.mxu0 %v918
        %v1770 = vpop.f32.mrf.mxu0
        %v1771 = vadd.f32 0.0, %v1770
        %v1772 = vpop.f32.mrf.mxu0
        %v1773 = vadd.f32 0.0, %v1772
        %v1774 = vpop.f32.mrf.mxu0
        %v1775 = vadd.f32 0.0, %v1774
        %v1776 = vpop.f32.mrf.mxu0
        %v1777 = vadd.f32 0.0, %v1776
        %1778 = vmatprep.mubr.bf16.mxu0 %v921
        %1779 = vmatmul.mubr.bf16.gmra.mxu0 %v920
        %v1780 = vpop.f32.mrf.mxu0
        %v1781 = vadd.f32 0.0, %v1780
        %v1782 = vpop.f32.mrf.mxu0
        %v1783 = vadd.f32 0.0, %v1782
        %v1784 = vpop.f32.mrf.mxu0
        %v1785 = vadd.f32 0.0, %v1784
        %v1786 = vpop.f32.mrf.mxu0
        %v1787 = vadd.f32 0.0, %v1786
        %1788 = vmatprep.mubr.bf16.mxu0 %v923
        %1789 = vmatmul.mubr.bf16.gmra.mxu0 %v922
        %v1790 = vpop.f32.mrf.mxu0
        %v1791 = vadd.f32 0.0, %v1790
        %v1792 = vpop.f32.mrf.mxu0
        %v1793 = vadd.f32 0.0, %v1792
        %v1794 = vpop.f32.mrf.mxu0
        %v1795 = vadd.f32 0.0, %v1794
        %v1796 = vpop.f32.mrf.mxu0
        %v1797 = vadd.f32 0.0, %v1796
        %1798 = vmatprep.mubr.bf16.mxu0 %v925
        %1799 = vmatmul.mubr.bf16.gmra.mxu0 %v924
        %v1800 = vpop.f32.mrf.mxu0
        %v1801 = vadd.f32 0.0, %v1800
        %v1802 = vpop.f32.mrf.mxu0
        %v1803 = vadd.f32 0.0, %v1802
        %v1804 = vpop.f32.mrf.mxu0
        %v1805 = vadd.f32 0.0, %v1804
        %v1806 = vpop.f32.mrf.mxu0
        %v1807 = vadd.f32 0.0, %v1806
        %1808 = vmatprep.mubr.bf16.mxu0 %v927
        %1809 = vmatmul.mubr.bf16.gmra.mxu0 %v926
        %v1810 = vpop.f32.mrf.mxu0
        %v1811 = vadd.f32 0.0, %v1810
        %v1812 = vpop.f32.mrf.mxu0
        %v1813 = vadd.f32 0.0, %v1812
        %v1814 = vpop.f32.mrf.mxu0
        %v1815 = vadd.f32 0.0, %v1814
        %v1816 = vpop.f32.mrf.mxu0
        %v1817 = vadd.f32 0.0, %v1816
        %1818 = vmatprep.mubr.bf16.mxu0 %v929
        %1819 = vmatmul.mubr.bf16.gmra.mxu0 %v928
        %v1820 = vpop.f32.mrf.mxu0
        %v1821 = vadd.f32 0.0, %v1820
        %v1822 = vpop.f32.mrf.mxu0
        %v1823 = vadd.f32 0.0, %v1822
        %v1824 = vpop.f32.mrf.mxu0
        %v1825 = vadd.f32 0.0, %v1824
        %v1826 = vpop.f32.mrf.mxu0
        %v1827 = vadd.f32 0.0, %v1826
        %1828 = vmatprep.mubr.bf16.mxu0 %v931
        %1829 = vmatmul.mubr.bf16.gmra.mxu0 %v930
        %v1830 = vpop.f32.mrf.mxu0
        %v1831 = vadd.f32 0.0, %v1830
        %v1832 = vpop.f32.mrf.mxu0
        %v1833 = vadd.f32 0.0, %v1832
        %v1834 = vpop.f32.mrf.mxu0
        %v1835 = vadd.f32 0.0, %v1834
        %v1836 = vpop.f32.mrf.mxu0
        %v1837 = vadd.f32 0.0, %v1836
        %1838 = vmatprep.mubr.bf16.mxu0 %v933
        %1839 = vmatmul.mubr.bf16.gmra.mxu0 %v932
        %v1840 = vpop.f32.mrf.mxu0
        %v1841 = vadd.f32 0.0, %v1840
        %v1842 = vpop.f32.mrf.mxu0
        %v1843 = vadd.f32 0.0, %v1842
        %v1844 = vpop.f32.mrf.mxu0
        %v1845 = vadd.f32 0.0, %v1844
        %v1846 = vpop.f32.mrf.mxu0
        %v1847 = vadd.f32 0.0, %v1846
        %1848 = vdwg.mxu0
        %v1849 = vmul.f32 %v1161, %v650
        %v1850 = vmul.f32 %v1165, %v651
        %v1851 = vmul.f32 %v1171, %v652
        %v1852 = vmul.f32 %v1175, %v653
        %v1853 = vmul.f32 %v1181, %v654
        %v1854 = vmul.f32 %v1185, %v655
        %v1855 = vmul.f32 %v1191, %v656
        %v1856 = vmul.f32 %v1195, %v657
        %v1857 = vmul.f32 %v1201, %v658
        %v1858 = vmul.f32 %v1205, %v659
        %v1859 = vmul.f32 %v1211, %v660
        %v1860 = vmul.f32 %v1215, %v661
        %v1861 = vmul.f32 %v1221, %v662
        %v1862 = vmul.f32 %v1225, %v663
        %v1863 = vmul.f32 %v1231, %v664
        %v1864 = vmul.f32 %v1235, %v665
        %1865 = vrot.lane.b32.xlu0 %v1161, 64
        %v1866 = vpop.permute.xlu0 %1865
        %1867 = vrot.lane.b32.xlu0 %v1165, 64
        %v1868 = vpop.permute.xlu0 %1867
        %1869 = vrot.lane.b32.xlu0 %v1171, 64
        %v1870 = vpop.permute.xlu0 %1869
        %1871 = vrot.lane.b32.xlu0 %v1175, 64
        %v1872 = vpop.permute.xlu0 %1871
        %1873 = vrot.lane.b32.xlu0 %v1181, 64
        %v1874 = vpop.permute.xlu0 %1873
        %1875 = vrot.lane.b32.xlu0 %v1185, 64
        %v1876 = vpop.permute.xlu0 %1875
        %1877 = vrot.lane.b32.xlu0 %v1191, 64
        %v1878 = vpop.permute.xlu0 %1877
        %1879 = vrot.lane.b32.xlu0 %v1195, 64
        %v1880 = vpop.permute.xlu0 %1879
        %1881 = vrot.lane.b32.xlu0 %v1201, 64
        %v1882 = vpop.permute.xlu0 %1881
        %1883 = vrot.lane.b32.xlu0 %v1205, 64
        %v1884 = vpop.permute.xlu0 %1883
        %1885 = vrot.lane.b32.xlu0 %v1211, 64
        %v1886 = vpop.permute.xlu0 %1885
        %1887 = vrot.lane.b32.xlu0 %v1215, 64
        %v1888 = vpop.permute.xlu0 %1887
        %1889 = vrot.lane.b32.xlu0 %v1221, 64
        %v1890 = vpop.permute.xlu0 %1889
        %1891 = vrot.lane.b32.xlu0 %v1225, 64
        %v1892 = vpop.permute.xlu0 %1891
        %1893 = vrot.lane.b32.xlu0 %v1231, 64
        %v1894 = vpop.permute.xlu0 %1893
        %1895 = vrot.lane.b32.xlu0 %v1235, 64
        %v1896 = vpop.permute.xlu0 %1895
        %v1897 = vmul.f32 %v1866, %v666
        %v1898 = vmul.f32 %v1868, %v667
        %v1899 = vmul.f32 %v1870, %v668
        %v1900 = vmul.f32 %v1872, %v669
        %v1901 = vmul.f32 %v1874, %v670
        %v1902 = vmul.f32 %v1876, %v671
        %v1903 = vmul.f32 %v1878, %v672
        %v1904 = vmul.f32 %v1880, %v673
        %v1905 = vmul.f32 %v1882, %v674
        %v1906 = vmul.f32 %v1884, %v675
        %v1907 = vmul.f32 %v1886, %v676
        %v1908 = vmul.f32 %v1888, %v677
        %v1909 = vmul.f32 %v1890, %v678
        %v1910 = vmul.f32 %v1892, %v679
        %v1911 = vmul.f32 %v1894, %v680
        %v1912 = vmul.f32 %v1896, %v681
        %v1913 = vadd.f32 %v1849, %v1897
        %v1914 = vadd.f32 %v1850, %v1898
        %v1915 = vadd.f32 %v1851, %v1899
        %v1916 = vadd.f32 %v1852, %v1900
        %v1917 = vadd.f32 %v1853, %v1901
        %v1918 = vadd.f32 %v1854, %v1902
        %v1919 = vadd.f32 %v1855, %v1903
        %v1920 = vadd.f32 %v1856, %v1904
        %v1921 = vadd.f32 %v1857, %v1905
        %v1922 = vadd.f32 %v1858, %v1906
        %v1923 = vadd.f32 %v1859, %v1907
        %v1924 = vadd.f32 %v1860, %v1908
        %v1925 = vadd.f32 %v1861, %v1909
        %v1926 = vadd.f32 %v1862, %v1910
        %v1927 = vadd.f32 %v1863, %v1911
        %v1928 = vadd.f32 %v1864, %v1912
        %v1929 = vmul.f32 %v1913, 0.088388346
        %v1930 = vmul.f32 %v1914, 0.088388346
        %v1931 = vmul.f32 %v1915, 0.088388346
        %v1932 = vmul.f32 %v1916, 0.088388346
        %v1933 = vmul.f32 %v1917, 0.088388346
        %v1934 = vmul.f32 %v1918, 0.088388346
        %v1935 = vmul.f32 %v1919, 0.088388346
        %v1936 = vmul.f32 %v1920, 0.088388346
        %v1937 = vmul.f32 %v1921, 0.088388346
        %v1938 = vmul.f32 %v1922, 0.088388346
        %v1939 = vmul.f32 %v1923, 0.088388346
        %v1940 = vmul.f32 %v1924, 0.088388346
        %v1941 = vmul.f32 %v1925, 0.088388346
        %v1942 = vmul.f32 %v1926, 0.088388346
        %v1943 = vmul.f32 %v1927, 0.088388346
        %v1944 = vmul.f32 %v1928, 0.088388346
        %v1945 = vpack.c.bf16 %v1930, %v1929
        %v1946 = vpack.c.bf16 %v1932, %v1931
        %v1947 = vpack.c.bf16 %v1934, %v1933
        %v1948 = vpack.c.bf16 %v1936, %v1935
        %v1949 = vpack.c.bf16 %v1938, %v1937
        %v1950 = vpack.c.bf16 %v1940, %v1939
        %v1951 = vpack.c.bf16 %v1942, %v1941
        %v1952 = vpack.c.bf16 %v1944, %v1943
        %v1953 = vmul.f32 %v1466, %v650
        %v1954 = vmul.f32 %v1470, %v651
        %v1955 = vmul.f32 %v1476, %v652
        %v1956 = vmul.f32 %v1480, %v653
        %v1957 = vmul.f32 %v1486, %v654
        %v1958 = vmul.f32 %v1490, %v655
        %v1959 = vmul.f32 %v1496, %v656
        %v1960 = vmul.f32 %v1500, %v657
        %v1961 = vmul.f32 %v1506, %v658
        %v1962 = vmul.f32 %v1510, %v659
        %v1963 = vmul.f32 %v1516, %v660
        %v1964 = vmul.f32 %v1520, %v661
        %v1965 = vmul.f32 %v1526, %v662
        %v1966 = vmul.f32 %v1530, %v663
        %v1967 = vmul.f32 %v1536, %v664
        %v1968 = vmul.f32 %v1540, %v665
        %1969 = vrot.lane.b32.xlu0 %v1466, 64
        %v1970 = vpop.permute.xlu0 %1969
        %1971 = vrot.lane.b32.xlu0 %v1470, 64
        %v1972 = vpop.permute.xlu0 %1971
        %1973 = vrot.lane.b32.xlu0 %v1476, 64
        %v1974 = vpop.permute.xlu0 %1973
        %1975 = vrot.lane.b32.xlu0 %v1480, 64
        %v1976 = vpop.permute.xlu0 %1975
        %1977 = vrot.lane.b32.xlu0 %v1486, 64
        %v1978 = vpop.permute.xlu0 %1977
        %1979 = vrot.lane.b32.xlu0 %v1490, 64
        %v1980 = vpop.permute.xlu0 %1979
        %1981 = vrot.lane.b32.xlu0 %v1496, 64
        %v1982 = vpop.permute.xlu0 %1981
        %1983 = vrot.lane.b32.xlu0 %v1500, 64
        %v1984 = vpop.permute.xlu0 %1983
        %1985 = vrot.lane.b32.xlu0 %v1506, 64
        %v1986 = vpop.permute.xlu0 %1985
        %1987 = vrot.lane.b32.xlu0 %v1510, 64
        %v1988 = vpop.permute.xlu0 %1987
        %1989 = vrot.lane.b32.xlu0 %v1516, 64
        %v1990 = vpop.permute.xlu0 %1989
        %1991 = vrot.lane.b32.xlu0 %v1520, 64
        %v1992 = vpop.permute.xlu0 %1991
        %1993 = vrot.lane.b32.xlu0 %v1526, 64
        %v1994 = vpop.permute.xlu0 %1993
        %1995 = vrot.lane.b32.xlu0 %v1530, 64
        %v1996 = vpop.permute.xlu0 %1995
        %1997 = vrot.lane.b32.xlu0 %v1536, 64
        %v1998 = vpop.permute.xlu0 %1997
        %1999 = vrot.lane.b32.xlu0 %v1540, 64
        %v2000 = vpop.permute.xlu0 %1999
        %v2001 = vmul.f32 %v1970, %v666
        %v2002 = vmul.f32 %v1972, %v667
        %v2003 = vmul.f32 %v1974, %v668
        %v2004 = vmul.f32 %v1976, %v669
        %v2005 = vmul.f32 %v1978, %v670
        %v2006 = vmul.f32 %v1980, %v671
        %v2007 = vmul.f32 %v1982, %v672
        %v2008 = vmul.f32 %v1984, %v673
        %v2009 = vmul.f32 %v1986, %v674
        %v2010 = vmul.f32 %v1988, %v675
        %v2011 = vmul.f32 %v1990, %v676
        %v2012 = vmul.f32 %v1992, %v677
        %v2013 = vmul.f32 %v1994, %v678
        %v2014 = vmul.f32 %v1996, %v679
        %v2015 = vmul.f32 %v1998, %v680
        %v2016 = vmul.f32 %v2000, %v681
        %v2017 = vadd.f32 %v1953, %v2001
        %v2018 = vadd.f32 %v1954, %v2002
        %v2019 = vadd.f32 %v1955, %v2003
        %v2020 = vadd.f32 %v1956, %v2004
        %v2021 = vadd.f32 %v1957, %v2005
        %v2022 = vadd.f32 %v1958, %v2006
        %v2023 = vadd.f32 %v1959, %v2007
        %v2024 = vadd.f32 %v1960, %v2008
        %v2025 = vadd.f32 %v1961, %v2009
        %v2026 = vadd.f32 %v1962, %v2010
        %v2027 = vadd.f32 %v1963, %v2011
        %v2028 = vadd.f32 %v1964, %v2012
        %v2029 = vadd.f32 %v1965, %v2013
        %v2030 = vadd.f32 %v1966, %v2014
        %v2031 = vadd.f32 %v1967, %v2015
        %v2032 = vadd.f32 %v1968, %v2016
        %v2033 = vpack.c.bf16 %v2018, %v2017
        %v2034 = vpack.c.bf16 %v2020, %v2019
        %v2035 = vpack.c.bf16 %v2022, %v2021
        %v2036 = vpack.c.bf16 %v2024, %v2023
        %v2037 = vpack.c.bf16 %v2026, %v2025
        %v2038 = vpack.c.bf16 %v2028, %v2027
        %v2039 = vpack.c.bf16 %v2030, %v2029
        %v2040 = vpack.c.bf16 %v2032, %v2031
        %v2049 = vunpack.c.l.b16 %v2033
        %v2050 = vunpack.c.h.b16 %v2033
        %v2051 = vunpack.c.l.b16 %v2034
        %v2052 = vunpack.c.h.b16 %v2034
        %v2053 = vunpack.c.l.b16 %v2035
        %v2054 = vunpack.c.h.b16 %v2035
        %v2055 = vunpack.c.l.b16 %v2036
        %v2056 = vunpack.c.h.b16 %v2036
        %v2057 = vunpack.c.l.b16 %v2037
        %v2058 = vunpack.c.h.b16 %v2037
        %v2059 = vunpack.c.l.b16 %v2038
        %v2060 = vunpack.c.h.b16 %v2038
        %v2061 = vunpack.c.l.b16 %v2039
        %v2062 = vunpack.c.h.b16 %v2039
        %v2063 = vunpack.c.l.b16 %v2040
        %v2064 = vunpack.c.h.b16 %v2040
        %v2065 = vpack.c.b16 %v2049, %v2049
        %v2066 = vpack.c.b16 %v2050, %v2050
        %v2067 = vpack.c.b16 %v2051, %v2051
        %v2068 = vpack.c.b16 %v2052, %v2052
        %v2069 = vpack.c.b16 %v2053, %v2053
        %v2070 = vpack.c.b16 %v2054, %v2054
        %v2071 = vpack.c.b16 %v2055, %v2055
        %v2072 = vpack.c.b16 %v2056, %v2056
        %v2073 = vpack.c.b16 %v2057, %v2057
        %v2074 = vpack.c.b16 %v2058, %v2058
        %v2075 = vpack.c.b16 %v2059, %v2059
        %v2076 = vpack.c.b16 %v2060, %v2060
        %v2077 = vpack.c.b16 %v2061, %v2061
        %v2078 = vpack.c.b16 %v2062, %v2062
        %v2079 = vpack.c.b16 %v2063, %v2063
        %v2080 = vpack.c.b16 %v2064, %v2064
        %s2097 = sshra.s32 %s647, 3
        %s2098 = sand.u32 %s647, 7
        %s2099 = smul.addr %s2097, 4
        %s2100 = scalar_lea.vmem [#allocation2], %s2099
        %2101 = vst [vmem:[%s2100] sm:$0xf] %v2065
        %2102 = vst [vmem:[%s2100 + $0x4] sm:$0xf] %v2066
        %2103 = vst [vmem:[%s2100 + $0x8] sm:$0xf] %v2067
        %2104 = vst [vmem:[%s2100 + $0xc] sm:$0xf] %v2068
        %2105 = vst [vmem:[%s2100 + $0x10] sm:$0xf] %v2069
        %2106 = vst [vmem:[%s2100 + $0x14] sm:$0xf] %v2070
        %2107 = vst [vmem:[%s2100 + $0x18] sm:$0xf] %v2071
        %2108 = vst [vmem:[%s2100 + $0x1c] sm:$0xf] %v2072
        %2109 = vst [vmem:[%s2100 + $0x20] sm:$0xf] %v2073
        %2110 = vst [vmem:[%s2100 + $0x24] sm:$0xf] %v2074
        %2111 = vst [vmem:[%s2100 + $0x28] sm:$0xf] %v2075
        %2112 = vst [vmem:[%s2100 + $0x2c] sm:$0xf] %v2076
        %2113 = vst [vmem:[%s2100 + $0x30] sm:$0xf] %v2077
        %2114 = vst [vmem:[%s2100 + $0x34] sm:$0xf] %v2078
        %2115 = vst [vmem:[%s2100 + $0x38] sm:$0xf] %v2079
        %2116 = vst [vmem:[%s2100 + $0x3c] sm:$0xf] %v2080
        %v2117 = vpack.c.bf16 %v1775, %v1771
        %v2118 = vpack.c.bf16 %v1785, %v1781
        %v2119 = vpack.c.bf16 %v1795, %v1791
        %v2120 = vpack.c.bf16 %v1805, %v1801
        %v2121 = vpack.c.bf16 %v1815, %v1811
        %v2122 = vpack.c.bf16 %v1825, %v1821
        %v2123 = vpack.c.bf16 %v1835, %v1831
        %v2124 = vpack.c.bf16 %v1845, %v1841
        %v2133 = vunpack.c.l.b16 %v2117
        %v2134 = vunpack.c.h.b16 %v2117
        %v2135 = vunpack.c.l.b16 %v2118
        %v2136 = vunpack.c.h.b16 %v2118
        %v2137 = vunpack.c.l.b16 %v2119
        %v2138 = vunpack.c.h.b16 %v2119
        %v2139 = vunpack.c.l.b16 %v2120
        %v2140 = vunpack.c.h.b16 %v2120
        %v2141 = vunpack.c.l.b16 %v2121
        %v2142 = vunpack.c.h.b16 %v2121
        %v2143 = vunpack.c.l.b16 %v2122
        %v2144 = vunpack.c.h.b16 %v2122
        %v2145 = vunpack.c.l.b16 %v2123
        %v2146 = vunpack.c.h.b16 %v2123
        %v2147 = vunpack.c.l.b16 %v2124
        %v2148 = vunpack.c.h.b16 %v2124
        %v2149 = vpack.c.b16 %v2133, %v2133
        %v2150 = vpack.c.b16 %v2134, %v2134
        %v2151 = vpack.c.b16 %v2135, %v2135
        %v2152 = vpack.c.b16 %v2136, %v2136
        %v2153 = vpack.c.b16 %v2137, %v2137
        %v2154 = vpack.c.b16 %v2138, %v2138
        %v2155 = vpack.c.b16 %v2139, %v2139
        %v2156 = vpack.c.b16 %v2140, %v2140
        %v2157 = vpack.c.b16 %v2141, %v2141
        %v2158 = vpack.c.b16 %v2142, %v2142
        %v2159 = vpack.c.b16 %v2143, %v2143
        %v2160 = vpack.c.b16 %v2144, %v2144
        %v2161 = vpack.c.b16 %v2145, %v2145
        %v2162 = vpack.c.b16 %v2146, %v2146
        %v2163 = vpack.c.b16 %v2147, %v2147
        %v2164 = vpack.c.b16 %v2148, %v2148
        %s2181 = smul.addr %s2097, 4
        %s2182 = scalar_lea.vmem [#allocation3], %s2181
        %2183 = vst [vmem:[%s2182] sm:$0xf] %v2149
        %2184 = vst [vmem:[%s2182 + $0x4] sm:$0xf] %v2150
        %2185 = vst [vmem:[%s2182 + $0x8] sm:$0xf] %v2151
        %2186 = vst [vmem:[%s2182 + $0xc] sm:$0xf] %v2152
        %2187 = vst [vmem:[%s2182 + $0x10] sm:$0xf] %v2153
        %2188 = vst [vmem:[%s2182 + $0x14] sm:$0xf] %v2154
        %2189 = vst [vmem:[%s2182 + $0x18] sm:$0xf] %v2155
        %2190 = vst [vmem:[%s2182 + $0x1c] sm:$0xf] %v2156
        %2191 = vst [vmem:[%s2182 + $0x20] sm:$0xf] %v2157
        %2192 = vst [vmem:[%s2182 + $0x24] sm:$0xf] %v2158
        %2193 = vst [vmem:[%s2182 + $0x28] sm:$0xf] %v2159
        %2194 = vst [vmem:[%s2182 + $0x2c] sm:$0xf] %v2160
        %2195 = vst [vmem:[%s2182 + $0x30] sm:$0xf] %v2161
        %2196 = vst [vmem:[%s2182 + $0x34] sm:$0xf] %v2162
        %2197 = vst [vmem:[%s2182 + $0x38] sm:$0xf] %v2163
        %2198 = vst [vmem:[%s2182 + $0x3c] sm:$0xf] %v2164
        %v2199 = vmul.f32 %v1163, %v650
        %v2200 = vmul.f32 %v1167, %v651
        %v2201 = vmul.f32 %v1173, %v652
        %v2202 = vmul.f32 %v1177, %v653
        %v2203 = vmul.f32 %v1183, %v654
        %v2204 = vmul.f32 %v1187, %v655
        %v2205 = vmul.f32 %v1193, %v656
        %v2206 = vmul.f32 %v1197, %v657
        %v2207 = vmul.f32 %v1203, %v658
        %v2208 = vmul.f32 %v1207, %v659
        %v2209 = vmul.f32 %v1213, %v660
        %v2210 = vmul.f32 %v1217, %v661
        %v2211 = vmul.f32 %v1223, %v662
        %v2212 = vmul.f32 %v1227, %v663
        %v2213 = vmul.f32 %v1233, %v664
        %v2214 = vmul.f32 %v1237, %v665
        %2215 = vrot.lane.b32.xlu0 %v1163, 64
        %v2216 = vpop.permute.xlu0 %2215
        %2217 = vrot.lane.b32.xlu0 %v1167, 64
        %v2218 = vpop.permute.xlu0 %2217
        %2219 = vrot.lane.b32.xlu0 %v1173, 64
        %v2220 = vpop.permute.xlu0 %2219
        %2221 = vrot.lane.b32.xlu0 %v1177, 64
        %v2222 = vpop.permute.xlu0 %2221
        %2223 = vrot.lane.b32.xlu0 %v1183, 64
        %v2224 = vpop.permute.xlu0 %2223
        %2225 = vrot.lane.b32.xlu0 %v1187, 64
        %v2226 = vpop.permute.xlu0 %2225
        %2227 = vrot.lane.b32.xlu0 %v1193, 64
        %v2228 = vpop.permute.xlu0 %2227
        %2229 = vrot.lane.b32.xlu0 %v1197, 64
        %v2230 = vpop.permute.xlu0 %2229
        %2231 = vrot.lane.b32.xlu0 %v1203, 64
        %v2232 = vpop.permute.xlu0 %2231
        %2233 = vrot.lane.b32.xlu0 %v1207, 64
        %v2234 = vpop.permute.xlu0 %2233
        %2235 = vrot.lane.b32.xlu0 %v1213, 64
        %v2236 = vpop.permute.xlu0 %2235
        %2237 = vrot.lane.b32.xlu0 %v1217, 64
        %v2238 = vpop.permute.xlu0 %2237
        %2239 = vrot.lane.b32.xlu0 %v1223, 64
        %v2240 = vpop.permute.xlu0 %2239
        %2241 = vrot.lane.b32.xlu0 %v1227, 64
        %v2242 = vpop.permute.xlu0 %2241
        %2243 = vrot.lane.b32.xlu0 %v1233, 64
        %v2244 = vpop.permute.xlu0 %2243
        %2245 = vrot.lane.b32.xlu0 %v1237, 64
        %v2246 = vpop.permute.xlu0 %2245
        %v2247 = vmul.f32 %v2216, %v666
        %v2248 = vmul.f32 %v2218, %v667
        %v2249 = vmul.f32 %v2220, %v668
        %v2250 = vmul.f32 %v2222, %v669
        %v2251 = vmul.f32 %v2224, %v670
        %v2252 = vmul.f32 %v2226, %v671
        %v2253 = vmul.f32 %v2228, %v672
        %v2254 = vmul.f32 %v2230, %v673
        %v2255 = vmul.f32 %v2232, %v674
        %v2256 = vmul.f32 %v2234, %v675
        %v2257 = vmul.f32 %v2236, %v676
        %v2258 = vmul.f32 %v2238, %v677
        %v2259 = vmul.f32 %v2240, %v678
        %v2260 = vmul.f32 %v2242, %v679
        %v2261 = vmul.f32 %v2244, %v680
        %v2262 = vmul.f32 %v2246, %v681
        %v2263 = vadd.f32 %v2199, %v2247
        %v2264 = vadd.f32 %v2200, %v2248
        %v2265 = vadd.f32 %v2201, %v2249
        %v2266 = vadd.f32 %v2202, %v2250
        %v2267 = vadd.f32 %v2203, %v2251
        %v2268 = vadd.f32 %v2204, %v2252
        %v2269 = vadd.f32 %v2205, %v2253
        %v2270 = vadd.f32 %v2206, %v2254
        %v2271 = vadd.f32 %v2207, %v2255
        %v2272 = vadd.f32 %v2208, %v2256
        %v2273 = vadd.f32 %v2209, %v2257
        %v2274 = vadd.f32 %v2210, %v2258
        %v2275 = vadd.f32 %v2211, %v2259
        %v2276 = vadd.f32 %v2212, %v2260
        %v2277 = vadd.f32 %v2213, %v2261
        %v2278 = vadd.f32 %v2214, %v2262
        %v2279 = vmul.f32 %v2263, 0.088388346
        %v2280 = vmul.f32 %v2264, 0.088388346
        %v2281 = vmul.f32 %v2265, 0.088388346
        %v2282 = vmul.f32 %v2266, 0.088388346
        %v2283 = vmul.f32 %v2267, 0.088388346
        %v2284 = vmul.f32 %v2268, 0.088388346
        %v2285 = vmul.f32 %v2269, 0.088388346
        %v2286 = vmul.f32 %v2270, 0.088388346
        %v2287 = vmul.f32 %v2271, 0.088388346
        %v2288 = vmul.f32 %v2272, 0.088388346
        %v2289 = vmul.f32 %v2273, 0.088388346
        %v2290 = vmul.f32 %v2274, 0.088388346
        %v2291 = vmul.f32 %v2275, 0.088388346
        %v2292 = vmul.f32 %v2276, 0.088388346
        %v2293 = vmul.f32 %v2277, 0.088388346
        %v2294 = vmul.f32 %v2278, 0.088388346
        %v2295 = vpack.c.bf16 %v2280, %v2279
        %v2296 = vpack.c.bf16 %v2282, %v2281
        %v2297 = vpack.c.bf16 %v2284, %v2283
        %v2298 = vpack.c.bf16 %v2286, %v2285
        %v2299 = vpack.c.bf16 %v2288, %v2287
        %v2300 = vpack.c.bf16 %v2290, %v2289
        %v2301 = vpack.c.bf16 %v2292, %v2291
        %v2302 = vpack.c.bf16 %v2294, %v2293
        %v2303 = vmul.f32 %v1468, %v650
        %v2304 = vmul.f32 %v1472, %v651
        %v2305 = vmul.f32 %v1478, %v652
        %v2306 = vmul.f32 %v1482, %v653
        %v2307 = vmul.f32 %v1488, %v654
        %v2308 = vmul.f32 %v1492, %v655
        %v2309 = vmul.f32 %v1498, %v656
        %v2310 = vmul.f32 %v1502, %v657
        %v2311 = vmul.f32 %v1508, %v658
        %v2312 = vmul.f32 %v1512, %v659
        %v2313 = vmul.f32 %v1518, %v660
        %v2314 = vmul.f32 %v1522, %v661
        %v2315 = vmul.f32 %v1528, %v662
        %v2316 = vmul.f32 %v1532, %v663
        %v2317 = vmul.f32 %v1538, %v664
        %v2318 = vmul.f32 %v1542, %v665
        %2319 = vrot.lane.b32.xlu0 %v1468, 64
        %v2320 = vpop.permute.xlu0 %2319
        %2321 = vrot.lane.b32.xlu0 %v1472, 64
        %v2322 = vpop.permute.xlu0 %2321
        %2323 = vrot.lane.b32.xlu0 %v1478, 64
        %v2324 = vpop.permute.xlu0 %2323
        %2325 = vrot.lane.b32.xlu0 %v1482, 64
        %v2326 = vpop.permute.xlu0 %2325
        %2327 = vrot.lane.b32.xlu0 %v1488, 64
        %v2328 = vpop.permute.xlu0 %2327
        %2329 = vrot.lane.b32.xlu0 %v1492, 64
        %v2330 = vpop.permute.xlu0 %2329
        %2331 = vrot.lane.b32.xlu0 %v1498, 64
        %v2332 = vpop.permute.xlu0 %2331
        %2333 = vrot.lane.b32.xlu0 %v1502, 64
        %v2334 = vpop.permute.xlu0 %2333
        %2335 = vrot.lane.b32.xlu0 %v1508, 64
        %v2336 = vpop.permute.xlu0 %2335
        %2337 = vrot.lane.b32.xlu0 %v1512, 64
        %v2338 = vpop.permute.xlu0 %2337
        %2339 = vrot.lane.b32.xlu0 %v1518, 64
        %v2340 = vpop.permute.xlu0 %2339
        %2341 = vrot.lane.b32.xlu0 %v1522, 64
        %v2342 = vpop.permute.xlu0 %2341
        %2343 = vrot.lane.b32.xlu0 %v1528, 64
        %v2344 = vpop.permute.xlu0 %2343
        %2345 = vrot.lane.b32.xlu0 %v1532, 64
        %v2346 = vpop.permute.xlu0 %2345
        %2347 = vrot.lane.b32.xlu0 %v1538, 64
        %v2348 = vpop.permute.xlu0 %2347
        %2349 = vrot.lane.b32.xlu0 %v1542, 64
        %v2350 = vpop.permute.xlu0 %2349
        %v2351 = vmul.f32 %v2320, %v666
        %v2352 = vmul.f32 %v2322, %v667
        %v2353 = vmul.f32 %v2324, %v668
        %v2354 = vmul.f32 %v2326, %v669
        %v2355 = vmul.f32 %v2328, %v670
        %v2356 = vmul.f32 %v2330, %v671
        %v2357 = vmul.f32 %v2332, %v672
        %v2358 = vmul.f32 %v2334, %v673
        %v2359 = vmul.f32 %v2336, %v674
        %v2360 = vmul.f32 %v2338, %v675
        %v2361 = vmul.f32 %v2340, %v676
        %v2362 = vmul.f32 %v2342, %v677
        %v2363 = vmul.f32 %v2344, %v678
        %v2364 = vmul.f32 %v2346, %v679
        %v2365 = vmul.f32 %v2348, %v680
        %v2366 = vmul.f32 %v2350, %v681
        %v2367 = vadd.f32 %v2303, %v2351
        %v2368 = vadd.f32 %v2304, %v2352
        %v2369 = vadd.f32 %v2305, %v2353
        %v2370 = vadd.f32 %v2306, %v2354
        %v2371 = vadd.f32 %v2307, %v2355
        %v2372 = vadd.f32 %v2308, %v2356
        %v2373 = vadd.f32 %v2309, %v2357
        %v2374 = vadd.f32 %v2310, %v2358
        %v2375 = vadd.f32 %v2311, %v2359
        %v2376 = vadd.f32 %v2312, %v2360
        %v2377 = vadd.f32 %v2313, %v2361
        %v2378 = vadd.f32 %v2314, %v2362
        %v2379 = vadd.f32 %v2315, %v2363
        %v2380 = vadd.f32 %v2316, %v2364
        %v2381 = vadd.f32 %v2317, %v2365
        %v2382 = vadd.f32 %v2318, %v2366
        %v2383 = vpack.c.bf16 %v2368, %v2367
        %v2384 = vpack.c.bf16 %v2370, %v2369
        %v2385 = vpack.c.bf16 %v2372, %v2371
        %v2386 = vpack.c.bf16 %v2374, %v2373
        %v2387 = vpack.c.bf16 %v2376, %v2375
        %v2388 = vpack.c.bf16 %v2378, %v2377
        %v2389 = vpack.c.bf16 %v2380, %v2379
        %v2390 = vpack.c.bf16 %v2382, %v2381
        %v2399 = vunpack.c.l.b16 %v2383
        %v2400 = vunpack.c.h.b16 %v2383
        %v2401 = vunpack.c.l.b16 %v2384
        %v2402 = vunpack.c.h.b16 %v2384
        %v2403 = vunpack.c.l.b16 %v2385
        %v2404 = vunpack.c.h.b16 %v2385
        %v2405 = vunpack.c.l.b16 %v2386
        %v2406 = vunpack.c.h.b16 %v2386
        %v2407 = vunpack.c.l.b16 %v2387
        %v2408 = vunpack.c.h.b16 %v2387
        %v2409 = vunpack.c.l.b16 %v2388
        %v2410 = vunpack.c.h.b16 %v2388
        %v2411 = vunpack.c.l.b16 %v2389
        %v2412 = vunpack.c.h.b16 %v2389
        %v2413 = vunpack.c.l.b16 %v2390
        %v2414 = vunpack.c.h.b16 %v2390
        %v2415 = vpack.c.b16 %v2399, %v2399
        %v2416 = vpack.c.b16 %v2400, %v2400
        %v2417 = vpack.c.b16 %v2401, %v2401
        %v2418 = vpack.c.b16 %v2402, %v2402
        %v2419 = vpack.c.b16 %v2403, %v2403
        %v2420 = vpack.c.b16 %v2404, %v2404
        %v2421 = vpack.c.b16 %v2405, %v2405
        %v2422 = vpack.c.b16 %v2406, %v2406
        %v2423 = vpack.c.b16 %v2407, %v2407
        %v2424 = vpack.c.b16 %v2408, %v2408
        %v2425 = vpack.c.b16 %v2409, %v2409
        %v2426 = vpack.c.b16 %v2410, %v2410
        %v2427 = vpack.c.b16 %v2411, %v2411
        %v2428 = vpack.c.b16 %v2412, %v2412
        %v2429 = vpack.c.b16 %v2413, %v2413
        %v2430 = vpack.c.b16 %v2414, %v2414
        %s2447 = sadd.s32 %s2097, 32
        %s2448 = smul.addr %s2447, 4
        %s2449 = scalar_lea.vmem [#allocation2], %s2448
        %2450 = vst [vmem:[%s2449] sm:$0xf] %v2415
        %2451 = vst [vmem:[%s2449 + $0x4] sm:$0xf] %v2416
        %2452 = vst [vmem:[%s2449 + $0x8] sm:$0xf] %v2417
        %2453 = vst [vmem:[%s2449 + $0xc] sm:$0xf] %v2418
        %2454 = vst [vmem:[%s2449 + $0x10] sm:$0xf] %v2419
        %2455 = vst [vmem:[%s2449 + $0x14] sm:$0xf] %v2420
        %2456 = vst [vmem:[%s2449 + $0x18] sm:$0xf] %v2421
        %2457 = vst [vmem:[%s2449 + $0x1c] sm:$0xf] %v2422
        %2458 = vst [vmem:[%s2449 + $0x20] sm:$0xf] %v2423
        %2459 = vst [vmem:[%s2449 + $0x24] sm:$0xf] %v2424
        %2460 = vst [vmem:[%s2449 + $0x28] sm:$0xf] %v2425
        %2461 = vst [vmem:[%s2449 + $0x2c] sm:$0xf] %v2426
        %2462 = vst [vmem:[%s2449 + $0x30] sm:$0xf] %v2427
        %2463 = vst [vmem:[%s2449 + $0x34] sm:$0xf] %v2428
        %2464 = vst [vmem:[%s2449 + $0x38] sm:$0xf] %v2429
        %2465 = vst [vmem:[%s2449 + $0x3c] sm:$0xf] %v2430
        %v2466 = vpack.c.bf16 %v1777, %v1773
        %v2467 = vpack.c.bf16 %v1787, %v1783
        %v2468 = vpack.c.bf16 %v1797, %v1793
        %v2469 = vpack.c.bf16 %v1807, %v1803
        %v2470 = vpack.c.bf16 %v1817, %v1813
        %v2471 = vpack.c.bf16 %v1827, %v1823
        %v2472 = vpack.c.bf16 %v1837, %v1833
        %v2473 = vpack.c.bf16 %v1847, %v1843
        %v2482 = vunpack.c.l.b16 %v2466
        %v2483 = vunpack.c.h.b16 %v2466
        %v2484 = vunpack.c.l.b16 %v2467
        %v2485 = vunpack.c.h.b16 %v2467
        %v2486 = vunpack.c.l.b16 %v2468
        %v2487 = vunpack.c.h.b16 %v2468
        %v2488 = vunpack.c.l.b16 %v2469
        %v2489 = vunpack.c.h.b16 %v2469
        %v2490 = vunpack.c.l.b16 %v2470
        %v2491 = vunpack.c.h.b16 %v2470
        %v2492 = vunpack.c.l.b16 %v2471
        %v2493 = vunpack.c.h.b16 %v2471
        %v2494 = vunpack.c.l.b16 %v2472
        %v2495 = vunpack.c.h.b16 %v2472
        %v2496 = vunpack.c.l.b16 %v2473
        %v2497 = vunpack.c.h.b16 %v2473
        %v2498 = vpack.c.b16 %v2482, %v2482
        %v2499 = vpack.c.b16 %v2483, %v2483
        %v2500 = vpack.c.b16 %v2484, %v2484
        %v2501 = vpack.c.b16 %v2485, %v2485
        %v2502 = vpack.c.b16 %v2486, %v2486
        %v2503 = vpack.c.b16 %v2487, %v2487
        %v2504 = vpack.c.b16 %v2488, %v2488
        %v2505 = vpack.c.b16 %v2489, %v2489
        %v2506 = vpack.c.b16 %v2490, %v2490
        %v2507 = vpack.c.b16 %v2491, %v2491
        %v2508 = vpack.c.b16 %v2492, %v2492
        %v2509 = vpack.c.b16 %v2493, %v2493
        %v2510 = vpack.c.b16 %v2494, %v2494
        %v2511 = vpack.c.b16 %v2495, %v2495
        %v2512 = vpack.c.b16 %v2496, %v2496
        %v2513 = vpack.c.b16 %v2497, %v2497
        %s2530 = smul.addr %s2447, 4
        %s2531 = scalar_lea.vmem [#allocation3], %s2530
        %2532 = vst [vmem:[%s2531] sm:$0xf] %v2498
        %2533 = vst [vmem:[%s2531 + $0x4] sm:$0xf] %v2499
        %2534 = vst [vmem:[%s2531 + $0x8] sm:$0xf] %v2500
        %2535 = vst [vmem:[%s2531 + $0xc] sm:$0xf] %v2501
        %2536 = vst [vmem:[%s2531 + $0x10] sm:$0xf] %v2502
        %2537 = vst [vmem:[%s2531 + $0x14] sm:$0xf] %v2503
        %2538 = vst [vmem:[%s2531 + $0x18] sm:$0xf] %v2504
        %2539 = vst [vmem:[%s2531 + $0x1c] sm:$0xf] %v2505
        %2540 = vst [vmem:[%s2531 + $0x20] sm:$0xf] %v2506
        %2541 = vst [vmem:[%s2531 + $0x24] sm:$0xf] %v2507
        %2542 = vst [vmem:[%s2531 + $0x28] sm:$0xf] %v2508
        %2543 = vst [vmem:[%s2531 + $0x2c] sm:$0xf] %v2509
        %2544 = vst [vmem:[%s2531 + $0x30] sm:$0xf] %v2510
        %2545 = vst [vmem:[%s2531 + $0x34] sm:$0xf] %v2511
        %2546 = vst [vmem:[%s2531 + $0x38] sm:$0xf] %v2512
        %2547 = vst [vmem:[%s2531 + $0x3c] sm:$0xf] %v2513
        // While loop
        $region113: #{tpu_custom_call.1} parent=67 // loop_pre_header
          _
        $region114: #{tpu_custom_call.1} parent=67 // loop_header
          %s2549 = sphi 0, %s2551
          %p2550 = scmp.ge.s32.totalorder %s2549, %s41
          %v2554 = vphi -1e+30, %v3075
          %v2555 = vphi -1e+30, %v3076
          %v2556 = vphi -1e+30, %v3077
          %v2557 = vphi -1e+30, %v3078
          %v2558 = vphi -1e+30, %v3079
          %v2559 = vphi -1e+30, %v3080
          %v2560 = vphi -1e+30, %v3081
          %v2561 = vphi -1e+30, %v3082
          %v2562 = vphi -1e+30, %v3083
          %v2563 = vphi -1e+30, %v3084
          %v2564 = vphi -1e+30, %v3085
          %v2565 = vphi -1e+30, %v3086
          %v2566 = vphi -1e+30, %v3087
          %v2567 = vphi -1e+30, %v3088
          %v2568 = vphi -1e+30, %v3089
          %v2569 = vphi -1e+30, %v3090
          %v2570 = vphi -1e+30, %v3091
          %v2571 = vphi -1e+30, %v3092
          %v2572 = vphi -1e+30, %v3093
          %v2573 = vphi -1e+30, %v3094
          %v2574 = vphi -1e+30, %v3095
          %v2575 = vphi -1e+30, %v3096
          %v2576 = vphi -1e+30, %v3097
          %v2577 = vphi -1e+30, %v3098
          %v2578 = vphi -1e+30, %v3099
          %v2579 = vphi -1e+30, %v3100
          %v2580 = vphi -1e+30, %v3101
          %v2581 = vphi -1e+30, %v3102
          %v2582 = vphi -1e+30, %v3103
          %v2583 = vphi -1e+30, %v3104
          %v2584 = vphi -1e+30, %v3105
          %v2585 = vphi -1e+30, %v3106
          %v2586 = vphi 0.0, %v3395
          %v2587 = vphi 0.0, %v3396
          %v2588 = vphi 0.0, %v3397
          %v2589 = vphi 0.0, %v3398
          %v2590 = vphi 0.0, %v3399
          %v2591 = vphi 0.0, %v3400
          %v2592 = vphi 0.0, %v3401
          %v2593 = vphi 0.0, %v3402
          %v2594 = vphi 0.0, %v3403
          %v2595 = vphi 0.0, %v3404
          %v2596 = vphi 0.0, %v3405
          %v2597 = vphi 0.0, %v3406
          %v2598 = vphi 0.0, %v3407
          %v2599 = vphi 0.0, %v3408
          %v2600 = vphi 0.0, %v3409
          %v2601 = vphi 0.0, %v3410
          %v2602 = vphi 0.0, %v3411
          %v2603 = vphi 0.0, %v3412
          %v2604 = vphi 0.0, %v3413
          %v2605 = vphi 0.0, %v3414
          %v2606 = vphi 0.0, %v3415
          %v2607 = vphi 0.0, %v3416
          %v2608 = vphi 0.0, %v3417
          %v2609 = vphi 0.0, %v3418
          %v2610 = vphi 0.0, %v3419
          %v2611 = vphi 0.0, %v3420
          %v2612 = vphi 0.0, %v3421
          %v2613 = vphi 0.0, %v3422
          %v2614 = vphi 0.0, %v3423
          %v2615 = vphi 0.0, %v3424
          %v2616 = vphi 0.0, %v3425
          %v2617 = vphi 0.0, %v3426
          %v2618 = vphi 0.0, %v3765
          %v2619 = vphi 0.0, %v3766
          %v2620 = vphi 0.0, %v3767
          %v2621 = vphi 0.0, %v3768
          %v2622 = vphi 0.0, %v3769
          %v2623 = vphi 0.0, %v3770
          %v2624 = vphi 0.0, %v3771
          %v2625 = vphi 0.0, %v3772
          %v2626 = vphi 0.0, %v3773
          %v2627 = vphi 0.0, %v3774
          %v2628 = vphi 0.0, %v3775
          %v2629 = vphi 0.0, %v3776
          %v2630 = vphi 0.0, %v3777
          %v2631 = vphi 0.0, %v3778
          %v2632 = vphi 0.0, %v3779
          %v2633 = vphi 0.0, %v3780
          %v2634 = vphi 0.0, %v3781
          %v2635 = vphi 0.0, %v3782
          %v2636 = vphi 0.0, %v3783
          %v2637 = vphi 0.0, %v3784
          %v2638 = vphi 0.0, %v3785
          %v2639 = vphi 0.0, %v3786
          %v2640 = vphi 0.0, %v3787
          %v2641 = vphi 0.0, %v3788
          %v2642 = vphi 0.0, %v3789
          %v2643 = vphi 0.0, %v3790
          %v2644 = vphi 0.0, %v3791
          %v2645 = vphi 0.0, %v3792
          %v2646 = vphi 0.0, %v3793
          %v2647 = vphi 0.0, %v3794
          %v2648 = vphi 0.0, %v3795
          %v2649 = vphi 0.0, %v3796
        $region115: #{tpu_custom_call.1} parent=67 // loop_header_branch
          %2553 = sbr.rel (%p2550) target = $region119
        $region116: #{tpu_custom_call.1} parent=67 // loop_body
          %s2650 = smul.u32 %s2549, 128
          %s2651 = sshra.s32 %s2650, 3
          %s2652 = sand.u32 %s2650, 7
          %s2653 = smul.addr %s2651, 4
          %s2654 = scalar_lea.vmem [#allocation2], %s2653
          %v2655 = vld [vmem:[%s2654] sm:$0xf]
          %v2656 = vld [vmem:[%s2654 + $0x4] sm:$0xf]
          %v2657 = vld [vmem:[%s2654 + $0x8] sm:$0xf]
          %v2658 = vld [vmem:[%s2654 + $0xc] sm:$0xf]
          %v2659 = vld [vmem:[%s2654 + $0x10] sm:$0xf]
          %v2660 = vld [vmem:[%s2654 + $0x14] sm:$0xf]
          %v2661 = vld [vmem:[%s2654 + $0x18] sm:$0xf]
          %v2662 = vld [vmem:[%s2654 + $0x1c] sm:$0xf]
          %v2663 = vld [vmem:[%s2654 + $0x20] sm:$0xf]
          %v2664 = vld [vmem:[%s2654 + $0x24] sm:$0xf]
          %v2665 = vld [vmem:[%s2654 + $0x28] sm:$0xf]
          %v2666 = vld [vmem:[%s2654 + $0x2c] sm:$0xf]
          %v2667 = vld [vmem:[%s2654 + $0x30] sm:$0xf]
          %v2668 = vld [vmem:[%s2654 + $0x34] sm:$0xf]
          %v2669 = vld [vmem:[%s2654 + $0x38] sm:$0xf]
          %v2670 = vld [vmem:[%s2654 + $0x3c] sm:$0xf]
          %v2671 = vld [vmem:[%s2654 + $0x80] sm:$0xf]
          %v2672 = vld [vmem:[%s2654 + $0x84] sm:$0xf]
          %v2673 = vld [vmem:[%s2654 + $0x88] sm:$0xf]
          %v2674 = vld [vmem:[%s2654 + $0x8c] sm:$0xf]
          %v2675 = vld [vmem:[%s2654 + $0x90] sm:$0xf]
          %v2676 = vld [vmem:[%s2654 + $0x94] sm:$0xf]
          %v2677 = vld [vmem:[%s2654 + $0x98] sm:$0xf]
          %v2678 = vld [vmem:[%s2654 + $0x9c] sm:$0xf]
          %v2679 = vld [vmem:[%s2654 + $0xa0] sm:$0xf]
          %v2680 = vld [vmem:[%s2654 + $0xa4] sm:$0xf]
          %v2681 = vld [vmem:[%s2654 + $0xa8] sm:$0xf]
          %v2682 = vld [vmem:[%s2654 + $0xac] sm:$0xf]
          %v2683 = vld [vmem:[%s2654 + $0xb0] sm:$0xf]
          %v2684 = vld [vmem:[%s2654 + $0xb4] sm:$0xf]
          %v2685 = vld [vmem:[%s2654 + $0xb8] sm:$0xf]
          %v2686 = vld [vmem:[%s2654 + $0xbc] sm:$0xf]
          %s2687 = smul.addr %s2651, 4
          %s2688 = scalar_lea.vmem [#allocation3], %s2687
          %v2689 = vld [vmem:[%s2688] sm:$0xf]
          %v2690 = vld [vmem:[%s2688 + $0x4] sm:$0xf]
          %v2691 = vld [vmem:[%s2688 + $0x8] sm:$0xf]
          %v2692 = vld [vmem:[%s2688 + $0xc] sm:$0xf]
          %v2693 = vld [vmem:[%s2688 + $0x10] sm:$0xf]
          %v2694 = vld [vmem:[%s2688 + $0x14] sm:$0xf]
          %v2695 = vld [vmem:[%s2688 + $0x18] sm:$0xf]
          %v2696 = vld [vmem:[%s2688 + $0x1c] sm:$0xf]
          %v2697 = vld [vmem:[%s2688 + $0x20] sm:$0xf]
          %v2698 = vld [vmem:[%s2688 + $0x24] sm:$0xf]
          %v2699 = vld [vmem:[%s2688 + $0x28] sm:$0xf]
          %v2700 = vld [vmem:[%s2688 + $0x2c] sm:$0xf]
          %v2701 = vld [vmem:[%s2688 + $0x30] sm:$0xf]
          %v2702 = vld [vmem:[%s2688 + $0x34] sm:$0xf]
          %v2703 = vld [vmem:[%s2688 + $0x38] sm:$0xf]
          %v2704 = vld [vmem:[%s2688 + $0x3c] sm:$0xf]
          %v2705 = vld [vmem:[%s2688 + $0x80] sm:$0xf]
          %v2706 = vld [vmem:[%s2688 + $0x84] sm:$0xf]
          %v2707 = vld [vmem:[%s2688 + $0x88] sm:$0xf]
          %v2708 = vld [vmem:[%s2688 + $0x8c] sm:$0xf]
          %v2709 = vld [vmem:[%s2688 + $0x90] sm:$0xf]
          %v2710 = vld [vmem:[%s2688 + $0x94] sm:$0xf]
          %v2711 = vld [vmem:[%s2688 + $0x98] sm:$0xf]
          %v2712 = vld [vmem:[%s2688 + $0x9c] sm:$0xf]
          %v2713 = vld [vmem:[%s2688 + $0xa0] sm:$0xf]
          %v2714 = vld [vmem:[%s2688 + $0xa4] sm:$0xf]
          %v2715 = vld [vmem:[%s2688 + $0xa8] sm:$0xf]
          %v2716 = vld [vmem:[%s2688 + $0xac] sm:$0xf]
          %v2717 = vld [vmem:[%s2688 + $0xb0] sm:$0xf]
          %v2718 = vld [vmem:[%s2688 + $0xb4] sm:$0xf]
          %v2719 = vld [vmem:[%s2688 + $0xb8] sm:$0xf]
          %v2720 = vld [vmem:[%s2688 + $0xbc] sm:$0xf]
          %v2737 = vunpack.c.l.b16 %v2655
          %v2738 = vunpack.c.l.b16 %v2656
          %v2739 = vunpack.c.l.b16 %v2657
          %v2740 = vunpack.c.l.b16 %v2658
          %v2741 = vunpack.c.l.b16 %v2659
          %v2742 = vunpack.c.l.b16 %v2660
          %v2743 = vunpack.c.l.b16 %v2661
          %v2744 = vunpack.c.l.b16 %v2662
          %v2745 = vunpack.c.l.b16 %v2663
          %v2746 = vunpack.c.l.b16 %v2664
          %v2747 = vunpack.c.l.b16 %v2665
          %v2748 = vunpack.c.l.b16 %v2666
          %v2749 = vunpack.c.l.b16 %v2667
          %v2750 = vunpack.c.l.b16 %v2668
          %v2751 = vunpack.c.l.b16 %v2669
          %v2752 = vunpack.c.l.b16 %v2670
          %v2753 = vpack.c.b16 %v2738, %v2737
          %v2754 = vpack.c.b16 %v2740, %v2739
          %v2755 = vpack.c.b16 %v2742, %v2741
          %v2756 = vpack.c.b16 %v2744, %v2743
          %v2757 = vpack.c.b16 %v2746, %v2745
          %v2758 = vpack.c.b16 %v2748, %v2747
          %v2759 = vpack.c.b16 %v2750, %v2749
          %v2760 = vpack.c.b16 %v2752, %v2751
          %2769 = vmatprep.subr.bf16.mxu0 0
          %2770 = vmatpush1.bf16.xpose.msra.mxu0 %v2760
          %2771 = vmatprep.subr.bf16.mxu0 0
          %2772 = vmatpush1.bf16.xpose.msra.mxu0 %v2759
          %2773 = vmatprep.subr.bf16.mxu0 0
          %2774 = vmatpush1.bf16.xpose.msra.mxu0 %v2758
          %2775 = vmatprep.subr.bf16.mxu0 0
          %2776 = vmatpush1.bf16.xpose.msra.mxu0 %v2757
          %2777 = vmatprep.subr.bf16.mxu0 0
          %2778 = vmatpush1.bf16.xpose.msra.mxu0 %v2756
          %2779 = vmatprep.subr.bf16.mxu0 0
          %2780 = vmatpush1.bf16.xpose.msra.mxu0 %v2755
          %2781 = vmatprep.subr.bf16.mxu0 0
          %2782 = vmatpush1.bf16.xpose.msra.mxu0 %v2754
          %2783 = vmatprep.subr.bf16.mxu0 0
          %2784 = vmatpush1.bf16.xpose.msra.mxu0 %v2753
          %2785 = vmatprep.subr.bf16.mxu0 0
          %2786 = vmatpush2.bf16.xpose.msra.mxu0 0
          %2787 = vmatprep.subr.bf16.mxu0 0
          %2788 = vmatpush2.bf16.xpose.msra.mxu0 0
          %2789 = vmatprep.subr.bf16.mxu0 0
          %2790 = vmatpush2.bf16.xpose.msra.mxu0 0
          %2791 = vmatprep.subr.bf16.mxu0 0
          %2792 = vmatpush2.bf16.xpose.msra.mxu0 0
          %2793 = vmatprep.subr.bf16.mxu0 0
          %2794 = vmatpush2.bf16.xpose.msra.mxu0 0
          %2795 = vmatprep.subr.bf16.mxu0 0
          %2796 = vmatpush2.bf16.xpose.msra.mxu0 0
          %2797 = vmatprep.subr.bf16.mxu0 0
          %2798 = vmatpush2.bf16.xpose.msra.mxu0 0
          %2799 = vmatprep.subr.bf16.mxu0 0
          %2800 = vmatpush2.bf16.xpose.msra.mxu0 0
          %2801 = vmatprep.mubr.bf16.mxu0 0
          %2802 = vmatmul.mubr.bf16.gmra.mxu0 %v1945
          %v2803 = vpop.f32.mrf.mxu0
          %v2804 = vadd.f32 0.0, %v2803
          %v2805 = vpop.f32.mrf.mxu0
          %v2806 = vpop.f32.mrf.mxu0
          %v2807 = vadd.f32 0.0, %v2806
          %v2808 = vpop.f32.mrf.mxu0
          %2809 = vmatprep.mubr.bf16.mxu0 0
          %2810 = vmatmul.mubr.bf16.gmra.mxu0 %v1946
          %v2811 = vpop.f32.mrf.mxu0
          %v2812 = vadd.f32 0.0, %v2811
          %v2813 = vpop.f32.mrf.mxu0
          %v2814 = vpop.f32.mrf.mxu0
          %v2815 = vadd.f32 0.0, %v2814
          %v2816 = vpop.f32.mrf.mxu0
          %2817 = vmatprep.mubr.bf16.mxu0 0
          %2818 = vmatmul.mubr.bf16.gmra.mxu0 %v1947
          %v2819 = vpop.f32.mrf.mxu0
          %v2820 = vadd.f32 0.0, %v2819
          %v2821 = vpop.f32.mrf.mxu0
          %v2822 = vpop.f32.mrf.mxu0
          %v2823 = vadd.f32 0.0, %v2822
          %v2824 = vpop.f32.mrf.mxu0
          %2825 = vmatprep.mubr.bf16.mxu0 0
          %2826 = vmatmul.mubr.bf16.gmra.mxu0 %v1948
          %v2827 = vpop.f32.mrf.mxu0
          %v2828 = vadd.f32 0.0, %v2827
          %v2829 = vpop.f32.mrf.mxu0
          %v2830 = vpop.f32.mrf.mxu0
          %v2831 = vadd.f32 0.0, %v2830
          %v2832 = vpop.f32.mrf.mxu0
          %2833 = vmatprep.mubr.bf16.mxu0 0
          %2834 = vmatmul.mubr.bf16.gmra.mxu0 %v1949
          %v2835 = vpop.f32.mrf.mxu0
          %v2836 = vadd.f32 0.0, %v2835
          %v2837 = vpop.f32.mrf.mxu0
          %v2838 = vpop.f32.mrf.mxu0
          %v2839 = vadd.f32 0.0, %v2838
          %v2840 = vpop.f32.mrf.mxu0
          %2841 = vmatprep.mubr.bf16.mxu0 0
          %2842 = vmatmul.mubr.bf16.gmra.mxu0 %v1950
          %v2843 = vpop.f32.mrf.mxu0
          %v2844 = vadd.f32 0.0, %v2843
          %v2845 = vpop.f32.mrf.mxu0
          %v2846 = vpop.f32.mrf.mxu0
          %v2847 = vadd.f32 0.0, %v2846
          %v2848 = vpop.f32.mrf.mxu0
          %2849 = vmatprep.mubr.bf16.mxu0 0
          %2850 = vmatmul.mubr.bf16.gmra.mxu0 %v1951
          %v2851 = vpop.f32.mrf.mxu0
          %v2852 = vadd.f32 0.0, %v2851
          %v2853 = vpop.f32.mrf.mxu0
          %v2854 = vpop.f32.mrf.mxu0
          %v2855 = vadd.f32 0.0, %v2854
          %v2856 = vpop.f32.mrf.mxu0
          %2857 = vmatprep.mubr.bf16.mxu0 0
          %2858 = vmatmul.mubr.bf16.gmra.mxu0 %v1952
          %v2859 = vpop.f32.mrf.mxu0
          %v2860 = vadd.f32 0.0, %v2859
          %v2861 = vpop.f32.mrf.mxu0
          %v2862 = vpop.f32.mrf.mxu0
          %v2863 = vadd.f32 0.0, %v2862
          %v2864 = vpop.f32.mrf.mxu0
          %2865 = vdwg.mxu0
          %v2882 = vunpack.c.l.b16 %v2671
          %v2883 = vunpack.c.l.b16 %v2672
          %v2884 = vunpack.c.l.b16 %v2673
          %v2885 = vunpack.c.l.b16 %v2674
          %v2886 = vunpack.c.l.b16 %v2675
          %v2887 = vunpack.c.l.b16 %v2676
          %v2888 = vunpack.c.l.b16 %v2677
          %v2889 = vunpack.c.l.b16 %v2678
          %v2890 = vunpack.c.l.b16 %v2679
          %v2891 = vunpack.c.l.b16 %v2680
          %v2892 = vunpack.c.l.b16 %v2681
          %v2893 = vunpack.c.l.b16 %v2682
          %v2894 = vunpack.c.l.b16 %v2683
          %v2895 = vunpack.c.l.b16 %v2684
          %v2896 = vunpack.c.l.b16 %v2685
          %v2897 = vunpack.c.l.b16 %v2686
          %v2898 = vpack.c.b16 %v2883, %v2882
          %v2899 = vpack.c.b16 %v2885, %v2884
          %v2900 = vpack.c.b16 %v2887, %v2886
          %v2901 = vpack.c.b16 %v2889, %v2888
          %v2902 = vpack.c.b16 %v2891, %v2890
          %v2903 = vpack.c.b16 %v2893, %v2892
          %v2904 = vpack.c.b16 %v2895, %v2894
          %v2905 = vpack.c.b16 %v2897, %v2896
          %2914 = vmatprep.subr.bf16.mxu0 0
          %2915 = vmatpush1.bf16.xpose.msra.mxu0 %v2905
          %2916 = vmatprep.subr.bf16.mxu0 0
          %2917 = vmatpush1.bf16.xpose.msra.mxu0 %v2904
          %2918 = vmatprep.subr.bf16.mxu0 0
          %2919 = vmatpush1.bf16.xpose.msra.mxu0 %v2903
          %2920 = vmatprep.subr.bf16.mxu0 0
          %2921 = vmatpush1.bf16.xpose.msra.mxu0 %v2902
          %2922 = vmatprep.subr.bf16.mxu0 0
          %2923 = vmatpush1.bf16.xpose.msra.mxu0 %v2901
          %2924 = vmatprep.subr.bf16.mxu0 0
          %2925 = vmatpush1.bf16.xpose.msra.mxu0 %v2900
          %2926 = vmatprep.subr.bf16.mxu0 0
          %2927 = vmatpush1.bf16.xpose.msra.mxu0 %v2899
          %2928 = vmatprep.subr.bf16.mxu0 0
          %2929 = vmatpush1.bf16.xpose.msra.mxu0 %v2898
          %2930 = vmatprep.subr.bf16.mxu0 0
          %2931 = vmatpush2.bf16.xpose.msra.mxu0 0
          %2932 = vmatprep.subr.bf16.mxu0 0
          %2933 = vmatpush2.bf16.xpose.msra.mxu0 0
          %2934 = vmatprep.subr.bf16.mxu0 0
          %2935 = vmatpush2.bf16.xpose.msra.mxu0 0
          %2936 = vmatprep.subr.bf16.mxu0 0
          %2937 = vmatpush2.bf16.xpose.msra.mxu0 0
          %2938 = vmatprep.subr.bf16.mxu0 0
          %2939 = vmatpush2.bf16.xpose.msra.mxu0 0
          %2940 = vmatprep.subr.bf16.mxu0 0
          %2941 = vmatpush2.bf16.xpose.msra.mxu0 0
          %2942 = vmatprep.subr.bf16.mxu0 0
          %2943 = vmatpush2.bf16.xpose.msra.mxu0 0
          %2944 = vmatprep.subr.bf16.mxu0 0
          %2945 = vmatpush2.bf16.xpose.msra.mxu0 0
          %2946 = vmatprep.mubr.bf16.mxu0 0
          %2947 = vmatmul.mubr.bf16.gmra.mxu0 %v2295
          %v2948 = vpop.f32.mrf.mxu0
          %v2949 = vadd.f32 0.0, %v2948
          %v2950 = vpop.f32.mrf.mxu0
          %v2951 = vpop.f32.mrf.mxu0
          %v2952 = vadd.f32 0.0, %v2951
          %v2953 = vpop.f32.mrf.mxu0
          %2954 = vmatprep.mubr.bf16.mxu0 0
          %2955 = vmatmul.mubr.bf16.gmra.mxu0 %v2296
          %v2956 = vpop.f32.mrf.mxu0
          %v2957 = vadd.f32 0.0, %v2956
          %v2958 = vpop.f32.mrf.mxu0
          %v2959 = vpop.f32.mrf.mxu0
          %v2960 = vadd.f32 0.0, %v2959
          %v2961 = vpop.f32.mrf.mxu0
          %2962 = vmatprep.mubr.bf16.mxu0 0
          %2963 = vmatmul.mubr.bf16.gmra.mxu0 %v2297
          %v2964 = vpop.f32.mrf.mxu0
          %v2965 = vadd.f32 0.0, %v2964
          %v2966 = vpop.f32.mrf.mxu0
          %v2967 = vpop.f32.mrf.mxu0
          %v2968 = vadd.f32 0.0, %v2967
          %v2969 = vpop.f32.mrf.mxu0
          %2970 = vmatprep.mubr.bf16.mxu0 0
          %2971 = vmatmul.mubr.bf16.gmra.mxu0 %v2298
          %v2972 = vpop.f32.mrf.mxu0
          %v2973 = vadd.f32 0.0, %v2972
          %v2974 = vpop.f32.mrf.mxu0
          %v2975 = vpop.f32.mrf.mxu0
          %v2976 = vadd.f32 0.0, %v2975
          %v2977 = vpop.f32.mrf.mxu0
          %2978 = vmatprep.mubr.bf16.mxu0 0
          %2979 = vmatmul.mubr.bf16.gmra.mxu0 %v2299
          %v2980 = vpop.f32.mrf.mxu0
          %v2981 = vadd.f32 0.0, %v2980
          %v2982 = vpop.f32.mrf.mxu0
          %v2983 = vpop.f32.mrf.mxu0
          %v2984 = vadd.f32 0.0, %v2983
          %v2985 = vpop.f32.mrf.mxu0
          %2986 = vmatprep.mubr.bf16.mxu0 0
          %2987 = vmatmul.mubr.bf16.gmra.mxu0 %v2300
          %v2988 = vpop.f32.mrf.mxu0
          %v2989 = vadd.f32 0.0, %v2988
          %v2990 = vpop.f32.mrf.mxu0
          %v2991 = vpop.f32.mrf.mxu0
          %v2992 = vadd.f32 0.0, %v2991
          %v2993 = vpop.f32.mrf.mxu0
          %2994 = vmatprep.mubr.bf16.mxu0 0
          %2995 = vmatmul.mubr.bf16.gmra.mxu0 %v2301
          %v2996 = vpop.f32.mrf.mxu0
          %v2997 = vadd.f32 0.0, %v2996
          %v2998 = vpop.f32.mrf.mxu0
          %v2999 = vpop.f32.mrf.mxu0
          %v3000 = vadd.f32 0.0, %v2999
          %v3001 = vpop.f32.mrf.mxu0
          %3002 = vmatprep.mubr.bf16.mxu0 0
          %3003 = vmatmul.mubr.bf16.gmra.mxu0 %v2302
          %v3004 = vpop.f32.mrf.mxu0
          %v3005 = vadd.f32 0.0, %v3004
          %v3006 = vpop.f32.mrf.mxu0
          %v3007 = vpop.f32.mrf.mxu0
          %v3008 = vadd.f32 0.0, %v3007
          %v3009 = vpop.f32.mrf.mxu0
          %3010 = vdwg.mxu0
          %3011 = vmax.xlane.f32.xlu0 %v2804
          %v3012 = vpop.xlane.xlu0 %3011
          %3013 = vmax.xlane.f32.xlu0 %v2807
          %v3014 = vpop.xlane.xlu0 %3013
          %3015 = vmax.xlane.f32.xlu0 %v2812
          %v3016 = vpop.xlane.xlu0 %3015
          %3017 = vmax.xlane.f32.xlu0 %v2815
          %v3018 = vpop.xlane.xlu0 %3017
          %3019 = vmax.xlane.f32.xlu0 %v2820
          %v3020 = vpop.xlane.xlu0 %3019
          %3021 = vmax.xlane.f32.xlu0 %v2823
          %v3022 = vpop.xlane.xlu0 %3021
          %3023 = vmax.xlane.f32.xlu0 %v2828
          %v3024 = vpop.xlane.xlu0 %3023
          %3025 = vmax.xlane.f32.xlu0 %v2831
          %v3026 = vpop.xlane.xlu0 %3025
          %3027 = vmax.xlane.f32.xlu0 %v2836
          %v3028 = vpop.xlane.xlu0 %3027
          %3029 = vmax.xlane.f32.xlu0 %v2839
          %v3030 = vpop.xlane.xlu0 %3029
          %3031 = vmax.xlane.f32.xlu0 %v2844
          %v3032 = vpop.xlane.xlu0 %3031
          %3033 = vmax.xlane.f32.xlu0 %v2847
          %v3034 = vpop.xlane.xlu0 %3033
          %3035 = vmax.xlane.f32.xlu0 %v2852
          %v3036 = vpop.xlane.xlu0 %3035
          %3037 = vmax.xlane.f32.xlu0 %v2855
          %v3038 = vpop.xlane.xlu0 %3037
          %3039 = vmax.xlane.f32.xlu0 %v2860
          %v3040 = vpop.xlane.xlu0 %3039
          %3041 = vmax.xlane.f32.xlu0 %v2863
          %v3042 = vpop.xlane.xlu0 %3041
          %3043 = vmax.xlane.f32.xlu0 %v2949
          %v3044 = vpop.xlane.xlu0 %3043
          %3045 = vmax.xlane.f32.xlu0 %v2952
          %v3046 = vpop.xlane.xlu0 %3045
          %3047 = vmax.xlane.f32.xlu0 %v2957
          %v3048 = vpop.xlane.xlu0 %3047
          %3049 = vmax.xlane.f32.xlu0 %v2960
          %v3050 = vpop.xlane.xlu0 %3049
          %3051 = vmax.xlane.f32.xlu0 %v2965
          %v3052 = vpop.xlane.xlu0 %3051
          %3053 = vmax.xlane.f32.xlu0 %v2968
          %v3054 = vpop.xlane.xlu0 %3053
          %3055 = vmax.xlane.f32.xlu0 %v2973
          %v3056 = vpop.xlane.xlu0 %3055
          %3057 = vmax.xlane.f32.xlu0 %v2976
          %v3058 = vpop.xlane.xlu0 %3057
          %3059 = vmax.xlane.f32.xlu0 %v2981
          %v3060 = vpop.xlane.xlu0 %3059
          %3061 = vmax.xlane.f32.xlu0 %v2984
          %v3062 = vpop.xlane.xlu0 %3061
          %3063 = vmax.xlane.f32.xlu0 %v2989
          %v3064 = vpop.xlane.xlu0 %3063
          %3065 = vmax.xlane.f32.xlu0 %v2992
          %v3066 = vpop.xlane.xlu0 %3065
          %3067 = vmax.xlane.f32.xlu0 %v2997
          %v3068 = vpop.xlane.xlu0 %3067
          %3069 = vmax.xlane.f32.xlu0 %v3000
          %v3070 = vpop.xlane.xlu0 %3069
          %3071 = vmax.xlane.f32.xlu0 %v3005
          %v3072 = vpop.xlane.xlu0 %3071
          %3073 = vmax.xlane.f32.xlu0 %v3008
          %v3074 = vpop.xlane.xlu0 %3073
          %v3075 = vmax.f32 %v2554, %v3012
          %v3076 = vmax.f32 %v2555, %v3014
          %v3077 = vmax.f32 %v2556, %v3016
          %v3078 = vmax.f32 %v2557, %v3018
          %v3079 = vmax.f32 %v2558, %v3020
          %v3080 = vmax.f32 %v2559, %v3022
          %v3081 = vmax.f32 %v2560, %v3024
          %v3082 = vmax.f32 %v2561, %v3026
          %v3083 = vmax.f32 %v2562, %v3028
          %v3084 = vmax.f32 %v2563, %v3030
          %v3085 = vmax.f32 %v2564, %v3032
          %v3086 = vmax.f32 %v2565, %v3034
          %v3087 = vmax.f32 %v2566, %v3036
          %v3088 = vmax.f32 %v2567, %v3038
          %v3089 = vmax.f32 %v2568, %v3040
          %v3090 = vmax.f32 %v2569, %v3042
          %v3091 = vmax.f32 %v2570, %v3044
          %v3092 = vmax.f32 %v2571, %v3046
          %v3093 = vmax.f32 %v2572, %v3048
          %v3094 = vmax.f32 %v2573, %v3050
          %v3095 = vmax.f32 %v2574, %v3052
          %v3096 = vmax.f32 %v2575, %v3054
          %v3097 = vmax.f32 %v2576, %v3056
          %v3098 = vmax.f32 %v2577, %v3058
          %v3099 = vmax.f32 %v2578, %v3060
          %v3100 = vmax.f32 %v2579, %v3062
          %v3101 = vmax.f32 %v2580, %v3064
          %v3102 = vmax.f32 %v2581, %v3066
          %v3103 = vmax.f32 %v2582, %v3068
          %v3104 = vmax.f32 %v2583, %v3070
          %v3105 = vmax.f32 %v2584, %v3072
          %v3106 = vmax.f32 %v2585, %v3074
          %v3107 = vsub.f32 %v2554, %v3075
          %v3108 = vsub.f32 %v2555, %v3076
          %v3109 = vsub.f32 %v2556, %v3077
          %v3110 = vsub.f32 %v2557, %v3078
          %v3111 = vsub.f32 %v2558, %v3079
          %v3112 = vsub.f32 %v2559, %v3080
          %v3113 = vsub.f32 %v2560, %v3081
          %v3114 = vsub.f32 %v2561, %v3082
          %v3115 = vsub.f32 %v2562, %v3083
          %v3116 = vsub.f32 %v2563, %v3084
          %v3117 = vsub.f32 %v2564, %v3085
          %v3118 = vsub.f32 %v2565, %v3086
          %v3119 = vsub.f32 %v2566, %v3087
          %v3120 = vsub.f32 %v2567, %v3088
          %v3121 = vsub.f32 %v2568, %v3089
          %v3122 = vsub.f32 %v2569, %v3090
          %v3123 = vsub.f32 %v2570, %v3091
          %v3124 = vsub.f32 %v2571, %v3092
          %v3125 = vsub.f32 %v2572, %v3093
          %v3126 = vsub.f32 %v2573, %v3094
          %v3127 = vsub.f32 %v2574, %v3095
          %v3128 = vsub.f32 %v2575, %v3096
          %v3129 = vsub.f32 %v2576, %v3097
          %v3130 = vsub.f32 %v2577, %v3098
          %v3131 = vsub.f32 %v2578, %v3099
          %v3132 = vsub.f32 %v2579, %v3100
          %v3133 = vsub.f32 %v2580, %v3101
          %v3134 = vsub.f32 %v2581, %v3102
          %v3135 = vsub.f32 %v2582, %v3103
          %v3136 = vsub.f32 %v2583, %v3104
          %v3137 = vsub.f32 %v2584, %v3105
          %v3138 = vsub.f32 %v2585, %v3106
          %v3139 = vmul.f32 %v3107, 1.442695
          %v3140 = vpow.pop %v3139
          %v3141 = vmul.f32 %v3108, 1.442695
          %v3142 = vpow.pop %v3141
          %v3143 = vmul.f32 %v3109, 1.442695
          %v3144 = vpow.pop %v3143
          %v3145 = vmul.f32 %v3110, 1.442695
          %v3146 = vpow.pop %v3145
          %v3147 = vmul.f32 %v3111, 1.442695
          %v3148 = vpow.pop %v3147
          %v3149 = vmul.f32 %v3112, 1.442695
          %v3150 = vpow.pop %v3149
          %v3151 = vmul.f32 %v3113, 1.442695
          %v3152 = vpow.pop %v3151
          %v3153 = vmul.f32 %v3114, 1.442695
          %v3154 = vpow.pop %v3153
          %v3155 = vmul.f32 %v3115, 1.442695
          %v3156 = vpow.pop %v3155
          %v3157 = vmul.f32 %v3116, 1.442695
          %v3158 = vpow.pop %v3157
          %v3159 = vmul.f32 %v3117, 1.442695
          %v3160 = vpow.pop %v3159
          %v3161 = vmul.f32 %v3118, 1.442695
          %v3162 = vpow.pop %v3161
          %v3163 = vmul.f32 %v3119, 1.442695
          %v3164 = vpow.pop %v3163
          %v3165 = vmul.f32 %v3120, 1.442695
          %v3166 = vpow.pop %v3165
          %v3167 = vmul.f32 %v3121, 1.442695
          %v3168 = vpow.pop %v3167
          %v3169 = vmul.f32 %v3122, 1.442695
          %v3170 = vpow.pop %v3169
          %v3171 = vmul.f32 %v3123, 1.442695
          %v3172 = vpow.pop %v3171
          %v3173 = vmul.f32 %v3124, 1.442695
          %v3174 = vpow.pop %v3173
          %v3175 = vmul.f32 %v3125, 1.442695
          %v3176 = vpow.pop %v3175
          %v3177 = vmul.f32 %v3126, 1.442695
          %v3178 = vpow.pop %v3177
          %v3179 = vmul.f32 %v3127, 1.442695
          %v3180 = vpow.pop %v3179
          %v3181 = vmul.f32 %v3128, 1.442695
          %v3182 = vpow.pop %v3181
          %v3183 = vmul.f32 %v3129, 1.442695
          %v3184 = vpow.pop %v3183
          %v3185 = vmul.f32 %v3130, 1.442695
          %v3186 = vpow.pop %v3185
          %v3187 = vmul.f32 %v3131, 1.442695
          %v3188 = vpow.pop %v3187
          %v3189 = vmul.f32 %v3132, 1.442695
          %v3190 = vpow.pop %v3189
          %v3191 = vmul.f32 %v3133, 1.442695
          %v3192 = vpow.pop %v3191
          %v3193 = vmul.f32 %v3134, 1.442695
          %v3194 = vpow.pop %v3193
          %v3195 = vmul.f32 %v3135, 1.442695
          %v3196 = vpow.pop %v3195
          %v3197 = vmul.f32 %v3136, 1.442695
          %v3198 = vpow.pop %v3197
          %v3199 = vmul.f32 %v3137, 1.442695
          %v3200 = vpow.pop %v3199
          %v3201 = vmul.f32 %v3138, 1.442695
          %v3202 = vpow.pop %v3201
          %v3203 = vsub.f32 %v2804, %v3075
          %v3204 = vsub.f32 %v2807, %v3076
          %v3205 = vsub.f32 %v2812, %v3077
          %v3206 = vsub.f32 %v2815, %v3078
          %v3207 = vsub.f32 %v2820, %v3079
          %v3208 = vsub.f32 %v2823, %v3080
          %v3209 = vsub.f32 %v2828, %v3081
          %v3210 = vsub.f32 %v2831, %v3082
          %v3211 = vsub.f32 %v2836, %v3083
          %v3212 = vsub.f32 %v2839, %v3084
          %v3213 = vsub.f32 %v2844, %v3085
          %v3214 = vsub.f32 %v2847, %v3086
          %v3215 = vsub.f32 %v2852, %v3087
          %v3216 = vsub.f32 %v2855, %v3088
          %v3217 = vsub.f32 %v2860, %v3089
          %v3218 = vsub.f32 %v2863, %v3090
          %v3219 = vsub.f32 %v2949, %v3091
          %v3220 = vsub.f32 %v2952, %v3092
          %v3221 = vsub.f32 %v2957, %v3093
          %v3222 = vsub.f32 %v2960, %v3094
          %v3223 = vsub.f32 %v2965, %v3095
          %v3224 = vsub.f32 %v2968, %v3096
          %v3225 = vsub.f32 %v2973, %v3097
          %v3226 = vsub.f32 %v2976, %v3098
          %v3227 = vsub.f32 %v2981, %v3099
          %v3228 = vsub.f32 %v2984, %v3100
          %v3229 = vsub.f32 %v2989, %v3101
          %v3230 = vsub.f32 %v2992, %v3102
          %v3231 = vsub.f32 %v2997, %v3103
          %v3232 = vsub.f32 %v3000, %v3104
          %v3233 = vsub.f32 %v3005, %v3105
          %v3234 = vsub.f32 %v3008, %v3106
          %v3235 = vmul.f32 %v3203, 1.442695
          %v3236 = vpow.pop %v3235
          %v3237 = vmul.f32 %v3204, 1.442695
          %v3238 = vpow.pop %v3237
          %v3239 = vmul.f32 %v3205, 1.442695
          %v3240 = vpow.pop %v3239
          %v3241 = vmul.f32 %v3206, 1.442695
          %v3242 = vpow.pop %v3241
          %v3243 = vmul.f32 %v3207, 1.442695
          %v3244 = vpow.pop %v3243
          %v3245 = vmul.f32 %v3208, 1.442695
          %v3246 = vpow.pop %v3245
          %v3247 = vmul.f32 %v3209, 1.442695
          %v3248 = vpow.pop %v3247
          %v3249 = vmul.f32 %v3210, 1.442695
          %v3250 = vpow.pop %v3249
          %v3251 = vmul.f32 %v3211, 1.442695
          %v3252 = vpow.pop %v3251
          %v3253 = vmul.f32 %v3212, 1.442695
          %v3254 = vpow.pop %v3253
          %v3255 = vmul.f32 %v3213, 1.442695
          %v3256 = vpow.pop %v3255
          %v3257 = vmul.f32 %v3214, 1.442695
          %v3258 = vpow.pop %v3257
          %v3259 = vmul.f32 %v3215, 1.442695
          %v3260 = vpow.pop %v3259
          %v3261 = vmul.f32 %v3216, 1.442695
          %v3262 = vpow.pop %v3261
          %v3263 = vmul.f32 %v3217, 1.442695
          %v3264 = vpow.pop %v3263
          %v3265 = vmul.f32 %v3218, 1.442695
          %v3266 = vpow.pop %v3265
          %v3267 = vmul.f32 %v3219, 1.442695
          %v3268 = vpow.pop %v3267
          %v3269 = vmul.f32 %v3220, 1.442695
          %v3270 = vpow.pop %v3269
          %v3271 = vmul.f32 %v3221, 1.442695
          %v3272 = vpow.pop %v3271
          %v3273 = vmul.f32 %v3222, 1.442695
          %v3274 = vpow.pop %v3273
          %v3275 = vmul.f32 %v3223, 1.442695
          %v3276 = vpow.pop %v3275
          %v3277 = vmul.f32 %v3224, 1.442695
          %v3278 = vpow.pop %v3277
          %v3279 = vmul.f32 %v3225, 1.442695
          %v3280 = vpow.pop %v3279
          %v3281 = vmul.f32 %v3226, 1.442695
          %v3282 = vpow.pop %v3281
          %v3283 = vmul.f32 %v3227, 1.442695
          %v3284 = vpow.pop %v3283
          %v3285 = vmul.f32 %v3228, 1.442695
          %v3286 = vpow.pop %v3285
          %v3287 = vmul.f32 %v3229, 1.442695
          %v3288 = vpow.pop %v3287
          %v3289 = vmul.f32 %v3230, 1.442695
          %v3290 = vpow.pop %v3289
          %v3291 = vmul.f32 %v3231, 1.442695
          %v3292 = vpow.pop %v3291
          %v3293 = vmul.f32 %v3232, 1.442695
          %v3294 = vpow.pop %v3293
          %v3295 = vmul.f32 %v3233, 1.442695
          %v3296 = vpow.pop %v3295
          %v3297 = vmul.f32 %v3234, 1.442695
          %v3298 = vpow.pop %v3297
          %v3299 = vmul.f32 %v3140, %v2586
          %v3300 = vmul.f32 %v3142, %v2587
          %v3301 = vmul.f32 %v3144, %v2588
          %v3302 = vmul.f32 %v3146, %v2589
          %v3303 = vmul.f32 %v3148, %v2590
          %v3304 = vmul.f32 %v3150, %v2591
          %v3305 = vmul.f32 %v3152, %v2592
          %v3306 = vmul.f32 %v3154, %v2593
          %v3307 = vmul.f32 %v3156, %v2594
          %v3308 = vmul.f32 %v3158, %v2595
          %v3309 = vmul.f32 %v3160, %v2596
          %v3310 = vmul.f32 %v3162, %v2597
          %v3311 = vmul.f32 %v3164, %v2598
          %v3312 = vmul.f32 %v3166, %v2599
          %v3313 = vmul.f32 %v3168, %v2600
          %v3314 = vmul.f32 %v3170, %v2601
          %v3315 = vmul.f32 %v3172, %v2602
          %v3316 = vmul.f32 %v3174, %v2603
          %v3317 = vmul.f32 %v3176, %v2604
          %v3318 = vmul.f32 %v3178, %v2605
          %v3319 = vmul.f32 %v3180, %v2606
          %v3320 = vmul.f32 %v3182, %v2607
          %v3321 = vmul.f32 %v3184, %v2608
          %v3322 = vmul.f32 %v3186, %v2609
          %v3323 = vmul.f32 %v3188, %v2610
          %v3324 = vmul.f32 %v3190, %v2611
          %v3325 = vmul.f32 %v3192, %v2612
          %v3326 = vmul.f32 %v3194, %v2613
          %v3327 = vmul.f32 %v3196, %v2614
          %v3328 = vmul.f32 %v3198, %v2615
          %v3329 = vmul.f32 %v3200, %v2616
          %v3330 = vmul.f32 %v3202, %v2617
          %3331 = vadd.xlane.f32.xlu0 %v3236
          %v3332 = vpop.xlane.xlu0 %3331
          %3333 = vadd.xlane.f32.xlu0 %v3238
          %v3334 = vpop.xlane.xlu0 %3333
          %3335 = vadd.xlane.f32.xlu0 %v3240
          %v3336 = vpop.xlane.xlu0 %3335
          %3337 = vadd.xlane.f32.xlu0 %v3242
          %v3338 = vpop.xlane.xlu0 %3337
          %3339 = vadd.xlane.f32.xlu0 %v3244
          %v3340 = vpop.xlane.xlu0 %3339
          %3341 = vadd.xlane.f32.xlu0 %v3246
          %v3342 = vpop.xlane.xlu0 %3341
          %3343 = vadd.xlane.f32.xlu0 %v3248
          %v3344 = vpop.xlane.xlu0 %3343
          %3345 = vadd.xlane.f32.xlu0 %v3250
          %v3346 = vpop.xlane.xlu0 %3345
          %3347 = vadd.xlane.f32.xlu0 %v3252
          %v3348 = vpop.xlane.xlu0 %3347
          %3349 = vadd.xlane.f32.xlu0 %v3254
          %v3350 = vpop.xlane.xlu0 %3349
          %3351 = vadd.xlane.f32.xlu0 %v3256
          %v3352 = vpop.xlane.xlu0 %3351
          %3353 = vadd.xlane.f32.xlu0 %v3258
          %v3354 = vpop.xlane.xlu0 %3353
          %3355 = vadd.xlane.f32.xlu0 %v3260
          %v3356 = vpop.xlane.xlu0 %3355
          %3357 = vadd.xlane.f32.xlu0 %v3262
          %v3358 = vpop.xlane.xlu0 %3357
          %3359 = vadd.xlane.f32.xlu0 %v3264
          %v3360 = vpop.xlane.xlu0 %3359
          %3361 = vadd.xlane.f32.xlu0 %v3266
          %v3362 = vpop.xlane.xlu0 %3361
          %3363 = vadd.xlane.f32.xlu0 %v3268
          %v3364 = vpop.xlane.xlu0 %3363
          %3365 = vadd.xlane.f32.xlu0 %v3270
          %v3366 = vpop.xlane.xlu0 %3365
          %3367 = vadd.xlane.f32.xlu0 %v3272
          %v3368 = vpop.xlane.xlu0 %3367
          %3369 = vadd.xlane.f32.xlu0 %v3274
          %v3370 = vpop.xlane.xlu0 %3369
          %3371 = vadd.xlane.f32.xlu0 %v3276
          %v3372 = vpop.xlane.xlu0 %3371
          %3373 = vadd.xlane.f32.xlu0 %v3278
          %v3374 = vpop.xlane.xlu0 %3373
          %3375 = vadd.xlane.f32.xlu0 %v3280
          %v3376 = vpop.xlane.xlu0 %3375
          %3377 = vadd.xlane.f32.xlu0 %v3282
          %v3378 = vpop.xlane.xlu0 %3377
          %3379 = vadd.xlane.f32.xlu0 %v3284
          %v3380 = vpop.xlane.xlu0 %3379
          %3381 = vadd.xlane.f32.xlu0 %v3286
          %v3382 = vpop.xlane.xlu0 %3381
          %3383 = vadd.xlane.f32.xlu0 %v3288
          %v3384 = vpop.xlane.xlu0 %3383
          %3385 = vadd.xlane.f32.xlu0 %v3290
          %v3386 = vpop.xlane.xlu0 %3385
          %3387 = vadd.xlane.f32.xlu0 %v3292
          %v3388 = vpop.xlane.xlu0 %3387
          %3389 = vadd.xlane.f32.xlu0 %v3294
          %v3390 = vpop.xlane.xlu0 %3389
          %3391 = vadd.xlane.f32.xlu0 %v3296
          %v3392 = vpop.xlane.xlu0 %3391
          %3393 = vadd.xlane.f32.xlu0 %v3298
          %v3394 = vpop.xlane.xlu0 %3393
          %v3395 = vadd.f32 %v3299, %v3332
          %v3396 = vadd.f32 %v3300, %v3334
          %v3397 = vadd.f32 %v3301, %v3336
          %v3398 = vadd.f32 %v3302, %v3338
          %v3399 = vadd.f32 %v3303, %v3340
          %v3400 = vadd.f32 %v3304, %v3342
          %v3401 = vadd.f32 %v3305, %v3344
          %v3402 = vadd.f32 %v3306, %v3346
          %v3403 = vadd.f32 %v3307, %v3348
          %v3404 = vadd.f32 %v3308, %v3350
          %v3405 = vadd.f32 %v3309, %v3352
          %v3406 = vadd.f32 %v3310, %v3354
          %v3407 = vadd.f32 %v3311, %v3356
          %v3408 = vadd.f32 %v3312, %v3358
          %v3409 = vadd.f32 %v3313, %v3360
          %v3410 = vadd.f32 %v3314, %v3362
          %v3411 = vadd.f32 %v3315, %v3364
          %v3412 = vadd.f32 %v3316, %v3366
          %v3413 = vadd.f32 %v3317, %v3368
          %v3414 = vadd.f32 %v3318, %v3370
          %v3415 = vadd.f32 %v3319, %v3372
          %v3416 = vadd.f32 %v3320, %v3374
          %v3417 = vadd.f32 %v3321, %v3376
          %v3418 = vadd.f32 %v3322, %v3378
          %v3419 = vadd.f32 %v3323, %v3380
          %v3420 = vadd.f32 %v3324, %v3382
          %v3421 = vadd.f32 %v3325, %v3384
          %v3422 = vadd.f32 %v3326, %v3386
          %v3423 = vadd.f32 %v3327, %v3388
          %v3424 = vadd.f32 %v3328, %v3390
          %v3425 = vadd.f32 %v3329, %v3392
          %v3426 = vadd.f32 %v3330, %v3394
          %v3427 = vmul.f32 %v3140, %v2618
          %v3428 = vmul.f32 %v3142, %v2619
          %v3429 = vmul.f32 %v3144, %v2620
          %v3430 = vmul.f32 %v3146, %v2621
          %v3431 = vmul.f32 %v3148, %v2622
          %v3432 = vmul.f32 %v3150, %v2623
          %v3433 = vmul.f32 %v3152, %v2624
          %v3434 = vmul.f32 %v3154, %v2625
          %v3435 = vmul.f32 %v3156, %v2626
          %v3436 = vmul.f32 %v3158, %v2627
          %v3437 = vmul.f32 %v3160, %v2628
          %v3438 = vmul.f32 %v3162, %v2629
          %v3439 = vmul.f32 %v3164, %v2630
          %v3440 = vmul.f32 %v3166, %v2631
          %v3441 = vmul.f32 %v3168, %v2632
          %v3442 = vmul.f32 %v3170, %v2633
          %v3443 = vmul.f32 %v3172, %v2634
          %v3444 = vmul.f32 %v3174, %v2635
          %v3445 = vmul.f32 %v3176, %v2636
          %v3446 = vmul.f32 %v3178, %v2637
          %v3447 = vmul.f32 %v3180, %v2638
          %v3448 = vmul.f32 %v3182, %v2639
          %v3449 = vmul.f32 %v3184, %v2640
          %v3450 = vmul.f32 %v3186, %v2641
          %v3451 = vmul.f32 %v3188, %v2642
          %v3452 = vmul.f32 %v3190, %v2643
          %v3453 = vmul.f32 %v3192, %v2644
          %v3454 = vmul.f32 %v3194, %v2645
          %v3455 = vmul.f32 %v3196, %v2646
          %v3456 = vmul.f32 %v3198, %v2647
          %v3457 = vmul.f32 %v3200, %v2648
          %v3458 = vmul.f32 %v3202, %v2649
          %v3459 = vpack.c.bf16 %v3238, %v3236
          %v3460 = vpack.c.bf16 %v3242, %v3240
          %v3461 = vpack.c.bf16 %v3246, %v3244
          %v3462 = vpack.c.bf16 %v3250, %v3248
          %v3463 = vpack.c.bf16 %v3254, %v3252
          %v3464 = vpack.c.bf16 %v3258, %v3256
          %v3465 = vpack.c.bf16 %v3262, %v3260
          %v3466 = vpack.c.bf16 %v3266, %v3264
          %v3467 = vpack.c.bf16 %v3270, %v3268
          %v3468 = vpack.c.bf16 %v3274, %v3272
          %v3469 = vpack.c.bf16 %v3278, %v3276
          %v3470 = vpack.c.bf16 %v3282, %v3280
          %v3471 = vpack.c.bf16 %v3286, %v3284
          %v3472 = vpack.c.bf16 %v3290, %v3288
          %v3473 = vpack.c.bf16 %v3294, %v3292
          %v3474 = vpack.c.bf16 %v3298, %v3296
          %v3491 = vunpack.c.l.b16 %v2689
          %v3492 = vunpack.c.l.b16 %v2690
          %v3493 = vunpack.c.l.b16 %v2691
          %v3494 = vunpack.c.l.b16 %v2692
          %v3495 = vunpack.c.l.b16 %v2693
          %v3496 = vunpack.c.l.b16 %v2694
          %v3497 = vunpack.c.l.b16 %v2695
          %v3498 = vunpack.c.l.b16 %v2696
          %v3499 = vunpack.c.l.b16 %v2697
          %v3500 = vunpack.c.l.b16 %v2698
          %v3501 = vunpack.c.l.b16 %v2699
          %v3502 = vunpack.c.l.b16 %v2700
          %v3503 = vunpack.c.l.b16 %v2701
          %v3504 = vunpack.c.l.b16 %v2702
          %v3505 = vunpack.c.l.b16 %v2703
          %v3506 = vunpack.c.l.b16 %v2704
          %v3507 = vpack.c.b16 %v3492, %v3491
          %v3508 = vpack.c.b16 %v3494, %v3493
          %v3509 = vpack.c.b16 %v3496, %v3495
          %v3510 = vpack.c.b16 %v3498, %v3497
          %v3511 = vpack.c.b16 %v3500, %v3499
          %v3512 = vpack.c.b16 %v3502, %v3501
          %v3513 = vpack.c.b16 %v3504, %v3503
          %v3514 = vpack.c.b16 %v3506, %v3505
          %3523 = vmatprep.subr.bf16.mxu0 0
          %3524 = vmatpush1.bf16.msra.mxu0 %v3514
          %3525 = vmatprep.subr.bf16.mxu0 0
          %3526 = vmatpush1.bf16.msra.mxu0 %v3513
          %3527 = vmatprep.subr.bf16.mxu0 0
          %3528 = vmatpush1.bf16.msra.mxu0 %v3512
          %3529 = vmatprep.subr.bf16.mxu0 0
          %3530 = vmatpush1.bf16.msra.mxu0 %v3511
          %3531 = vmatprep.subr.bf16.mxu0 0
          %3532 = vmatpush1.bf16.msra.mxu0 %v3510
          %3533 = vmatprep.subr.bf16.mxu0 0
          %3534 = vmatpush1.bf16.msra.mxu0 %v3509
          %3535 = vmatprep.subr.bf16.mxu0 0
          %3536 = vmatpush1.bf16.msra.mxu0 %v3508
          %3537 = vmatprep.subr.bf16.mxu0 0
          %3538 = vmatpush1.bf16.msra.mxu0 %v3507
          %3539 = vmatprep.subr.bf16.mxu0 0
          %3540 = vmatpush2.bf16.msra.mxu0 0
          %3541 = vmatprep.subr.bf16.mxu0 0
          %3542 = vmatpush2.bf16.msra.mxu0 0
          %3543 = vmatprep.subr.bf16.mxu0 0
          %3544 = vmatpush2.bf16.msra.mxu0 0
          %3545 = vmatprep.subr.bf16.mxu0 0
          %3546 = vmatpush2.bf16.msra.mxu0 0
          %3547 = vmatprep.subr.bf16.mxu0 0
          %3548 = vmatpush2.bf16.msra.mxu0 0
          %3549 = vmatprep.subr.bf16.mxu0 0
          %3550 = vmatpush2.bf16.msra.mxu0 0
          %3551 = vmatprep.subr.bf16.mxu0 0
          %3552 = vmatpush2.bf16.msra.mxu0 0
          %3553 = vmatprep.subr.bf16.mxu0 0
          %3554 = vmatpush2.bf16.msra.mxu0 0
          %3555 = vmatprep.mubr.bf16.mxu0 0
          %3556 = vmatmul.mubr.bf16.gmra.mxu0 %v3459
          %v3557 = vpop.f32.mrf.mxu0
          %v3558 = vadd.f32 0.0, %v3557
          %v3559 = vpop.f32.mrf.mxu0
          %v3560 = vpop.f32.mrf.mxu0
          %v3561 = vadd.f32 0.0, %v3560
          %v3562 = vpop.f32.mrf.mxu0
          %3563 = vmatprep.mubr.bf16.mxu0 0
          %3564 = vmatmul.mubr.bf16.gmra.mxu0 %v3460
          %v3565 = vpop.f32.mrf.mxu0
          %v3566 = vadd.f32 0.0, %v3565
          %v3567 = vpop.f32.mrf.mxu0
          %v3568 = vpop.f32.mrf.mxu0
          %v3569 = vadd.f32 0.0, %v3568
          %v3570 = vpop.f32.mrf.mxu0
          %3571 = vmatprep.mubr.bf16.mxu0 0
          %3572 = vmatmul.mubr.bf16.gmra.mxu0 %v3461
          %v3573 = vpop.f32.mrf.mxu0
          %v3574 = vadd.f32 0.0, %v3573
          %v3575 = vpop.f32.mrf.mxu0
          %v3576 = vpop.f32.mrf.mxu0
          %v3577 = vadd.f32 0.0, %v3576
          %v3578 = vpop.f32.mrf.mxu0
          %3579 = vmatprep.mubr.bf16.mxu0 0
          %3580 = vmatmul.mubr.bf16.gmra.mxu0 %v3462
          %v3581 = vpop.f32.mrf.mxu0
          %v3582 = vadd.f32 0.0, %v3581
          %v3583 = vpop.f32.mrf.mxu0
          %v3584 = vpop.f32.mrf.mxu0
          %v3585 = vadd.f32 0.0, %v3584
          %v3586 = vpop.f32.mrf.mxu0
          %3587 = vmatprep.mubr.bf16.mxu0 0
          %3588 = vmatmul.mubr.bf16.gmra.mxu0 %v3463
          %v3589 = vpop.f32.mrf.mxu0
          %v3590 = vadd.f32 0.0, %v3589
          %v3591 = vpop.f32.mrf.mxu0
          %v3592 = vpop.f32.mrf.mxu0
          %v3593 = vadd.f32 0.0, %v3592
          %v3594 = vpop.f32.mrf.mxu0
          %3595 = vmatprep.mubr.bf16.mxu0 0
          %3596 = vmatmul.mubr.bf16.gmra.mxu0 %v3464
          %v3597 = vpop.f32.mrf.mxu0
          %v3598 = vadd.f32 0.0, %v3597
          %v3599 = vpop.f32.mrf.mxu0
          %v3600 = vpop.f32.mrf.mxu0
          %v3601 = vadd.f32 0.0, %v3600
          %v3602 = vpop.f32.mrf.mxu0
          %3603 = vmatprep.mubr.bf16.mxu0 0
          %3604 = vmatmul.mubr.bf16.gmra.mxu0 %v3465
          %v3605 = vpop.f32.mrf.mxu0
          %v3606 = vadd.f32 0.0, %v3605
          %v3607 = vpop.f32.mrf.mxu0
          %v3608 = vpop.f32.mrf.mxu0
          %v3609 = vadd.f32 0.0, %v3608
          %v3610 = vpop.f32.mrf.mxu0
          %3611 = vmatprep.mubr.bf16.mxu0 0
          %3612 = vmatmul.mubr.bf16.gmra.mxu0 %v3466
          %v3613 = vpop.f32.mrf.mxu0
          %v3614 = vadd.f32 0.0, %v3613
          %v3615 = vpop.f32.mrf.mxu0
          %v3616 = vpop.f32.mrf.mxu0
          %v3617 = vadd.f32 0.0, %v3616
          %v3618 = vpop.f32.mrf.mxu0
          %3619 = vdwg.mxu0
          %v3636 = vunpack.c.l.b16 %v2705
          %v3637 = vunpack.c.l.b16 %v2706
          %v3638 = vunpack.c.l.b16 %v2707
          %v3639 = vunpack.c.l.b16 %v2708
          %v3640 = vunpack.c.l.b16 %v2709
          %v3641 = vunpack.c.l.b16 %v2710
          %v3642 = vunpack.c.l.b16 %v2711
          %v3643 = vunpack.c.l.b16 %v2712
          %v3644 = vunpack.c.l.b16 %v2713
          %v3645 = vunpack.c.l.b16 %v2714
          %v3646 = vunpack.c.l.b16 %v2715
          %v3647 = vunpack.c.l.b16 %v2716
          %v3648 = vunpack.c.l.b16 %v2717
          %v3649 = vunpack.c.l.b16 %v2718
          %v3650 = vunpack.c.l.b16 %v2719
          %v3651 = vunpack.c.l.b16 %v2720
          %v3652 = vpack.c.b16 %v3637, %v3636
          %v3653 = vpack.c.b16 %v3639, %v3638
          %v3654 = vpack.c.b16 %v3641, %v3640
          %v3655 = vpack.c.b16 %v3643, %v3642
          %v3656 = vpack.c.b16 %v3645, %v3644
          %v3657 = vpack.c.b16 %v3647, %v3646
          %v3658 = vpack.c.b16 %v3649, %v3648
          %v3659 = vpack.c.b16 %v3651, %v3650
          %3668 = vmatprep.subr.bf16.mxu0 0
          %3669 = vmatpush1.bf16.msra.mxu0 %v3659
          %3670 = vmatprep.subr.bf16.mxu0 0
          %3671 = vmatpush1.bf16.msra.mxu0 %v3658
          %3672 = vmatprep.subr.bf16.mxu0 0
          %3673 = vmatpush1.bf16.msra.mxu0 %v3657
          %3674 = vmatprep.subr.bf16.mxu0 0
          %3675 = vmatpush1.bf16.msra.mxu0 %v3656
          %3676 = vmatprep.subr.bf16.mxu0 0
          %3677 = vmatpush1.bf16.msra.mxu0 %v3655
          %3678 = vmatprep.subr.bf16.mxu0 0
          %3679 = vmatpush1.bf16.msra.mxu0 %v3654
          %3680 = vmatprep.subr.bf16.mxu0 0
          %3681 = vmatpush1.bf16.msra.mxu0 %v3653
          %3682 = vmatprep.subr.bf16.mxu0 0
          %3683 = vmatpush1.bf16.msra.mxu0 %v3652
          %3684 = vmatprep.subr.bf16.mxu0 0
          %3685 = vmatpush2.bf16.msra.mxu0 0
          %3686 = vmatprep.subr.bf16.mxu0 0
          %3687 = vmatpush2.bf16.msra.mxu0 0
          %3688 = vmatprep.subr.bf16.mxu0 0
          %3689 = vmatpush2.bf16.msra.mxu0 0
          %3690 = vmatprep.subr.bf16.mxu0 0
          %3691 = vmatpush2.bf16.msra.mxu0 0
          %3692 = vmatprep.subr.bf16.mxu0 0
          %3693 = vmatpush2.bf16.msra.mxu0 0
          %3694 = vmatprep.subr.bf16.mxu0 0
          %3695 = vmatpush2.bf16.msra.mxu0 0
          %3696 = vmatprep.subr.bf16.mxu0 0
          %3697 = vmatpush2.bf16.msra.mxu0 0
          %3698 = vmatprep.subr.bf16.mxu0 0
          %3699 = vmatpush2.bf16.msra.mxu0 0
          %3700 = vmatprep.mubr.bf16.mxu0 0
          %3701 = vmatmul.mubr.bf16.gmra.mxu0 %v3467
          %v3702 = vpop.f32.mrf.mxu0
          %v3703 = vadd.f32 0.0, %v3702
          %v3704 = vpop.f32.mrf.mxu0
          %v3705 = vpop.f32.mrf.mxu0
          %v3706 = vadd.f32 0.0, %v3705
          %v3707 = vpop.f32.mrf.mxu0
          %3708 = vmatprep.mubr.bf16.mxu0 0
          %3709 = vmatmul.mubr.bf16.gmra.mxu0 %v3468
          %v3710 = vpop.f32.mrf.mxu0
          %v3711 = vadd.f32 0.0, %v3710
          %v3712 = vpop.f32.mrf.mxu0
          %v3713 = vpop.f32.mrf.mxu0
          %v3714 = vadd.f32 0.0, %v3713
          %v3715 = vpop.f32.mrf.mxu0
          %3716 = vmatprep.mubr.bf16.mxu0 0
          %3717 = vmatmul.mubr.bf16.gmra.mxu0 %v3469
          %v3718 = vpop.f32.mrf.mxu0
          %v3719 = vadd.f32 0.0, %v3718
          %v3720 = vpop.f32.mrf.mxu0
          %v3721 = vpop.f32.mrf.mxu0
          %v3722 = vadd.f32 0.0, %v3721
          %v3723 = vpop.f32.mrf.mxu0
          %3724 = vmatprep.mubr.bf16.mxu0 0
          %3725 = vmatmul.mubr.bf16.gmra.mxu0 %v3470
          %v3726 = vpop.f32.mrf.mxu0
          %v3727 = vadd.f32 0.0, %v3726
          %v3728 = vpop.f32.mrf.mxu0
          %v3729 = vpop.f32.mrf.mxu0
          %v3730 = vadd.f32 0.0, %v3729
          %v3731 = vpop.f32.mrf.mxu0
          %3732 = vmatprep.mubr.bf16.mxu0 0
          %3733 = vmatmul.mubr.bf16.gmra.mxu0 %v3471
          %v3734 = vpop.f32.mrf.mxu0
          %v3735 = vadd.f32 0.0, %v3734
          %v3736 = vpop.f32.mrf.mxu0
          %v3737 = vpop.f32.mrf.mxu0
          %v3738 = vadd.f32 0.0, %v3737
          %v3739 = vpop.f32.mrf.mxu0
          %3740 = vmatprep.mubr.bf16.mxu0 0
          %3741 = vmatmul.mubr.bf16.gmra.mxu0 %v3472
          %v3742 = vpop.f32.mrf.mxu0
          %v3743 = vadd.f32 0.0, %v3742
          %v3744 = vpop.f32.mrf.mxu0
          %v3745 = vpop.f32.mrf.mxu0
          %v3746 = vadd.f32 0.0, %v3745
          %v3747 = vpop.f32.mrf.mxu0
          %3748 = vmatprep.mubr.bf16.mxu0 0
          %3749 = vmatmul.mubr.bf16.gmra.mxu0 %v3473
          %v3750 = vpop.f32.mrf.mxu0
          %v3751 = vadd.f32 0.0, %v3750
          %v3752 = vpop.f32.mrf.mxu0
          %v3753 = vpop.f32.mrf.mxu0
          %v3754 = vadd.f32 0.0, %v3753
          %v3755 = vpop.f32.mrf.mxu0
          %3756 = vmatprep.mubr.bf16.mxu0 0
          %3757 = vmatmul.mubr.bf16.gmra.mxu0 %v3474
          %v3758 = vpop.f32.mrf.mxu0
          %v3759 = vadd.f32 0.0, %v3758
          %v3760 = vpop.f32.mrf.mxu0
          %v3761 = vpop.f32.mrf.mxu0
          %v3762 = vadd.f32 0.0, %v3761
          %v3763 = vpop.f32.mrf.mxu0
          %3764 = vdwg.mxu0
          %v3765 = vadd.f32 %v3427, %v3558
          %v3766 = vadd.f32 %v3428, %v3561
          %v3767 = vadd.f32 %v3429, %v3566
          %v3768 = vadd.f32 %v3430, %v3569
          %v3769 = vadd.f32 %v3431, %v3574
          %v3770 = vadd.f32 %v3432, %v3577
          %v3771 = vadd.f32 %v3433, %v3582
          %v3772 = vadd.f32 %v3434, %v3585
          %v3773 = vadd.f32 %v3435, %v3590
          %v3774 = vadd.f32 %v3436, %v3593
          %v3775 = vadd.f32 %v3437, %v3598
          %v3776 = vadd.f32 %v3438, %v3601
          %v3777 = vadd.f32 %v3439, %v3606
          %v3778 = vadd.f32 %v3440, %v3609
          %v3779 = vadd.f32 %v3441, %v3614
          %v3780 = vadd.f32 %v3442, %v3617
          %v3781 = vadd.f32 %v3443, %v3703
          %v3782 = vadd.f32 %v3444, %v3706
          %v3783 = vadd.f32 %v3445, %v3711
          %v3784 = vadd.f32 %v3446, %v3714
          %v3785 = vadd.f32 %v3447, %v3719
          %v3786 = vadd.f32 %v3448, %v3722
          %v3787 = vadd.f32 %v3449, %v3727
          %v3788 = vadd.f32 %v3450, %v3730
          %v3789 = vadd.f32 %v3451, %v3735
          %v3790 = vadd.f32 %v3452, %v3738
          %v3791 = vadd.f32 %v3453, %v3743
          %v3792 = vadd.f32 %v3454, %v3746
          %v3793 = vadd.f32 %v3455, %v3751
          %v3794 = vadd.f32 %v3456, %v3754
          %v3795 = vadd.f32 %v3457, %v3759
          %v3796 = vadd.f32 %v3458, %v3762
        $region117: #{tpu_custom_call.1} parent=67 // loop_footer
          %s2551 = sadd.s32 %s2549, 1
        $region118: #{tpu_custom_call.1} parent=67 // loop_footer_branch
          %2548 = sbr.rel target = $region114
        $region119: #{tpu_custom_call.1} parent=67 // loop_exit
          _
        %v3797 = vlaneseq
        %v3798 = vshrl.u32 %v3797, 7
        %v3799 = vadd.s32 %v3798, 8
        %v3800 = vadd.s32 %v3798, 16
        %v3801 = vadd.s32 %v3798, 24
        %v3802 = vadd.s32 %v3798, 32
        %v3803 = vadd.s32 %v3798, 40
        %v3804 = vadd.s32 %v3798, 48
        %v3805 = vadd.s32 %v3798, 56
        %v3806 = vadd.s32 %v3798, 64
        %v3807 = vadd.s32 %v3798, 72
        %v3808 = vadd.s32 %v3798, 80
        %v3809 = vadd.s32 %v3798, 88
        %v3810 = vadd.s32 %v3798, 96
        %v3811 = vadd.s32 %v3798, 104
        %v3812 = vadd.s32 %v3798, 112
        %v3813 = vadd.s32 %v3798, 120
        %v3814 = vlaneseq
        %v3815 = vand.u32 %v3814, 127
        %vm3816 = vcmp.le.s32.totalorder %v3815, %v3798
        %vm3817 = vcmp.le.s32.totalorder %v3815, %v3799
        %vm3818 = vcmp.le.s32.totalorder %v3815, %v3800
        %vm3819 = vcmp.le.s32.totalorder %v3815, %v3801
        %vm3820 = vcmp.le.s32.totalorder %v3815, %v3802
        %vm3821 = vcmp.le.s32.totalorder %v3815, %v3803
        %vm3822 = vcmp.le.s32.totalorder %v3815, %v3804
        %vm3823 = vcmp.le.s32.totalorder %v3815, %v3805
        %vm3824 = vcmp.le.s32.totalorder %v3815, %v3806
        %vm3825 = vcmp.le.s32.totalorder %v3815, %v3807
        %vm3826 = vcmp.le.s32.totalorder %v3815, %v3808
        %vm3827 = vcmp.le.s32.totalorder %v3815, %v3809
        %vm3828 = vcmp.le.s32.totalorder %v3815, %v3810
        %vm3829 = vcmp.le.s32.totalorder %v3815, %v3811
        %vm3830 = vcmp.le.s32.totalorder %v3815, %v3812
        %vm3831 = vcmp.le.s32.totalorder %v3815, %v3813
        %v3832 = vld [vmem:[%s2100] sm:$0xf]
        %v3833 = vld [vmem:[%s2100 + $0x4] sm:$0xf]
        %v3834 = vld [vmem:[%s2100 + $0x8] sm:$0xf]
        %v3835 = vld [vmem:[%s2100 + $0xc] sm:$0xf]
        %v3836 = vld [vmem:[%s2100 + $0x10] sm:$0xf]
        %v3837 = vld [vmem:[%s2100 + $0x14] sm:$0xf]
        %v3838 = vld [vmem:[%s2100 + $0x18] sm:$0xf]
        %v3839 = vld [vmem:[%s2100 + $0x1c] sm:$0xf]
        %v3840 = vld [vmem:[%s2100 + $0x20] sm:$0xf]
        %v3841 = vld [vmem:[%s2100 + $0x24] sm:$0xf]
        %v3842 = vld [vmem:[%s2100 + $0x28] sm:$0xf]
        %v3843 = vld [vmem:[%s2100 + $0x2c] sm:$0xf]
        %v3844 = vld [vmem:[%s2100 + $0x30] sm:$0xf]
        %v3845 = vld [vmem:[%s2100 + $0x34] sm:$0xf]
        %v3846 = vld [vmem:[%s2100 + $0x38] sm:$0xf]
        %v3847 = vld [vmem:[%s2100 + $0x3c] sm:$0xf]
        %v3848 = vld [vmem:[%s2100 + $0x80] sm:$0xf]
        %v3849 = vld [vmem:[%s2100 + $0x84] sm:$0xf]
        %v3850 = vld [vmem:[%s2100 + $0x88] sm:$0xf]
        %v3851 = vld [vmem:[%s2100 + $0x8c] sm:$0xf]
        %v3852 = vld [vmem:[%s2100 + $0x90] sm:$0xf]
        %v3853 = vld [vmem:[%s2100 + $0x94] sm:$0xf]
        %v3854 = vld [vmem:[%s2100 + $0x98] sm:$0xf]
        %v3855 = vld [vmem:[%s2100 + $0x9c] sm:$0xf]
        %v3856 = vld [vmem:[%s2100 + $0xa0] sm:$0xf]
        %v3857 = vld [vmem:[%s2100 + $0xa4] sm:$0xf]
        %v3858 = vld [vmem:[%s2100 + $0xa8] sm:$0xf]
        %v3859 = vld [vmem:[%s2100 + $0xac] sm:$0xf]
        %v3860 = vld [vmem:[%s2100 + $0xb0] sm:$0xf]
        %v3861 = vld [vmem:[%s2100 + $0xb4] sm:$0xf]
        %v3862 = vld [vmem:[%s2100 + $0xb8] sm:$0xf]
        %v3863 = vld [vmem:[%s2100 + $0xbc] sm:$0xf]
        %v3864 = vld [vmem:[%s2182] sm:$0xf]
        %v3865 = vld [vmem:[%s2182 + $0x4] sm:$0xf]
        %v3866 = vld [vmem:[%s2182 + $0x8] sm:$0xf]
        %v3867 = vld [vmem:[%s2182 + $0xc] sm:$0xf]
        %v3868 = vld [vmem:[%s2182 + $0x10] sm:$0xf]
        %v3869 = vld [vmem:[%s2182 + $0x14] sm:$0xf]
        %v3870 = vld [vmem:[%s2182 + $0x18] sm:$0xf]
        %v3871 = vld [vmem:[%s2182 + $0x1c] sm:$0xf]
        %v3872 = vld [vmem:[%s2182 + $0x20] sm:$0xf]
        %v3873 = vld [vmem:[%s2182 + $0x24] sm:$0xf]
        %v3874 = vld [vmem:[%s2182 + $0x28] sm:$0xf]
        %v3875 = vld [vmem:[%s2182 + $0x2c] sm:$0xf]
        %v3876 = vld [vmem:[%s2182 + $0x30] sm:$0xf]
        %v3877 = vld [vmem:[%s2182 + $0x34] sm:$0xf]
        %v3878 = vld [vmem:[%s2182 + $0x38] sm:$0xf]
        %v3879 = vld [vmem:[%s2182 + $0x3c] sm:$0xf]
        %v3880 = vld [vmem:[%s2182 + $0x80] sm:$0xf]
        %v3881 = vld [vmem:[%s2182 + $0x84] sm:$0xf]
        %v3882 = vld [vmem:[%s2182 + $0x88] sm:$0xf]
        %v3883 = vld [vmem:[%s2182 + $0x8c] sm:$0xf]
        %v3884 = vld [vmem:[%s2182 + $0x90] sm:$0xf]
        %v3885 = vld [vmem:[%s2182 + $0x94] sm:$0xf]
        %v3886 = vld [vmem:[%s2182 + $0x98] sm:$0xf]
        %v3887 = vld [vmem:[%s2182 + $0x9c] sm:$0xf]
        %v3888 = vld [vmem:[%s2182 + $0xa0] sm:$0xf]
        %v3889 = vld [vmem:[%s2182 + $0xa4] sm:$0xf]
        %v3890 = vld [vmem:[%s2182 + $0xa8] sm:$0xf]
        %v3891 = vld [vmem:[%s2182 + $0xac] sm:$0xf]
        %v3892 = vld [vmem:[%s2182 + $0xb0] sm:$0xf]
        %v3893 = vld [vmem:[%s2182 + $0xb4] sm:$0xf]
        %v3894 = vld [vmem:[%s2182 + $0xb8] sm:$0xf]
        %v3895 = vld [vmem:[%s2182 + $0xbc] sm:$0xf]
        %v3912 = vunpack.c.l.b16 %v3832
        %v3913 = vunpack.c.l.b16 %v3833
        %v3914 = vunpack.c.l.b16 %v3834
        %v3915 = vunpack.c.l.b16 %v3835
        %v3916 = vunpack.c.l.b16 %v3836
        %v3917 = vunpack.c.l.b16 %v3837
        %v3918 = vunpack.c.l.b16 %v3838
        %v3919 = vunpack.c.l.b16 %v3839
        %v3920 = vunpack.c.l.b16 %v3840
        %v3921 = vunpack.c.l.b16 %v3841
        %v3922 = vunpack.c.l.b16 %v3842
        %v3923 = vunpack.c.l.b16 %v3843
        %v3924 = vunpack.c.l.b16 %v3844
        %v3925 = vunpack.c.l.b16 %v3845
        %v3926 = vunpack.c.l.b16 %v3846
        %v3927 = vunpack.c.l.b16 %v3847
        %v3928 = vpack.c.b16 %v3913, %v3912
        %v3929 = vpack.c.b16 %v3915, %v3914
        %v3930 = vpack.c.b16 %v3917, %v3916
        %v3931 = vpack.c.b16 %v3919, %v3918
        %v3932 = vpack.c.b16 %v3921, %v3920
        %v3933 = vpack.c.b16 %v3923, %v3922
        %v3934 = vpack.c.b16 %v3925, %v3924
        %v3935 = vpack.c.b16 %v3927, %v3926
        %3944 = vmatprep.subr.bf16.mxu0 0
        %3945 = vmatpush1.bf16.xpose.msra.mxu0 %v3935
        %3946 = vmatprep.subr.bf16.mxu0 0
        %3947 = vmatpush1.bf16.xpose.msra.mxu0 %v3934
        %3948 = vmatprep.subr.bf16.mxu0 0
        %3949 = vmatpush1.bf16.xpose.msra.mxu0 %v3933
        %3950 = vmatprep.subr.bf16.mxu0 0
        %3951 = vmatpush1.bf16.xpose.msra.mxu0 %v3932
        %3952 = vmatprep.subr.bf16.mxu0 0
        %3953 = vmatpush1.bf16.xpose.msra.mxu0 %v3931
        %3954 = vmatprep.subr.bf16.mxu0 0
        %3955 = vmatpush1.bf16.xpose.msra.mxu0 %v3930
        %3956 = vmatprep.subr.bf16.mxu0 0
        %3957 = vmatpush1.bf16.xpose.msra.mxu0 %v3929
        %3958 = vmatprep.subr.bf16.mxu0 0
        %3959 = vmatpush1.bf16.xpose.msra.mxu0 %v3928
        %3960 = vmatprep.subr.bf16.mxu0 0
        %3961 = vmatpush2.bf16.xpose.msra.mxu0 0
        %3962 = vmatprep.subr.bf16.mxu0 0
        %3963 = vmatpush2.bf16.xpose.msra.mxu0 0
        %3964 = vmatprep.subr.bf16.mxu0 0
        %3965 = vmatpush2.bf16.xpose.msra.mxu0 0
        %3966 = vmatprep.subr.bf16.mxu0 0
        %3967 = vmatpush2.bf16.xpose.msra.mxu0 0
        %3968 = vmatprep.subr.bf16.mxu0 0
        %3969 = vmatpush2.bf16.xpose.msra.mxu0 0
        %3970 = vmatprep.subr.bf16.mxu0 0
        %3971 = vmatpush2.bf16.xpose.msra.mxu0 0
        %3972 = vmatprep.subr.bf16.mxu0 0
        %3973 = vmatpush2.bf16.xpose.msra.mxu0 0
        %3974 = vmatprep.subr.bf16.mxu0 0
        %3975 = vmatpush2.bf16.xpose.msra.mxu0 0
        %3976 = vmatprep.mubr.bf16.mxu0 0
        %3977 = vmatmul.mubr.bf16.gmra.mxu0 %v1945
        %v3978 = vpop.f32.mrf.mxu0
        %v3979 = vadd.f32 0.0, %v3978
        %v3980 = vpop.f32.mrf.mxu0
        %v3981 = vpop.f32.mrf.mxu0
        %v3982 = vadd.f32 0.0, %v3981
        %v3983 = vpop.f32.mrf.mxu0
        %3984 = vmatprep.mubr.bf16.mxu0 0
        %3985 = vmatmul.mubr.bf16.gmra.mxu0 %v1946
        %v3986 = vpop.f32.mrf.mxu0
        %v3987 = vadd.f32 0.0, %v3986
        %v3988 = vpop.f32.mrf.mxu0
        %v3989 = vpop.f32.mrf.mxu0
        %v3990 = vadd.f32 0.0, %v3989
        %v3991 = vpop.f32.mrf.mxu0
        %3992 = vmatprep.mubr.bf16.mxu0 0
        %3993 = vmatmul.mubr.bf16.gmra.mxu0 %v1947
        %v3994 = vpop.f32.mrf.mxu0
        %v3995 = vadd.f32 0.0, %v3994
        %v3996 = vpop.f32.mrf.mxu0
        %v3997 = vpop.f32.mrf.mxu0
        %v3998 = vadd.f32 0.0, %v3997
        %v3999 = vpop.f32.mrf.mxu0
        %4000 = vmatprep.mubr.bf16.mxu0 0
        %4001 = vmatmul.mubr.bf16.gmra.mxu0 %v1948
        %v4002 = vpop.f32.mrf.mxu0
        %v4003 = vadd.f32 0.0, %v4002
        %v4004 = vpop.f32.mrf.mxu0
        %v4005 = vpop.f32.mrf.mxu0
        %v4006 = vadd.f32 0.0, %v4005
        %v4007 = vpop.f32.mrf.mxu0
        %4008 = vmatprep.mubr.bf16.mxu0 0
        %4009 = vmatmul.mubr.bf16.gmra.mxu0 %v1949
        %v4010 = vpop.f32.mrf.mxu0
        %v4011 = vadd.f32 0.0, %v4010
        %v4012 = vpop.f32.mrf.mxu0
        %v4013 = vpop.f32.mrf.mxu0
        %v4014 = vadd.f32 0.0, %v4013
        %v4015 = vpop.f32.mrf.mxu0
        %4016 = vmatprep.mubr.bf16.mxu0 0
        %4017 = vmatmul.mubr.bf16.gmra.mxu0 %v1950
        %v4018 = vpop.f32.mrf.mxu0
        %v4019 = vadd.f32 0.0, %v4018
        %v4020 = vpop.f32.mrf.mxu0
        %v4021 = vpop.f32.mrf.mxu0
        %v4022 = vadd.f32 0.0, %v4021
        %v4023 = vpop.f32.mrf.mxu0
        %4024 = vmatprep.mubr.bf16.mxu0 0
        %4025 = vmatmul.mubr.bf16.gmra.mxu0 %v1951
        %v4026 = vpop.f32.mrf.mxu0
        %v4027 = vadd.f32 0.0, %v4026
        %v4028 = vpop.f32.mrf.mxu0
        %v4029 = vpop.f32.mrf.mxu0
        %v4030 = vadd.f32 0.0, %v4029
        %v4031 = vpop.f32.mrf.mxu0
        %4032 = vmatprep.mubr.bf16.mxu0 0
        %4033 = vmatmul.mubr.bf16.gmra.mxu0 %v1952
        %v4034 = vpop.f32.mrf.mxu0
        %v4035 = vadd.f32 0.0, %v4034
        %v4036 = vpop.f32.mrf.mxu0
        %v4037 = vpop.f32.mrf.mxu0
        %v4038 = vadd.f32 0.0, %v4037
        %v4039 = vpop.f32.mrf.mxu0
        %4040 = vdwg.mxu0
        %v4057 = vunpack.c.l.b16 %v3848
        %v4058 = vunpack.c.l.b16 %v3849
        %v4059 = vunpack.c.l.b16 %v3850
        %v4060 = vunpack.c.l.b16 %v3851
        %v4061 = vunpack.c.l.b16 %v3852
        %v4062 = vunpack.c.l.b16 %v3853
        %v4063 = vunpack.c.l.b16 %v3854
        %v4064 = vunpack.c.l.b16 %v3855
        %v4065 = vunpack.c.l.b16 %v3856
        %v4066 = vunpack.c.l.b16 %v3857
        %v4067 = vunpack.c.l.b16 %v3858
        %v4068 = vunpack.c.l.b16 %v3859
        %v4069 = vunpack.c.l.b16 %v3860
        %v4070 = vunpack.c.l.b16 %v3861
        %v4071 = vunpack.c.l.b16 %v3862
        %v4072 = vunpack.c.l.b16 %v3863
        %v4073 = vpack.c.b16 %v4058, %v4057
        %v4074 = vpack.c.b16 %v4060, %v4059
        %v4075 = vpack.c.b16 %v4062, %v4061
        %v4076 = vpack.c.b16 %v4064, %v4063
        %v4077 = vpack.c.b16 %v4066, %v4065
        %v4078 = vpack.c.b16 %v4068, %v4067
        %v4079 = vpack.c.b16 %v4070, %v4069
        %v4080 = vpack.c.b16 %v4072, %v4071
        %4089 = vmatprep.subr.bf16.mxu0 0
        %4090 = vmatpush1.bf16.xpose.msra.mxu0 %v4080
        %4091 = vmatprep.subr.bf16.mxu0 0
        %4092 = vmatpush1.bf16.xpose.msra.mxu0 %v4079
        %4093 = vmatprep.subr.bf16.mxu0 0
        %4094 = vmatpush1.bf16.xpose.msra.mxu0 %v4078
        %4095 = vmatprep.subr.bf16.mxu0 0
        %4096 = vmatpush1.bf16.xpose.msra.mxu0 %v4077
        %4097 = vmatprep.subr.bf16.mxu0 0
        %4098 = vmatpush1.bf16.xpose.msra.mxu0 %v4076
        %4099 = vmatprep.subr.bf16.mxu0 0
        %4100 = vmatpush1.bf16.xpose.msra.mxu0 %v4075
        %4101 = vmatprep.subr.bf16.mxu0 0
        %4102 = vmatpush1.bf16.xpose.msra.mxu0 %v4074
        %4103 = vmatprep.subr.bf16.mxu0 0
        %4104 = vmatpush1.bf16.xpose.msra.mxu0 %v4073
        %4105 = vmatprep.subr.bf16.mxu0 0
        %4106 = vmatpush2.bf16.xpose.msra.mxu0 0
        %4107 = vmatprep.subr.bf16.mxu0 0
        %4108 = vmatpush2.bf16.xpose.msra.mxu0 0
        %4109 = vmatprep.subr.bf16.mxu0 0
        %4110 = vmatpush2.bf16.xpose.msra.mxu0 0
        %4111 = vmatprep.subr.bf16.mxu0 0
        %4112 = vmatpush2.bf16.xpose.msra.mxu0 0
        %4113 = vmatprep.subr.bf16.mxu0 0
        %4114 = vmatpush2.bf16.xpose.msra.mxu0 0
        %4115 = vmatprep.subr.bf16.mxu0 0
        %4116 = vmatpush2.bf16.xpose.msra.mxu0 0
        %4117 = vmatprep.subr.bf16.mxu0 0
        %4118 = vmatpush2.bf16.xpose.msra.mxu0 0
        %4119 = vmatprep.subr.bf16.mxu0 0
        %4120 = vmatpush2.bf16.xpose.msra.mxu0 0
        %4121 = vmatprep.mubr.bf16.mxu0 0
        %4122 = vmatmul.mubr.bf16.gmra.mxu0 %v2295
        %v4123 = vpop.f32.mrf.mxu0
        %v4124 = vadd.f32 0.0, %v4123
        %v4125 = vpop.f32.mrf.mxu0
        %v4126 = vpop.f32.mrf.mxu0
        %v4127 = vadd.f32 0.0, %v4126
        %v4128 = vpop.f32.mrf.mxu0
        %4129 = vmatprep.mubr.bf16.mxu0 0
        %4130 = vmatmul.mubr.bf16.gmra.mxu0 %v2296
        %v4131 = vpop.f32.mrf.mxu0
        %v4132 = vadd.f32 0.0, %v4131
        %v4133 = vpop.f32.mrf.mxu0
        %v4134 = vpop.f32.mrf.mxu0
        %v4135 = vadd.f32 0.0, %v4134
        %v4136 = vpop.f32.mrf.mxu0
        %4137 = vmatprep.mubr.bf16.mxu0 0
        %4138 = vmatmul.mubr.bf16.gmra.mxu0 %v2297
        %v4139 = vpop.f32.mrf.mxu0
        %v4140 = vadd.f32 0.0, %v4139
        %v4141 = vpop.f32.mrf.mxu0
        %v4142 = vpop.f32.mrf.mxu0
        %v4143 = vadd.f32 0.0, %v4142
        %v4144 = vpop.f32.mrf.mxu0
        %4145 = vmatprep.mubr.bf16.mxu0 0
        %4146 = vmatmul.mubr.bf16.gmra.mxu0 %v2298
        %v4147 = vpop.f32.mrf.mxu0
        %v4148 = vadd.f32 0.0, %v4147
        %v4149 = vpop.f32.mrf.mxu0
        %v4150 = vpop.f32.mrf.mxu0
        %v4151 = vadd.f32 0.0, %v4150
        %v4152 = vpop.f32.mrf.mxu0
        %4153 = vmatprep.mubr.bf16.mxu0 0
        %4154 = vmatmul.mubr.bf16.gmra.mxu0 %v2299
        %v4155 = vpop.f32.mrf.mxu0
        %v4156 = vadd.f32 0.0, %v4155
        %v4157 = vpop.f32.mrf.mxu0
        %v4158 = vpop.f32.mrf.mxu0
        %v4159 = vadd.f32 0.0, %v4158
        %v4160 = vpop.f32.mrf.mxu0
        %4161 = vmatprep.mubr.bf16.mxu0 0
        %4162 = vmatmul.mubr.bf16.gmra.mxu0 %v2300
        %v4163 = vpop.f32.mrf.mxu0
        %v4164 = vadd.f32 0.0, %v4163
        %v4165 = vpop.f32.mrf.mxu0
        %v4166 = vpop.f32.mrf.mxu0
        %v4167 = vadd.f32 0.0, %v4166
        %v4168 = vpop.f32.mrf.mxu0
        %4169 = vmatprep.mubr.bf16.mxu0 0
        %4170 = vmatmul.mubr.bf16.gmra.mxu0 %v2301
        %v4171 = vpop.f32.mrf.mxu0
        %v4172 = vadd.f32 0.0, %v4171
        %v4173 = vpop.f32.mrf.mxu0
        %v4174 = vpop.f32.mrf.mxu0
        %v4175 = vadd.f32 0.0, %v4174
        %v4176 = vpop.f32.mrf.mxu0
        %4177 = vmatprep.mubr.bf16.mxu0 0
        %4178 = vmatmul.mubr.bf16.gmra.mxu0 %v2302
        %v4179 = vpop.f32.mrf.mxu0
        %v4180 = vadd.f32 0.0, %v4179
        %v4181 = vpop.f32.mrf.mxu0
        %v4182 = vpop.f32.mrf.mxu0
        %v4183 = vadd.f32 0.0, %v4182
        %v4184 = vpop.f32.mrf.mxu0
        %4185 = vdwg.mxu0
        %v4186 = vsel %vm3816, 1, 0
        %v4187 = vsel %vm3817, 1, 0
        %v4188 = vsel %vm3818, 1, 0
        %v4189 = vsel %vm3819, 1, 0
        %v4190 = vsel %vm3820, 1, 0
        %v4191 = vsel %vm3821, 1, 0
        %v4192 = vsel %vm3822, 1, 0
        %v4193 = vsel %vm3823, 1, 0
        %v4194 = vsel %vm3824, 1, 0
        %v4195 = vsel %vm3825, 1, 0
        %v4196 = vsel %vm3826, 1, 0
        %v4197 = vsel %vm3827, 1, 0
        %v4198 = vsel %vm3828, 1, 0
        %v4199 = vsel %vm3829, 1, 0
        %v4200 = vsel %vm3830, 1, 0
        %v4201 = vsel %vm3831, 1, 0
        %vm4202 = vcmp.eq.s32.totalorder %v4186, 1
        %vm4203 = vcmp.eq.s32.totalorder %v4187, 1
        %vm4204 = vcmp.eq.s32.totalorder %v4188, 1
        %vm4205 = vcmp.eq.s32.totalorder %v4189, 1
        %vm4206 = vcmp.eq.s32.totalorder %v4190, 1
        %vm4207 = vcmp.eq.s32.totalorder %v4191, 1
        %vm4208 = vcmp.eq.s32.totalorder %v4192, 1
        %vm4209 = vcmp.eq.s32.totalorder %v4193, 1
        %vm4210 = vcmp.eq.s32.totalorder %v4194, 1
        %vm4211 = vcmp.eq.s32.totalorder %v4195, 1
        %vm4212 = vcmp.eq.s32.totalorder %v4196, 1
        %vm4213 = vcmp.eq.s32.totalorder %v4197, 1
        %vm4214 = vcmp.eq.s32.totalorder %v4198, 1
        %vm4215 = vcmp.eq.s32.totalorder %v4199, 1
        %vm4216 = vcmp.eq.s32.totalorder %v4200, 1
        %vm4217 = vcmp.eq.s32.totalorder %v4201, 1
        %v4218 = vsel %vm4202, %v3979, -1e+09
        %v4219 = vsel %vm4203, %v3982, -1e+09
        %v4220 = vsel %vm4204, %v3987, -1e+09
        %v4221 = vsel %vm4205, %v3990, -1e+09
        %v4222 = vsel %vm4206, %v3995, -1e+09
        %v4223 = vsel %vm4207, %v3998, -1e+09
        %v4224 = vsel %vm4208, %v4003, -1e+09
        %v4225 = vsel %vm4209, %v4006, -1e+09
        %v4226 = vsel %vm4210, %v4011, -1e+09
        %v4227 = vsel %vm4211, %v4014, -1e+09
        %v4228 = vsel %vm4212, %v4019, -1e+09
        %v4229 = vsel %vm4213, %v4022, -1e+09
        %v4230 = vsel %vm4214, %v4027, -1e+09
        %v4231 = vsel %vm4215, %v4030, -1e+09
        %v4232 = vsel %vm4216, %v4035, -1e+09
        %v4233 = vsel %vm4217, %v4038, -1e+09
        %v4234 = vsel %vm4202, %v4124, -1e+09
        %v4235 = vsel %vm4203, %v4127, -1e+09
        %v4236 = vsel %vm4204, %v4132, -1e+09
        %v4237 = vsel %vm4205, %v4135, -1e+09
        %v4238 = vsel %vm4206, %v4140, -1e+09
        %v4239 = vsel %vm4207, %v4143, -1e+09
        %v4240 = vsel %vm4208, %v4148, -1e+09
        %v4241 = vsel %vm4209, %v4151, -1e+09
        %v4242 = vsel %vm4210, %v4156, -1e+09
        %v4243 = vsel %vm4211, %v4159, -1e+09
        %v4244 = vsel %vm4212, %v4164, -1e+09
        %v4245 = vsel %vm4213, %v4167, -1e+09
        %v4246 = vsel %vm4214, %v4172, -1e+09
        %v4247 = vsel %vm4215, %v4175, -1e+09
        %v4248 = vsel %vm4216, %v4180, -1e+09
        %v4249 = vsel %vm4217, %v4183, -1e+09
        %4250 = vmax.xlane.f32.xlu0 %v4218
        %v4251 = vpop.xlane.xlu0 %4250
        %4252 = vmax.xlane.f32.xlu0 %v4219
        %v4253 = vpop.xlane.xlu0 %4252
        %4254 = vmax.xlane.f32.xlu0 %v4220
        %v4255 = vpop.xlane.xlu0 %4254
        %4256 = vmax.xlane.f32.xlu0 %v4221
        %v4257 = vpop.xlane.xlu0 %4256
        %4258 = vmax.xlane.f32.xlu0 %v4222
        %v4259 = vpop.xlane.xlu0 %4258
        %4260 = vmax.xlane.f32.xlu0 %v4223
        %v4261 = vpop.xlane.xlu0 %4260
        %4262 = vmax.xlane.f32.xlu0 %v4224
        %v4263 = vpop.xlane.xlu0 %4262
        %4264 = vmax.xlane.f32.xlu0 %v4225
        %v4265 = vpop.xlane.xlu0 %4264
        %4266 = vmax.xlane.f32.xlu0 %v4226
        %v4267 = vpop.xlane.xlu0 %4266
        %4268 = vmax.xlane.f32.xlu0 %v4227
        %v4269 = vpop.xlane.xlu0 %4268
        %4270 = vmax.xlane.f32.xlu0 %v4228
        %v4271 = vpop.xlane.xlu0 %4270
        %4272 = vmax.xlane.f32.xlu0 %v4229
        %v4273 = vpop.xlane.xlu0 %4272
        %4274 = vmax.xlane.f32.xlu0 %v4230
        %v4275 = vpop.xlane.xlu0 %4274
        %4276 = vmax.xlane.f32.xlu0 %v4231
        %v4277 = vpop.xlane.xlu0 %4276
        %4278 = vmax.xlane.f32.xlu0 %v4232
        %v4279 = vpop.xlane.xlu0 %4278
        %4280 = vmax.xlane.f32.xlu0 %v4233
        %v4281 = vpop.xlane.xlu0 %4280
        %4282 = vmax.xlane.f32.xlu0 %v4234
        %v4283 = vpop.xlane.xlu0 %4282
        %4284 = vmax.xlane.f32.xlu0 %v4235
        %v4285 = vpop.xlane.xlu0 %4284
        %4286 = vmax.xlane.f32.xlu0 %v4236
        %v4287 = vpop.xlane.xlu0 %4286
        %4288 = vmax.xlane.f32.xlu0 %v4237
        %v4289 = vpop.xlane.xlu0 %4288
        %4290 = vmax.xlane.f32.xlu0 %v4238
        %v4291 = vpop.xlane.xlu0 %4290
        %4292 = vmax.xlane.f32.xlu0 %v4239
        %v4293 = vpop.xlane.xlu0 %4292
        %4294 = vmax.xlane.f32.xlu0 %v4240
        %v4295 = vpop.xlane.xlu0 %4294
        %4296 = vmax.xlane.f32.xlu0 %v4241
        %v4297 = vpop.xlane.xlu0 %4296
        %4298 = vmax.xlane.f32.xlu0 %v4242
        %v4299 = vpop.xlane.xlu0 %4298
        %4300 = vmax.xlane.f32.xlu0 %v4243
        %v4301 = vpop.xlane.xlu0 %4300
        %4302 = vmax.xlane.f32.xlu0 %v4244
        %v4303 = vpop.xlane.xlu0 %4302
        %4304 = vmax.xlane.f32.xlu0 %v4245
        %v4305 = vpop.xlane.xlu0 %4304
        %4306 = vmax.xlane.f32.xlu0 %v4246
        %v4307 = vpop.xlane.xlu0 %4306
        %4308 = vmax.xlane.f32.xlu0 %v4247
        %v4309 = vpop.xlane.xlu0 %4308
        %4310 = vmax.xlane.f32.xlu0 %v4248
        %v4311 = vpop.xlane.xlu0 %4310
        %4312 = vmax.xlane.f32.xlu0 %v4249
        %v4313 = vpop.xlane.xlu0 %4312
        %v4314 = vmax.f32 %v2554, %v4251
        %v4315 = vmax.f32 %v2555, %v4253
        %v4316 = vmax.f32 %v2556, %v4255
        %v4317 = vmax.f32 %v2557, %v4257
        %v4318 = vmax.f32 %v2558, %v4259
        %v4319 = vmax.f32 %v2559, %v4261
        %v4320 = vmax.f32 %v2560, %v4263
        %v4321 = vmax.f32 %v2561, %v4265
        %v4322 = vmax.f32 %v2562, %v4267
        %v4323 = vmax.f32 %v2563, %v4269
        %v4324 = vmax.f32 %v2564, %v4271
        %v4325 = vmax.f32 %v2565, %v4273
        %v4326 = vmax.f32 %v2566, %v4275
        %v4327 = vmax.f32 %v2567, %v4277
        %v4328 = vmax.f32 %v2568, %v4279
        %v4329 = vmax.f32 %v2569, %v4281
        %v4330 = vmax.f32 %v2570, %v4283
        %v4331 = vmax.f32 %v2571, %v4285
        %v4332 = vmax.f32 %v2572, %v4287
        %v4333 = vmax.f32 %v2573, %v4289
        %v4334 = vmax.f32 %v2574, %v4291
        %v4335 = vmax.f32 %v2575, %v4293
        %v4336 = vmax.f32 %v2576, %v4295
        %v4337 = vmax.f32 %v2577, %v4297
        %v4338 = vmax.f32 %v2578, %v4299
        %v4339 = vmax.f32 %v2579, %v4301
        %v4340 = vmax.f32 %v2580, %v4303
        %v4341 = vmax.f32 %v2581, %v4305
        %v4342 = vmax.f32 %v2582, %v4307
        %v4343 = vmax.f32 %v2583, %v4309
        %v4344 = vmax.f32 %v2584, %v4311
        %v4345 = vmax.f32 %v2585, %v4313
        %v4346 = vsub.f32 %v2554, %v4314
        %v4347 = vsub.f32 %v2555, %v4315
        %v4348 = vsub.f32 %v2556, %v4316
        %v4349 = vsub.f32 %v2557, %v4317
        %v4350 = vsub.f32 %v2558, %v4318
        %v4351 = vsub.f32 %v2559, %v4319
        %v4352 = vsub.f32 %v2560, %v4320
        %v4353 = vsub.f32 %v2561, %v4321
        %v4354 = vsub.f32 %v2562, %v4322
        %v4355 = vsub.f32 %v2563, %v4323
        %v4356 = vsub.f32 %v2564, %v4324
        %v4357 = vsub.f32 %v2565, %v4325
        %v4358 = vsub.f32 %v2566, %v4326
        %v4359 = vsub.f32 %v2567, %v4327
        %v4360 = vsub.f32 %v2568, %v4328
        %v4361 = vsub.f32 %v2569, %v4329
        %v4362 = vsub.f32 %v2570, %v4330
        %v4363 = vsub.f32 %v2571, %v4331
        %v4364 = vsub.f32 %v2572, %v4332
        %v4365 = vsub.f32 %v2573, %v4333
        %v4366 = vsub.f32 %v2574, %v4334
        %v4367 = vsub.f32 %v2575, %v4335
        %v4368 = vsub.f32 %v2576, %v4336
        %v4369 = vsub.f32 %v2577, %v4337
        %v4370 = vsub.f32 %v2578, %v4338
        %v4371 = vsub.f32 %v2579, %v4339
        %v4372 = vsub.f32 %v2580, %v4340
        %v4373 = vsub.f32 %v2581, %v4341
        %v4374 = vsub.f32 %v2582, %v4342
        %v4375 = vsub.f32 %v2583, %v4343
        %v4376 = vsub.f32 %v2584, %v4344
        %v4377 = vsub.f32 %v2585, %v4345
        %v4378 = vmul.f32 %v4346, 1.442695
        %v4379 = vpow.pop %v4378
        %v4380 = vmul.f32 %v4347, 1.442695
        %v4381 = vpow.pop %v4380
        %v4382 = vmul.f32 %v4348, 1.442695
        %v4383 = vpow.pop %v4382
        %v4384 = vmul.f32 %v4349, 1.442695
        %v4385 = vpow.pop %v4384
        %v4386 = vmul.f32 %v4350, 1.442695
        %v4387 = vpow.pop %v4386
        %v4388 = vmul.f32 %v4351, 1.442695
        %v4389 = vpow.pop %v4388
        %v4390 = vmul.f32 %v4352, 1.442695
        %v4391 = vpow.pop %v4390
        %v4392 = vmul.f32 %v4353, 1.442695
        %v4393 = vpow.pop %v4392
        %v4394 = vmul.f32 %v4354, 1.442695
        %v4395 = vpow.pop %v4394
        %v4396 = vmul.f32 %v4355, 1.442695
        %v4397 = vpow.pop %v4396
        %v4398 = vmul.f32 %v4356, 1.442695
        %v4399 = vpow.pop %v4398
        %v4400 = vmul.f32 %v4357, 1.442695
        %v4401 = vpow.pop %v4400
        %v4402 = vmul.f32 %v4358, 1.442695
        %v4403 = vpow.pop %v4402
        %v4404 = vmul.f32 %v4359, 1.442695
        %v4405 = vpow.pop %v4404
        %v4406 = vmul.f32 %v4360, 1.442695
        %v4407 = vpow.pop %v4406
        %v4408 = vmul.f32 %v4361, 1.442695
        %v4409 = vpow.pop %v4408
        %v4410 = vmul.f32 %v4362, 1.442695
        %v4411 = vpow.pop %v4410
        %v4412 = vmul.f32 %v4363, 1.442695
        %v4413 = vpow.pop %v4412
        %v4414 = vmul.f32 %v4364, 1.442695
        %v4415 = vpow.pop %v4414
        %v4416 = vmul.f32 %v4365, 1.442695
        %v4417 = vpow.pop %v4416
        %v4418 = vmul.f32 %v4366, 1.442695
        %v4419 = vpow.pop %v4418
        %v4420 = vmul.f32 %v4367, 1.442695
        %v4421 = vpow.pop %v4420
        %v4422 = vmul.f32 %v4368, 1.442695
        %v4423 = vpow.pop %v4422
        %v4424 = vmul.f32 %v4369, 1.442695
        %v4425 = vpow.pop %v4424
        %v4426 = vmul.f32 %v4370, 1.442695
        %v4427 = vpow.pop %v4426
        %v4428 = vmul.f32 %v4371, 1.442695
        %v4429 = vpow.pop %v4428
        %v4430 = vmul.f32 %v4372, 1.442695
        %v4431 = vpow.pop %v4430
        %v4432 = vmul.f32 %v4373, 1.442695
        %v4433 = vpow.pop %v4432
        %v4434 = vmul.f32 %v4374, 1.442695
        %v4435 = vpow.pop %v4434
        %v4436 = vmul.f32 %v4375, 1.442695
        %v4437 = vpow.pop %v4436
        %v4438 = vmul.f32 %v4376, 1.442695
        %v4439 = vpow.pop %v4438
        %v4440 = vmul.f32 %v4377, 1.442695
        %v4441 = vpow.pop %v4440
        %v4442 = vsub.f32 %v4218, %v4314
        %v4443 = vsub.f32 %v4219, %v4315
        %v4444 = vsub.f32 %v4220, %v4316
        %v4445 = vsub.f32 %v4221, %v4317
        %v4446 = vsub.f32 %v4222, %v4318
        %v4447 = vsub.f32 %v4223, %v4319
        %v4448 = vsub.f32 %v4224, %v4320
        %v4449 = vsub.f32 %v4225, %v4321
        %v4450 = vsub.f32 %v4226, %v4322
        %v4451 = vsub.f32 %v4227, %v4323
        %v4452 = vsub.f32 %v4228, %v4324
        %v4453 = vsub.f32 %v4229, %v4325
        %v4454 = vsub.f32 %v4230, %v4326
        %v4455 = vsub.f32 %v4231, %v4327
        %v4456 = vsub.f32 %v4232, %v4328
        %v4457 = vsub.f32 %v4233, %v4329
        %v4458 = vsub.f32 %v4234, %v4330
        %v4459 = vsub.f32 %v4235, %v4331
        %v4460 = vsub.f32 %v4236, %v4332
        %v4461 = vsub.f32 %v4237, %v4333
        %v4462 = vsub.f32 %v4238, %v4334
        %v4463 = vsub.f32 %v4239, %v4335
        %v4464 = vsub.f32 %v4240, %v4336
        %v4465 = vsub.f32 %v4241, %v4337
        %v4466 = vsub.f32 %v4242, %v4338
        %v4467 = vsub.f32 %v4243, %v4339
        %v4468 = vsub.f32 %v4244, %v4340
        %v4469 = vsub.f32 %v4245, %v4341
        %v4470 = vsub.f32 %v4246, %v4342
        %v4471 = vsub.f32 %v4247, %v4343
        %v4472 = vsub.f32 %v4248, %v4344
        %v4473 = vsub.f32 %v4249, %v4345
        %v4474 = vmul.f32 %v4442, 1.442695
        %v4475 = vpow.pop %v4474
        %v4476 = vmul.f32 %v4443, 1.442695
        %v4477 = vpow.pop %v4476
        %v4478 = vmul.f32 %v4444, 1.442695
        %v4479 = vpow.pop %v4478
        %v4480 = vmul.f32 %v4445, 1.442695
        %v4481 = vpow.pop %v4480
        %v4482 = vmul.f32 %v4446, 1.442695
        %v4483 = vpow.pop %v4482
        %v4484 = vmul.f32 %v4447, 1.442695
        %v4485 = vpow.pop %v4484
        %v4486 = vmul.f32 %v4448, 1.442695
        %v4487 = vpow.pop %v4486
        %v4488 = vmul.f32 %v4449, 1.442695
        %v4489 = vpow.pop %v4488
        %v4490 = vmul.f32 %v4450, 1.442695
        %v4491 = vpow.pop %v4490
        %v4492 = vmul.f32 %v4451, 1.442695
        %v4493 = vpow.pop %v4492
        %v4494 = vmul.f32 %v4452, 1.442695
        %v4495 = vpow.pop %v4494
        %v4496 = vmul.f32 %v4453, 1.442695
        %v4497 = vpow.pop %v4496
        %v4498 = vmul.f32 %v4454, 1.442695
        %v4499 = vpow.pop %v4498
        %v4500 = vmul.f32 %v4455, 1.442695
        %v4501 = vpow.pop %v4500
        %v4502 = vmul.f32 %v4456, 1.442695
        %v4503 = vpow.pop %v4502
        %v4504 = vmul.f32 %v4457, 1.442695
        %v4505 = vpow.pop %v4504
        %v4506 = vmul.f32 %v4458, 1.442695
        %v4507 = vpow.pop %v4506
        %v4508 = vmul.f32 %v4459, 1.442695
        %v4509 = vpow.pop %v4508
        %v4510 = vmul.f32 %v4460, 1.442695
        %v4511 = vpow.pop %v4510
        %v4512 = vmul.f32 %v4461, 1.442695
        %v4513 = vpow.pop %v4512
        %v4514 = vmul.f32 %v4462, 1.442695
        %v4515 = vpow.pop %v4514
        %v4516 = vmul.f32 %v4463, 1.442695
        %v4517 = vpow.pop %v4516
        %v4518 = vmul.f32 %v4464, 1.442695
        %v4519 = vpow.pop %v4518
        %v4520 = vmul.f32 %v4465, 1.442695
        %v4521 = vpow.pop %v4520
        %v4522 = vmul.f32 %v4466, 1.442695
        %v4523 = vpow.pop %v4522
        %v4524 = vmul.f32 %v4467, 1.442695
        %v4525 = vpow.pop %v4524
        %v4526 = vmul.f32 %v4468, 1.442695
        %v4527 = vpow.pop %v4526
        %v4528 = vmul.f32 %v4469, 1.442695
        %v4529 = vpow.pop %v4528
        %v4530 = vmul.f32 %v4470, 1.442695
        %v4531 = vpow.pop %v4530
        %v4532 = vmul.f32 %v4471, 1.442695
        %v4533 = vpow.pop %v4532
        %v4534 = vmul.f32 %v4472, 1.442695
        %v4535 = vpow.pop %v4534
        %v4536 = vmul.f32 %v4473, 1.442695
        %v4537 = vpow.pop %v4536
        %v4538 = vmul.f32 %v4379, %v2586
        %v4539 = vmul.f32 %v4381, %v2587
        %v4540 = vmul.f32 %v4383, %v2588
        %v4541 = vmul.f32 %v4385, %v2589
        %v4542 = vmul.f32 %v4387, %v2590
        %v4543 = vmul.f32 %v4389, %v2591
        %v4544 = vmul.f32 %v4391, %v2592
        %v4545 = vmul.f32 %v4393, %v2593
        %v4546 = vmul.f32 %v4395, %v2594
        %v4547 = vmul.f32 %v4397, %v2595
        %v4548 = vmul.f32 %v4399, %v2596
        %v4549 = vmul.f32 %v4401, %v2597
        %v4550 = vmul.f32 %v4403, %v2598
        %v4551 = vmul.f32 %v4405, %v2599
        %v4552 = vmul.f32 %v4407, %v2600
        %v4553 = vmul.f32 %v4409, %v2601
        %v4554 = vmul.f32 %v4411, %v2602
        %v4555 = vmul.f32 %v4413, %v2603
        %v4556 = vmul.f32 %v4415, %v2604
        %v4557 = vmul.f32 %v4417, %v2605
        %v4558 = vmul.f32 %v4419, %v2606
        %v4559 = vmul.f32 %v4421, %v2607
        %v4560 = vmul.f32 %v4423, %v2608
        %v4561 = vmul.f32 %v4425, %v2609
        %v4562 = vmul.f32 %v4427, %v2610
        %v4563 = vmul.f32 %v4429, %v2611
        %v4564 = vmul.f32 %v4431, %v2612
        %v4565 = vmul.f32 %v4433, %v2613
        %v4566 = vmul.f32 %v4435, %v2614
        %v4567 = vmul.f32 %v4437, %v2615
        %v4568 = vmul.f32 %v4439, %v2616
        %v4569 = vmul.f32 %v4441, %v2617
        %4570 = vadd.xlane.f32.xlu0 %v4475
        %v4571 = vpop.xlane.xlu0 %4570
        %4572 = vadd.xlane.f32.xlu0 %v4477
        %v4573 = vpop.xlane.xlu0 %4572
        %4574 = vadd.xlane.f32.xlu0 %v4479
        %v4575 = vpop.xlane.xlu0 %4574
        %4576 = vadd.xlane.f32.xlu0 %v4481
        %v4577 = vpop.xlane.xlu0 %4576
        %4578 = vadd.xlane.f32.xlu0 %v4483
        %v4579 = vpop.xlane.xlu0 %4578
        %4580 = vadd.xlane.f32.xlu0 %v4485
        %v4581 = vpop.xlane.xlu0 %4580
        %4582 = vadd.xlane.f32.xlu0 %v4487
        %v4583 = vpop.xlane.xlu0 %4582
        %4584 = vadd.xlane.f32.xlu0 %v4489
        %v4585 = vpop.xlane.xlu0 %4584
        %4586 = vadd.xlane.f32.xlu0 %v4491
        %v4587 = vpop.xlane.xlu0 %4586
        %4588 = vadd.xlane.f32.xlu0 %v4493
        %v4589 = vpop.xlane.xlu0 %4588
        %4590 = vadd.xlane.f32.xlu0 %v4495
        %v4591 = vpop.xlane.xlu0 %4590
        %4592 = vadd.xlane.f32.xlu0 %v4497
        %v4593 = vpop.xlane.xlu0 %4592
        %4594 = vadd.xlane.f32.xlu0 %v4499
        %v4595 = vpop.xlane.xlu0 %4594
        %4596 = vadd.xlane.f32.xlu0 %v4501
        %v4597 = vpop.xlane.xlu0 %4596
        %4598 = vadd.xlane.f32.xlu0 %v4503
        %v4599 = vpop.xlane.xlu0 %4598
        %4600 = vadd.xlane.f32.xlu0 %v4505
        %v4601 = vpop.xlane.xlu0 %4600
        %4602 = vadd.xlane.f32.xlu0 %v4507
        %v4603 = vpop.xlane.xlu0 %4602
        %4604 = vadd.xlane.f32.xlu0 %v4509
        %v4605 = vpop.xlane.xlu0 %4604
        %4606 = vadd.xlane.f32.xlu0 %v4511
        %v4607 = vpop.xlane.xlu0 %4606
        %4608 = vadd.xlane.f32.xlu0 %v4513
        %v4609 = vpop.xlane.xlu0 %4608
        %4610 = vadd.xlane.f32.xlu0 %v4515
        %v4611 = vpop.xlane.xlu0 %4610
        %4612 = vadd.xlane.f32.xlu0 %v4517
        %v4613 = vpop.xlane.xlu0 %4612
        %4614 = vadd.xlane.f32.xlu0 %v4519
        %v4615 = vpop.xlane.xlu0 %4614
        %4616 = vadd.xlane.f32.xlu0 %v4521
        %v4617 = vpop.xlane.xlu0 %4616
        %4618 = vadd.xlane.f32.xlu0 %v4523
        %v4619 = vpop.xlane.xlu0 %4618
        %4620 = vadd.xlane.f32.xlu0 %v4525
        %v4621 = vpop.xlane.xlu0 %4620
        %4622 = vadd.xlane.f32.xlu0 %v4527
        %v4623 = vpop.xlane.xlu0 %4622
        %4624 = vadd.xlane.f32.xlu0 %v4529
        %v4625 = vpop.xlane.xlu0 %4624
        %4626 = vadd.xlane.f32.xlu0 %v4531
        %v4627 = vpop.xlane.xlu0 %4626
        %4628 = vadd.xlane.f32.xlu0 %v4533
        %v4629 = vpop.xlane.xlu0 %4628
        %4630 = vadd.xlane.f32.xlu0 %v4535
        %v4631 = vpop.xlane.xlu0 %4630
        %4632 = vadd.xlane.f32.xlu0 %v4537
        %v4633 = vpop.xlane.xlu0 %4632
        %v4634 = vadd.f32 %v4538, %v4571
        %v4635 = vadd.f32 %v4539, %v4573
        %v4636 = vadd.f32 %v4540, %v4575
        %v4637 = vadd.f32 %v4541, %v4577
        %v4638 = vadd.f32 %v4542, %v4579
        %v4639 = vadd.f32 %v4543, %v4581
        %v4640 = vadd.f32 %v4544, %v4583
        %v4641 = vadd.f32 %v4545, %v4585
        %v4642 = vadd.f32 %v4546, %v4587
        %v4643 = vadd.f32 %v4547, %v4589
        %v4644 = vadd.f32 %v4548, %v4591
        %v4645 = vadd.f32 %v4549, %v4593
        %v4646 = vadd.f32 %v4550, %v4595
        %v4647 = vadd.f32 %v4551, %v4597
        %v4648 = vadd.f32 %v4552, %v4599
        %v4649 = vadd.f32 %v4553, %v4601
        %v4650 = vadd.f32 %v4554, %v4603
        %v4651 = vadd.f32 %v4555, %v4605
        %v4652 = vadd.f32 %v4556, %v4607
        %v4653 = vadd.f32 %v4557, %v4609
        %v4654 = vadd.f32 %v4558, %v4611
        %v4655 = vadd.f32 %v4559, %v4613
        %v4656 = vadd.f32 %v4560, %v4615
        %v4657 = vadd.f32 %v4561, %v4617
        %v4658 = vadd.f32 %v4562, %v4619
        %v4659 = vadd.f32 %v4563, %v4621
        %v4660 = vadd.f32 %v4564, %v4623
        %v4661 = vadd.f32 %v4565, %v4625
        %v4662 = vadd.f32 %v4566, %v4627
        %v4663 = vadd.f32 %v4567, %v4629
        %v4664 = vadd.f32 %v4568, %v4631
        %v4665 = vadd.f32 %v4569, %v4633
        %v4666 = vmul.f32 %v4379, %v2618
        %v4667 = vmul.f32 %v4381, %v2619
        %v4668 = vmul.f32 %v4383, %v2620
        %v4669 = vmul.f32 %v4385, %v2621
        %v4670 = vmul.f32 %v4387, %v2622
        %v4671 = vmul.f32 %v4389, %v2623
        %v4672 = vmul.f32 %v4391, %v2624
        %v4673 = vmul.f32 %v4393, %v2625
        %v4674 = vmul.f32 %v4395, %v2626
        %v4675 = vmul.f32 %v4397, %v2627
        %v4676 = vmul.f32 %v4399, %v2628
        %v4677 = vmul.f32 %v4401, %v2629
        %v4678 = vmul.f32 %v4403, %v2630
        %v4679 = vmul.f32 %v4405, %v2631
        %v4680 = vmul.f32 %v4407, %v2632
        %v4681 = vmul.f32 %v4409, %v2633
        %v4682 = vmul.f32 %v4411, %v2634
        %v4683 = vmul.f32 %v4413, %v2635
        %v4684 = vmul.f32 %v4415, %v2636
        %v4685 = vmul.f32 %v4417, %v2637
        %v4686 = vmul.f32 %v4419, %v2638
        %v4687 = vmul.f32 %v4421, %v2639
        %v4688 = vmul.f32 %v4423, %v2640
        %v4689 = vmul.f32 %v4425, %v2641
        %v4690 = vmul.f32 %v4427, %v2642
        %v4691 = vmul.f32 %v4429, %v2643
        %v4692 = vmul.f32 %v4431, %v2644
        %v4693 = vmul.f32 %v4433, %v2645
        %v4694 = vmul.f32 %v4435, %v2646
        %v4695 = vmul.f32 %v4437, %v2647
        %v4696 = vmul.f32 %v4439, %v2648
        %v4697 = vmul.f32 %v4441, %v2649
        %v4698 = vpack.c.bf16 %v4477, %v4475
        %v4699 = vpack.c.bf16 %v4481, %v4479
        %v4700 = vpack.c.bf16 %v4485, %v4483
        %v4701 = vpack.c.bf16 %v4489, %v4487
        %v4702 = vpack.c.bf16 %v4493, %v4491
        %v4703 = vpack.c.bf16 %v4497, %v4495
        %v4704 = vpack.c.bf16 %v4501, %v4499
        %v4705 = vpack.c.bf16 %v4505, %v4503
        %v4706 = vpack.c.bf16 %v4509, %v4507
        %v4707 = vpack.c.bf16 %v4513, %v4511
        %v4708 = vpack.c.bf16 %v4517, %v4515
        %v4709 = vpack.c.bf16 %v4521, %v4519
        %v4710 = vpack.c.bf16 %v4525, %v4523
        %v4711 = vpack.c.bf16 %v4529, %v4527
        %v4712 = vpack.c.bf16 %v4533, %v4531
        %v4713 = vpack.c.bf16 %v4537, %v4535
        %v4730 = vunpack.c.l.b16 %v3864
        %v4731 = vunpack.c.l.b16 %v3865
        %v4732 = vunpack.c.l.b16 %v3866
        %v4733 = vunpack.c.l.b16 %v3867
        %v4734 = vunpack.c.l.b16 %v3868
        %v4735 = vunpack.c.l.b16 %v3869
        %v4736 = vunpack.c.l.b16 %v3870
        %v4737 = vunpack.c.l.b16 %v3871
        %v4738 = vunpack.c.l.b16 %v3872
        %v4739 = vunpack.c.l.b16 %v3873
        %v4740 = vunpack.c.l.b16 %v3874
        %v4741 = vunpack.c.l.b16 %v3875
        %v4742 = vunpack.c.l.b16 %v3876
        %v4743 = vunpack.c.l.b16 %v3877
        %v4744 = vunpack.c.l.b16 %v3878
        %v4745 = vunpack.c.l.b16 %v3879
        %v4746 = vpack.c.b16 %v4731, %v4730
        %v4747 = vpack.c.b16 %v4733, %v4732
        %v4748 = vpack.c.b16 %v4735, %v4734
        %v4749 = vpack.c.b16 %v4737, %v4736
        %v4750 = vpack.c.b16 %v4739, %v4738
        %v4751 = vpack.c.b16 %v4741, %v4740
        %v4752 = vpack.c.b16 %v4743, %v4742
        %v4753 = vpack.c.b16 %v4745, %v4744
        %4762 = vmatprep.subr.bf16.mxu0 0
        %4763 = vmatpush1.bf16.msra.mxu0 %v4753
        %4764 = vmatprep.subr.bf16.mxu0 0
        %4765 = vmatpush1.bf16.msra.mxu0 %v4752
        %4766 = vmatprep.subr.bf16.mxu0 0
        %4767 = vmatpush1.bf16.msra.mxu0 %v4751
        %4768 = vmatprep.subr.bf16.mxu0 0
        %4769 = vmatpush1.bf16.msra.mxu0 %v4750
        %4770 = vmatprep.subr.bf16.mxu0 0
        %4771 = vmatpush1.bf16.msra.mxu0 %v4749
        %4772 = vmatprep.subr.bf16.mxu0 0
        %4773 = vmatpush1.bf16.msra.mxu0 %v4748
        %4774 = vmatprep.subr.bf16.mxu0 0
        %4775 = vmatpush1.bf16.msra.mxu0 %v4747
        %4776 = vmatprep.subr.bf16.mxu0 0
        %4777 = vmatpush1.bf16.msra.mxu0 %v4746
        %4778 = vmatprep.subr.bf16.mxu0 0
        %4779 = vmatpush2.bf16.msra.mxu0 0
        %4780 = vmatprep.subr.bf16.mxu0 0
        %4781 = vmatpush2.bf16.msra.mxu0 0
        %4782 = vmatprep.subr.bf16.mxu0 0
        %4783 = vmatpush2.bf16.msra.mxu0 0
        %4784 = vmatprep.subr.bf16.mxu0 0
        %4785 = vmatpush2.bf16.msra.mxu0 0
        %4786 = vmatprep.subr.bf16.mxu0 0
        %4787 = vmatpush2.bf16.msra.mxu0 0
        %4788 = vmatprep.subr.bf16.mxu0 0
        %4789 = vmatpush2.bf16.msra.mxu0 0
        %4790 = vmatprep.subr.bf16.mxu0 0
        %4791 = vmatpush2.bf16.msra.mxu0 0
        %4792 = vmatprep.subr.bf16.mxu0 0
        %4793 = vmatpush2.bf16.msra.mxu0 0
        %4794 = vmatprep.mubr.bf16.mxu0 0
        %4795 = vmatmul.mubr.bf16.gmra.mxu0 %v4698
        %v4796 = vpop.f32.mrf.mxu0
        %v4797 = vadd.f32 0.0, %v4796
        %v4798 = vpop.f32.mrf.mxu0
        %v4799 = vpop.f32.mrf.mxu0
        %v4800 = vadd.f32 0.0, %v4799
        %v4801 = vpop.f32.mrf.mxu0
        %4802 = vmatprep.mubr.bf16.mxu0 0
        %4803 = vmatmul.mubr.bf16.gmra.mxu0 %v4699
        %v4804 = vpop.f32.mrf.mxu0
        %v4805 = vadd.f32 0.0, %v4804
        %v4806 = vpop.f32.mrf.mxu0
        %v4807 = vpop.f32.mrf.mxu0
        %v4808 = vadd.f32 0.0, %v4807
        %v4809 = vpop.f32.mrf.mxu0
        %4810 = vmatprep.mubr.bf16.mxu0 0
        %4811 = vmatmul.mubr.bf16.gmra.mxu0 %v4700
        %v4812 = vpop.f32.mrf.mxu0
        %v4813 = vadd.f32 0.0, %v4812
        %v4814 = vpop.f32.mrf.mxu0
        %v4815 = vpop.f32.mrf.mxu0
        %v4816 = vadd.f32 0.0, %v4815
        %v4817 = vpop.f32.mrf.mxu0
        %4818 = vmatprep.mubr.bf16.mxu0 0
        %4819 = vmatmul.mubr.bf16.gmra.mxu0 %v4701
        %v4820 = vpop.f32.mrf.mxu0
        %v4821 = vadd.f32 0.0, %v4820
        %v4822 = vpop.f32.mrf.mxu0
        %v4823 = vpop.f32.mrf.mxu0
        %v4824 = vadd.f32 0.0, %v4823
        %v4825 = vpop.f32.mrf.mxu0
        %4826 = vmatprep.mubr.bf16.mxu0 0
        %4827 = vmatmul.mubr.bf16.gmra.mxu0 %v4702
        %v4828 = vpop.f32.mrf.mxu0
        %v4829 = vadd.f32 0.0, %v4828
        %v4830 = vpop.f32.mrf.mxu0
        %v4831 = vpop.f32.mrf.mxu0
        %v4832 = vadd.f32 0.0, %v4831
        %v4833 = vpop.f32.mrf.mxu0
        %4834 = vmatprep.mubr.bf16.mxu0 0
        %4835 = vmatmul.mubr.bf16.gmra.mxu0 %v4703
        %v4836 = vpop.f32.mrf.mxu0
        %v4837 = vadd.f32 0.0, %v4836
        %v4838 = vpop.f32.mrf.mxu0
        %v4839 = vpop.f32.mrf.mxu0
        %v4840 = vadd.f32 0.0, %v4839
        %v4841 = vpop.f32.mrf.mxu0
        %4842 = vmatprep.mubr.bf16.mxu0 0
        %4843 = vmatmul.mubr.bf16.gmra.mxu0 %v4704
        %v4844 = vpop.f32.mrf.mxu0
        %v4845 = vadd.f32 0.0, %v4844
        %v4846 = vpop.f32.mrf.mxu0
        %v4847 = vpop.f32.mrf.mxu0
        %v4848 = vadd.f32 0.0, %v4847
        %v4849 = vpop.f32.mrf.mxu0
        %4850 = vmatprep.mubr.bf16.mxu0 0
        %4851 = vmatmul.mubr.bf16.gmra.mxu0 %v4705
        %v4852 = vpop.f32.mrf.mxu0
        %v4853 = vadd.f32 0.0, %v4852
        %v4854 = vpop.f32.mrf.mxu0
        %v4855 = vpop.f32.mrf.mxu0
        %v4856 = vadd.f32 0.0, %v4855
        %v4857 = vpop.f32.mrf.mxu0
        %4858 = vdwg.mxu0
        %v4875 = vunpack.c.l.b16 %v3880
        %v4876 = vunpack.c.l.b16 %v3881
        %v4877 = vunpack.c.l.b16 %v3882
        %v4878 = vunpack.c.l.b16 %v3883
        %v4879 = vunpack.c.l.b16 %v3884
        %v4880 = vunpack.c.l.b16 %v3885
        %v4881 = vunpack.c.l.b16 %v3886
        %v4882 = vunpack.c.l.b16 %v3887
        %v4883 = vunpack.c.l.b16 %v3888
        %v4884 = vunpack.c.l.b16 %v3889
        %v4885 = vunpack.c.l.b16 %v3890
        %v4886 = vunpack.c.l.b16 %v3891
        %v4887 = vunpack.c.l.b16 %v3892
        %v4888 = vunpack.c.l.b16 %v3893
        %v4889 = vunpack.c.l.b16 %v3894
        %v4890 = vunpack.c.l.b16 %v3895
        %v4891 = vpack.c.b16 %v4876, %v4875
        %v4892 = vpack.c.b16 %v4878, %v4877
        %v4893 = vpack.c.b16 %v4880, %v4879
        %v4894 = vpack.c.b16 %v4882, %v4881
        %v4895 = vpack.c.b16 %v4884, %v4883
        %v4896 = vpack.c.b16 %v4886, %v4885
        %v4897 = vpack.c.b16 %v4888, %v4887
        %v4898 = vpack.c.b16 %v4890, %v4889
        %4907 = vmatprep.subr.bf16.mxu0 0
        %4908 = vmatpush1.bf16.msra.mxu0 %v4898
        %4909 = vmatprep.subr.bf16.mxu0 0
        %4910 = vmatpush1.bf16.msra.mxu0 %v4897
        %4911 = vmatprep.subr.bf16.mxu0 0
        %4912 = vmatpush1.bf16.msra.mxu0 %v4896
        %4913 = vmatprep.subr.bf16.mxu0 0
        %4914 = vmatpush1.bf16.msra.mxu0 %v4895
        %4915 = vmatprep.subr.bf16.mxu0 0
        %4916 = vmatpush1.bf16.msra.mxu0 %v4894
        %4917 = vmatprep.subr.bf16.mxu0 0
        %4918 = vmatpush1.bf16.msra.mxu0 %v4893
        %4919 = vmatprep.subr.bf16.mxu0 0
        %4920 = vmatpush1.bf16.msra.mxu0 %v4892
        %4921 = vmatprep.subr.bf16.mxu0 0
        %4922 = vmatpush1.bf16.msra.mxu0 %v4891
        %4923 = vmatprep.subr.bf16.mxu0 0
        %4924 = vmatpush2.bf16.msra.mxu0 0
        %4925 = vmatprep.subr.bf16.mxu0 0
        %4926 = vmatpush2.bf16.msra.mxu0 0
        %4927 = vmatprep.subr.bf16.mxu0 0
        %4928 = vmatpush2.bf16.msra.mxu0 0
        %4929 = vmatprep.subr.bf16.mxu0 0
        %4930 = vmatpush2.bf16.msra.mxu0 0
        %4931 = vmatprep.subr.bf16.mxu0 0
        %4932 = vmatpush2.bf16.msra.mxu0 0
        %4933 = vmatprep.subr.bf16.mxu0 0
        %4934 = vmatpush2.bf16.msra.mxu0 0
        %4935 = vmatprep.subr.bf16.mxu0 0
        %4936 = vmatpush2.bf16.msra.mxu0 0
        %4937 = vmatprep.subr.bf16.mxu0 0
        %4938 = vmatpush2.bf16.msra.mxu0 0
        %4939 = vmatprep.mubr.bf16.mxu0 0
        %4940 = vmatmul.mubr.bf16.gmra.mxu0 %v4706
        %v4941 = vpop.f32.mrf.mxu0
        %v4942 = vadd.f32 0.0, %v4941
        %v4943 = vpop.f32.mrf.mxu0
        %v4944 = vpop.f32.mrf.mxu0
        %v4945 = vadd.f32 0.0, %v4944
        %v4946 = vpop.f32.mrf.mxu0
        %4947 = vmatprep.mubr.bf16.mxu0 0
        %4948 = vmatmul.mubr.bf16.gmra.mxu0 %v4707
        %v4949 = vpop.f32.mrf.mxu0
        %v4950 = vadd.f32 0.0, %v4949
        %v4951 = vpop.f32.mrf.mxu0
        %v4952 = vpop.f32.mrf.mxu0
        %v4953 = vadd.f32 0.0, %v4952
        %v4954 = vpop.f32.mrf.mxu0
        %4955 = vmatprep.mubr.bf16.mxu0 0
        %4956 = vmatmul.mubr.bf16.gmra.mxu0 %v4708
        %v4957 = vpop.f32.mrf.mxu0
        %v4958 = vadd.f32 0.0, %v4957
        %v4959 = vpop.f32.mrf.mxu0
        %v4960 = vpop.f32.mrf.mxu0
        %v4961 = vadd.f32 0.0, %v4960
        %v4962 = vpop.f32.mrf.mxu0
        %4963 = vmatprep.mubr.bf16.mxu0 0
        %4964 = vmatmul.mubr.bf16.gmra.mxu0 %v4709
        %v4965 = vpop.f32.mrf.mxu0
        %v4966 = vadd.f32 0.0, %v4965
        %v4967 = vpop.f32.mrf.mxu0
        %v4968 = vpop.f32.mrf.mxu0
        %v4969 = vadd.f32 0.0, %v4968
        %v4970 = vpop.f32.mrf.mxu0
        %4971 = vmatprep.mubr.bf16.mxu0 0
        %4972 = vmatmul.mubr.bf16.gmra.mxu0 %v4710
        %v4973 = vpop.f32.mrf.mxu0
        %v4974 = vadd.f32 0.0, %v4973
        %v4975 = vpop.f32.mrf.mxu0
        %v4976 = vpop.f32.mrf.mxu0
        %v4977 = vadd.f32 0.0, %v4976
        %v4978 = vpop.f32.mrf.mxu0
        %4979 = vmatprep.mubr.bf16.mxu0 0
        %4980 = vmatmul.mubr.bf16.gmra.mxu0 %v4711
        %v4981 = vpop.f32.mrf.mxu0
        %v4982 = vadd.f32 0.0, %v4981
        %v4983 = vpop.f32.mrf.mxu0
        %v4984 = vpop.f32.mrf.mxu0
        %v4985 = vadd.f32 0.0, %v4984
        %v4986 = vpop.f32.mrf.mxu0
        %4987 = vmatprep.mubr.bf16.mxu0 0
        %4988 = vmatmul.mubr.bf16.gmra.mxu0 %v4712
        %v4989 = vpop.f32.mrf.mxu0
        %v4990 = vadd.f32 0.0, %v4989
        %v4991 = vpop.f32.mrf.mxu0
        %v4992 = vpop.f32.mrf.mxu0
        %v4993 = vadd.f32 0.0, %v4992
        %v4994 = vpop.f32.mrf.mxu0
        %4995 = vmatprep.mubr.bf16.mxu0 0
        %4996 = vmatmul.mubr.bf16.gmra.mxu0 %v4713
        %v4997 = vpop.f32.mrf.mxu0
        %v4998 = vadd.f32 0.0, %v4997
        %v4999 = vpop.f32.mrf.mxu0
        %v5000 = vpop.f32.mrf.mxu0
        %v5001 = vadd.f32 0.0, %v5000
        %v5002 = vpop.f32.mrf.mxu0
        %5003 = vdwg.mxu0
        %v5004 = vadd.f32 %v4666, %v4797
        %v5005 = vadd.f32 %v4667, %v4800
        %v5006 = vadd.f32 %v4668, %v4805
        %v5007 = vadd.f32 %v4669, %v4808
        %v5008 = vadd.f32 %v4670, %v4813
        %v5009 = vadd.f32 %v4671, %v4816
        %v5010 = vadd.f32 %v4672, %v4821
        %v5011 = vadd.f32 %v4673, %v4824
        %v5012 = vadd.f32 %v4674, %v4829
        %v5013 = vadd.f32 %v4675, %v4832
        %v5014 = vadd.f32 %v4676, %v4837
        %v5015 = vadd.f32 %v4677, %v4840
        %v5016 = vadd.f32 %v4678, %v4845
        %v5017 = vadd.f32 %v4679, %v4848
        %v5018 = vadd.f32 %v4680, %v4853
        %v5019 = vadd.f32 %v4681, %v4856
        %v5020 = vadd.f32 %v4682, %v4942
        %v5021 = vadd.f32 %v4683, %v4945
        %v5022 = vadd.f32 %v4684, %v4950
        %v5023 = vadd.f32 %v4685, %v4953
        %v5024 = vadd.f32 %v4686, %v4958
        %v5025 = vadd.f32 %v4687, %v4961
        %v5026 = vadd.f32 %v4688, %v4966
        %v5027 = vadd.f32 %v4689, %v4969
        %v5028 = vadd.f32 %v4690, %v4974
        %v5029 = vadd.f32 %v4691, %v4977
        %v5030 = vadd.f32 %v4692, %v4982
        %v5031 = vadd.f32 %v4693, %v4985
        %v5032 = vadd.f32 %v4694, %v4990
        %v5033 = vadd.f32 %v4695, %v4993
        %v5034 = vadd.f32 %v4696, %v4998
        %v5035 = vadd.f32 %v4697, %v5001
        %v5036 = vrcp.pop %v4634
        %v5037 = vmul.f32 %v5004, %v5036
        %v5038 = vrcp.pop %v4635
        %v5039 = vmul.f32 %v5005, %v5038
        %v5040 = vrcp.pop %v4636
        %v5041 = vmul.f32 %v5006, %v5040
        %v5042 = vrcp.pop %v4637
        %v5043 = vmul.f32 %v5007, %v5042
        %v5044 = vrcp.pop %v4638
        %v5045 = vmul.f32 %v5008, %v5044
        %v5046 = vrcp.pop %v4639
        %v5047 = vmul.f32 %v5009, %v5046
        %v5048 = vrcp.pop %v4640
        %v5049 = vmul.f32 %v5010, %v5048
        %v5050 = vrcp.pop %v4641
        %v5051 = vmul.f32 %v5011, %v5050
        %v5052 = vrcp.pop %v4642
        %v5053 = vmul.f32 %v5012, %v5052
        %v5054 = vrcp.pop %v4643
        %v5055 = vmul.f32 %v5013, %v5054
        %v5056 = vrcp.pop %v4644
        %v5057 = vmul.f32 %v5014, %v5056
        %v5058 = vrcp.pop %v4645
        %v5059 = vmul.f32 %v5015, %v5058
        %v5060 = vrcp.pop %v4646
        %v5061 = vmul.f32 %v5016, %v5060
        %v5062 = vrcp.pop %v4647
        %v5063 = vmul.f32 %v5017, %v5062
        %v5064 = vrcp.pop %v4648
        %v5065 = vmul.f32 %v5018, %v5064
        %v5066 = vrcp.pop %v4649
        %v5067 = vmul.f32 %v5019, %v5066
        %v5068 = vrcp.pop %v4650
        %v5069 = vmul.f32 %v5020, %v5068
        %v5070 = vrcp.pop %v4651
        %v5071 = vmul.f32 %v5021, %v5070
        %v5072 = vrcp.pop %v4652
        %v5073 = vmul.f32 %v5022, %v5072
        %v5074 = vrcp.pop %v4653
        %v5075 = vmul.f32 %v5023, %v5074
        %v5076 = vrcp.pop %v4654
        %v5077 = vmul.f32 %v5024, %v5076
        %v5078 = vrcp.pop %v4655
        %v5079 = vmul.f32 %v5025, %v5078
        %v5080 = vrcp.pop %v4656
        %v5081 = vmul.f32 %v5026, %v5080
        %v5082 = vrcp.pop %v4657
        %v5083 = vmul.f32 %v5027, %v5082
        %v5084 = vrcp.pop %v4658
        %v5085 = vmul.f32 %v5028, %v5084
        %v5086 = vrcp.pop %v4659
        %v5087 = vmul.f32 %v5029, %v5086
        %v5088 = vrcp.pop %v4660
        %v5089 = vmul.f32 %v5030, %v5088
        %v5090 = vrcp.pop %v4661
        %v5091 = vmul.f32 %v5031, %v5090
        %v5092 = vrcp.pop %v4662
        %v5093 = vmul.f32 %v5032, %v5092
        %v5094 = vrcp.pop %v4663
        %v5095 = vmul.f32 %v5033, %v5094
        %v5096 = vrcp.pop %v4664
        %v5097 = vmul.f32 %v5034, %v5096
        %v5098 = vrcp.pop %v4665
        %v5099 = vmul.f32 %v5035, %v5098
        %v5100 = vpack.c.bf16 %v5039, %v5037
        %v5101 = vpack.c.bf16 %v5043, %v5041
        %v5102 = vpack.c.bf16 %v5047, %v5045
        %v5103 = vpack.c.bf16 %v5051, %v5049
        %v5104 = vpack.c.bf16 %v5055, %v5053
        %v5105 = vpack.c.bf16 %v5059, %v5057
        %v5106 = vpack.c.bf16 %v5063, %v5061
        %v5107 = vpack.c.bf16 %v5067, %v5065
        %v5108 = vld [vmem:[#allocation13] sm:$0xff]
        %v5109 = vld [vmem:[#allocation13 + $0x8] sm:$0xff]
        %v5110 = vld [vmem:[#allocation13 + $0x10] sm:$0xff]
        %v5111 = vld [vmem:[#allocation13 + $0x18] sm:$0xff]
        %v5112 = vld [vmem:[#allocation13 + $0x20] sm:$0xff]
        %v5113 = vld [vmem:[#allocation13 + $0x28] sm:$0xff]
        %v5114 = vld [vmem:[#allocation13 + $0x30] sm:$0xff]
        %v5115 = vld [vmem:[#allocation13 + $0x38] sm:$0xff]
        %v5116 = vld [vmem:[#allocation13 + $0x40] sm:$0xff]
        %v5117 = vld [vmem:[#allocation13 + $0x48] sm:$0xff]
        %v5118 = vld [vmem:[#allocation13 + $0x50] sm:$0xff]
        %v5119 = vld [vmem:[#allocation13 + $0x58] sm:$0xff]
        %v5120 = vld [vmem:[#allocation13 + $0x60] sm:$0xff]
        %v5121 = vld [vmem:[#allocation13 + $0x68] sm:$0xff]
        %v5122 = vld [vmem:[#allocation13 + $0x70] sm:$0xff]
        %v5123 = vld [vmem:[#allocation13 + $0x78] sm:$0xff]
        %v5140 = vunpack.c.l.b16 %v5108
        %v5141 = vunpack.c.h.b16 %v5108
        %v5142 = vunpack.c.l.b16 %v5109
        %v5143 = vunpack.c.h.b16 %v5109
        %v5144 = vunpack.c.l.b16 %v5110
        %v5145 = vunpack.c.h.b16 %v5110
        %v5146 = vunpack.c.l.b16 %v5111
        %v5147 = vunpack.c.h.b16 %v5111
        %v5148 = vunpack.c.l.b16 %v5112
        %v5149 = vunpack.c.h.b16 %v5112
        %v5150 = vunpack.c.l.b16 %v5113
        %v5151 = vunpack.c.h.b16 %v5113
        %v5152 = vunpack.c.l.b16 %v5114
        %v5153 = vunpack.c.h.b16 %v5114
        %v5154 = vunpack.c.l.b16 %v5115
        %v5155 = vunpack.c.h.b16 %v5115
        %v5156 = vunpack.c.l.b16 %v5116
        %v5157 = vunpack.c.h.b16 %v5116
        %v5158 = vunpack.c.l.b16 %v5117
        %v5159 = vunpack.c.h.b16 %v5117
        %v5160 = vunpack.c.l.b16 %v5118
        %v5161 = vunpack.c.h.b16 %v5118
        %v5162 = vunpack.c.l.b16 %v5119
        %v5163 = vunpack.c.h.b16 %v5119
        %v5164 = vunpack.c.l.b16 %v5120
        %v5165 = vunpack.c.h.b16 %v5120
        %v5166 = vunpack.c.l.b16 %v5121
        %v5167 = vunpack.c.h.b16 %v5121
        %v5168 = vunpack.c.l.b16 %v5122
        %v5169 = vunpack.c.h.b16 %v5122
        %v5170 = vunpack.c.l.b16 %v5123
        %v5171 = vunpack.c.h.b16 %v5123
        %v5172 = vpack.c.b16 %v5142, %v5140
        %v5173 = vpack.c.b16 %v5143, %v5141
        %v5174 = vpack.c.b16 %v5146, %v5144
        %v5175 = vpack.c.b16 %v5147, %v5145
        %v5176 = vpack.c.b16 %v5150, %v5148
        %v5177 = vpack.c.b16 %v5151, %v5149
        %v5178 = vpack.c.b16 %v5154, %v5152
        %v5179 = vpack.c.b16 %v5155, %v5153
        %v5180 = vpack.c.b16 %v5158, %v5156
        %v5181 = vpack.c.b16 %v5159, %v5157
        %v5182 = vpack.c.b16 %v5162, %v5160
        %v5183 = vpack.c.b16 %v5163, %v5161
        %v5184 = vpack.c.b16 %v5166, %v5164
        %v5185 = vpack.c.b16 %v5167, %v5165
        %v5186 = vpack.c.b16 %v5170, %v5168
        %v5187 = vpack.c.b16 %v5171, %v5169
        %5204 = vmatprep.subr.bf16.mxu0 %v5187
        %5205 = vmatpush1.bf16.msra.mxu0 %v5186
        %5206 = vmatprep.subr.bf16.mxu0 %v5185
        %5207 = vmatpush1.bf16.msra.mxu0 %v5184
        %5208 = vmatprep.subr.bf16.mxu0 %v5183
        %5209 = vmatpush1.bf16.msra.mxu0 %v5182
        %5210 = vmatprep.subr.bf16.mxu0 %v5181
        %5211 = vmatpush1.bf16.msra.mxu0 %v5180
        %5212 = vmatprep.subr.bf16.mxu0 %v5179
        %5213 = vmatpush1.bf16.msra.mxu0 %v5178
        %5214 = vmatprep.subr.bf16.mxu0 %v5177
        %5215 = vmatpush1.bf16.msra.mxu0 %v5176
        %5216 = vmatprep.subr.bf16.mxu0 %v5175
        %5217 = vmatpush1.bf16.msra.mxu0 %v5174
        %5218 = vmatprep.subr.bf16.mxu0 %v5173
        %5219 = vmatpush1.bf16.msra.mxu0 %v5172
        %5220 = vmatprep.subr.bf16.mxu0 0
        %5221 = vmatpush2.bf16.msra.mxu0 0
        %5222 = vmatprep.subr.bf16.mxu0 0
        %5223 = vmatpush2.bf16.msra.mxu0 0
        %5224 = vmatprep.subr.bf16.mxu0 0
        %5225 = vmatpush2.bf16.msra.mxu0 0
        %5226 = vmatprep.subr.bf16.mxu0 0
        %5227 = vmatpush2.bf16.msra.mxu0 0
        %5228 = vmatprep.subr.bf16.mxu0 0
        %5229 = vmatpush2.bf16.msra.mxu0 0
        %5230 = vmatprep.subr.bf16.mxu0 0
        %5231 = vmatpush2.bf16.msra.mxu0 0
        %5232 = vmatprep.subr.bf16.mxu0 0
        %5233 = vmatpush2.bf16.msra.mxu0 0
        %5234 = vmatprep.subr.bf16.mxu0 0
        %5235 = vmatpush2.bf16.msra.mxu0 0
        %5236 = vmatprep.mubr.bf16.mxu0 0
        %5237 = vmatmul.mubr.bf16.gmra.mxu0 %v5100
        %v5238 = vpop.f32.mrf.mxu0
        %v5239 = vadd.f32 0.0, %v5238
        %v5240 = vpop.f32.mrf.mxu0
        %v5241 = vadd.f32 0.0, %v5240
        %v5242 = vpop.f32.mrf.mxu0
        %v5243 = vadd.f32 0.0, %v5242
        %v5244 = vpop.f32.mrf.mxu0
        %v5245 = vadd.f32 0.0, %v5244
        %5246 = vmatprep.mubr.bf16.mxu0 0
        %5247 = vmatmul.mubr.bf16.gmra.mxu0 %v5101
        %v5248 = vpop.f32.mrf.mxu0
        %v5249 = vadd.f32 0.0, %v5248
        %v5250 = vpop.f32.mrf.mxu0
        %v5251 = vadd.f32 0.0, %v5250
        %v5252 = vpop.f32.mrf.mxu0
        %v5253 = vadd.f32 0.0, %v5252
        %v5254 = vpop.f32.mrf.mxu0
        %v5255 = vadd.f32 0.0, %v5254
        %5256 = vmatprep.mubr.bf16.mxu0 0
        %5257 = vmatmul.mubr.bf16.gmra.mxu0 %v5102
        %v5258 = vpop.f32.mrf.mxu0
        %v5259 = vadd.f32 0.0, %v5258
        %v5260 = vpop.f32.mrf.mxu0
        %v5261 = vadd.f32 0.0, %v5260
        %v5262 = vpop.f32.mrf.mxu0
        %v5263 = vadd.f32 0.0, %v5262
        %v5264 = vpop.f32.mrf.mxu0
        %v5265 = vadd.f32 0.0, %v5264
        %5266 = vmatprep.mubr.bf16.mxu0 0
        %5267 = vmatmul.mubr.bf16.gmra.mxu0 %v5103
        %v5268 = vpop.f32.mrf.mxu0
        %v5269 = vadd.f32 0.0, %v5268
        %v5270 = vpop.f32.mrf.mxu0
        %v5271 = vadd.f32 0.0, %v5270
        %v5272 = vpop.f32.mrf.mxu0
        %v5273 = vadd.f32 0.0, %v5272
        %v5274 = vpop.f32.mrf.mxu0
        %v5275 = vadd.f32 0.0, %v5274
        %5276 = vmatprep.mubr.bf16.mxu0 0
        %5277 = vmatmul.mubr.bf16.gmra.mxu0 %v5104
        %v5278 = vpop.f32.mrf.mxu0
        %v5279 = vadd.f32 0.0, %v5278
        %v5280 = vpop.f32.mrf.mxu0
        %v5281 = vadd.f32 0.0, %v5280
        %v5282 = vpop.f32.mrf.mxu0
        %v5283 = vadd.f32 0.0, %v5282
        %v5284 = vpop.f32.mrf.mxu0
        %v5285 = vadd.f32 0.0, %v5284
        %5286 = vmatprep.mubr.bf16.mxu0 0
        %5287 = vmatmul.mubr.bf16.gmra.mxu0 %v5105
        %v5288 = vpop.f32.mrf.mxu0
        %v5289 = vadd.f32 0.0, %v5288
        %v5290 = vpop.f32.mrf.mxu0
        %v5291 = vadd.f32 0.0, %v5290
        %v5292 = vpop.f32.mrf.mxu0
        %v5293 = vadd.f32 0.0, %v5292
        %v5294 = vpop.f32.mrf.mxu0
        %v5295 = vadd.f32 0.0, %v5294
        %5296 = vmatprep.mubr.bf16.mxu0 0
        %5297 = vmatmul.mubr.bf16.gmra.mxu0 %v5106
        %v5298 = vpop.f32.mrf.mxu0
        %v5299 = vadd.f32 0.0, %v5298
        %v5300 = vpop.f32.mrf.mxu0
        %v5301 = vadd.f32 0.0, %v5300
        %v5302 = vpop.f32.mrf.mxu0
        %v5303 = vadd.f32 0.0, %v5302
        %v5304 = vpop.f32.mrf.mxu0
        %v5305 = vadd.f32 0.0, %v5304
        %5306 = vmatprep.mubr.bf16.mxu0 0
        %5307 = vmatmul.mubr.bf16.gmra.mxu0 %v5107
        %v5308 = vpop.f32.mrf.mxu0
        %v5309 = vadd.f32 0.0, %v5308
        %v5310 = vpop.f32.mrf.mxu0
        %v5311 = vadd.f32 0.0, %v5310
        %v5312 = vpop.f32.mrf.mxu0
        %v5313 = vadd.f32 0.0, %v5312
        %v5314 = vpop.f32.mrf.mxu0
        %v5315 = vadd.f32 0.0, %v5314
        %5316 = vdwg.mxu0
        %v5317 = vadd.f32 %v682, %v5239
        %v5318 = vadd.f32 %v683, %v5241
        %v5319 = vadd.f32 %v684, %v5243
        %v5320 = vadd.f32 %v685, %v5245
        %v5321 = vadd.f32 %v686, %v5249
        %v5322 = vadd.f32 %v687, %v5251
        %v5323 = vadd.f32 %v688, %v5253
        %v5324 = vadd.f32 %v689, %v5255
        %v5325 = vadd.f32 %v690, %v5259
        %v5326 = vadd.f32 %v691, %v5261
        %v5327 = vadd.f32 %v692, %v5263
        %v5328 = vadd.f32 %v693, %v5265
        %v5329 = vadd.f32 %v694, %v5269
        %v5330 = vadd.f32 %v695, %v5271
        %v5331 = vadd.f32 %v696, %v5273
        %v5332 = vadd.f32 %v697, %v5275
        %v5333 = vadd.f32 %v698, %v5279
        %v5334 = vadd.f32 %v699, %v5281
        %v5335 = vadd.f32 %v700, %v5283
        %v5336 = vadd.f32 %v701, %v5285
        %v5337 = vadd.f32 %v702, %v5289
        %v5338 = vadd.f32 %v703, %v5291
        %v5339 = vadd.f32 %v704, %v5293
        %v5340 = vadd.f32 %v705, %v5295
        %v5341 = vadd.f32 %v706, %v5299
        %v5342 = vadd.f32 %v707, %v5301
        %v5343 = vadd.f32 %v708, %v5303
        %v5344 = vadd.f32 %v709, %v5305
        %v5345 = vadd.f32 %v710, %v5309
        %v5346 = vadd.f32 %v711, %v5311
        %v5347 = vadd.f32 %v712, %v5313
        %v5348 = vadd.f32 %v713, %v5315
        %v5349 = vpack.c.bf16 %v5071, %v5069
        %v5350 = vpack.c.bf16 %v5075, %v5073
        %v5351 = vpack.c.bf16 %v5079, %v5077
        %v5352 = vpack.c.bf16 %v5083, %v5081
        %v5353 = vpack.c.bf16 %v5087, %v5085
        %v5354 = vpack.c.bf16 %v5091, %v5089
        %v5355 = vpack.c.bf16 %v5095, %v5093
        %v5356 = vpack.c.bf16 %v5099, %v5097
        %s5357 = scalar_lea.vmem [#allocation13], 128
        %v5358 = vld [vmem:[%s5357] sm:$0xff]
        %v5359 = vld [vmem:[%s5357 + $0x8] sm:$0xff]
        %v5360 = vld [vmem:[%s5357 + $0x10] sm:$0xff]
        %v5361 = vld [vmem:[%s5357 + $0x18] sm:$0xff]
        %v5362 = vld [vmem:[%s5357 + $0x20] sm:$0xff]
        %v5363 = vld [vmem:[%s5357 + $0x28] sm:$0xff]
        %v5364 = vld [vmem:[%s5357 + $0x30] sm:$0xff]
        %v5365 = vld [vmem:[%s5357 + $0x38] sm:$0xff]
        %v5366 = vld [vmem:[%s5357 + $0x40] sm:$0xff]
        %v5367 = vld [vmem:[%s5357 + $0x48] sm:$0xff]
        %v5368 = vld [vmem:[%s5357 + $0x50] sm:$0xff]
        %v5369 = vld [vmem:[%s5357 + $0x58] sm:$0xff]
        %v5370 = vld [vmem:[%s5357 + $0x60] sm:$0xff]
        %v5371 = vld [vmem:[%s5357 + $0x68] sm:$0xff]
        %v5372 = vld [vmem:[%s5357 + $0x70] sm:$0xff]
        %v5373 = vld [vmem:[%s5357 + $0x78] sm:$0xff]
        %v5390 = vunpack.c.l.b16 %v5358
        %v5391 = vunpack.c.h.b16 %v5358
        %v5392 = vunpack.c.l.b16 %v5359
        %v5393 = vunpack.c.h.b16 %v5359
        %v5394 = vunpack.c.l.b16 %v5360
        %v5395 = vunpack.c.h.b16 %v5360
        %v5396 = vunpack.c.l.b16 %v5361
        %v5397 = vunpack.c.h.b16 %v5361
        %v5398 = vunpack.c.l.b16 %v5362
        %v5399 = vunpack.c.h.b16 %v5362
        %v5400 = vunpack.c.l.b16 %v5363
        %v5401 = vunpack.c.h.b16 %v5363
        %v5402 = vunpack.c.l.b16 %v5364
        %v5403 = vunpack.c.h.b16 %v5364
        %v5404 = vunpack.c.l.b16 %v5365
        %v5405 = vunpack.c.h.b16 %v5365
        %v5406 = vunpack.c.l.b16 %v5366
        %v5407 = vunpack.c.h.b16 %v5366
        %v5408 = vunpack.c.l.b16 %v5367
        %v5409 = vunpack.c.h.b16 %v5367
        %v5410 = vunpack.c.l.b16 %v5368
        %v5411 = vunpack.c.h.b16 %v5368
        %v5412 = vunpack.c.l.b16 %v5369
        %v5413 = vunpack.c.h.b16 %v5369
        %v5414 = vunpack.c.l.b16 %v5370
        %v5415 = vunpack.c.h.b16 %v5370
        %v5416 = vunpack.c.l.b16 %v5371
        %v5417 = vunpack.c.h.b16 %v5371
        %v5418 = vunpack.c.l.b16 %v5372
        %v5419 = vunpack.c.h.b16 %v5372
        %v5420 = vunpack.c.l.b16 %v5373
        %v5421 = vunpack.c.h.b16 %v5373
        %v5422 = vpack.c.b16 %v5392, %v5390
        %v5423 = vpack.c.b16 %v5393, %v5391
        %v5424 = vpack.c.b16 %v5396, %v5394
        %v5425 = vpack.c.b16 %v5397, %v5395
        %v5426 = vpack.c.b16 %v5400, %v5398
        %v5427 = vpack.c.b16 %v5401, %v5399
        %v5428 = vpack.c.b16 %v5404, %v5402
        %v5429 = vpack.c.b16 %v5405, %v5403
        %v5430 = vpack.c.b16 %v5408, %v5406
        %v5431 = vpack.c.b16 %v5409, %v5407
        %v5432 = vpack.c.b16 %v5412, %v5410
        %v5433 = vpack.c.b16 %v5413, %v5411
        %v5434 = vpack.c.b16 %v5416, %v5414
        %v5435 = vpack.c.b16 %v5417, %v5415
        %v5436 = vpack.c.b16 %v5420, %v5418
        %v5437 = vpack.c.b16 %v5421, %v5419
        %5454 = vmatprep.subr.bf16.mxu0 %v5437
        %5455 = vmatpush1.bf16.msra.mxu0 %v5436
        %5456 = vmatprep.subr.bf16.mxu0 %v5435
        %5457 = vmatpush1.bf16.msra.mxu0 %v5434
        %5458 = vmatprep.subr.bf16.mxu0 %v5433
        %5459 = vmatpush1.bf16.msra.mxu0 %v5432
        %5460 = vmatprep.subr.bf16.mxu0 %v5431
        %5461 = vmatpush1.bf16.msra.mxu0 %v5430
        %5462 = vmatprep.subr.bf16.mxu0 %v5429
        %5463 = vmatpush1.bf16.msra.mxu0 %v5428
        %5464 = vmatprep.subr.bf16.mxu0 %v5427
        %5465 = vmatpush1.bf16.msra.mxu0 %v5426
        %5466 = vmatprep.subr.bf16.mxu0 %v5425
        %5467 = vmatpush1.bf16.msra.mxu0 %v5424
        %5468 = vmatprep.subr.bf16.mxu0 %v5423
        %5469 = vmatpush1.bf16.msra.mxu0 %v5422
        %5470 = vmatprep.subr.bf16.mxu0 0
        %5471 = vmatpush2.bf16.msra.mxu0 0
        %5472 = vmatprep.subr.bf16.mxu0 0
        %5473 = vmatpush2.bf16.msra.mxu0 0
        %5474 = vmatprep.subr.bf16.mxu0 0
        %5475 = vmatpush2.bf16.msra.mxu0 0
        %5476 = vmatprep.subr.bf16.mxu0 0
        %5477 = vmatpush2.bf16.msra.mxu0 0
        %5478 = vmatprep.subr.bf16.mxu0 0
        %5479 = vmatpush2.bf16.msra.mxu0 0
        %5480 = vmatprep.subr.bf16.mxu0 0
        %5481 = vmatpush2.bf16.msra.mxu0 0
        %5482 = vmatprep.subr.bf16.mxu0 0
        %5483 = vmatpush2.bf16.msra.mxu0 0
        %5484 = vmatprep.subr.bf16.mxu0 0
        %5485 = vmatpush2.bf16.msra.mxu0 0
        %5486 = vmatprep.mubr.bf16.mxu0 0
        %5487 = vmatmul.mubr.bf16.gmra.mxu0 %v5349
        %v5488 = vpop.f32.mrf.mxu0
        %v5489 = vadd.f32 0.0, %v5488
        %v5490 = vpop.f32.mrf.mxu0
        %v5491 = vadd.f32 0.0, %v5490
        %v5492 = vpop.f32.mrf.mxu0
        %v5493 = vadd.f32 0.0, %v5492
        %v5494 = vpop.f32.mrf.mxu0
        %v5495 = vadd.f32 0.0, %v5494
        %5496 = vmatprep.mubr.bf16.mxu0 0
        %5497 = vmatmul.mubr.bf16.gmra.mxu0 %v5350
        %v5498 = vpop.f32.mrf.mxu0
        %v5499 = vadd.f32 0.0, %v5498
        %v5500 = vpop.f32.mrf.mxu0
        %v5501 = vadd.f32 0.0, %v5500
        %v5502 = vpop.f32.mrf.mxu0
        %v5503 = vadd.f32 0.0, %v5502
        %v5504 = vpop.f32.mrf.mxu0
        %v5505 = vadd.f32 0.0, %v5504
        %5506 = vmatprep.mubr.bf16.mxu0 0
        %5507 = vmatmul.mubr.bf16.gmra.mxu0 %v5351
        %v5508 = vpop.f32.mrf.mxu0
        %v5509 = vadd.f32 0.0, %v5508
        %v5510 = vpop.f32.mrf.mxu0
        %v5511 = vadd.f32 0.0, %v5510
        %v5512 = vpop.f32.mrf.mxu0
        %v5513 = vadd.f32 0.0, %v5512
        %v5514 = vpop.f32.mrf.mxu0
        %v5515 = vadd.f32 0.0, %v5514
        %5516 = vmatprep.mubr.bf16.mxu0 0
        %5517 = vmatmul.mubr.bf16.gmra.mxu0 %v5352
        %v5518 = vpop.f32.mrf.mxu0
        %v5519 = vadd.f32 0.0, %v5518
        %v5520 = vpop.f32.mrf.mxu0
        %v5521 = vadd.f32 0.0, %v5520
        %v5522 = vpop.f32.mrf.mxu0
        %v5523 = vadd.f32 0.0, %v5522
        %v5524 = vpop.f32.mrf.mxu0
        %v5525 = vadd.f32 0.0, %v5524
        %5526 = vmatprep.mubr.bf16.mxu0 0
        %5527 = vmatmul.mubr.bf16.gmra.mxu0 %v5353
        %v5528 = vpop.f32.mrf.mxu0
        %v5529 = vadd.f32 0.0, %v5528
        %v5530 = vpop.f32.mrf.mxu0
        %v5531 = vadd.f32 0.0, %v5530
        %v5532 = vpop.f32.mrf.mxu0
        %v5533 = vadd.f32 0.0, %v5532
        %v5534 = vpop.f32.mrf.mxu0
        %v5535 = vadd.f32 0.0, %v5534
        %5536 = vmatprep.mubr.bf16.mxu0 0
        %5537 = vmatmul.mubr.bf16.gmra.mxu0 %v5354
        %v5538 = vpop.f32.mrf.mxu0
        %v5539 = vadd.f32 0.0, %v5538
        %v5540 = vpop.f32.mrf.mxu0
        %v5541 = vadd.f32 0.0, %v5540
        %v5542 = vpop.f32.mrf.mxu0
        %v5543 = vadd.f32 0.0, %v5542
        %v5544 = vpop.f32.mrf.mxu0
        %v5545 = vadd.f32 0.0, %v5544
        %5546 = vmatprep.mubr.bf16.mxu0 0
        %5547 = vmatmul.mubr.bf16.gmra.mxu0 %v5355
        %v5548 = vpop.f32.mrf.mxu0
        %v5549 = vadd.f32 0.0, %v5548
        %v5550 = vpop.f32.mrf.mxu0
        %v5551 = vadd.f32 0.0, %v5550
        %v5552 = vpop.f32.mrf.mxu0
        %v5553 = vadd.f32 0.0, %v5552
        %v5554 = vpop.f32.mrf.mxu0
        %v5555 = vadd.f32 0.0, %v5554
        %5556 = vmatprep.mubr.bf16.mxu0 0
        %5557 = vmatmul.mubr.bf16.gmra.mxu0 %v5356
        %v5558 = vpop.f32.mrf.mxu0
        %v5559 = vadd.f32 0.0, %v5558
        %v5560 = vpop.f32.mrf.mxu0
        %v5561 = vadd.f32 0.0, %v5560
        %v5562 = vpop.f32.mrf.mxu0
        %v5563 = vadd.f32 0.0, %v5562
        %v5564 = vpop.f32.mrf.mxu0
        %v5565 = vadd.f32 0.0, %v5564
        %5566 = vdwg.mxu0
        %v5567 = vadd.f32 %v5317, %v5489
        %v5568 = vadd.f32 %v5318, %v5491
        %v5569 = vadd.f32 %v5319, %v5493
        %v5570 = vadd.f32 %v5320, %v5495
        %v5571 = vadd.f32 %v5321, %v5499
        %v5572 = vadd.f32 %v5322, %v5501
        %v5573 = vadd.f32 %v5323, %v5503
        %v5574 = vadd.f32 %v5324, %v5505
        %v5575 = vadd.f32 %v5325, %v5509
        %v5576 = vadd.f32 %v5326, %v5511
        %v5577 = vadd.f32 %v5327, %v5513
        %v5578 = vadd.f32 %v5328, %v5515
        %v5579 = vadd.f32 %v5329, %v5519
        %v5580 = vadd.f32 %v5330, %v5521
        %v5581 = vadd.f32 %v5331, %v5523
        %v5582 = vadd.f32 %v5332, %v5525
        %v5583 = vadd.f32 %v5333, %v5529
        %v5584 = vadd.f32 %v5334, %v5531
        %v5585 = vadd.f32 %v5335, %v5533
        %v5586 = vadd.f32 %v5336, %v5535
        %v5587 = vadd.f32 %v5337, %v5539
        %v5588 = vadd.f32 %v5338, %v5541
        %v5589 = vadd.f32 %v5339, %v5543
        %v5590 = vadd.f32 %v5340, %v5545
        %v5591 = vadd.f32 %v5341, %v5549
        %v5592 = vadd.f32 %v5342, %v5551
        %v5593 = vadd.f32 %v5343, %v5553
        %v5594 = vadd.f32 %v5344, %v5555
        %v5595 = vadd.f32 %v5345, %v5559
        %v5596 = vadd.f32 %v5346, %v5561
        %v5597 = vadd.f32 %v5347, %v5563
        %v5598 = vadd.f32 %v5348, %v5565
        %v5599 = vmul.f32 %v5567, %v5567
        %v5600 = vmul.f32 %v5568, %v5568
        %v5601 = vmul.f32 %v5569, %v5569
        %v5602 = vmul.f32 %v5570, %v5570
        %v5603 = vmul.f32 %v5571, %v5571
        %v5604 = vmul.f32 %v5572, %v5572
        %v5605 = vmul.f32 %v5573, %v5573
        %v5606 = vmul.f32 %v5574, %v5574
        %v5607 = vmul.f32 %v5575, %v5575
        %v5608 = vmul.f32 %v5576, %v5576
        %v5609 = vmul.f32 %v5577, %v5577
        %v5610 = vmul.f32 %v5578, %v5578
        %v5611 = vmul.f32 %v5579, %v5579
        %v5612 = vmul.f32 %v5580, %v5580
        %v5613 = vmul.f32 %v5581, %v5581
        %v5614 = vmul.f32 %v5582, %v5582
        %v5615 = vmul.f32 %v5583, %v5583
        %v5616 = vmul.f32 %v5584, %v5584
        %v5617 = vmul.f32 %v5585, %v5585
        %v5618 = vmul.f32 %v5586, %v5586
        %v5619 = vmul.f32 %v5587, %v5587
        %v5620 = vmul.f32 %v5588, %v5588
        %v5621 = vmul.f32 %v5589, %v5589
        %v5622 = vmul.f32 %v5590, %v5590
        %v5623 = vmul.f32 %v5591, %v5591
        %v5624 = vmul.f32 %v5592, %v5592
        %v5625 = vmul.f32 %v5593, %v5593
        %v5626 = vmul.f32 %v5594, %v5594
        %v5627 = vmul.f32 %v5595, %v5595
        %v5628 = vmul.f32 %v5596, %v5596
        %v5629 = vmul.f32 %v5597, %v5597
        %v5630 = vmul.f32 %v5598, %v5598
        %v5631 = vadd.f32 %v5599, %v5600
        %5632 = vadd.xlane.f32.xlu0 %v5631
        %v5633 = vpop.xlane.xlu0 %5632
        %v5634 = vadd.f32 %v5601, %v5602
        %5635 = vadd.xlane.f32.xlu0 %v5634
        %v5636 = vpop.xlane.xlu0 %5635
        %v5637 = vadd.f32 %v5603, %v5604
        %5638 = vadd.xlane.f32.xlu0 %v5637
        %v5639 = vpop.xlane.xlu0 %5638
        %v5640 = vadd.f32 %v5605, %v5606
        %5641 = vadd.xlane.f32.xlu0 %v5640
        %v5642 = vpop.xlane.xlu0 %5641
        %v5643 = vadd.f32 %v5607, %v5608
        %5644 = vadd.xlane.f32.xlu0 %v5643
        %v5645 = vpop.xlane.xlu0 %5644
        %v5646 = vadd.f32 %v5609, %v5610
        %5647 = vadd.xlane.f32.xlu0 %v5646
        %v5648 = vpop.xlane.xlu0 %5647
        %v5649 = vadd.f32 %v5611, %v5612
        %5650 = vadd.xlane.f32.xlu0 %v5649
        %v5651 = vpop.xlane.xlu0 %5650
        %v5652 = vadd.f32 %v5613, %v5614
        %5653 = vadd.xlane.f32.xlu0 %v5652
        %v5654 = vpop.xlane.xlu0 %5653
        %v5655 = vadd.f32 %v5615, %v5616
        %5656 = vadd.xlane.f32.xlu0 %v5655
        %v5657 = vpop.xlane.xlu0 %5656
        %v5658 = vadd.f32 %v5617, %v5618
        %5659 = vadd.xlane.f32.xlu0 %v5658
        %v5660 = vpop.xlane.xlu0 %5659
        %v5661 = vadd.f32 %v5619, %v5620
        %5662 = vadd.xlane.f32.xlu0 %v5661
        %v5663 = vpop.xlane.xlu0 %5662
        %v5664 = vadd.f32 %v5621, %v5622
        %5665 = vadd.xlane.f32.xlu0 %v5664
        %v5666 = vpop.xlane.xlu0 %5665
        %v5667 = vadd.f32 %v5623, %v5624
        %5668 = vadd.xlane.f32.xlu0 %v5667
        %v5669 = vpop.xlane.xlu0 %5668
        %v5670 = vadd.f32 %v5625, %v5626
        %5671 = vadd.xlane.f32.xlu0 %v5670
        %v5672 = vpop.xlane.xlu0 %5671
        %v5673 = vadd.f32 %v5627, %v5628
        %5674 = vadd.xlane.f32.xlu0 %v5673
        %v5675 = vpop.xlane.xlu0 %5674
        %v5676 = vadd.f32 %v5629, %v5630
        %5677 = vadd.xlane.f32.xlu0 %v5676
        %v5678 = vpop.xlane.xlu0 %5677
        %v5679 = vmul.f32 %v5633, %v794
        %v5680 = vmul.f32 %v5636, %v794
        %v5681 = vmul.f32 %v5639, %v794
        %v5682 = vmul.f32 %v5642, %v794
        %v5683 = vmul.f32 %v5645, %v794
        %v5684 = vmul.f32 %v5648, %v794
        %v5685 = vmul.f32 %v5651, %v794
        %v5686 = vmul.f32 %v5654, %v794
        %v5687 = vmul.f32 %v5657, %v794
        %v5688 = vmul.f32 %v5660, %v794
        %v5689 = vmul.f32 %v5663, %v794
        %v5690 = vmul.f32 %v5666, %v794
        %v5691 = vmul.f32 %v5669, %v794
        %v5692 = vmul.f32 %v5672, %v794
        %v5693 = vmul.f32 %v5675, %v794
        %v5694 = vmul.f32 %v5678, %v794
        %v5695 = vadd.f32 %v5679, 1e-05
        %v5696 = vadd.f32 %v5680, 1e-05
        %v5697 = vadd.f32 %v5681, 1e-05
        %v5698 = vadd.f32 %v5682, 1e-05
        %v5699 = vadd.f32 %v5683, 1e-05
        %v5700 = vadd.f32 %v5684, 1e-05
        %v5701 = vadd.f32 %v5685, 1e-05
        %v5702 = vadd.f32 %v5686, 1e-05
        %v5703 = vadd.f32 %v5687, 1e-05
        %v5704 = vadd.f32 %v5688, 1e-05
        %v5705 = vadd.f32 %v5689, 1e-05
        %v5706 = vadd.f32 %v5690, 1e-05
        %v5707 = vadd.f32 %v5691, 1e-05
        %v5708 = vadd.f32 %v5692, 1e-05
        %v5709 = vadd.f32 %v5693, 1e-05
        %v5710 = vadd.f32 %v5694, 1e-05
        %v5711 = vrsqrt.pop %v5695
        %v5712 = vrsqrt.pop %v5696
        %v5713 = vrsqrt.pop %v5697
        %v5714 = vrsqrt.pop %v5698
        %v5715 = vrsqrt.pop %v5699
        %v5716 = vrsqrt.pop %v5700
        %v5717 = vrsqrt.pop %v5701
        %v5718 = vrsqrt.pop %v5702
        %v5719 = vrsqrt.pop %v5703
        %v5720 = vrsqrt.pop %v5704
        %v5721 = vrsqrt.pop %v5705
        %v5722 = vrsqrt.pop %v5706
        %v5723 = vrsqrt.pop %v5707
        %v5724 = vrsqrt.pop %v5708
        %v5725 = vrsqrt.pop %v5709
        %v5726 = vrsqrt.pop %v5710
        %v5727 = vmul.f32 %v5567, %v5711
        %v5728 = vmul.f32 %v5568, %v5711
        %v5729 = vmul.f32 %v5569, %v5712
        %v5730 = vmul.f32 %v5570, %v5712
        %v5731 = vmul.f32 %v5571, %v5713
        %v5732 = vmul.f32 %v5572, %v5713
        %v5733 = vmul.f32 %v5573, %v5714
        %v5734 = vmul.f32 %v5574, %v5714
        %v5735 = vmul.f32 %v5575, %v5715
        %v5736 = vmul.f32 %v5576, %v5715
        %v5737 = vmul.f32 %v5577, %v5716
        %v5738 = vmul.f32 %v5578, %v5716
        %v5739 = vmul.f32 %v5579, %v5717
        %v5740 = vmul.f32 %v5580, %v5717
        %v5741 = vmul.f32 %v5581, %v5718
        %v5742 = vmul.f32 %v5582, %v5718
        %v5743 = vmul.f32 %v5583, %v5719
        %v5744 = vmul.f32 %v5584, %v5719
        %v5745 = vmul.f32 %v5585, %v5720
        %v5746 = vmul.f32 %v5586, %v5720
        %v5747 = vmul.f32 %v5587, %v5721
        %v5748 = vmul.f32 %v5588, %v5721
        %v5749 = vmul.f32 %v5589, %v5722
        %v5750 = vmul.f32 %v5590, %v5722
        %v5751 = vmul.f32 %v5591, %v5723
        %v5752 = vmul.f32 %v5592, %v5723
        %v5753 = vmul.f32 %v5593, %v5724
        %v5754 = vmul.f32 %v5594, %v5724
        %v5755 = vmul.f32 %v5595, %v5725
        %v5756 = vmul.f32 %v5596, %v5725
        %v5757 = vmul.f32 %v5597, %v5726
        %v5758 = vmul.f32 %v5598, %v5726
        %v5760 = vlaneseq
        %v5761 = vshrl.u32 %v5760, 7
        %v5762 = vsub.s32 0, %v5761
        %v5763 = vrot.slane %v649, %v5762
        %v5764 = vlaneseq
        %v5765 = vshrl.u32 %v5764, 7
        %v5766 = vsub.s32 1, %v5765
        %v5767 = vrot.slane %v649, %v5766
        %v5770 = vmul.f32 %v5727, %v5763
        %v5771 = vmul.f32 %v5728, %v5767
        %v5772 = vmul.f32 %v5729, %v5763
        %v5773 = vmul.f32 %v5730, %v5767
        %v5774 = vmul.f32 %v5731, %v5763
        %v5775 = vmul.f32 %v5732, %v5767
        %v5776 = vmul.f32 %v5733, %v5763
        %v5777 = vmul.f32 %v5734, %v5767
        %v5778 = vmul.f32 %v5735, %v5763
        %v5779 = vmul.f32 %v5736, %v5767
        %v5780 = vmul.f32 %v5737, %v5763
        %v5781 = vmul.f32 %v5738, %v5767
        %v5782 = vmul.f32 %v5739, %v5763
        %v5783 = vmul.f32 %v5740, %v5767
        %v5784 = vmul.f32 %v5741, %v5763
        %v5785 = vmul.f32 %v5742, %v5767
        %v5786 = vmul.f32 %v5743, %v5763
        %v5787 = vmul.f32 %v5744, %v5767
        %v5788 = vmul.f32 %v5745, %v5763
        %v5789 = vmul.f32 %v5746, %v5767
        %v5790 = vmul.f32 %v5747, %v5763
        %v5791 = vmul.f32 %v5748, %v5767
        %v5792 = vmul.f32 %v5749, %v5763
        %v5793 = vmul.f32 %v5750, %v5767
        %v5794 = vmul.f32 %v5751, %v5763
        %v5795 = vmul.f32 %v5752, %v5767
        %v5796 = vmul.f32 %v5753, %v5763
        %v5797 = vmul.f32 %v5754, %v5767
        %v5798 = vmul.f32 %v5755, %v5763
        %v5799 = vmul.f32 %v5756, %v5767
        %v5800 = vmul.f32 %v5757, %v5763
        %v5801 = vmul.f32 %v5758, %v5767
        %v5802 = vpack.c.bf16 %v5772, %v5770
        %v5803 = vpack.c.bf16 %v5773, %v5771
        %v5804 = vpack.c.bf16 %v5776, %v5774
        %v5805 = vpack.c.bf16 %v5777, %v5775
        %v5806 = vpack.c.bf16 %v5780, %v5778
        %v5807 = vpack.c.bf16 %v5781, %v5779
        %v5808 = vpack.c.bf16 %v5784, %v5782
        %v5809 = vpack.c.bf16 %v5785, %v5783
        %v5810 = vpack.c.bf16 %v5788, %v5786
        %v5811 = vpack.c.bf16 %v5789, %v5787
        %v5812 = vpack.c.bf16 %v5792, %v5790
        %v5813 = vpack.c.bf16 %v5793, %v5791
        %v5814 = vpack.c.bf16 %v5796, %v5794
        %v5815 = vpack.c.bf16 %v5797, %v5795
        %v5816 = vpack.c.bf16 %v5800, %v5798
        %v5817 = vpack.c.bf16 %v5801, %v5799
        %v5818 = vld [vmem:[#allocation15] sm:$0xff]
        %v5819 = vld [vmem:[#allocation15 + $0x8] sm:$0xff]
        %v5820 = vld [vmem:[#allocation15 + $0x10] sm:$0xff]
        %v5821 = vld [vmem:[#allocation15 + $0x18] sm:$0xff]
        %v5822 = vld [vmem:[#allocation15 + $0x20] sm:$0xff]
        %v5823 = vld [vmem:[#allocation15 + $0x28] sm:$0xff]
        %v5824 = vld [vmem:[#allocation15 + $0x30] sm:$0xff]
        %v5825 = vld [vmem:[#allocation15 + $0x38] sm:$0xff]
        %v5826 = vld [vmem:[#allocation15 + $0x40] sm:$0xff]
        %v5827 = vld [vmem:[#allocation15 + $0x48] sm:$0xff]
        %v5828 = vld [vmem:[#allocation15 + $0x50] sm:$0xff]
        %v5829 = vld [vmem:[#allocation15 + $0x58] sm:$0xff]
        %v5830 = vld [vmem:[#allocation15 + $0x60] sm:$0xff]
        %v5831 = vld [vmem:[#allocation15 + $0x68] sm:$0xff]
        %v5832 = vld [vmem:[#allocation15 + $0x70] sm:$0xff]
        %v5833 = vld [vmem:[#allocation15 + $0x78] sm:$0xff]
        %v5834 = vld [vmem:[#allocation15 + $0x80] sm:$0xff]
        %v5835 = vld [vmem:[#allocation15 + $0x88] sm:$0xff]
        %v5836 = vld [vmem:[#allocation15 + $0x90] sm:$0xff]
        %v5837 = vld [vmem:[#allocation15 + $0x98] sm:$0xff]
        %v5838 = vld [vmem:[#allocation15 + $0xa0] sm:$0xff]
        %v5839 = vld [vmem:[#allocation15 + $0xa8] sm:$0xff]
        %v5840 = vld [vmem:[#allocation15 + $0xb0] sm:$0xff]
        %v5841 = vld [vmem:[#allocation15 + $0xb8] sm:$0xff]
        %v5842 = vld [vmem:[#allocation15 + $0xc0] sm:$0xff]
        %v5843 = vld [vmem:[#allocation15 + $0xc8] sm:$0xff]
        %v5844 = vld [vmem:[#allocation15 + $0xd0] sm:$0xff]
        %v5845 = vld [vmem:[#allocation15 + $0xd8] sm:$0xff]
        %v5846 = vld [vmem:[#allocation15 + $0xe0] sm:$0xff]
        %v5847 = vld [vmem:[#allocation15 + $0xe8] sm:$0xff]
        %v5848 = vld [vmem:[#allocation15 + $0xf0] sm:$0xff]
        %v5849 = vld [vmem:[#allocation15 + $0xf8] sm:$0xff]
        %v5850 = vld [vmem:[#allocation15 + $0x100] sm:$0xff]
        %v5851 = vld [vmem:[#allocation15 + $0x108] sm:$0xff]
        %v5852 = vld [vmem:[#allocation15 + $0x110] sm:$0xff]
        %v5853 = vld [vmem:[#allocation15 + $0x118] sm:$0xff]
        %v5854 = vld [vmem:[#allocation15 + $0x120] sm:$0xff]
        %v5855 = vld [vmem:[#allocation15 + $0x128] sm:$0xff]
        %v5856 = vld [vmem:[#allocation15 + $0x130] sm:$0xff]
        %v5857 = vld [vmem:[#allocation15 + $0x138] sm:$0xff]
        %v5858 = vld [vmem:[#allocation15 + $0x140] sm:$0xff]
        %v5859 = vld [vmem:[#allocation15 + $0x148] sm:$0xff]
        %v5860 = vld [vmem:[#allocation15 + $0x150] sm:$0xff]
        %v5861 = vld [vmem:[#allocation15 + $0x158] sm:$0xff]
        %v5862 = vld [vmem:[#allocation15 + $0x160] sm:$0xff]
        %v5863 = vld [vmem:[#allocation15 + $0x168] sm:$0xff]
        %v5864 = vld [vmem:[#allocation15 + $0x170] sm:$0xff]
        %v5865 = vld [vmem:[#allocation15 + $0x178] sm:$0xff]
        %v5866 = vld [vmem:[#allocation15 + $0x180] sm:$0xff]
        %v5867 = vld [vmem:[#allocation15 + $0x188] sm:$0xff]
        %v5868 = vld [vmem:[#allocation15 + $0x190] sm:$0xff]
        %v5869 = vld [vmem:[#allocation15 + $0x198] sm:$0xff]
        %v5870 = vld [vmem:[#allocation15 + $0x1a0] sm:$0xff]
        %v5871 = vld [vmem:[#allocation15 + $0x1a8] sm:$0xff]
        %v5872 = vld [vmem:[#allocation15 + $0x1b0] sm:$0xff]
        %v5873 = vld [vmem:[#allocation15 + $0x1b8] sm:$0xff]
        %v5874 = vld [vmem:[#allocation15 + $0x1c0] sm:$0xff]
        %v5875 = vld [vmem:[#allocation15 + $0x1c8] sm:$0xff]
        %v5876 = vld [vmem:[#allocation15 + $0x1d0] sm:$0xff]
        %v5877 = vld [vmem:[#allocation15 + $0x1d8] sm:$0xff]
        %v5878 = vld [vmem:[#allocation15 + $0x1e0] sm:$0xff]
        %v5879 = vld [vmem:[#allocation15 + $0x1e8] sm:$0xff]
        %v5880 = vld [vmem:[#allocation15 + $0x1f0] sm:$0xff]
        %v5881 = vld [vmem:[#allocation15 + $0x1f8] sm:$0xff]
        %v5946 = vunpack.c.l.b16 %v5818
        %v5947 = vunpack.c.h.b16 %v5818
        %v5948 = vunpack.c.l.b16 %v5819
        %v5949 = vunpack.c.h.b16 %v5819
        %v5950 = vunpack.c.l.b16 %v5820
        %v5951 = vunpack.c.h.b16 %v5820
        %v5952 = vunpack.c.l.b16 %v5821
        %v5953 = vunpack.c.h.b16 %v5821
        %v5954 = vunpack.c.l.b16 %v5822
        %v5955 = vunpack.c.h.b16 %v5822
        %v5956 = vunpack.c.l.b16 %v5823
        %v5957 = vunpack.c.h.b16 %v5823
        %v5958 = vunpack.c.l.b16 %v5824
        %v5959 = vunpack.c.h.b16 %v5824
        %v5960 = vunpack.c.l.b16 %v5825
        %v5961 = vunpack.c.h.b16 %v5825
        %v5962 = vunpack.c.l.b16 %v5826
        %v5963 = vunpack.c.h.b16 %v5826
        %v5964 = vunpack.c.l.b16 %v5827
        %v5965 = vunpack.c.h.b16 %v5827
        %v5966 = vunpack.c.l.b16 %v5828
        %v5967 = vunpack.c.h.b16 %v5828
        %v5968 = vunpack.c.l.b16 %v5829
        %v5969 = vunpack.c.h.b16 %v5829
        %v5970 = vunpack.c.l.b16 %v5830
        %v5971 = vunpack.c.h.b16 %v5830
        %v5972 = vunpack.c.l.b16 %v5831
        %v5973 = vunpack.c.h.b16 %v5831
        %v5974 = vunpack.c.l.b16 %v5832
        %v5975 = vunpack.c.h.b16 %v5832
        %v5976 = vunpack.c.l.b16 %v5833
        %v5977 = vunpack.c.h.b16 %v5833
        %v5978 = vunpack.c.l.b16 %v5834
        %v5979 = vunpack.c.h.b16 %v5834
        %v5980 = vunpack.c.l.b16 %v5835
        %v5981 = vunpack.c.h.b16 %v5835
        %v5982 = vunpack.c.l.b16 %v5836
        %v5983 = vunpack.c.h.b16 %v5836
        %v5984 = vunpack.c.l.b16 %v5837
        %v5985 = vunpack.c.h.b16 %v5837
        %v5986 = vunpack.c.l.b16 %v5838
        %v5987 = vunpack.c.h.b16 %v5838
        %v5988 = vunpack.c.l.b16 %v5839
        %v5989 = vunpack.c.h.b16 %v5839
        %v5990 = vunpack.c.l.b16 %v5840
        %v5991 = vunpack.c.h.b16 %v5840
        %v5992 = vunpack.c.l.b16 %v5841
        %v5993 = vunpack.c.h.b16 %v5841
        %v5994 = vunpack.c.l.b16 %v5842
        %v5995 = vunpack.c.h.b16 %v5842
        %v5996 = vunpack.c.l.b16 %v5843
        %v5997 = vunpack.c.h.b16 %v5843
        %v5998 = vunpack.c.l.b16 %v5844
        %v5999 = vunpack.c.h.b16 %v5844
        %v6000 = vunpack.c.l.b16 %v5845
        %v6001 = vunpack.c.h.b16 %v5845
        %v6002 = vunpack.c.l.b16 %v5846
        %v6003 = vunpack.c.h.b16 %v5846
        %v6004 = vunpack.c.l.b16 %v5847
        %v6005 = vunpack.c.h.b16 %v5847
        %v6006 = vunpack.c.l.b16 %v5848
        %v6007 = vunpack.c.h.b16 %v5848
        %v6008 = vunpack.c.l.b16 %v5849
        %v6009 = vunpack.c.h.b16 %v5849
        %v6010 = vunpack.c.l.b16 %v5850
        %v6011 = vunpack.c.h.b16 %v5850
        %v6012 = vunpack.c.l.b16 %v5851
        %v6013 = vunpack.c.h.b16 %v5851
        %v6014 = vunpack.c.l.b16 %v5852
        %v6015 = vunpack.c.h.b16 %v5852
        %v6016 = vunpack.c.l.b16 %v5853
        %v6017 = vunpack.c.h.b16 %v5853
        %v6018 = vunpack.c.l.b16 %v5854
        %v6019 = vunpack.c.h.b16 %v5854
        %v6020 = vunpack.c.l.b16 %v5855
        %v6021 = vunpack.c.h.b16 %v5855
        %v6022 = vunpack.c.l.b16 %v5856
        %v6023 = vunpack.c.h.b16 %v5856
        %v6024 = vunpack.c.l.b16 %v5857
        %v6025 = vunpack.c.h.b16 %v5857
        %v6026 = vunpack.c.l.b16 %v5858
        %v6027 = vunpack.c.h.b16 %v5858
        %v6028 = vunpack.c.l.b16 %v5859
        %v6029 = vunpack.c.h.b16 %v5859
        %v6030 = vunpack.c.l.b16 %v5860
        %v6031 = vunpack.c.h.b16 %v5860
        %v6032 = vunpack.c.l.b16 %v5861
        %v6033 = vunpack.c.h.b16 %v5861
        %v6034 = vunpack.c.l.b16 %v5862
        %v6035 = vunpack.c.h.b16 %v5862
        %v6036 = vunpack.c.l.b16 %v5863
        %v6037 = vunpack.c.h.b16 %v5863
        %v6038 = vunpack.c.l.b16 %v5864
        %v6039 = vunpack.c.h.b16 %v5864
        %v6040 = vunpack.c.l.b16 %v5865
        %v6041 = vunpack.c.h.b16 %v5865
        %v6042 = vunpack.c.l.b16 %v5866
        %v6043 = vunpack.c.h.b16 %v5866
        %v6044 = vunpack.c.l.b16 %v5867
        %v6045 = vunpack.c.h.b16 %v5867
        %v6046 = vunpack.c.l.b16 %v5868
        %v6047 = vunpack.c.h.b16 %v5868
        %v6048 = vunpack.c.l.b16 %v5869
        %v6049 = vunpack.c.h.b16 %v5869
        %v6050 = vunpack.c.l.b16 %v5870
        %v6051 = vunpack.c.h.b16 %v5870
        %v6052 = vunpack.c.l.b16 %v5871
        %v6053 = vunpack.c.h.b16 %v5871
        %v6054 = vunpack.c.l.b16 %v5872
        %v6055 = vunpack.c.h.b16 %v5872
        %v6056 = vunpack.c.l.b16 %v5873
        %v6057 = vunpack.c.h.b16 %v5873
        %v6058 = vunpack.c.l.b16 %v5874
        %v6059 = vunpack.c.h.b16 %v5874
        %v6060 = vunpack.c.l.b16 %v5875
        %v6061 = vunpack.c.h.b16 %v5875
        %v6062 = vunpack.c.l.b16 %v5876
        %v6063 = vunpack.c.h.b16 %v5876
        %v6064 = vunpack.c.l.b16 %v5877
        %v6065 = vunpack.c.h.b16 %v5877
        %v6066 = vunpack.c.l.b16 %v5878
        %v6067 = vunpack.c.h.b16 %v5878
        %v6068 = vunpack.c.l.b16 %v5879
        %v6069 = vunpack.c.h.b16 %v5879
        %v6070 = vunpack.c.l.b16 %v5880
        %v6071 = vunpack.c.h.b16 %v5880
        %v6072 = vunpack.c.l.b16 %v5881
        %v6073 = vunpack.c.h.b16 %v5881
        %v6074 = vpack.c.b16 %v5950, %v5946
        %v6075 = vpack.c.b16 %v5951, %v5947
        %v6076 = vpack.c.b16 %v5952, %v5948
        %v6077 = vpack.c.b16 %v5953, %v5949
        %v6078 = vpack.c.b16 %v5958, %v5954
        %v6079 = vpack.c.b16 %v5959, %v5955
        %v6080 = vpack.c.b16 %v5960, %v5956
        %v6081 = vpack.c.b16 %v5961, %v5957
        %v6082 = vpack.c.b16 %v5966, %v5962
        %v6083 = vpack.c.b16 %v5967, %v5963
        %v6084 = vpack.c.b16 %v5968, %v5964
        %v6085 = vpack.c.b16 %v5969, %v5965
        %v6086 = vpack.c.b16 %v5974, %v5970
        %v6087 = vpack.c.b16 %v5975, %v5971
        %v6088 = vpack.c.b16 %v5976, %v5972
        %v6089 = vpack.c.b16 %v5977, %v5973
        %v6090 = vpack.c.b16 %v5982, %v5978
        %v6091 = vpack.c.b16 %v5983, %v5979
        %v6092 = vpack.c.b16 %v5984, %v5980
        %v6093 = vpack.c.b16 %v5985, %v5981
        %v6094 = vpack.c.b16 %v5990, %v5986
        %v6095 = vpack.c.b16 %v5991, %v5987
        %v6096 = vpack.c.b16 %v5992, %v5988
        %v6097 = vpack.c.b16 %v5993, %v5989
        %v6098 = vpack.c.b16 %v5998, %v5994
        %v6099 = vpack.c.b16 %v5999, %v5995
        %v6100 = vpack.c.b16 %v6000, %v5996
        %v6101 = vpack.c.b16 %v6001, %v5997
        %v6102 = vpack.c.b16 %v6006, %v6002
        %v6103 = vpack.c.b16 %v6007, %v6003
        %v6104 = vpack.c.b16 %v6008, %v6004
        %v6105 = vpack.c.b16 %v6009, %v6005
        %v6106 = vpack.c.b16 %v6014, %v6010
        %v6107 = vpack.c.b16 %v6015, %v6011
        %v6108 = vpack.c.b16 %v6016, %v6012
        %v6109 = vpack.c.b16 %v6017, %v6013
        %v6110 = vpack.c.b16 %v6022, %v6018
        %v6111 = vpack.c.b16 %v6023, %v6019
        %v6112 = vpack.c.b16 %v6024, %v6020
        %v6113 = vpack.c.b16 %v6025, %v6021
        %v6114 = vpack.c.b16 %v6030, %v6026
        %v6115 = vpack.c.b16 %v6031, %v6027
        %v6116 = vpack.c.b16 %v6032, %v6028
        %v6117 = vpack.c.b16 %v6033, %v6029
        %v6118 = vpack.c.b16 %v6038, %v6034
        %v6119 = vpack.c.b16 %v6039, %v6035
        %v6120 = vpack.c.b16 %v6040, %v6036
        %v6121 = vpack.c.b16 %v6041, %v6037
        %v6122 = vpack.c.b16 %v6046, %v6042
        %v6123 = vpack.c.b16 %v6047, %v6043
        %v6124 = vpack.c.b16 %v6048, %v6044
        %v6125 = vpack.c.b16 %v6049, %v6045
        %v6126 = vpack.c.b16 %v6054, %v6050
        %v6127 = vpack.c.b16 %v6055, %v6051
        %v6128 = vpack.c.b16 %v6056, %v6052
        %v6129 = vpack.c.b16 %v6057, %v6053
        %v6130 = vpack.c.b16 %v6062, %v6058
        %v6131 = vpack.c.b16 %v6063, %v6059
        %v6132 = vpack.c.b16 %v6064, %v6060
        %v6133 = vpack.c.b16 %v6065, %v6061
        %v6134 = vpack.c.b16 %v6070, %v6066
        %v6135 = vpack.c.b16 %v6071, %v6067
        %v6136 = vpack.c.b16 %v6072, %v6068
        %v6137 = vpack.c.b16 %v6073, %v6069
        %6202 = vmatprep.subr.bf16.mxu0 %v6103
        %6203 = vmatpush1.bf16.msra.mxu0 %v6102
        %6204 = vmatprep.subr.bf16.mxu0 %v6099
        %6205 = vmatpush1.bf16.msra.mxu0 %v6098
        %6206 = vmatprep.subr.bf16.mxu0 %v6095
        %6207 = vmatpush1.bf16.msra.mxu0 %v6094
        %6208 = vmatprep.subr.bf16.mxu0 %v6091
        %6209 = vmatpush1.bf16.msra.mxu0 %v6090
        %6210 = vmatprep.subr.bf16.mxu0 %v6087
        %6211 = vmatpush1.bf16.msra.mxu0 %v6086
        %6212 = vmatprep.subr.bf16.mxu0 %v6083
        %6213 = vmatpush1.bf16.msra.mxu0 %v6082
        %6214 = vmatprep.subr.bf16.mxu0 %v6079
        %6215 = vmatpush1.bf16.msra.mxu0 %v6078
        %6216 = vmatprep.subr.bf16.mxu0 %v6075
        %6217 = vmatpush1.bf16.msra.mxu0 %v6074
        %6218 = vmatprep.subr.bf16.mxu0 %v6135
        %6219 = vmatpush2.bf16.msra.mxu0 %v6134
        %6220 = vmatprep.subr.bf16.mxu0 %v6131
        %6221 = vmatpush2.bf16.msra.mxu0 %v6130
        %6222 = vmatprep.subr.bf16.mxu0 %v6127
        %6223 = vmatpush2.bf16.msra.mxu0 %v6126
        %6224 = vmatprep.subr.bf16.mxu0 %v6123
        %6225 = vmatpush2.bf16.msra.mxu0 %v6122
        %6226 = vmatprep.subr.bf16.mxu0 %v6119
        %6227 = vmatpush2.bf16.msra.mxu0 %v6118
        %6228 = vmatprep.subr.bf16.mxu0 %v6115
        %6229 = vmatpush2.bf16.msra.mxu0 %v6114
        %6230 = vmatprep.subr.bf16.mxu0 %v6111
        %6231 = vmatpush2.bf16.msra.mxu0 %v6110
        %6232 = vmatprep.subr.bf16.mxu0 %v6107
        %6233 = vmatpush2.bf16.msra.mxu0 %v6106
        %6234 = vmatprep.mubr.bf16.mxu0 %v5803
        %6235 = vmatmul.mubr.bf16.gmra.mxu0 %v5802
        %v6236 = vpop.f32.mrf.mxu0
        %v6237 = vadd.f32 0.0, %v6236
        %v6238 = vpop.f32.mrf.mxu0
        %v6239 = vadd.f32 0.0, %v6238
        %v6240 = vpop.f32.mrf.mxu0
        %v6241 = vadd.f32 0.0, %v6240
        %v6242 = vpop.f32.mrf.mxu0
        %v6243 = vadd.f32 0.0, %v6242
        %6244 = vmatprep.mubr.bf16.mxu0 %v5805
        %6245 = vmatmul.mubr.bf16.gmra.mxu0 %v5804
        %v6246 = vpop.f32.mrf.mxu0
        %v6247 = vadd.f32 0.0, %v6246
        %v6248 = vpop.f32.mrf.mxu0
        %v6249 = vadd.f32 0.0, %v6248
        %v6250 = vpop.f32.mrf.mxu0
        %v6251 = vadd.f32 0.0, %v6250
        %v6252 = vpop.f32.mrf.mxu0
        %v6253 = vadd.f32 0.0, %v6252
        %6254 = vmatprep.mubr.bf16.mxu0 %v5807
        %6255 = vmatmul.mubr.bf16.gmra.mxu0 %v5806
        %v6256 = vpop.f32.mrf.mxu0
        %v6257 = vadd.f32 0.0, %v6256
        %v6258 = vpop.f32.mrf.mxu0
        %v6259 = vadd.f32 0.0, %v6258
        %v6260 = vpop.f32.mrf.mxu0
        %v6261 = vadd.f32 0.0, %v6260
        %v6262 = vpop.f32.mrf.mxu0
        %v6263 = vadd.f32 0.0, %v6262
        %6264 = vmatprep.mubr.bf16.mxu0 %v5809
        %6265 = vmatmul.mubr.bf16.gmra.mxu0 %v5808
        %v6266 = vpop.f32.mrf.mxu0
        %v6267 = vadd.f32 0.0, %v6266
        %v6268 = vpop.f32.mrf.mxu0
        %v6269 = vadd.f32 0.0, %v6268
        %v6270 = vpop.f32.mrf.mxu0
        %v6271 = vadd.f32 0.0, %v6270
        %v6272 = vpop.f32.mrf.mxu0
        %v6273 = vadd.f32 0.0, %v6272
        %6274 = vmatprep.mubr.bf16.mxu0 %v5811
        %6275 = vmatmul.mubr.bf16.gmra.mxu0 %v5810
        %v6276 = vpop.f32.mrf.mxu0
        %v6277 = vadd.f32 0.0, %v6276
        %v6278 = vpop.f32.mrf.mxu0
        %v6279 = vadd.f32 0.0, %v6278
        %v6280 = vpop.f32.mrf.mxu0
        %v6281 = vadd.f32 0.0, %v6280
        %v6282 = vpop.f32.mrf.mxu0
        %v6283 = vadd.f32 0.0, %v6282
        %6284 = vmatprep.mubr.bf16.mxu0 %v5813
        %6285 = vmatmul.mubr.bf16.gmra.mxu0 %v5812
        %v6286 = vpop.f32.mrf.mxu0
        %v6287 = vadd.f32 0.0, %v6286
        %v6288 = vpop.f32.mrf.mxu0
        %v6289 = vadd.f32 0.0, %v6288
        %v6290 = vpop.f32.mrf.mxu0
        %v6291 = vadd.f32 0.0, %v6290
        %v6292 = vpop.f32.mrf.mxu0
        %v6293 = vadd.f32 0.0, %v6292
        %6294 = vmatprep.mubr.bf16.mxu0 %v5815
        %6295 = vmatmul.mubr.bf16.gmra.mxu0 %v5814
        %v6296 = vpop.f32.mrf.mxu0
        %v6297 = vadd.f32 0.0, %v6296
        %v6298 = vpop.f32.mrf.mxu0
        %v6299 = vadd.f32 0.0, %v6298
        %v6300 = vpop.f32.mrf.mxu0
        %v6301 = vadd.f32 0.0, %v6300
        %v6302 = vpop.f32.mrf.mxu0
        %v6303 = vadd.f32 0.0, %v6302
        %6304 = vmatprep.mubr.bf16.mxu0 %v5817
        %6305 = vmatmul.mubr.bf16.gmra.mxu0 %v5816
        %v6306 = vpop.f32.mrf.mxu0
        %v6307 = vadd.f32 0.0, %v6306
        %v6308 = vpop.f32.mrf.mxu0
        %v6309 = vadd.f32 0.0, %v6308
        %v6310 = vpop.f32.mrf.mxu0
        %v6311 = vadd.f32 0.0, %v6310
        %v6312 = vpop.f32.mrf.mxu0
        %v6313 = vadd.f32 0.0, %v6312
        %6314 = vdwg.mxu0
        %6315 = vmatprep.subr.bf16.mxu0 %v6105
        %6316 = vmatpush1.bf16.msra.mxu0 %v6104
        %6317 = vmatprep.subr.bf16.mxu0 %v6101
        %6318 = vmatpush1.bf16.msra.mxu0 %v6100
        %6319 = vmatprep.subr.bf16.mxu0 %v6097
        %6320 = vmatpush1.bf16.msra.mxu0 %v6096
        %6321 = vmatprep.subr.bf16.mxu0 %v6093
        %6322 = vmatpush1.bf16.msra.mxu0 %v6092
        %6323 = vmatprep.subr.bf16.mxu0 %v6089
        %6324 = vmatpush1.bf16.msra.mxu0 %v6088
        %6325 = vmatprep.subr.bf16.mxu0 %v6085
        %6326 = vmatpush1.bf16.msra.mxu0 %v6084
        %6327 = vmatprep.subr.bf16.mxu0 %v6081
        %6328 = vmatpush1.bf16.msra.mxu0 %v6080
        %6329 = vmatprep.subr.bf16.mxu0 %v6077
        %6330 = vmatpush1.bf16.msra.mxu0 %v6076
        %6331 = vmatprep.subr.bf16.mxu0 %v6137
        %6332 = vmatpush2.bf16.msra.mxu0 %v6136
        %6333 = vmatprep.subr.bf16.mxu0 %v6133
        %6334 = vmatpush2.bf16.msra.mxu0 %v6132
        %6335 = vmatprep.subr.bf16.mxu0 %v6129
        %6336 = vmatpush2.bf16.msra.mxu0 %v6128
        %6337 = vmatprep.subr.bf16.mxu0 %v6125
        %6338 = vmatpush2.bf16.msra.mxu0 %v6124
        %6339 = vmatprep.subr.bf16.mxu0 %v6121
        %6340 = vmatpush2.bf16.msra.mxu0 %v6120
        %6341 = vmatprep.subr.bf16.mxu0 %v6117
        %6342 = vmatpush2.bf16.msra.mxu0 %v6116
        %6343 = vmatprep.subr.bf16.mxu0 %v6113
        %6344 = vmatpush2.bf16.msra.mxu0 %v6112
        %6345 = vmatprep.subr.bf16.mxu0 %v6109
        %6346 = vmatpush2.bf16.msra.mxu0 %v6108
        %6347 = vmatprep.mubr.bf16.mxu0 %v5803
        %6348 = vmatmul.mubr.bf16.gmra.mxu0 %v5802
        %v6349 = vpop.f32.mrf.mxu0
        %v6350 = vadd.f32 0.0, %v6349
        %v6351 = vpop.f32.mrf.mxu0
        %v6352 = vadd.f32 0.0, %v6351
        %v6353 = vpop.f32.mrf.mxu0
        %v6354 = vadd.f32 0.0, %v6353
        %v6355 = vpop.f32.mrf.mxu0
        %v6356 = vadd.f32 0.0, %v6355
        %6357 = vmatprep.mubr.bf16.mxu0 %v5805
        %6358 = vmatmul.mubr.bf16.gmra.mxu0 %v5804
        %v6359 = vpop.f32.mrf.mxu0
        %v6360 = vadd.f32 0.0, %v6359
        %v6361 = vpop.f32.mrf.mxu0
        %v6362 = vadd.f32 0.0, %v6361
        %v6363 = vpop.f32.mrf.mxu0
        %v6364 = vadd.f32 0.0, %v6363
        %v6365 = vpop.f32.mrf.mxu0
        %v6366 = vadd.f32 0.0, %v6365
        %6367 = vmatprep.mubr.bf16.mxu0 %v5807
        %6368 = vmatmul.mubr.bf16.gmra.mxu0 %v5806
        %v6369 = vpop.f32.mrf.mxu0
        %v6370 = vadd.f32 0.0, %v6369
        %v6371 = vpop.f32.mrf.mxu0
        %v6372 = vadd.f32 0.0, %v6371
        %v6373 = vpop.f32.mrf.mxu0
        %v6374 = vadd.f32 0.0, %v6373
        %v6375 = vpop.f32.mrf.mxu0
        %v6376 = vadd.f32 0.0, %v6375
        %6377 = vmatprep.mubr.bf16.mxu0 %v5809
        %6378 = vmatmul.mubr.bf16.gmra.mxu0 %v5808
        %v6379 = vpop.f32.mrf.mxu0
        %v6380 = vadd.f32 0.0, %v6379
        %v6381 = vpop.f32.mrf.mxu0
        %v6382 = vadd.f32 0.0, %v6381
        %v6383 = vpop.f32.mrf.mxu0
        %v6384 = vadd.f32 0.0, %v6383
        %v6385 = vpop.f32.mrf.mxu0
        %v6386 = vadd.f32 0.0, %v6385
        %6387 = vmatprep.mubr.bf16.mxu0 %v5811
        %6388 = vmatmul.mubr.bf16.gmra.mxu0 %v5810
        %v6389 = vpop.f32.mrf.mxu0
        %v6390 = vadd.f32 0.0, %v6389
        %v6391 = vpop.f32.mrf.mxu0
        %v6392 = vadd.f32 0.0, %v6391
        %v6393 = vpop.f32.mrf.mxu0
        %v6394 = vadd.f32 0.0, %v6393
        %v6395 = vpop.f32.mrf.mxu0
        %v6396 = vadd.f32 0.0, %v6395
        %6397 = vmatprep.mubr.bf16.mxu0 %v5813
        %6398 = vmatmul.mubr.bf16.gmra.mxu0 %v5812
        %v6399 = vpop.f32.mrf.mxu0
        %v6400 = vadd.f32 0.0, %v6399
        %v6401 = vpop.f32.mrf.mxu0
        %v6402 = vadd.f32 0.0, %v6401
        %v6403 = vpop.f32.mrf.mxu0
        %v6404 = vadd.f32 0.0, %v6403
        %v6405 = vpop.f32.mrf.mxu0
        %v6406 = vadd.f32 0.0, %v6405
        %6407 = vmatprep.mubr.bf16.mxu0 %v5815
        %6408 = vmatmul.mubr.bf16.gmra.mxu0 %v5814
        %v6409 = vpop.f32.mrf.mxu0
        %v6410 = vadd.f32 0.0, %v6409
        %v6411 = vpop.f32.mrf.mxu0
        %v6412 = vadd.f32 0.0, %v6411
        %v6413 = vpop.f32.mrf.mxu0
        %v6414 = vadd.f32 0.0, %v6413
        %v6415 = vpop.f32.mrf.mxu0
        %v6416 = vadd.f32 0.0, %v6415
        %6417 = vmatprep.mubr.bf16.mxu0 %v5817
        %6418 = vmatmul.mubr.bf16.gmra.mxu0 %v5816
        %v6419 = vpop.f32.mrf.mxu0
        %v6420 = vadd.f32 0.0, %v6419
        %v6421 = vpop.f32.mrf.mxu0
        %v6422 = vadd.f32 0.0, %v6421
        %v6423 = vpop.f32.mrf.mxu0
        %v6424 = vadd.f32 0.0, %v6423
        %v6425 = vpop.f32.mrf.mxu0
        %v6426 = vadd.f32 0.0, %v6425
        %6427 = vdwg.mxu0
        %v6428 = vld [vmem:[#allocation18] sm:$0xff]
        %v6429 = vld [vmem:[#allocation18 + $0x8] sm:$0xff]
        %v6430 = vld [vmem:[#allocation18 + $0x10] sm:$0xff]
        %v6431 = vld [vmem:[#allocation18 + $0x18] sm:$0xff]
        %v6432 = vld [vmem:[#allocation18 + $0x20] sm:$0xff]
        %v6433 = vld [vmem:[#allocation18 + $0x28] sm:$0xff]
        %v6434 = vld [vmem:[#allocation18 + $0x30] sm:$0xff]
        %v6435 = vld [vmem:[#allocation18 + $0x38] sm:$0xff]
        %v6436 = vld [vmem:[#allocation18 + $0x40] sm:$0xff]
        %v6437 = vld [vmem:[#allocation18 + $0x48] sm:$0xff]
        %v6438 = vld [vmem:[#allocation18 + $0x50] sm:$0xff]
        %v6439 = vld [vmem:[#allocation18 + $0x58] sm:$0xff]
        %v6440 = vld [vmem:[#allocation18 + $0x60] sm:$0xff]
        %v6441 = vld [vmem:[#allocation18 + $0x68] sm:$0xff]
        %v6442 = vld [vmem:[#allocation18 + $0x70] sm:$0xff]
        %v6443 = vld [vmem:[#allocation18 + $0x78] sm:$0xff]
        %v6444 = vld [vmem:[#allocation18 + $0x80] sm:$0xff]
        %v6445 = vld [vmem:[#allocation18 + $0x88] sm:$0xff]
        %v6446 = vld [vmem:[#allocation18 + $0x90] sm:$0xff]
        %v6447 = vld [vmem:[#allocation18 + $0x98] sm:$0xff]
        %v6448 = vld [vmem:[#allocation18 + $0xa0] sm:$0xff]
        %v6449 = vld [vmem:[#allocation18 + $0xa8] sm:$0xff]
        %v6450 = vld [vmem:[#allocation18 + $0xb0] sm:$0xff]
        %v6451 = vld [vmem:[#allocation18 + $0xb8] sm:$0xff]
        %v6452 = vld [vmem:[#allocation18 + $0xc0] sm:$0xff]
        %v6453 = vld [vmem:[#allocation18 + $0xc8] sm:$0xff]
        %v6454 = vld [vmem:[#allocation18 + $0xd0] sm:$0xff]
        %v6455 = vld [vmem:[#allocation18 + $0xd8] sm:$0xff]
        %v6456 = vld [vmem:[#allocation18 + $0xe0] sm:$0xff]
        %v6457 = vld [vmem:[#allocation18 + $0xe8] sm:$0xff]
        %v6458 = vld [vmem:[#allocation18 + $0xf0] sm:$0xff]
        %v6459 = vld [vmem:[#allocation18 + $0xf8] sm:$0xff]
        %v6460 = vld [vmem:[#allocation18 + $0x100] sm:$0xff]
        %v6461 = vld [vmem:[#allocation18 + $0x108] sm:$0xff]
        %v6462 = vld [vmem:[#allocation18 + $0x110] sm:$0xff]
        %v6463 = vld [vmem:[#allocation18 + $0x118] sm:$0xff]
        %v6464 = vld [vmem:[#allocation18 + $0x120] sm:$0xff]
        %v6465 = vld [vmem:[#allocation18 + $0x128] sm:$0xff]
        %v6466 = vld [vmem:[#allocation18 + $0x130] sm:$0xff]
        %v6467 = vld [vmem:[#allocation18 + $0x138] sm:$0xff]
        %v6468 = vld [vmem:[#allocation18 + $0x140] sm:$0xff]
        %v6469 = vld [vmem:[#allocation18 + $0x148] sm:$0xff]
        %v6470 = vld [vmem:[#allocation18 + $0x150] sm:$0xff]
        %v6471 = vld [vmem:[#allocation18 + $0x158] sm:$0xff]
        %v6472 = vld [vmem:[#allocation18 + $0x160] sm:$0xff]
        %v6473 = vld [vmem:[#allocation18 + $0x168] sm:$0xff]
        %v6474 = vld [vmem:[#allocation18 + $0x170] sm:$0xff]
        %v6475 = vld [vmem:[#allocation18 + $0x178] sm:$0xff]
        %v6476 = vld [vmem:[#allocation18 + $0x180] sm:$0xff]
        %v6477 = vld [vmem:[#allocation18 + $0x188] sm:$0xff]
        %v6478 = vld [vmem:[#allocation18 + $0x190] sm:$0xff]
        %v6479 = vld [vmem:[#allocation18 + $0x198] sm:$0xff]
        %v6480 = vld [vmem:[#allocation18 + $0x1a0] sm:$0xff]
        %v6481 = vld [vmem:[#allocation18 + $0x1a8] sm:$0xff]
        %v6482 = vld [vmem:[#allocation18 + $0x1b0] sm:$0xff]
        %v6483 = vld [vmem:[#allocation18 + $0x1b8] sm:$0xff]
        %v6484 = vld [vmem:[#allocation18 + $0x1c0] sm:$0xff]
        %v6485 = vld [vmem:[#allocation18 + $0x1c8] sm:$0xff]
        %v6486 = vld [vmem:[#allocation18 + $0x1d0] sm:$0xff]
        %v6487 = vld [vmem:[#allocation18 + $0x1d8] sm:$0xff]
        %v6488 = vld [vmem:[#allocation18 + $0x1e0] sm:$0xff]
        %v6489 = vld [vmem:[#allocation18 + $0x1e8] sm:$0xff]
        %v6490 = vld [vmem:[#allocation18 + $0x1f0] sm:$0xff]
        %v6491 = vld [vmem:[#allocation18 + $0x1f8] sm:$0xff]
        %v6556 = vunpack.c.l.b16 %v6428
        %v6557 = vunpack.c.h.b16 %v6428
        %v6558 = vunpack.c.l.b16 %v6429
        %v6559 = vunpack.c.h.b16 %v6429
        %v6560 = vunpack.c.l.b16 %v6430
        %v6561 = vunpack.c.h.b16 %v6430
        %v6562 = vunpack.c.l.b16 %v6431
        %v6563 = vunpack.c.h.b16 %v6431
        %v6564 = vunpack.c.l.b16 %v6432
        %v6565 = vunpack.c.h.b16 %v6432
        %v6566 = vunpack.c.l.b16 %v6433
        %v6567 = vunpack.c.h.b16 %v6433
        %v6568 = vunpack.c.l.b16 %v6434
        %v6569 = vunpack.c.h.b16 %v6434
        %v6570 = vunpack.c.l.b16 %v6435
        %v6571 = vunpack.c.h.b16 %v6435
        %v6572 = vunpack.c.l.b16 %v6436
        %v6573 = vunpack.c.h.b16 %v6436
        %v6574 = vunpack.c.l.b16 %v6437
        %v6575 = vunpack.c.h.b16 %v6437
        %v6576 = vunpack.c.l.b16 %v6438
        %v6577 = vunpack.c.h.b16 %v6438
        %v6578 = vunpack.c.l.b16 %v6439
        %v6579 = vunpack.c.h.b16 %v6439
        %v6580 = vunpack.c.l.b16 %v6440
        %v6581 = vunpack.c.h.b16 %v6440
        %v6582 = vunpack.c.l.b16 %v6441
        %v6583 = vunpack.c.h.b16 %v6441
        %v6584 = vunpack.c.l.b16 %v6442
        %v6585 = vunpack.c.h.b16 %v6442
        %v6586 = vunpack.c.l.b16 %v6443
        %v6587 = vunpack.c.h.b16 %v6443
        %v6588 = vunpack.c.l.b16 %v6444
        %v6589 = vunpack.c.h.b16 %v6444
        %v6590 = vunpack.c.l.b16 %v6445
        %v6591 = vunpack.c.h.b16 %v6445
        %v6592 = vunpack.c.l.b16 %v6446
        %v6593 = vunpack.c.h.b16 %v6446
        %v6594 = vunpack.c.l.b16 %v6447
        %v6595 = vunpack.c.h.b16 %v6447
        %v6596 = vunpack.c.l.b16 %v6448
        %v6597 = vunpack.c.h.b16 %v6448
        %v6598 = vunpack.c.l.b16 %v6449
        %v6599 = vunpack.c.h.b16 %v6449
        %v6600 = vunpack.c.l.b16 %v6450
        %v6601 = vunpack.c.h.b16 %v6450
        %v6602 = vunpack.c.l.b16 %v6451
        %v6603 = vunpack.c.h.b16 %v6451
        %v6604 = vunpack.c.l.b16 %v6452
        %v6605 = vunpack.c.h.b16 %v6452
        %v6606 = vunpack.c.l.b16 %v6453
        %v6607 = vunpack.c.h.b16 %v6453
        %v6608 = vunpack.c.l.b16 %v6454
        %v6609 = vunpack.c.h.b16 %v6454
        %v6610 = vunpack.c.l.b16 %v6455
        %v6611 = vunpack.c.h.b16 %v6455
        %v6612 = vunpack.c.l.b16 %v6456
        %v6613 = vunpack.c.h.b16 %v6456
        %v6614 = vunpack.c.l.b16 %v6457
        %v6615 = vunpack.c.h.b16 %v6457
        %v6616 = vunpack.c.l.b16 %v6458
        %v6617 = vunpack.c.h.b16 %v6458
        %v6618 = vunpack.c.l.b16 %v6459
        %v6619 = vunpack.c.h.b16 %v6459
        %v6620 = vunpack.c.l.b16 %v6460
        %v6621 = vunpack.c.h.b16 %v6460
        %v6622 = vunpack.c.l.b16 %v6461
        %v6623 = vunpack.c.h.b16 %v6461
        %v6624 = vunpack.c.l.b16 %v6462
        %v6625 = vunpack.c.h.b16 %v6462
        %v6626 = vunpack.c.l.b16 %v6463
        %v6627 = vunpack.c.h.b16 %v6463
        %v6628 = vunpack.c.l.b16 %v6464
        %v6629 = vunpack.c.h.b16 %v6464
        %v6630 = vunpack.c.l.b16 %v6465
        %v6631 = vunpack.c.h.b16 %v6465
        %v6632 = vunpack.c.l.b16 %v6466
        %v6633 = vunpack.c.h.b16 %v6466
        %v6634 = vunpack.c.l.b16 %v6467
        %v6635 = vunpack.c.h.b16 %v6467
        %v6636 = vunpack.c.l.b16 %v6468
        %v6637 = vunpack.c.h.b16 %v6468
        %v6638 = vunpack.c.l.b16 %v6469
        %v6639 = vunpack.c.h.b16 %v6469
        %v6640 = vunpack.c.l.b16 %v6470
        %v6641 = vunpack.c.h.b16 %v6470
        %v6642 = vunpack.c.l.b16 %v6471
        %v6643 = vunpack.c.h.b16 %v6471
        %v6644 = vunpack.c.l.b16 %v6472
        %v6645 = vunpack.c.h.b16 %v6472
        %v6646 = vunpack.c.l.b16 %v6473
        %v6647 = vunpack.c.h.b16 %v6473
        %v6648 = vunpack.c.l.b16 %v6474
        %v6649 = vunpack.c.h.b16 %v6474
        %v6650 = vunpack.c.l.b16 %v6475
        %v6651 = vunpack.c.h.b16 %v6475
        %v6652 = vunpack.c.l.b16 %v6476
        %v6653 = vunpack.c.h.b16 %v6476
        %v6654 = vunpack.c.l.b16 %v6477
        %v6655 = vunpack.c.h.b16 %v6477
        %v6656 = vunpack.c.l.b16 %v6478
        %v6657 = vunpack.c.h.b16 %v6478
        %v6658 = vunpack.c.l.b16 %v6479
        %v6659 = vunpack.c.h.b16 %v6479
        %v6660 = vunpack.c.l.b16 %v6480
        %v6661 = vunpack.c.h.b16 %v6480
        %v6662 = vunpack.c.l.b16 %v6481
        %v6663 = vunpack.c.h.b16 %v6481
        %v6664 = vunpack.c.l.b16 %v6482
        %v6665 = vunpack.c.h.b16 %v6482
        %v6666 = vunpack.c.l.b16 %v6483
        %v6667 = vunpack.c.h.b16 %v6483
        %v6668 = vunpack.c.l.b16 %v6484
        %v6669 = vunpack.c.h.b16 %v6484
        %v6670 = vunpack.c.l.b16 %v6485
        %v6671 = vunpack.c.h.b16 %v6485
        %v6672 = vunpack.c.l.b16 %v6486
        %v6673 = vunpack.c.h.b16 %v6486
        %v6674 = vunpack.c.l.b16 %v6487
        %v6675 = vunpack.c.h.b16 %v6487
        %v6676 = vunpack.c.l.b16 %v6488
        %v6677 = vunpack.c.h.b16 %v6488
        %v6678 = vunpack.c.l.b16 %v6489
        %v6679 = vunpack.c.h.b16 %v6489
        %v6680 = vunpack.c.l.b16 %v6490
        %v6681 = vunpack.c.h.b16 %v6490
        %v6682 = vunpack.c.l.b16 %v6491
        %v6683 = vunpack.c.h.b16 %v6491
        %v6684 = vpack.c.b16 %v6560, %v6556
        %v6685 = vpack.c.b16 %v6561, %v6557
        %v6686 = vpack.c.b16 %v6562, %v6558
        %v6687 = vpack.c.b16 %v6563, %v6559
        %v6688 = vpack.c.b16 %v6568, %v6564
        %v6689 = vpack.c.b16 %v6569, %v6565
        %v6690 = vpack.c.b16 %v6570, %v6566
        %v6691 = vpack.c.b16 %v6571, %v6567
        %v6692 = vpack.c.b16 %v6576, %v6572
        %v6693 = vpack.c.b16 %v6577, %v6573
        %v6694 = vpack.c.b16 %v6578, %v6574
        %v6695 = vpack.c.b16 %v6579, %v6575
        %v6696 = vpack.c.b16 %v6584, %v6580
        %v6697 = vpack.c.b16 %v6585, %v6581
        %v6698 = vpack.c.b16 %v6586, %v6582
        %v6699 = vpack.c.b16 %v6587, %v6583
        %v6700 = vpack.c.b16 %v6592, %v6588
        %v6701 = vpack.c.b16 %v6593, %v6589
        %v6702 = vpack.c.b16 %v6594, %v6590
        %v6703 = vpack.c.b16 %v6595, %v6591
        %v6704 = vpack.c.b16 %v6600, %v6596
        %v6705 = vpack.c.b16 %v6601, %v6597
        %v6706 = vpack.c.b16 %v6602, %v6598
        %v6707 = vpack.c.b16 %v6603, %v6599
        %v6708 = vpack.c.b16 %v6608, %v6604
        %v6709 = vpack.c.b16 %v6609, %v6605
        %v6710 = vpack.c.b16 %v6610, %v6606
        %v6711 = vpack.c.b16 %v6611, %v6607
        %v6712 = vpack.c.b16 %v6616, %v6612
        %v6713 = vpack.c.b16 %v6617, %v6613
        %v6714 = vpack.c.b16 %v6618, %v6614
        %v6715 = vpack.c.b16 %v6619, %v6615
        %v6716 = vpack.c.b16 %v6624, %v6620
        %v6717 = vpack.c.b16 %v6625, %v6621
        %v6718 = vpack.c.b16 %v6626, %v6622
        %v6719 = vpack.c.b16 %v6627, %v6623
        %v6720 = vpack.c.b16 %v6632, %v6628
        %v6721 = vpack.c.b16 %v6633, %v6629
        %v6722 = vpack.c.b16 %v6634, %v6630
        %v6723 = vpack.c.b16 %v6635, %v6631
        %v6724 = vpack.c.b16 %v6640, %v6636
        %v6725 = vpack.c.b16 %v6641, %v6637
        %v6726 = vpack.c.b16 %v6642, %v6638
        %v6727 = vpack.c.b16 %v6643, %v6639
        %v6728 = vpack.c.b16 %v6648, %v6644
        %v6729 = vpack.c.b16 %v6649, %v6645
        %v6730 = vpack.c.b16 %v6650, %v6646
        %v6731 = vpack.c.b16 %v6651, %v6647
        %v6732 = vpack.c.b16 %v6656, %v6652
        %v6733 = vpack.c.b16 %v6657, %v6653
        %v6734 = vpack.c.b16 %v6658, %v6654
        %v6735 = vpack.c.b16 %v6659, %v6655
        %v6736 = vpack.c.b16 %v6664, %v6660
        %v6737 = vpack.c.b16 %v6665, %v6661
        %v6738 = vpack.c.b16 %v6666, %v6662
        %v6739 = vpack.c.b16 %v6667, %v6663
        %v6740 = vpack.c.b16 %v6672, %v6668
        %v6741 = vpack.c.b16 %v6673, %v6669
        %v6742 = vpack.c.b16 %v6674, %v6670
        %v6743 = vpack.c.b16 %v6675, %v6671
        %v6744 = vpack.c.b16 %v6680, %v6676
        %v6745 = vpack.c.b16 %v6681, %v6677
        %v6746 = vpack.c.b16 %v6682, %v6678
        %v6747 = vpack.c.b16 %v6683, %v6679
        %6812 = vmatprep.subr.bf16.mxu0 %v6713
        %6813 = vmatpush1.bf16.msra.mxu0 %v6712
        %6814 = vmatprep.subr.bf16.mxu0 %v6709
        %6815 = vmatpush1.bf16.msra.mxu0 %v6708
        %6816 = vmatprep.subr.bf16.mxu0 %v6705
        %6817 = vmatpush1.bf16.msra.mxu0 %v6704
        %6818 = vmatprep.subr.bf16.mxu0 %v6701
        %6819 = vmatpush1.bf16.msra.mxu0 %v6700
        %6820 = vmatprep.subr.bf16.mxu0 %v6697
        %6821 = vmatpush1.bf16.msra.mxu0 %v6696
        %6822 = vmatprep.subr.bf16.mxu0 %v6693
        %6823 = vmatpush1.bf16.msra.mxu0 %v6692
        %6824 = vmatprep.subr.bf16.mxu0 %v6689
        %6825 = vmatpush1.bf16.msra.mxu0 %v6688
        %6826 = vmatprep.subr.bf16.mxu0 %v6685
        %6827 = vmatpush1.bf16.msra.mxu0 %v6684
        %6828 = vmatprep.subr.bf16.mxu0 %v6745
        %6829 = vmatpush2.bf16.msra.mxu0 %v6744
        %6830 = vmatprep.subr.bf16.mxu0 %v6741
        %6831 = vmatpush2.bf16.msra.mxu0 %v6740
        %6832 = vmatprep.subr.bf16.mxu0 %v6737
        %6833 = vmatpush2.bf16.msra.mxu0 %v6736
        %6834 = vmatprep.subr.bf16.mxu0 %v6733
        %6835 = vmatpush2.bf16.msra.mxu0 %v6732
        %6836 = vmatprep.subr.bf16.mxu0 %v6729
        %6837 = vmatpush2.bf16.msra.mxu0 %v6728
        %6838 = vmatprep.subr.bf16.mxu0 %v6725
        %6839 = vmatpush2.bf16.msra.mxu0 %v6724
        %6840 = vmatprep.subr.bf16.mxu0 %v6721
        %6841 = vmatpush2.bf16.msra.mxu0 %v6720
        %6842 = vmatprep.subr.bf16.mxu0 %v6717
        %6843 = vmatpush2.bf16.msra.mxu0 %v6716
        %6844 = vmatprep.mubr.bf16.mxu0 %v5803
        %6845 = vmatmul.mubr.bf16.gmra.mxu0 %v5802
        %v6846 = vpop.f32.mrf.mxu0
        %v6847 = vadd.f32 0.0, %v6846
        %v6848 = vpop.f32.mrf.mxu0
        %v6849 = vadd.f32 0.0, %v6848
        %v6850 = vpop.f32.mrf.mxu0
        %v6851 = vadd.f32 0.0, %v6850
        %v6852 = vpop.f32.mrf.mxu0
        %v6853 = vadd.f32 0.0, %v6852
        %6854 = vmatprep.mubr.bf16.mxu0 %v5805
        %6855 = vmatmul.mubr.bf16.gmra.mxu0 %v5804
        %v6856 = vpop.f32.mrf.mxu0
        %v6857 = vadd.f32 0.0, %v6856
        %v6858 = vpop.f32.mrf.mxu0
        %v6859 = vadd.f32 0.0, %v6858
        %v6860 = vpop.f32.mrf.mxu0
        %v6861 = vadd.f32 0.0, %v6860
        %v6862 = vpop.f32.mrf.mxu0
        %v6863 = vadd.f32 0.0, %v6862
        %6864 = vmatprep.mubr.bf16.mxu0 %v5807
        %6865 = vmatmul.mubr.bf16.gmra.mxu0 %v5806
        %v6866 = vpop.f32.mrf.mxu0
        %v6867 = vadd.f32 0.0, %v6866
        %v6868 = vpop.f32.mrf.mxu0
        %v6869 = vadd.f32 0.0, %v6868
        %v6870 = vpop.f32.mrf.mxu0
        %v6871 = vadd.f32 0.0, %v6870
        %v6872 = vpop.f32.mrf.mxu0
        %v6873 = vadd.f32 0.0, %v6872
        %6874 = vmatprep.mubr.bf16.mxu0 %v5809
        %6875 = vmatmul.mubr.bf16.gmra.mxu0 %v5808
        %v6876 = vpop.f32.mrf.mxu0
        %v6877 = vadd.f32 0.0, %v6876
        %v6878 = vpop.f32.mrf.mxu0
        %v6879 = vadd.f32 0.0, %v6878
        %v6880 = vpop.f32.mrf.mxu0
        %v6881 = vadd.f32 0.0, %v6880
        %v6882 = vpop.f32.mrf.mxu0
        %v6883 = vadd.f32 0.0, %v6882
        %6884 = vmatprep.mubr.bf16.mxu0 %v5811
        %6885 = vmatmul.mubr.bf16.gmra.mxu0 %v5810
        %v6886 = vpop.f32.mrf.mxu0
        %v6887 = vadd.f32 0.0, %v6886
        %v6888 = vpop.f32.mrf.mxu0
        %v6889 = vadd.f32 0.0, %v6888
        %v6890 = vpop.f32.mrf.mxu0
        %v6891 = vadd.f32 0.0, %v6890
        %v6892 = vpop.f32.mrf.mxu0
        %v6893 = vadd.f32 0.0, %v6892
        %6894 = vmatprep.mubr.bf16.mxu0 %v5813
        %6895 = vmatmul.mubr.bf16.gmra.mxu0 %v5812
        %v6896 = vpop.f32.mrf.mxu0
        %v6897 = vadd.f32 0.0, %v6896
        %v6898 = vpop.f32.mrf.mxu0
        %v6899 = vadd.f32 0.0, %v6898
        %v6900 = vpop.f32.mrf.mxu0
        %v6901 = vadd.f32 0.0, %v6900
        %v6902 = vpop.f32.mrf.mxu0
        %v6903 = vadd.f32 0.0, %v6902
        %6904 = vmatprep.mubr.bf16.mxu0 %v5815
        %6905 = vmatmul.mubr.bf16.gmra.mxu0 %v5814
        %v6906 = vpop.f32.mrf.mxu0
        %v6907 = vadd.f32 0.0, %v6906
        %v6908 = vpop.f32.mrf.mxu0
        %v6909 = vadd.f32 0.0, %v6908
        %v6910 = vpop.f32.mrf.mxu0
        %v6911 = vadd.f32 0.0, %v6910
        %v6912 = vpop.f32.mrf.mxu0
        %v6913 = vadd.f32 0.0, %v6912
        %6914 = vmatprep.mubr.bf16.mxu0 %v5817
        %6915 = vmatmul.mubr.bf16.gmra.mxu0 %v5816
        %v6916 = vpop.f32.mrf.mxu0
        %v6917 = vadd.f32 0.0, %v6916
        %v6918 = vpop.f32.mrf.mxu0
        %v6919 = vadd.f32 0.0, %v6918
        %v6920 = vpop.f32.mrf.mxu0
        %v6921 = vadd.f32 0.0, %v6920
        %v6922 = vpop.f32.mrf.mxu0
        %v6923 = vadd.f32 0.0, %v6922
        %6924 = vdwg.mxu0
        %6925 = vmatprep.subr.bf16.mxu0 %v6715
        %6926 = vmatpush1.bf16.msra.mxu0 %v6714
        %6927 = vmatprep.subr.bf16.mxu0 %v6711
        %6928 = vmatpush1.bf16.msra.mxu0 %v6710
        %6929 = vmatprep.subr.bf16.mxu0 %v6707
        %6930 = vmatpush1.bf16.msra.mxu0 %v6706
        %6931 = vmatprep.subr.bf16.mxu0 %v6703
        %6932 = vmatpush1.bf16.msra.mxu0 %v6702
        %6933 = vmatprep.subr.bf16.mxu0 %v6699
        %6934 = vmatpush1.bf16.msra.mxu0 %v6698
        %6935 = vmatprep.subr.bf16.mxu0 %v6695
        %6936 = vmatpush1.bf16.msra.mxu0 %v6694
        %6937 = vmatprep.subr.bf16.mxu0 %v6691
        %6938 = vmatpush1.bf16.msra.mxu0 %v6690
        %6939 = vmatprep.subr.bf16.mxu0 %v6687
        %6940 = vmatpush1.bf16.msra.mxu0 %v6686
        %6941 = vmatprep.subr.bf16.mxu0 %v6747
        %6942 = vmatpush2.bf16.msra.mxu0 %v6746
        %6943 = vmatprep.subr.bf16.mxu0 %v6743
        %6944 = vmatpush2.bf16.msra.mxu0 %v6742
        %6945 = vmatprep.subr.bf16.mxu0 %v6739
        %6946 = vmatpush2.bf16.msra.mxu0 %v6738
        %6947 = vmatprep.subr.bf16.mxu0 %v6735
        %6948 = vmatpush2.bf16.msra.mxu0 %v6734
        %6949 = vmatprep.subr.bf16.mxu0 %v6731
        %6950 = vmatpush2.bf16.msra.mxu0 %v6730
        %6951 = vmatprep.subr.bf16.mxu0 %v6727
        %6952 = vmatpush2.bf16.msra.mxu0 %v6726
        %6953 = vmatprep.subr.bf16.mxu0 %v6723
        %6954 = vmatpush2.bf16.msra.mxu0 %v6722
        %6955 = vmatprep.subr.bf16.mxu0 %v6719
        %6956 = vmatpush2.bf16.msra.mxu0 %v6718
        %6957 = vmatprep.mubr.bf16.mxu0 %v5803
        %6958 = vmatmul.mubr.bf16.gmra.mxu0 %v5802
        %v6959 = vpop.f32.mrf.mxu0
        %v6960 = vadd.f32 0.0, %v6959
        %v6961 = vpop.f32.mrf.mxu0
        %v6962 = vadd.f32 0.0, %v6961
        %v6963 = vpop.f32.mrf.mxu0
        %v6964 = vadd.f32 0.0, %v6963
        %v6965 = vpop.f32.mrf.mxu0
        %v6966 = vadd.f32 0.0, %v6965
        %6967 = vmatprep.mubr.bf16.mxu0 %v5805
        %6968 = vmatmul.mubr.bf16.gmra.mxu0 %v5804
        %v6969 = vpop.f32.mrf.mxu0
        %v6970 = vadd.f32 0.0, %v6969
        %v6971 = vpop.f32.mrf.mxu0
        %v6972 = vadd.f32 0.0, %v6971
        %v6973 = vpop.f32.mrf.mxu0
        %v6974 = vadd.f32 0.0, %v6973
        %v6975 = vpop.f32.mrf.mxu0
        %v6976 = vadd.f32 0.0, %v6975
        %6977 = vmatprep.mubr.bf16.mxu0 %v5807
        %6978 = vmatmul.mubr.bf16.gmra.mxu0 %v5806
        %v6979 = vpop.f32.mrf.mxu0
        %v6980 = vadd.f32 0.0, %v6979
        %v6981 = vpop.f32.mrf.mxu0
        %v6982 = vadd.f32 0.0, %v6981
        %v6983 = vpop.f32.mrf.mxu0
        %v6984 = vadd.f32 0.0, %v6983
        %v6985 = vpop.f32.mrf.mxu0
        %v6986 = vadd.f32 0.0, %v6985
        %6987 = vmatprep.mubr.bf16.mxu0 %v5809
        %6988 = vmatmul.mubr.bf16.gmra.mxu0 %v5808
        %v6989 = vpop.f32.mrf.mxu0
        %v6990 = vadd.f32 0.0, %v6989
        %v6991 = vpop.f32.mrf.mxu0
        %v6992 = vadd.f32 0.0, %v6991
        %v6993 = vpop.f32.mrf.mxu0
        %v6994 = vadd.f32 0.0, %v6993
        %v6995 = vpop.f32.mrf.mxu0
        %v6996 = vadd.f32 0.0, %v6995
        %6997 = vmatprep.mubr.bf16.mxu0 %v5811
        %6998 = vmatmul.mubr.bf16.gmra.mxu0 %v5810
        %v6999 = vpop.f32.mrf.mxu0
        %v7000 = vadd.f32 0.0, %v6999
        %v7001 = vpop.f32.mrf.mxu0
        %v7002 = vadd.f32 0.0, %v7001
        %v7003 = vpop.f32.mrf.mxu0
        %v7004 = vadd.f32 0.0, %v7003
        %v7005 = vpop.f32.mrf.mxu0
        %v7006 = vadd.f32 0.0, %v7005
        %7007 = vmatprep.mubr.bf16.mxu0 %v5813
        %7008 = vmatmul.mubr.bf16.gmra.mxu0 %v5812
        %v7009 = vpop.f32.mrf.mxu0
        %v7010 = vadd.f32 0.0, %v7009
        %v7011 = vpop.f32.mrf.mxu0
        %v7012 = vadd.f32 0.0, %v7011
        %v7013 = vpop.f32.mrf.mxu0
        %v7014 = vadd.f32 0.0, %v7013
        %v7015 = vpop.f32.mrf.mxu0
        %v7016 = vadd.f32 0.0, %v7015
        %7017 = vmatprep.mubr.bf16.mxu0 %v5815
        %7018 = vmatmul.mubr.bf16.gmra.mxu0 %v5814
        %v7019 = vpop.f32.mrf.mxu0
        %v7020 = vadd.f32 0.0, %v7019
        %v7021 = vpop.f32.mrf.mxu0
        %v7022 = vadd.f32 0.0, %v7021
        %v7023 = vpop.f32.mrf.mxu0
        %v7024 = vadd.f32 0.0, %v7023
        %v7025 = vpop.f32.mrf.mxu0
        %v7026 = vadd.f32 0.0, %v7025
        %7027 = vmatprep.mubr.bf16.mxu0 %v5817
        %7028 = vmatmul.mubr.bf16.gmra.mxu0 %v5816
        %v7029 = vpop.f32.mrf.mxu0
        %v7030 = vadd.f32 0.0, %v7029
        %v7031 = vpop.f32.mrf.mxu0
        %v7032 = vadd.f32 0.0, %v7031
        %v7033 = vpop.f32.mrf.mxu0
        %v7034 = vadd.f32 0.0, %v7033
        %v7035 = vpop.f32.mrf.mxu0
        %v7036 = vadd.f32 0.0, %v7035
        %7037 = vdwg.mxu0
        %v7038 = vsub.f32 0.0, %v6237
        %v7039 = vsub.f32 0.0, %v6239
        %v7040 = vsub.f32 0.0, %v6350
        %v7041 = vsub.f32 0.0, %v6352
        %v7042 = vsub.f32 0.0, %v6241
        %v7043 = vsub.f32 0.0, %v6243
        %v7044 = vsub.f32 0.0, %v6354
        %v7045 = vsub.f32 0.0, %v6356
        %v7046 = vsub.f32 0.0, %v6247
        %v7047 = vsub.f32 0.0, %v6249
        %v7048 = vsub.f32 0.0, %v6360
        %v7049 = vsub.f32 0.0, %v6362
        %v7050 = vsub.f32 0.0, %v6251
        %v7051 = vsub.f32 0.0, %v6253
        %v7052 = vsub.f32 0.0, %v6364
        %v7053 = vsub.f32 0.0, %v6366
        %v7054 = vsub.f32 0.0, %v6257
        %v7055 = vsub.f32 0.0, %v6259
        %v7056 = vsub.f32 0.0, %v6370
        %v7057 = vsub.f32 0.0, %v6372
        %v7058 = vsub.f32 0.0, %v6261
        %v7059 = vsub.f32 0.0, %v6263
        %v7060 = vsub.f32 0.0, %v6374
        %v7061 = vsub.f32 0.0, %v6376
        %v7062 = vsub.f32 0.0, %v6267
        %v7063 = vsub.f32 0.0, %v6269
        %v7064 = vsub.f32 0.0, %v6380
        %v7065 = vsub.f32 0.0, %v6382
        %v7066 = vsub.f32 0.0, %v6271
        %v7067 = vsub.f32 0.0, %v6273
        %v7068 = vsub.f32 0.0, %v6384
        %v7069 = vsub.f32 0.0, %v6386
        %v7070 = vsub.f32 0.0, %v6277
        %v7071 = vsub.f32 0.0, %v6279
        %v7072 = vsub.f32 0.0, %v6390
        %v7073 = vsub.f32 0.0, %v6392
        %v7074 = vsub.f32 0.0, %v6281
        %v7075 = vsub.f32 0.0, %v6283
        %v7076 = vsub.f32 0.0, %v6394
        %v7077 = vsub.f32 0.0, %v6396
        %v7078 = vsub.f32 0.0, %v6287
        %v7079 = vsub.f32 0.0, %v6289
        %v7080 = vsub.f32 0.0, %v6400
        %v7081 = vsub.f32 0.0, %v6402
        %v7082 = vsub.f32 0.0, %v6291
        %v7083 = vsub.f32 0.0, %v6293
        %v7084 = vsub.f32 0.0, %v6404
        %v7085 = vsub.f32 0.0, %v6406
        %v7086 = vsub.f32 0.0, %v6297
        %v7087 = vsub.f32 0.0, %v6299
        %v7088 = vsub.f32 0.0, %v6410
        %v7089 = vsub.f32 0.0, %v6412
        %v7090 = vsub.f32 0.0, %v6301
        %v7091 = vsub.f32 0.0, %v6303
        %v7092 = vsub.f32 0.0, %v6414
        %v7093 = vsub.f32 0.0, %v6416
        %v7094 = vsub.f32 0.0, %v6307
        %v7095 = vsub.f32 0.0, %v6309
        %v7096 = vsub.f32 0.0, %v6420
        %v7097 = vsub.f32 0.0, %v6422
        %v7098 = vsub.f32 0.0, %v6311
        %v7099 = vsub.f32 0.0, %v6313
        %v7100 = vsub.f32 0.0, %v6424
        %v7101 = vsub.f32 0.0, %v6426
        %v7102 = vmul.f32 %v7038, 1.442695
        %v7103 = vpow.pop %v7102
        %v7104 = vmul.f32 %v7039, 1.442695
        %v7105 = vpow.pop %v7104
        %v7106 = vmul.f32 %v7040, 1.442695
        %v7107 = vpow.pop %v7106
        %v7108 = vmul.f32 %v7041, 1.442695
        %v7109 = vpow.pop %v7108
        %v7110 = vmul.f32 %v7042, 1.442695
        %v7111 = vpow.pop %v7110
        %v7112 = vmul.f32 %v7043, 1.442695
        %v7113 = vpow.pop %v7112
        %v7114 = vmul.f32 %v7044, 1.442695
        %v7115 = vpow.pop %v7114
        %v7116 = vmul.f32 %v7045, 1.442695
        %v7117 = vpow.pop %v7116
        %v7118 = vmul.f32 %v7046, 1.442695
        %v7119 = vpow.pop %v7118
        %v7120 = vmul.f32 %v7047, 1.442695
        %v7121 = vpow.pop %v7120
        %v7122 = vmul.f32 %v7048, 1.442695
        %v7123 = vpow.pop %v7122
        %v7124 = vmul.f32 %v7049, 1.442695
        %v7125 = vpow.pop %v7124
        %v7126 = vmul.f32 %v7050, 1.442695
        %v7127 = vpow.pop %v7126
        %v7128 = vmul.f32 %v7051, 1.442695
        %v7129 = vpow.pop %v7128
        %v7130 = vmul.f32 %v7052, 1.442695
        %v7131 = vpow.pop %v7130
        %v7132 = vmul.f32 %v7053, 1.442695
        %v7133 = vpow.pop %v7132
        %v7134 = vmul.f32 %v7054, 1.442695
        %v7135 = vpow.pop %v7134
        %v7136 = vmul.f32 %v7055, 1.442695
        %v7137 = vpow.pop %v7136
        %v7138 = vmul.f32 %v7056, 1.442695
        %v7139 = vpow.pop %v7138
        %v7140 = vmul.f32 %v7057, 1.442695
        %v7141 = vpow.pop %v7140
        %v7142 = vmul.f32 %v7058, 1.442695
        %v7143 = vpow.pop %v7142
        %v7144 = vmul.f32 %v7059, 1.442695
        %v7145 = vpow.pop %v7144
        %v7146 = vmul.f32 %v7060, 1.442695
        %v7147 = vpow.pop %v7146
        %v7148 = vmul.f32 %v7061, 1.442695
        %v7149 = vpow.pop %v7148
        %v7150 = vmul.f32 %v7062, 1.442695
        %v7151 = vpow.pop %v7150
        %v7152 = vmul.f32 %v7063, 1.442695
        %v7153 = vpow.pop %v7152
        %v7154 = vmul.f32 %v7064, 1.442695
        %v7155 = vpow.pop %v7154
        %v7156 = vmul.f32 %v7065, 1.442695
        %v7157 = vpow.pop %v7156
        %v7158 = vmul.f32 %v7066, 1.442695
        %v7159 = vpow.pop %v7158
        %v7160 = vmul.f32 %v7067, 1.442695
        %v7161 = vpow.pop %v7160
        %v7162 = vmul.f32 %v7068, 1.442695
        %v7163 = vpow.pop %v7162
        %v7164 = vmul.f32 %v7069, 1.442695
        %v7165 = vpow.pop %v7164
        %v7166 = vmul.f32 %v7070, 1.442695
        %v7167 = vpow.pop %v7166
        %v7168 = vmul.f32 %v7071, 1.442695
        %v7169 = vpow.pop %v7168
        %v7170 = vmul.f32 %v7072, 1.442695
        %v7171 = vpow.pop %v7170
        %v7172 = vmul.f32 %v7073, 1.442695
        %v7173 = vpow.pop %v7172
        %v7174 = vmul.f32 %v7074, 1.442695
        %v7175 = vpow.pop %v7174
        %v7176 = vmul.f32 %v7075, 1.442695
        %v7177 = vpow.pop %v7176
        %v7178 = vmul.f32 %v7076, 1.442695
        %v7179 = vpow.pop %v7178
        %v7180 = vmul.f32 %v7077, 1.442695
        %v7181 = vpow.pop %v7180
        %v7182 = vmul.f32 %v7078, 1.442695
        %v7183 = vpow.pop %v7182
        %v7184 = vmul.f32 %v7079, 1.442695
        %v7185 = vpow.pop %v7184
        %v7186 = vmul.f32 %v7080, 1.442695
        %v7187 = vpow.pop %v7186
        %v7188 = vmul.f32 %v7081, 1.442695
        %v7189 = vpow.pop %v7188
        %v7190 = vmul.f32 %v7082, 1.442695
        %v7191 = vpow.pop %v7190
        %v7192 = vmul.f32 %v7083, 1.442695
        %v7193 = vpow.pop %v7192
        %v7194 = vmul.f32 %v7084, 1.442695
        %v7195 = vpow.pop %v7194
        %v7196 = vmul.f32 %v7085, 1.442695
        %v7197 = vpow.pop %v7196
        %v7198 = vmul.f32 %v7086, 1.442695
        %v7199 = vpow.pop %v7198
        %v7200 = vmul.f32 %v7087, 1.442695
        %v7201 = vpow.pop %v7200
        %v7202 = vmul.f32 %v7088, 1.442695
        %v7203 = vpow.pop %v7202
        %v7204 = vmul.f32 %v7089, 1.442695
        %v7205 = vpow.pop %v7204
        %v7206 = vmul.f32 %v7090, 1.442695
        %v7207 = vpow.pop %v7206
        %v7208 = vmul.f32 %v7091, 1.442695
        %v7209 = vpow.pop %v7208
        %v7210 = vmul.f32 %v7092, 1.442695
        %v7211 = vpow.pop %v7210
        %v7212 = vmul.f32 %v7093, 1.442695
        %v7213 = vpow.pop %v7212
        %v7214 = vmul.f32 %v7094, 1.442695
        %v7215 = vpow.pop %v7214
        %v7216 = vmul.f32 %v7095, 1.442695
        %v7217 = vpow.pop %v7216
        %v7218 = vmul.f32 %v7096, 1.442695
        %v7219 = vpow.pop %v7218
        %v7220 = vmul.f32 %v7097, 1.442695
        %v7221 = vpow.pop %v7220
        %v7222 = vmul.f32 %v7098, 1.442695
        %v7223 = vpow.pop %v7222
        %v7224 = vmul.f32 %v7099, 1.442695
        %v7225 = vpow.pop %v7224
        %v7226 = vmul.f32 %v7100, 1.442695
        %v7227 = vpow.pop %v7226
        %v7228 = vmul.f32 %v7101, 1.442695
        %v7229 = vpow.pop %v7228
        %v7230 = vadd.f32 %v7103, 1.0
        %v7231 = vadd.f32 %v7105, 1.0
        %v7232 = vadd.f32 %v7107, 1.0
        %v7233 = vadd.f32 %v7109, 1.0
        %v7234 = vadd.f32 %v7111, 1.0
        %v7235 = vadd.f32 %v7113, 1.0
        %v7236 = vadd.f32 %v7115, 1.0
        %v7237 = vadd.f32 %v7117, 1.0
        %v7238 = vadd.f32 %v7119, 1.0
        %v7239 = vadd.f32 %v7121, 1.0
        %v7240 = vadd.f32 %v7123, 1.0
        %v7241 = vadd.f32 %v7125, 1.0
        %v7242 = vadd.f32 %v7127, 1.0
        %v7243 = vadd.f32 %v7129, 1.0
        %v7244 = vadd.f32 %v7131, 1.0
        %v7245 = vadd.f32 %v7133, 1.0
        %v7246 = vadd.f32 %v7135, 1.0
        %v7247 = vadd.f32 %v7137, 1.0
        %v7248 = vadd.f32 %v7139, 1.0
        %v7249 = vadd.f32 %v7141, 1.0
        %v7250 = vadd.f32 %v7143, 1.0
        %v7251 = vadd.f32 %v7145, 1.0
        %v7252 = vadd.f32 %v7147, 1.0
        %v7253 = vadd.f32 %v7149, 1.0
        %v7254 = vadd.f32 %v7151, 1.0
        %v7255 = vadd.f32 %v7153, 1.0
        %v7256 = vadd.f32 %v7155, 1.0
        %v7257 = vadd.f32 %v7157, 1.0
        %v7258 = vadd.f32 %v7159, 1.0
        %v7259 = vadd.f32 %v7161, 1.0
        %v7260 = vadd.f32 %v7163, 1.0
        %v7261 = vadd.f32 %v7165, 1.0
        %v7262 = vadd.f32 %v7167, 1.0
        %v7263 = vadd.f32 %v7169, 1.0
        %v7264 = vadd.f32 %v7171, 1.0
        %v7265 = vadd.f32 %v7173, 1.0
        %v7266 = vadd.f32 %v7175, 1.0
        %v7267 = vadd.f32 %v7177, 1.0
        %v7268 = vadd.f32 %v7179, 1.0
        %v7269 = vadd.f32 %v7181, 1.0
        %v7270 = vadd.f32 %v7183, 1.0
        %v7271 = vadd.f32 %v7185, 1.0
        %v7272 = vadd.f32 %v7187, 1.0
        %v7273 = vadd.f32 %v7189, 1.0
        %v7274 = vadd.f32 %v7191, 1.0
        %v7275 = vadd.f32 %v7193, 1.0
        %v7276 = vadd.f32 %v7195, 1.0
        %v7277 = vadd.f32 %v7197, 1.0
        %v7278 = vadd.f32 %v7199, 1.0
        %v7279 = vadd.f32 %v7201, 1.0
        %v7280 = vadd.f32 %v7203, 1.0
        %v7281 = vadd.f32 %v7205, 1.0
        %v7282 = vadd.f32 %v7207, 1.0
        %v7283 = vadd.f32 %v7209, 1.0
        %v7284 = vadd.f32 %v7211, 1.0
        %v7285 = vadd.f32 %v7213, 1.0
        %v7286 = vadd.f32 %v7215, 1.0
        %v7287 = vadd.f32 %v7217, 1.0
        %v7288 = vadd.f32 %v7219, 1.0
        %v7289 = vadd.f32 %v7221, 1.0
        %v7290 = vadd.f32 %v7223, 1.0
        %v7291 = vadd.f32 %v7225, 1.0
        %v7292 = vadd.f32 %v7227, 1.0
        %v7293 = vadd.f32 %v7229, 1.0
        %v7294 = vrcp.pop %v7230
        %v7295 = vrcp.pop %v7231
        %v7296 = vrcp.pop %v7232
        %v7297 = vrcp.pop %v7233
        %v7298 = vrcp.pop %v7234
        %v7299 = vrcp.pop %v7235
        %v7300 = vrcp.pop %v7236
        %v7301 = vrcp.pop %v7237
        %v7302 = vrcp.pop %v7238
        %v7303 = vrcp.pop %v7239
        %v7304 = vrcp.pop %v7240
        %v7305 = vrcp.pop %v7241
        %v7306 = vrcp.pop %v7242
        %v7307 = vrcp.pop %v7243
        %v7308 = vrcp.pop %v7244
        %v7309 = vrcp.pop %v7245
        %v7310 = vrcp.pop %v7246
        %v7311 = vrcp.pop %v7247
        %v7312 = vrcp.pop %v7248
        %v7313 = vrcp.pop %v7249
        %v7314 = vrcp.pop %v7250
        %v7315 = vrcp.pop %v7251
        %v7316 = vrcp.pop %v7252
        %v7317 = vrcp.pop %v7253
        %v7318 = vrcp.pop %v7254
        %v7319 = vrcp.pop %v7255
        %v7320 = vrcp.pop %v7256
        %v7321 = vrcp.pop %v7257
        %v7322 = vrcp.pop %v7258
        %v7323 = vrcp.pop %v7259
        %v7324 = vrcp.pop %v7260
        %v7325 = vrcp.pop %v7261
        %v7326 = vrcp.pop %v7262
        %v7327 = vrcp.pop %v7263
        %v7328 = vrcp.pop %v7264
        %v7329 = vrcp.pop %v7265
        %v7330 = vrcp.pop %v7266
        %v7331 = vrcp.pop %v7267
        %v7332 = vrcp.pop %v7268
        %v7333 = vrcp.pop %v7269
        %v7334 = vrcp.pop %v7270
        %v7335 = vrcp.pop %v7271
        %v7336 = vrcp.pop %v7272
        %v7337 = vrcp.pop %v7273
        %v7338 = vrcp.pop %v7274
        %v7339 = vrcp.pop %v7275
        %v7340 = vrcp.pop %v7276
        %v7341 = vrcp.pop %v7277
        %v7342 = vrcp.pop %v7278
        %v7343 = vrcp.pop %v7279
        %v7344 = vrcp.pop %v7280
        %v7345 = vrcp.pop %v7281
        %v7346 = vrcp.pop %v7282
        %v7347 = vrcp.pop %v7283
        %v7348 = vrcp.pop %v7284
        %v7349 = vrcp.pop %v7285
        %v7350 = vrcp.pop %v7286
        %v7351 = vrcp.pop %v7287
        %v7352 = vrcp.pop %v7288
        %v7353 = vrcp.pop %v7289
        %v7354 = vrcp.pop %v7290
        %v7355 = vrcp.pop %v7291
        %v7356 = vrcp.pop %v7292
        %v7357 = vrcp.pop %v7293
        %v7358 = vmul.f32 %v6237, %v7294
        %v7359 = vmul.f32 %v6239, %v7295
        %v7360 = vmul.f32 %v6350, %v7296
        %v7361 = vmul.f32 %v6352, %v7297
        %v7362 = vmul.f32 %v6241, %v7298
        %v7363 = vmul.f32 %v6243, %v7299
        %v7364 = vmul.f32 %v6354, %v7300
        %v7365 = vmul.f32 %v6356, %v7301
        %v7366 = vmul.f32 %v6247, %v7302
        %v7367 = vmul.f32 %v6249, %v7303
        %v7368 = vmul.f32 %v6360, %v7304
        %v7369 = vmul.f32 %v6362, %v7305
        %v7370 = vmul.f32 %v6251, %v7306
        %v7371 = vmul.f32 %v6253, %v7307
        %v7372 = vmul.f32 %v6364, %v7308
        %v7373 = vmul.f32 %v6366, %v7309
        %v7374 = vmul.f32 %v6257, %v7310
        %v7375 = vmul.f32 %v6259, %v7311
        %v7376 = vmul.f32 %v6370, %v7312
        %v7377 = vmul.f32 %v6372, %v7313
        %v7378 = vmul.f32 %v6261, %v7314
        %v7379 = vmul.f32 %v6263, %v7315
        %v7380 = vmul.f32 %v6374, %v7316
        %v7381 = vmul.f32 %v6376, %v7317
        %v7382 = vmul.f32 %v6267, %v7318
        %v7383 = vmul.f32 %v6269, %v7319
        %v7384 = vmul.f32 %v6380, %v7320
        %v7385 = vmul.f32 %v6382, %v7321
        %v7386 = vmul.f32 %v6271, %v7322
        %v7387 = vmul.f32 %v6273, %v7323
        %v7388 = vmul.f32 %v6384, %v7324
        %v7389 = vmul.f32 %v6386, %v7325
        %v7390 = vmul.f32 %v6277, %v7326
        %v7391 = vmul.f32 %v6279, %v7327
        %v7392 = vmul.f32 %v6390, %v7328
        %v7393 = vmul.f32 %v6392, %v7329
        %v7394 = vmul.f32 %v6281, %v7330
        %v7395 = vmul.f32 %v6283, %v7331
        %v7396 = vmul.f32 %v6394, %v7332
        %v7397 = vmul.f32 %v6396, %v7333
        %v7398 = vmul.f32 %v6287, %v7334
        %v7399 = vmul.f32 %v6289, %v7335
        %v7400 = vmul.f32 %v6400, %v7336
        %v7401 = vmul.f32 %v6402, %v7337
        %v7402 = vmul.f32 %v6291, %v7338
        %v7403 = vmul.f32 %v6293, %v7339
        %v7404 = vmul.f32 %v6404, %v7340
        %v7405 = vmul.f32 %v6406, %v7341
        %v7406 = vmul.f32 %v6297, %v7342
        %v7407 = vmul.f32 %v6299, %v7343
        %v7408 = vmul.f32 %v6410, %v7344
        %v7409 = vmul.f32 %v6412, %v7345
        %v7410 = vmul.f32 %v6301, %v7346
        %v7411 = vmul.f32 %v6303, %v7347
        %v7412 = vmul.f32 %v6414, %v7348
        %v7413 = vmul.f32 %v6416, %v7349
        %v7414 = vmul.f32 %v6307, %v7350
        %v7415 = vmul.f32 %v6309, %v7351
        %v7416 = vmul.f32 %v6420, %v7352
        %v7417 = vmul.f32 %v6422, %v7353
        %v7418 = vmul.f32 %v6311, %v7354
        %v7419 = vmul.f32 %v6313, %v7355
        %v7420 = vmul.f32 %v6424, %v7356
        %v7421 = vmul.f32 %v6426, %v7357
        %v7422 = vmul.f32 %v7358, %v6847
        %v7423 = vmul.f32 %v7359, %v6849
        %v7424 = vmul.f32 %v7360, %v6960
        %v7425 = vmul.f32 %v7361, %v6962
        %v7426 = vmul.f32 %v7362, %v6851
        %v7427 = vmul.f32 %v7363, %v6853
        %v7428 = vmul.f32 %v7364, %v6964
        %v7429 = vmul.f32 %v7365, %v6966
        %v7430 = vmul.f32 %v7366, %v6857
        %v7431 = vmul.f32 %v7367, %v6859
        %v7432 = vmul.f32 %v7368, %v6970
        %v7433 = vmul.f32 %v7369, %v6972
        %v7434 = vmul.f32 %v7370, %v6861
        %v7435 = vmul.f32 %v7371, %v6863
        %v7436 = vmul.f32 %v7372, %v6974
        %v7437 = vmul.f32 %v7373, %v6976
        %v7438 = vmul.f32 %v7374, %v6867
        %v7439 = vmul.f32 %v7375, %v6869
        %v7440 = vmul.f32 %v7376, %v6980
        %v7441 = vmul.f32 %v7377, %v6982
        %v7442 = vmul.f32 %v7378, %v6871
        %v7443 = vmul.f32 %v7379, %v6873
        %v7444 = vmul.f32 %v7380, %v6984
        %v7445 = vmul.f32 %v7381, %v6986
        %v7446 = vmul.f32 %v7382, %v6877
        %v7447 = vmul.f32 %v7383, %v6879
        %v7448 = vmul.f32 %v7384, %v6990
        %v7449 = vmul.f32 %v7385, %v6992
        %v7450 = vmul.f32 %v7386, %v6881
        %v7451 = vmul.f32 %v7387, %v6883
        %v7452 = vmul.f32 %v7388, %v6994
        %v7453 = vmul.f32 %v7389, %v6996
        %v7454 = vmul.f32 %v7390, %v6887
        %v7455 = vmul.f32 %v7391, %v6889
        %v7456 = vmul.f32 %v7392, %v7000
        %v7457 = vmul.f32 %v7393, %v7002
        %v7458 = vmul.f32 %v7394, %v6891
        %v7459 = vmul.f32 %v7395, %v6893
        %v7460 = vmul.f32 %v7396, %v7004
        %v7461 = vmul.f32 %v7397, %v7006
        %v7462 = vmul.f32 %v7398, %v6897
        %v7463 = vmul.f32 %v7399, %v6899
        %v7464 = vmul.f32 %v7400, %v7010
        %v7465 = vmul.f32 %v7401, %v7012
        %v7466 = vmul.f32 %v7402, %v6901
        %v7467 = vmul.f32 %v7403, %v6903
        %v7468 = vmul.f32 %v7404, %v7014
        %v7469 = vmul.f32 %v7405, %v7016
        %v7470 = vmul.f32 %v7406, %v6907
        %v7471 = vmul.f32 %v7407, %v6909
        %v7472 = vmul.f32 %v7408, %v7020
        %v7473 = vmul.f32 %v7409, %v7022
        %v7474 = vmul.f32 %v7410, %v6911
        %v7475 = vmul.f32 %v7411, %v6913
        %v7476 = vmul.f32 %v7412, %v7024
        %v7477 = vmul.f32 %v7413, %v7026
        %v7478 = vmul.f32 %v7414, %v6917
        %v7479 = vmul.f32 %v7415, %v6919
        %v7480 = vmul.f32 %v7416, %v7030
        %v7481 = vmul.f32 %v7417, %v7032
        %v7482 = vmul.f32 %v7418, %v6921
        %v7483 = vmul.f32 %v7419, %v6923
        %v7484 = vmul.f32 %v7420, %v7034
        %v7485 = vmul.f32 %v7421, %v7036
        %v7486 = vpack.c.bf16 %v7426, %v7422
        %v7487 = vpack.c.bf16 %v7427, %v7423
        %v7488 = vpack.c.bf16 %v7428, %v7424
        %v7489 = vpack.c.bf16 %v7429, %v7425
        %v7490 = vpack.c.bf16 %v7434, %v7430
        %v7491 = vpack.c.bf16 %v7435, %v7431
        %v7492 = vpack.c.bf16 %v7436, %v7432
        %v7493 = vpack.c.bf16 %v7437, %v7433
        %v7494 = vpack.c.bf16 %v7442, %v7438
        %v7495 = vpack.c.bf16 %v7443, %v7439
        %v7496 = vpack.c.bf16 %v7444, %v7440
        %v7497 = vpack.c.bf16 %v7445, %v7441
        %v7498 = vpack.c.bf16 %v7450, %v7446
        %v7499 = vpack.c.bf16 %v7451, %v7447
        %v7500 = vpack.c.bf16 %v7452, %v7448
        %v7501 = vpack.c.bf16 %v7453, %v7449
        %v7502 = vpack.c.bf16 %v7458, %v7454
        %v7503 = vpack.c.bf16 %v7459, %v7455
        %v7504 = vpack.c.bf16 %v7460, %v7456
        %v7505 = vpack.c.bf16 %v7461, %v7457
        %v7506 = vpack.c.bf16 %v7466, %v7462
        %v7507 = vpack.c.bf16 %v7467, %v7463
        %v7508 = vpack.c.bf16 %v7468, %v7464
        %v7509 = vpack.c.bf16 %v7469, %v7465
        %v7510 = vpack.c.bf16 %v7474, %v7470
        %v7511 = vpack.c.bf16 %v7475, %v7471
        %v7512 = vpack.c.bf16 %v7476, %v7472
        %v7513 = vpack.c.bf16 %v7477, %v7473
        %v7514 = vpack.c.bf16 %v7482, %v7478
        %v7515 = vpack.c.bf16 %v7483, %v7479
        %v7516 = vpack.c.bf16 %v7484, %v7480
        %v7517 = vpack.c.bf16 %v7485, %v7481
        %v7518 = vld [vmem:[#allocation16] sm:$0xff]
        %v7519 = vld [vmem:[#allocation16 + $0x8] sm:$0xff]
        %v7520 = vld [vmem:[#allocation16 + $0x10] sm:$0xff]
        %v7521 = vld [vmem:[#allocation16 + $0x18] sm:$0xff]
        %v7522 = vld [vmem:[#allocation16 + $0x20] sm:$0xff]
        %v7523 = vld [vmem:[#allocation16 + $0x28] sm:$0xff]
        %v7524 = vld [vmem:[#allocation16 + $0x30] sm:$0xff]
        %v7525 = vld [vmem:[#allocation16 + $0x38] sm:$0xff]
        %v7526 = vld [vmem:[#allocation16 + $0x40] sm:$0xff]
        %v7527 = vld [vmem:[#allocation16 + $0x48] sm:$0xff]
        %v7528 = vld [vmem:[#allocation16 + $0x50] sm:$0xff]
        %v7529 = vld [vmem:[#allocation16 + $0x58] sm:$0xff]
        %v7530 = vld [vmem:[#allocation16 + $0x60] sm:$0xff]
        %v7531 = vld [vmem:[#allocation16 + $0x68] sm:$0xff]
        %v7532 = vld [vmem:[#allocation16 + $0x70] sm:$0xff]
        %v7533 = vld [vmem:[#allocation16 + $0x78] sm:$0xff]
        %v7534 = vld [vmem:[#allocation16 + $0x80] sm:$0xff]
        %v7535 = vld [vmem:[#allocation16 + $0x88] sm:$0xff]
        %v7536 = vld [vmem:[#allocation16 + $0x90] sm:$0xff]
        %v7537 = vld [vmem:[#allocation16 + $0x98] sm:$0xff]
        %v7538 = vld [vmem:[#allocation16 + $0xa0] sm:$0xff]
        %v7539 = vld [vmem:[#allocation16 + $0xa8] sm:$0xff]
        %v7540 = vld [vmem:[#allocation16 + $0xb0] sm:$0xff]
        %v7541 = vld [vmem:[#allocation16 + $0xb8] sm:$0xff]
        %v7542 = vld [vmem:[#allocation16 + $0xc0] sm:$0xff]
        %v7543 = vld [vmem:[#allocation16 + $0xc8] sm:$0xff]
        %v7544 = vld [vmem:[#allocation16 + $0xd0] sm:$0xff]
        %v7545 = vld [vmem:[#allocation16 + $0xd8] sm:$0xff]
        %v7546 = vld [vmem:[#allocation16 + $0xe0] sm:$0xff]
        %v7547 = vld [vmem:[#allocation16 + $0xe8] sm:$0xff]
        %v7548 = vld [vmem:[#allocation16 + $0xf0] sm:$0xff]
        %v7549 = vld [vmem:[#allocation16 + $0xf8] sm:$0xff]
        %v7550 = vld [vmem:[#allocation16 + $0x100] sm:$0xff]
        %v7551 = vld [vmem:[#allocation16 + $0x108] sm:$0xff]
        %v7552 = vld [vmem:[#allocation16 + $0x110] sm:$0xff]
        %v7553 = vld [vmem:[#allocation16 + $0x118] sm:$0xff]
        %v7554 = vld [vmem:[#allocation16 + $0x120] sm:$0xff]
        %v7555 = vld [vmem:[#allocation16 + $0x128] sm:$0xff]
        %v7556 = vld [vmem:[#allocation16 + $0x130] sm:$0xff]
        %v7557 = vld [vmem:[#allocation16 + $0x138] sm:$0xff]
        %v7558 = vld [vmem:[#allocation16 + $0x140] sm:$0xff]
        %v7559 = vld [vmem:[#allocation16 + $0x148] sm:$0xff]
        %v7560 = vld [vmem:[#allocation16 + $0x150] sm:$0xff]
        %v7561 = vld [vmem:[#allocation16 + $0x158] sm:$0xff]
        %v7562 = vld [vmem:[#allocation16 + $0x160] sm:$0xff]
        %v7563 = vld [vmem:[#allocation16 + $0x168] sm:$0xff]
        %v7564 = vld [vmem:[#allocation16 + $0x170] sm:$0xff]
        %v7565 = vld [vmem:[#allocation16 + $0x178] sm:$0xff]
        %v7566 = vld [vmem:[#allocation16 + $0x180] sm:$0xff]
        %v7567 = vld [vmem:[#allocation16 + $0x188] sm:$0xff]
        %v7568 = vld [vmem:[#allocation16 + $0x190] sm:$0xff]
        %v7569 = vld [vmem:[#allocation16 + $0x198] sm:$0xff]
        %v7570 = vld [vmem:[#allocation16 + $0x1a0] sm:$0xff]
        %v7571 = vld [vmem:[#allocation16 + $0x1a8] sm:$0xff]
        %v7572 = vld [vmem:[#allocation16 + $0x1b0] sm:$0xff]
        %v7573 = vld [vmem:[#allocation16 + $0x1b8] sm:$0xff]
        %v7574 = vld [vmem:[#allocation16 + $0x1c0] sm:$0xff]
        %v7575 = vld [vmem:[#allocation16 + $0x1c8] sm:$0xff]
        %v7576 = vld [vmem:[#allocation16 + $0x1d0] sm:$0xff]
        %v7577 = vld [vmem:[#allocation16 + $0x1d8] sm:$0xff]
        %v7578 = vld [vmem:[#allocation16 + $0x1e0] sm:$0xff]
        %v7579 = vld [vmem:[#allocation16 + $0x1e8] sm:$0xff]
        %v7580 = vld [vmem:[#allocation16 + $0x1f0] sm:$0xff]
        %v7581 = vld [vmem:[#allocation16 + $0x1f8] sm:$0xff]
        %v7646 = vunpack.c.l.b16 %v7518
        %v7647 = vunpack.c.h.b16 %v7518
        %v7648 = vunpack.c.l.b16 %v7519
        %v7649 = vunpack.c.h.b16 %v7519
        %v7650 = vunpack.c.l.b16 %v7520
        %v7651 = vunpack.c.h.b16 %v7520
        %v7652 = vunpack.c.l.b16 %v7521
        %v7653 = vunpack.c.h.b16 %v7521
        %v7654 = vunpack.c.l.b16 %v7522
        %v7655 = vunpack.c.h.b16 %v7522
        %v7656 = vunpack.c.l.b16 %v7523
        %v7657 = vunpack.c.h.b16 %v7523
        %v7658 = vunpack.c.l.b16 %v7524
        %v7659 = vunpack.c.h.b16 %v7524
        %v7660 = vunpack.c.l.b16 %v7525
        %v7661 = vunpack.c.h.b16 %v7525
        %v7662 = vunpack.c.l.b16 %v7526
        %v7663 = vunpack.c.h.b16 %v7526
        %v7664 = vunpack.c.l.b16 %v7527
        %v7665 = vunpack.c.h.b16 %v7527
        %v7666 = vunpack.c.l.b16 %v7528
        %v7667 = vunpack.c.h.b16 %v7528
        %v7668 = vunpack.c.l.b16 %v7529
        %v7669 = vunpack.c.h.b16 %v7529
        %v7670 = vunpack.c.l.b16 %v7530
        %v7671 = vunpack.c.h.b16 %v7530
        %v7672 = vunpack.c.l.b16 %v7531
        %v7673 = vunpack.c.h.b16 %v7531
        %v7674 = vunpack.c.l.b16 %v7532
        %v7675 = vunpack.c.h.b16 %v7532
        %v7676 = vunpack.c.l.b16 %v7533
        %v7677 = vunpack.c.h.b16 %v7533
        %v7678 = vunpack.c.l.b16 %v7534
        %v7679 = vunpack.c.h.b16 %v7534
        %v7680 = vunpack.c.l.b16 %v7535
        %v7681 = vunpack.c.h.b16 %v7535
        %v7682 = vunpack.c.l.b16 %v7536
        %v7683 = vunpack.c.h.b16 %v7536
        %v7684 = vunpack.c.l.b16 %v7537
        %v7685 = vunpack.c.h.b16 %v7537
        %v7686 = vunpack.c.l.b16 %v7538
        %v7687 = vunpack.c.h.b16 %v7538
        %v7688 = vunpack.c.l.b16 %v7539
        %v7689 = vunpack.c.h.b16 %v7539
        %v7690 = vunpack.c.l.b16 %v7540
        %v7691 = vunpack.c.h.b16 %v7540
        %v7692 = vunpack.c.l.b16 %v7541
        %v7693 = vunpack.c.h.b16 %v7541
        %v7694 = vunpack.c.l.b16 %v7542
        %v7695 = vunpack.c.h.b16 %v7542
        %v7696 = vunpack.c.l.b16 %v7543
        %v7697 = vunpack.c.h.b16 %v7543
        %v7698 = vunpack.c.l.b16 %v7544
        %v7699 = vunpack.c.h.b16 %v7544
        %v7700 = vunpack.c.l.b16 %v7545
        %v7701 = vunpack.c.h.b16 %v7545
        %v7702 = vunpack.c.l.b16 %v7546
        %v7703 = vunpack.c.h.b16 %v7546
        %v7704 = vunpack.c.l.b16 %v7547
        %v7705 = vunpack.c.h.b16 %v7547
        %v7706 = vunpack.c.l.b16 %v7548
        %v7707 = vunpack.c.h.b16 %v7548
        %v7708 = vunpack.c.l.b16 %v7549
        %v7709 = vunpack.c.h.b16 %v7549
        %v7710 = vunpack.c.l.b16 %v7550
        %v7711 = vunpack.c.h.b16 %v7550
        %v7712 = vunpack.c.l.b16 %v7551
        %v7713 = vunpack.c.h.b16 %v7551
        %v7714 = vunpack.c.l.b16 %v7552
        %v7715 = vunpack.c.h.b16 %v7552
        %v7716 = vunpack.c.l.b16 %v7553
        %v7717 = vunpack.c.h.b16 %v7553
        %v7718 = vunpack.c.l.b16 %v7554
        %v7719 = vunpack.c.h.b16 %v7554
        %v7720 = vunpack.c.l.b16 %v7555
        %v7721 = vunpack.c.h.b16 %v7555
        %v7722 = vunpack.c.l.b16 %v7556
        %v7723 = vunpack.c.h.b16 %v7556
        %v7724 = vunpack.c.l.b16 %v7557
        %v7725 = vunpack.c.h.b16 %v7557
        %v7726 = vunpack.c.l.b16 %v7558
        %v7727 = vunpack.c.h.b16 %v7558
        %v7728 = vunpack.c.l.b16 %v7559
        %v7729 = vunpack.c.h.b16 %v7559
        %v7730 = vunpack.c.l.b16 %v7560
        %v7731 = vunpack.c.h.b16 %v7560
        %v7732 = vunpack.c.l.b16 %v7561
        %v7733 = vunpack.c.h.b16 %v7561
        %v7734 = vunpack.c.l.b16 %v7562
        %v7735 = vunpack.c.h.b16 %v7562
        %v7736 = vunpack.c.l.b16 %v7563
        %v7737 = vunpack.c.h.b16 %v7563
        %v7738 = vunpack.c.l.b16 %v7564
        %v7739 = vunpack.c.h.b16 %v7564
        %v7740 = vunpack.c.l.b16 %v7565
        %v7741 = vunpack.c.h.b16 %v7565
        %v7742 = vunpack.c.l.b16 %v7566
        %v7743 = vunpack.c.h.b16 %v7566
        %v7744 = vunpack.c.l.b16 %v7567
        %v7745 = vunpack.c.h.b16 %v7567
        %v7746 = vunpack.c.l.b16 %v7568
        %v7747 = vunpack.c.h.b16 %v7568
        %v7748 = vunpack.c.l.b16 %v7569
        %v7749 = vunpack.c.h.b16 %v7569
        %v7750 = vunpack.c.l.b16 %v7570
        %v7751 = vunpack.c.h.b16 %v7570
        %v7752 = vunpack.c.l.b16 %v7571
        %v7753 = vunpack.c.h.b16 %v7571
        %v7754 = vunpack.c.l.b16 %v7572
        %v7755 = vunpack.c.h.b16 %v7572
        %v7756 = vunpack.c.l.b16 %v7573
        %v7757 = vunpack.c.h.b16 %v7573
        %v7758 = vunpack.c.l.b16 %v7574
        %v7759 = vunpack.c.h.b16 %v7574
        %v7760 = vunpack.c.l.b16 %v7575
        %v7761 = vunpack.c.h.b16 %v7575
        %v7762 = vunpack.c.l.b16 %v7576
        %v7763 = vunpack.c.h.b16 %v7576
        %v7764 = vunpack.c.l.b16 %v7577
        %v7765 = vunpack.c.h.b16 %v7577
        %v7766 = vunpack.c.l.b16 %v7578
        %v7767 = vunpack.c.h.b16 %v7578
        %v7768 = vunpack.c.l.b16 %v7579
        %v7769 = vunpack.c.h.b16 %v7579
        %v7770 = vunpack.c.l.b16 %v7580
        %v7771 = vunpack.c.h.b16 %v7580
        %v7772 = vunpack.c.l.b16 %v7581
        %v7773 = vunpack.c.h.b16 %v7581
        %v7774 = vpack.c.b16 %v7648, %v7646
        %v7775 = vpack.c.b16 %v7649, %v7647
        %v7776 = vpack.c.b16 %v7652, %v7650
        %v7777 = vpack.c.b16 %v7653, %v7651
        %v7778 = vpack.c.b16 %v7656, %v7654
        %v7779 = vpack.c.b16 %v7657, %v7655
        %v7780 = vpack.c.b16 %v7660, %v7658
        %v7781 = vpack.c.b16 %v7661, %v7659
        %v7782 = vpack.c.b16 %v7664, %v7662
        %v7783 = vpack.c.b16 %v7665, %v7663
        %v7784 = vpack.c.b16 %v7668, %v7666
        %v7785 = vpack.c.b16 %v7669, %v7667
        %v7786 = vpack.c.b16 %v7672, %v7670
        %v7787 = vpack.c.b16 %v7673, %v7671
        %v7788 = vpack.c.b16 %v7676, %v7674
        %v7789 = vpack.c.b16 %v7677, %v7675
        %v7790 = vpack.c.b16 %v7680, %v7678
        %v7791 = vpack.c.b16 %v7681, %v7679
        %v7792 = vpack.c.b16 %v7684, %v7682
        %v7793 = vpack.c.b16 %v7685, %v7683
        %v7794 = vpack.c.b16 %v7688, %v7686
        %v7795 = vpack.c.b16 %v7689, %v7687
        %v7796 = vpack.c.b16 %v7692, %v7690
        %v7797 = vpack.c.b16 %v7693, %v7691
        %v7798 = vpack.c.b16 %v7696, %v7694
        %v7799 = vpack.c.b16 %v7697, %v7695
        %v7800 = vpack.c.b16 %v7700, %v7698
        %v7801 = vpack.c.b16 %v7701, %v7699
        %v7802 = vpack.c.b16 %v7704, %v7702
        %v7803 = vpack.c.b16 %v7705, %v7703
        %v7804 = vpack.c.b16 %v7708, %v7706
        %v7805 = vpack.c.b16 %v7709, %v7707
        %v7806 = vpack.c.b16 %v7712, %v7710
        %v7807 = vpack.c.b16 %v7713, %v7711
        %v7808 = vpack.c.b16 %v7716, %v7714
        %v7809 = vpack.c.b16 %v7717, %v7715
        %v7810 = vpack.c.b16 %v7720, %v7718
        %v7811 = vpack.c.b16 %v7721, %v7719
        %v7812 = vpack.c.b16 %v7724, %v7722
        %v7813 = vpack.c.b16 %v7725, %v7723
        %v7814 = vpack.c.b16 %v7728, %v7726
        %v7815 = vpack.c.b16 %v7729, %v7727
        %v7816 = vpack.c.b16 %v7732, %v7730
        %v7817 = vpack.c.b16 %v7733, %v7731
        %v7818 = vpack.c.b16 %v7736, %v7734
        %v7819 = vpack.c.b16 %v7737, %v7735
        %v7820 = vpack.c.b16 %v7740, %v7738
        %v7821 = vpack.c.b16 %v7741, %v7739
        %v7822 = vpack.c.b16 %v7744, %v7742
        %v7823 = vpack.c.b16 %v7745, %v7743
        %v7824 = vpack.c.b16 %v7748, %v7746
        %v7825 = vpack.c.b16 %v7749, %v7747
        %v7826 = vpack.c.b16 %v7752, %v7750
        %v7827 = vpack.c.b16 %v7753, %v7751
        %v7828 = vpack.c.b16 %v7756, %v7754
        %v7829 = vpack.c.b16 %v7757, %v7755
        %v7830 = vpack.c.b16 %v7760, %v7758
        %v7831 = vpack.c.b16 %v7761, %v7759
        %v7832 = vpack.c.b16 %v7764, %v7762
        %v7833 = vpack.c.b16 %v7765, %v7763
        %v7834 = vpack.c.b16 %v7768, %v7766
        %v7835 = vpack.c.b16 %v7769, %v7767
        %v7836 = vpack.c.b16 %v7772, %v7770
        %v7837 = vpack.c.b16 %v7773, %v7771
        %7902 = vmatprep.subr.bf16.mxu0 %v7789
        %7903 = vmatpush1.bf16.msra.mxu0 %v7788
        %7904 = vmatprep.subr.bf16.mxu0 %v7787
        %7905 = vmatpush1.bf16.msra.mxu0 %v7786
        %7906 = vmatprep.subr.bf16.mxu0 %v7785
        %7907 = vmatpush1.bf16.msra.mxu0 %v7784
        %7908 = vmatprep.subr.bf16.mxu0 %v7783
        %7909 = vmatpush1.bf16.msra.mxu0 %v7782
        %7910 = vmatprep.subr.bf16.mxu0 %v7781
        %7911 = vmatpush1.bf16.msra.mxu0 %v7780
        %7912 = vmatprep.subr.bf16.mxu0 %v7779
        %7913 = vmatpush1.bf16.msra.mxu0 %v7778
        %7914 = vmatprep.subr.bf16.mxu0 %v7777
        %7915 = vmatpush1.bf16.msra.mxu0 %v7776
        %7916 = vmatprep.subr.bf16.mxu0 %v7775
        %7917 = vmatpush1.bf16.msra.mxu0 %v7774
        %7918 = vmatprep.subr.bf16.mxu0 %v7805
        %7919 = vmatpush2.bf16.msra.mxu0 %v7804
        %7920 = vmatprep.subr.bf16.mxu0 %v7803
        %7921 = vmatpush2.bf16.msra.mxu0 %v7802
        %7922 = vmatprep.subr.bf16.mxu0 %v7801
        %7923 = vmatpush2.bf16.msra.mxu0 %v7800
        %7924 = vmatprep.subr.bf16.mxu0 %v7799
        %7925 = vmatpush2.bf16.msra.mxu0 %v7798
        %7926 = vmatprep.subr.bf16.mxu0 %v7797
        %7927 = vmatpush2.bf16.msra.mxu0 %v7796
        %7928 = vmatprep.subr.bf16.mxu0 %v7795
        %7929 = vmatpush2.bf16.msra.mxu0 %v7794
        %7930 = vmatprep.subr.bf16.mxu0 %v7793
        %7931 = vmatpush2.bf16.msra.mxu0 %v7792
        %7932 = vmatprep.subr.bf16.mxu0 %v7791
        %7933 = vmatpush2.bf16.msra.mxu0 %v7790
        %7934 = vmatprep.mubr.bf16.mxu0 %v7487
        %7935 = vmatmul.mubr.bf16.gmra.mxu0 %v7486
        %v7936 = vpop.f32.mrf.mxu0
        %v7937 = vadd.f32 0.0, %v7936
        %v7938 = vpop.f32.mrf.mxu0
        %v7939 = vadd.f32 0.0, %v7938
        %v7940 = vpop.f32.mrf.mxu0
        %v7941 = vadd.f32 0.0, %v7940
        %v7942 = vpop.f32.mrf.mxu0
        %v7943 = vadd.f32 0.0, %v7942
        %7944 = vmatprep.mubr.bf16.mxu0 %v7491
        %7945 = vmatmul.mubr.bf16.gmra.mxu0 %v7490
        %v7946 = vpop.f32.mrf.mxu0
        %v7947 = vadd.f32 0.0, %v7946
        %v7948 = vpop.f32.mrf.mxu0
        %v7949 = vadd.f32 0.0, %v7948
        %v7950 = vpop.f32.mrf.mxu0
        %v7951 = vadd.f32 0.0, %v7950
        %v7952 = vpop.f32.mrf.mxu0
        %v7953 = vadd.f32 0.0, %v7952
        %7954 = vmatprep.mubr.bf16.mxu0 %v7495
        %7955 = vmatmul.mubr.bf16.gmra.mxu0 %v7494
        %v7956 = vpop.f32.mrf.mxu0
        %v7957 = vadd.f32 0.0, %v7956
        %v7958 = vpop.f32.mrf.mxu0
        %v7959 = vadd.f32 0.0, %v7958
        %v7960 = vpop.f32.mrf.mxu0
        %v7961 = vadd.f32 0.0, %v7960
        %v7962 = vpop.f32.mrf.mxu0
        %v7963 = vadd.f32 0.0, %v7962
        %7964 = vmatprep.mubr.bf16.mxu0 %v7499
        %7965 = vmatmul.mubr.bf16.gmra.mxu0 %v7498
        %v7966 = vpop.f32.mrf.mxu0
        %v7967 = vadd.f32 0.0, %v7966
        %v7968 = vpop.f32.mrf.mxu0
        %v7969 = vadd.f32 0.0, %v7968
        %v7970 = vpop.f32.mrf.mxu0
        %v7971 = vadd.f32 0.0, %v7970
        %v7972 = vpop.f32.mrf.mxu0
        %v7973 = vadd.f32 0.0, %v7972
        %7974 = vmatprep.mubr.bf16.mxu0 %v7503
        %7975 = vmatmul.mubr.bf16.gmra.mxu0 %v7502
        %v7976 = vpop.f32.mrf.mxu0
        %v7977 = vadd.f32 0.0, %v7976
        %v7978 = vpop.f32.mrf.mxu0
        %v7979 = vadd.f32 0.0, %v7978
        %v7980 = vpop.f32.mrf.mxu0
        %v7981 = vadd.f32 0.0, %v7980
        %v7982 = vpop.f32.mrf.mxu0
        %v7983 = vadd.f32 0.0, %v7982
        %7984 = vmatprep.mubr.bf16.mxu0 %v7507
        %7985 = vmatmul.mubr.bf16.gmra.mxu0 %v7506
        %v7986 = vpop.f32.mrf.mxu0
        %v7987 = vadd.f32 0.0, %v7986
        %v7988 = vpop.f32.mrf.mxu0
        %v7989 = vadd.f32 0.0, %v7988
        %v7990 = vpop.f32.mrf.mxu0
        %v7991 = vadd.f32 0.0, %v7990
        %v7992 = vpop.f32.mrf.mxu0
        %v7993 = vadd.f32 0.0, %v7992
        %7994 = vmatprep.mubr.bf16.mxu0 %v7511
        %7995 = vmatmul.mubr.bf16.gmra.mxu0 %v7510
        %v7996 = vpop.f32.mrf.mxu0
        %v7997 = vadd.f32 0.0, %v7996
        %v7998 = vpop.f32.mrf.mxu0
        %v7999 = vadd.f32 0.0, %v7998
        %v8000 = vpop.f32.mrf.mxu0
        %v8001 = vadd.f32 0.0, %v8000
        %v8002 = vpop.f32.mrf.mxu0
        %v8003 = vadd.f32 0.0, %v8002
        %8004 = vmatprep.mubr.bf16.mxu0 %v7515
        %8005 = vmatmul.mubr.bf16.gmra.mxu0 %v7514
        %v8006 = vpop.f32.mrf.mxu0
        %v8007 = vadd.f32 0.0, %v8006
        %v8008 = vpop.f32.mrf.mxu0
        %v8009 = vadd.f32 0.0, %v8008
        %v8010 = vpop.f32.mrf.mxu0
        %v8011 = vadd.f32 0.0, %v8010
        %v8012 = vpop.f32.mrf.mxu0
        %v8013 = vadd.f32 0.0, %v8012
        %8014 = vdwg.mxu0
        %8015 = vmatprep.subr.bf16.mxu0 %v7821
        %8016 = vmatpush1.bf16.msra.mxu0 %v7820
        %8017 = vmatprep.subr.bf16.mxu0 %v7819
        %8018 = vmatpush1.bf16.msra.mxu0 %v7818
        %8019 = vmatprep.subr.bf16.mxu0 %v7817
        %8020 = vmatpush1.bf16.msra.mxu0 %v7816
        %8021 = vmatprep.subr.bf16.mxu0 %v7815
        %8022 = vmatpush1.bf16.msra.mxu0 %v7814
        %8023 = vmatprep.subr.bf16.mxu0 %v7813
        %8024 = vmatpush1.bf16.msra.mxu0 %v7812
        %8025 = vmatprep.subr.bf16.mxu0 %v7811
        %8026 = vmatpush1.bf16.msra.mxu0 %v7810
        %8027 = vmatprep.subr.bf16.mxu0 %v7809
        %8028 = vmatpush1.bf16.msra.mxu0 %v7808
        %8029 = vmatprep.subr.bf16.mxu0 %v7807
        %8030 = vmatpush1.bf16.msra.mxu0 %v7806
        %8031 = vmatprep.subr.bf16.mxu0 %v7837
        %8032 = vmatpush2.bf16.msra.mxu0 %v7836
        %8033 = vmatprep.subr.bf16.mxu0 %v7835
        %8034 = vmatpush2.bf16.msra.mxu0 %v7834
        %8035 = vmatprep.subr.bf16.mxu0 %v7833
        %8036 = vmatpush2.bf16.msra.mxu0 %v7832
        %8037 = vmatprep.subr.bf16.mxu0 %v7831
        %8038 = vmatpush2.bf16.msra.mxu0 %v7830
        %8039 = vmatprep.subr.bf16.mxu0 %v7829
        %8040 = vmatpush2.bf16.msra.mxu0 %v7828
        %8041 = vmatprep.subr.bf16.mxu0 %v7827
        %8042 = vmatpush2.bf16.msra.mxu0 %v7826
        %8043 = vmatprep.subr.bf16.mxu0 %v7825
        %8044 = vmatpush2.bf16.msra.mxu0 %v7824
        %8045 = vmatprep.subr.bf16.mxu0 %v7823
        %8046 = vmatpush2.bf16.msra.mxu0 %v7822
        %8047 = vmatprep.mubr.bf16.mxu0 %v7489
        %8048 = vmatmul.mubr.bf16.gmra.mxu0 %v7488
        %v8049 = vpop.f32.mrf.mxu0
        %v8050 = vadd.f32 %v7937, %v8049
        %v8051 = vpop.f32.mrf.mxu0
        %v8052 = vadd.f32 %v7939, %v8051
        %v8053 = vpop.f32.mrf.mxu0
        %v8054 = vadd.f32 %v7941, %v8053
        %v8055 = vpop.f32.mrf.mxu0
        %v8056 = vadd.f32 %v7943, %v8055
        %8057 = vmatprep.mubr.bf16.mxu0 %v7493
        %8058 = vmatmul.mubr.bf16.gmra.mxu0 %v7492
        %v8059 = vpop.f32.mrf.mxu0
        %v8060 = vadd.f32 %v7947, %v8059
        %v8061 = vpop.f32.mrf.mxu0
        %v8062 = vadd.f32 %v7949, %v8061
        %v8063 = vpop.f32.mrf.mxu0
        %v8064 = vadd.f32 %v7951, %v8063
        %v8065 = vpop.f32.mrf.mxu0
        %v8066 = vadd.f32 %v7953, %v8065
        %8067 = vmatprep.mubr.bf16.mxu0 %v7497
        %8068 = vmatmul.mubr.bf16.gmra.mxu0 %v7496
        %v8069 = vpop.f32.mrf.mxu0
        %v8070 = vadd.f32 %v7957, %v8069
        %v8071 = vpop.f32.mrf.mxu0
        %v8072 = vadd.f32 %v7959, %v8071
        %v8073 = vpop.f32.mrf.mxu0
        %v8074 = vadd.f32 %v7961, %v8073
        %v8075 = vpop.f32.mrf.mxu0
        %v8076 = vadd.f32 %v7963, %v8075
        %8077 = vmatprep.mubr.bf16.mxu0 %v7501
        %8078 = vmatmul.mubr.bf16.gmra.mxu0 %v7500
        %v8079 = vpop.f32.mrf.mxu0
        %v8080 = vadd.f32 %v7967, %v8079
        %v8081 = vpop.f32.mrf.mxu0
        %v8082 = vadd.f32 %v7969, %v8081
        %v8083 = vpop.f32.mrf.mxu0
        %v8084 = vadd.f32 %v7971, %v8083
        %v8085 = vpop.f32.mrf.mxu0
        %v8086 = vadd.f32 %v7973, %v8085
        %8087 = vmatprep.mubr.bf16.mxu0 %v7505
        %8088 = vmatmul.mubr.bf16.gmra.mxu0 %v7504
        %v8089 = vpop.f32.mrf.mxu0
        %v8090 = vadd.f32 %v7977, %v8089
        %v8091 = vpop.f32.mrf.mxu0
        %v8092 = vadd.f32 %v7979, %v8091
        %v8093 = vpop.f32.mrf.mxu0
        %v8094 = vadd.f32 %v7981, %v8093
        %v8095 = vpop.f32.mrf.mxu0
        %v8096 = vadd.f32 %v7983, %v8095
        %8097 = vmatprep.mubr.bf16.mxu0 %v7509
        %8098 = vmatmul.mubr.bf16.gmra.mxu0 %v7508
        %v8099 = vpop.f32.mrf.mxu0
        %v8100 = vadd.f32 %v7987, %v8099
        %v8101 = vpop.f32.mrf.mxu0
        %v8102 = vadd.f32 %v7989, %v8101
        %v8103 = vpop.f32.mrf.mxu0
        %v8104 = vadd.f32 %v7991, %v8103
        %v8105 = vpop.f32.mrf.mxu0
        %v8106 = vadd.f32 %v7993, %v8105
        %8107 = vmatprep.mubr.bf16.mxu0 %v7513
        %8108 = vmatmul.mubr.bf16.gmra.mxu0 %v7512
        %v8109 = vpop.f32.mrf.mxu0
        %v8110 = vadd.f32 %v7997, %v8109
        %v8111 = vpop.f32.mrf.mxu0
        %v8112 = vadd.f32 %v7999, %v8111
        %v8113 = vpop.f32.mrf.mxu0
        %v8114 = vadd.f32 %v8001, %v8113
        %v8115 = vpop.f32.mrf.mxu0
        %v8116 = vadd.f32 %v8003, %v8115
        %8117 = vmatprep.mubr.bf16.mxu0 %v7517
        %8118 = vmatmul.mubr.bf16.gmra.mxu0 %v7516
        %v8119 = vpop.f32.mrf.mxu0
        %v8120 = vadd.f32 %v8007, %v8119
        %v8121 = vpop.f32.mrf.mxu0
        %v8122 = vadd.f32 %v8009, %v8121
        %v8123 = vpop.f32.mrf.mxu0
        %v8124 = vadd.f32 %v8011, %v8123
        %v8125 = vpop.f32.mrf.mxu0
        %v8126 = vadd.f32 %v8013, %v8125
        %8127 = vdwg.mxu0
        %v8128 = vadd.f32 %v5567, %v8050
        %v8129 = vadd.f32 %v5568, %v8052
        %v8130 = vadd.f32 %v5569, %v8054
        %v8131 = vadd.f32 %v5570, %v8056
        %v8132 = vadd.f32 %v5571, %v8060
        %v8133 = vadd.f32 %v5572, %v8062
        %v8134 = vadd.f32 %v5573, %v8064
        %v8135 = vadd.f32 %v5574, %v8066
        %v8136 = vadd.f32 %v5575, %v8070
        %v8137 = vadd.f32 %v5576, %v8072
        %v8138 = vadd.f32 %v5577, %v8074
        %v8139 = vadd.f32 %v5578, %v8076
        %v8140 = vadd.f32 %v5579, %v8080
        %v8141 = vadd.f32 %v5580, %v8082
        %v8142 = vadd.f32 %v5581, %v8084
        %v8143 = vadd.f32 %v5582, %v8086
        %v8144 = vadd.f32 %v5583, %v8090
        %v8145 = vadd.f32 %v5584, %v8092
        %v8146 = vadd.f32 %v5585, %v8094
        %v8147 = vadd.f32 %v5586, %v8096
        %v8148 = vadd.f32 %v5587, %v8100
        %v8149 = vadd.f32 %v5588, %v8102
        %v8150 = vadd.f32 %v5589, %v8104
        %v8151 = vadd.f32 %v5590, %v8106
        %v8152 = vadd.f32 %v5591, %v8110
        %v8153 = vadd.f32 %v5592, %v8112
        %v8154 = vadd.f32 %v5593, %v8114
        %v8155 = vadd.f32 %v5594, %v8116
        %v8156 = vadd.f32 %v5595, %v8120
        %v8157 = vadd.f32 %v5596, %v8122
        %v8158 = vadd.f32 %v5597, %v8124
        %v8159 = vadd.f32 %v5598, %v8126
        %8160 = vst [vmem:[%s641] sm:$0xff] %v8128
        %8161 = vst [vmem:[%s641 + $0x8] sm:$0xff] %v8129
        %8162 = vst [vmem:[%s641 + $0x10] sm:$0xff] %v8130
        %8163 = vst [vmem:[%s641 + $0x18] sm:$0xff] %v8131
        %8164 = vst [vmem:[%s641 + $0x20] sm:$0xff] %v8132
        %8165 = vst [vmem:[%s641 + $0x28] sm:$0xff] %v8133
        %8166 = vst [vmem:[%s641 + $0x30] sm:$0xff] %v8134
        %8167 = vst [vmem:[%s641 + $0x38] sm:$0xff] %v8135
        %8168 = vst [vmem:[%s641 + $0x40] sm:$0xff] %v8136
        %8169 = vst [vmem:[%s641 + $0x48] sm:$0xff] %v8137
        %8170 = vst [vmem:[%s641 + $0x50] sm:$0xff] %v8138
        %8171 = vst [vmem:[%s641 + $0x58] sm:$0xff] %v8139
        %8172 = vst [vmem:[%s641 + $0x60] sm:$0xff] %v8140
        %8173 = vst [vmem:[%s641 + $0x68] sm:$0xff] %v8141
        %8174 = vst [vmem:[%s641 + $0x70] sm:$0xff] %v8142
        %8175 = vst [vmem:[%s641 + $0x78] sm:$0xff] %v8143
        %8176 = vst [vmem:[%s641 + $0x80] sm:$0xff] %v8144
        %8177 = vst [vmem:[%s641 + $0x88] sm:$0xff] %v8145
        %8178 = vst [vmem:[%s641 + $0x90] sm:$0xff] %v8146
        %8179 = vst [vmem:[%s641 + $0x98] sm:$0xff] %v8147
        %8180 = vst [vmem:[%s641 + $0xa0] sm:$0xff] %v8148
        %8181 = vst [vmem:[%s641 + $0xa8] sm:$0xff] %v8149
        %8182 = vst [vmem:[%s641 + $0xb0] sm:$0xff] %v8150
        %8183 = vst [vmem:[%s641 + $0xb8] sm:$0xff] %v8151
        %8184 = vst [vmem:[%s641 + $0xc0] sm:$0xff] %v8152
        %8185 = vst [vmem:[%s641 + $0xc8] sm:$0xff] %v8153
        %8186 = vst [vmem:[%s641 + $0xd0] sm:$0xff] %v8154
        %8187 = vst [vmem:[%s641 + $0xd8] sm:$0xff] %v8155
        %8188 = vst [vmem:[%s641 + $0xe0] sm:$0xff] %v8156
        %8189 = vst [vmem:[%s641 + $0xe8] sm:$0xff] %v8157
        %8190 = vst [vmem:[%s641 + $0xf0] sm:$0xff] %v8158
        %8191 = vst [vmem:[%s641 + $0xf8] sm:$0xff] %v8159
        %s8192 = sand.u32 %s327, 1
        %s8193 = scalar_lea.sflag [#allocation6], %s8192
        %s8194 = sand.u32 %s327, 1
        %s8195 = smul.addr %s8194, 256
        %s8196 = scalar_lea.vmem [#allocation22], %s8195
        // Predicated region
        $region120: #{tpu_custom_call.1} parent=67 // pred_check
          %p8197 = pneg %p337
        $region121: #{tpu_custom_call.1} parent=67 // pred_check_branch
          %8199 = sbr.rel (%p8197) target = $region123
        $region122: #{tpu_custom_call.1} parent=67 // pred_region
          %s8200 = smul.u32 16, %s41
          %s8202 = ssub.s32 4096, 4096
          %8203 = vsyncadd %s8193, %s8202
          %s8204 = smul.addr %s8200, 2
          %s8205 = smul.addr %s40, 64
          %s8206 = sadd.s32 %s8204, %s8205
          %s8207 = smul.addr %s8206, 128
          %s8208 = scalar_lea.hbm %s12, %s8207
          %s8209 = sshll.u32 %s8196, 4
          %s8210 = int_to_ptr.vmem [resolvable:$true] %s8209
          %8215 = dma.vmem_to_hbm [thread:$0]  %s8210, 4096, %s8208, %s8193, 256, 256, 16
        $region123: #{tpu_custom_call.1} parent=67 // pred_fallthru
          _
      $region68: #{tpu_custom_call.1} parent=5 // pred_fallthru
        _
      %p8216 = scmp.le.s32.totalorder 2, %s31
      // Predicated region
      $region124: #{tpu_custom_call.1} parent=5 // pred_check
        %p8217 = pneg %p8216
      $region125: #{tpu_custom_call.1} parent=5 // pred_check_branch
        %8219 = sbr.rel (%p8217) target = $region127
      $region126: #{tpu_custom_call.1} parent=5 // pred_region
        %s8220 = ssub.s32 %s31, 2
        // Predicated region
        $region128: #{tpu_custom_call.1} parent=126 // pred_check
          %p8221 = pneg %p343
        $region129: #{tpu_custom_call.1} parent=126 // pred_check_branch
          %8223 = sbr.rel (%p8221) target = $region131
        $region130: #{tpu_custom_call.1} parent=126 // pred_region
          %s8224 = sand.u32 %s328, 1
          %s8225 = scalar_lea.sflag [#allocation6], %s8224
          %s8226 = sand.u32 %s328, 1
          %s8227 = smul.addr %s8226, 256
          %s8228 = scalar_lea.vmem [#allocation22], %s8227
          %8229 = dma.done %s8225, 4096
        $region131: #{tpu_custom_call.1} parent=126 // pred_fallthru
          _
      $region127: #{tpu_custom_call.1} parent=5 // pred_fallthru
        _
    $region6: #{tpu_custom_call.1} parent=1 // loop_footer
      %s35 = sadd.s32 1, %s31
    $region7: #{tpu_custom_call.1} parent=1 // loop_footer_branch
      %30 = sbr.rel target = $region3
    $region8: #{tpu_custom_call.1} parent=1 // loop_exit
      _
    %8230 = vsyncpa [#allocation5], 1
    %s8231 = scalar_lea.sflag [#allocation5], 1
    %8232 = vsyncpa %s8231, 1
    %8233 = vsyncpa [#allocation8], 1
    %8234 = vsyncpa [#allocation11], 1
    %8235 = vsyncpa [#allocation14], 1
    %8236 = vsyncpa [#allocation17], 1
    %8237 = vsyncpa [#allocation20], 1
    %s8238 = scalar_lea.sflag [#allocation20], 1
    %8239 = vsyncpa %s8238, 1
    %8240 = vsyncpa [#allocation6], 1
    %s8241 = scalar_lea.sflag [#allocation6], 1
    %8242 = vsyncpa %s8241, 1

</llo_original>
